<compile_context>
chip_gen: v6e
topology: v6e:2x2x1
jax: 0.10.0
libtpu: 0.0.40
codegen_flags: <defaults>
</compile_context>

<pallas_src>
import functools
import math

import jax
import jax.numpy as jnp
from jax.experimental import pallas as pl
from jax.experimental.pallas import tpu as pltpu

RELU_ALPHA = 0.2
_LANE = 128                       # lane width -> lane-dense output tiles
_TM_MAX = 512                     # row-tile cap
_TK_SINGLE_MAX = 512              # contraction dim kept whole below this
_TK_TILE = 256                    # contraction tile when K is large
_VMEM_LIMIT = 32 * 1024 * 1024    # scoped-VMEM budget (safe on v7x 64 MiB)

_COMPILER_PARAMS_MNK = pltpu.CompilerParams(
    dimension_semantics=("parallel", "parallel", "arbitrary"),
    vmem_limit_bytes=_VMEM_LIMIT,
)
_COMPILER_PARAMS_B = pltpu.CompilerParams(
    dimension_semantics=("parallel",),
    vmem_limit_bytes=_VMEM_LIMIT,
)


def _round_up(x, m):
    return (x + m - 1) // m * m


def _cdiv(a, b):
    return (a + b - 1) // b


def _k_split(k):
    """(K_padded, K_tile, num_k_steps) for a contraction dimension."""
    if k <= _TK_SINGLE_MAX:
        return k, k, 1
    kp = _round_up(k, _TK_TILE)
    return kp, _TK_TILE, kp // _TK_TILE


def _leaky(x):
    return jnp.where(x > 0, x, RELU_ALPHA * x)


# --------------------------------------------------------------------------
# Tiled fused matmul:  out = post_act(A @ W + b)
# --------------------------------------------------------------------------
def _matmul_kernel_acc(a_ref, w_ref, b_ref, o_ref, acc_ref, *, post_act):
    k = pl.program_id(2)

    @pl.when(k == 0)
    def _init():
        acc_ref[...] = jnp.zeros_like(acc_ref)

    acc_ref[...] += jnp.dot(a_ref[...], w_ref[...],
                            preferred_element_type=jnp.float32)

    @pl.when(k == pl.num_programs(2) - 1)
    def _finalize():
        out = acc_ref[...] + b_ref[...]
        if post_act == "relu":
            out = jnp.maximum(out, 0.0)
        o_ref[...] = out.astype(o_ref.dtype)


def _matmul_kernel_single(a_ref, w_ref, b_ref, o_ref, *, post_act):
    # Single K step: no accumulator scratch, no predicated init/finalize.
    out = jnp.dot(a_ref[...], w_ref[...],
                  preferred_element_type=jnp.float32) + b_ref[...]
    if post_act == "relu":
        out = jnp.maximum(out, 0.0)
    o_ref[...] = out.astype(o_ref.dtype)


def fused_matmul(a, w, b, post_act="none"):
    """Tiled (matmul -> +bias -> post-act) Pallas call with bf16 MXU operands."""
    M, K = a.shape
    N = w.shape[1]
    Np = _round_up(N, _LANE)
    tn = _LANE
    # Row tiling: cap at _TM_MAX and, when possible, split M into >= 2 blocks
    # so the "parallel" M axis actually feeds both TensorCores on v7x.
    tm = min(_TM_MAX, _round_up(M, 8))
    if M >= 16 and _cdiv(M, tm) < 2:
        tm = _round_up(_cdiv(M, 2), 8)
    Mp = _round_up(M, tm)
    Kp, tk, nk = _k_split(K)

    # Activations cast to bf16 host-side: halves A's HBM->VMEM DMA bytes and
    # avoids re-casting the same tile per N-column grid step.
    a_p = jnp.pad(a.astype(jnp.bfloat16), ((0, Mp - M), (0, Kp - K)))
    w_p = jnp.pad(w.astype(jnp.bfloat16), ((0, Kp - K), (0, Np - N)))
    b_p = jnp.pad(b.astype(jnp.float32).reshape(1, N), ((0, 0), (0, Np - N)))

    if nk == 1:
        kern = functools.partial(_matmul_kernel_single, post_act=post_act)
        scratch = []
    else:
        kern = functools.partial(_matmul_kernel_acc, post_act=post_act)
        scratch = [pltpu.VMEM((tm, tn), jnp.float32)]

    out = pl.pallas_call(
        kern,
        out_shape=jax.ShapeDtypeStruct((Mp, Np), jnp.float32),
        grid=(Mp // tm, Np // tn, nk),
        in_specs=[
            pl.BlockSpec((tm, tk), lambda i, j, k: (i, k)),
            pl.BlockSpec((tk, tn), lambda i, j, k: (k, j)),
            pl.BlockSpec((1, tn), lambda i, j, k: (0, j)),
        ],
        out_specs=pl.BlockSpec((tm, tn), lambda i, j, k: (i, j)),
        scratch_shapes=scratch,
        compiler_params=_COMPILER_PARAMS_MNK,
    )(a_p, w_p, b_p)
    return out[:M, :N]


# --------------------------------------------------------------------------
# Fused ResidualBlock kernel (stride=1, norm=None, dropout=None):
#   h1  = conv3x3_reflect(leaky(x)) + b1
#   out = conv3x3_reflect(leaky(h1)) + b2 + highway(x)
# The reflect-padded input arrives flattened as (B, (H+2)*(W+2), Cp); every
# conv tap is then a contiguous row-shifted slice (shift di*(W+2)+dj).  The 9
# tap slices are concatenated along K ("VMEM im2col") for ONE MXU matmul per
# conv.  h1, its LeakyReLU and its reflect padding live entirely in VMEM
# scratch; the highway (identity or 1x1 conv) and the residual add are fused
# in the same kernel.  Garbage lands only in the 2 padded width columns of
# the output, sliced off outside.
# --------------------------------------------------------------------------
def _resblock_kernel(xp_ref, w1_ref, b1_ref, w2_ref, b2_ref, *rest,
                     H, W, Cp, Fp, has_highway):
    if has_highway:
        (wh_ref, bh_ref, o_ref, xl_ref, h1l_ref, h1p_ref) = rest
    else:
        (o_ref, xl_ref, h1l_ref, h1p_ref) = rest

    Wp = W + 2
    R = H * Wp                     # output rows (valid cols are j < W)
    rows = (H + 2) * Wp            # reflect-padded rows
    Rtot = xl_ref.shape[0]
    taps = [(di, dj) for di in range(3) for dj in range(3)]

    # ---- block1: LeakyReLU(x) (hoisted, applied ONCE) -> 3x3 conv ---------
    xl_ref[...] = _leaky(xp_ref[0])                       # fp32, whole slab
    a1 = jnp.concatenate(
        [xl_ref[di * Wp + dj: di * Wp + dj + R, :] for (di, dj) in taps],
        axis=1).astype(jnp.bfloat16)                      # (R, 9*Cp), one cast
    h1 = jnp.dot(a1, w1_ref[...],
                 preferred_element_type=jnp.float32) + b1_ref[...]

    # ---- LeakyReLU(h1) + in-VMEM reflect padding --------------------------
    h1l_ref[0:R, :] = _leaky(h1)
    h1p_ref[rows:Rtot, :] = jnp.zeros((Rtot - rows, Fp), jnp.float32)
    for ii in range(H + 2):
        src = ii - 1
        if src < 0:
            src = 1                 # reflect: row -1 -> row 1
        elif src > H - 1:
            src = H - 2             # reflect: row H -> row H-2
        sb = src * Wp
        db = ii * Wp
        h1p_ref[db + 1:db + 1 + W, :] = h1l_ref[sb:sb + W, :]          # interior
        h1p_ref[db:db + 1, :] = h1l_ref[sb + 1:sb + 2, :]              # col -1 -> 1
        h1p_ref[db + W + 1:db + W + 2, :] = h1l_ref[sb + W - 2:sb + W - 1, :]  # col W -> W-2

    # ---- block2: 3x3 conv on leaky(h1) -------------------------------------
    a2 = jnp.concatenate(
        [h1p_ref[di * Wp + dj: di * Wp + dj + R, :] for (di, dj) in taps],
        axis=1).astype(jnp.bfloat16)                      # (R, 9*Fp)
    out = jnp.dot(a2, w2_ref[...],
                  preferred_element_type=jnp.float32) + b2_ref[...]

    # ---- highway (raw x, NOT activated) + residual add ---------------------
    xs = xp_ref[0, Wp + 1: Wp + 1 + R, :]                 # interior of x, fp32
    if has_highway:
        hw = jnp.dot(xs.astype(jnp.bfloat16), wh_ref[...],
                     preferred_element_type=jnp.float32) + bh_ref[...]
    else:
        hw = xs                                           # Cp == Fp here
    o_ref[0] = (out + hw).astype(o_ref.dtype)


def residual_block(x, p):
    """Whole ResidualBlock in ONE pallas_call (grid over batch only)."""
    B, H, W, C = x.shape
    F = p["b1"].shape[0]
    has_highway = "wh" in p
    if not has_highway:
        assert C == F, "identity highway requires matching channel counts"

    Wp = W + 2
    rows = (H + 2) * Wp
    R = H * Wp
    Cp = _round_up(C, _LANE)
    Fp = _round_up(F, _LANE)
    Rtot = _round_up(rows + 2, 8)      # +2 so the last tap slice stays in bounds
    Rpad = _round_up(R, 8)

    # Reflect-pad the input once (compact), lane-pad channels, flatten rows.
    xp = jnp.pad(x.astype(jnp.float32), ((0, 0), (1, 1), (1, 1), (0, 0)),
                 mode="reflect")
    xp = jnp.pad(xp, ((0, 0), (0, 0), (0, 0), (0, Cp - C)))
    xp = jnp.pad(xp.reshape(B, rows, Cp), ((0, 0), (0, Rtot - rows), (0, 0)))

    # Conv weights stacked tap-major along K for the single big-K matmul.
    w1 = jnp.pad(p["w1"].astype(jnp.bfloat16),
                 ((0, 0), (0, 0), (0, Cp - C), (0, Fp - F))).reshape(9 * Cp, Fp)
    w2 = jnp.pad(p["w2"].astype(jnp.bfloat16),
                 ((0, 0), (0, 0), (0, Fp - F), (0, Fp - F))).reshape(9 * Fp, Fp)
    b1 = jnp.pad(p["b1"].astype(jnp.float32).reshape(1, F), ((0, 0), (0, Fp - F)))
    b2 = jnp.pad(p["b2"].astype(jnp.float32).reshape(1, F), ((0, 0), (0, Fp - F)))

    args = [xp, w1, b1, w2, b2]
    in_specs = [
        pl.BlockSpec((1, Rtot, Cp), lambda bb: (bb, 0, 0)),
        pl.BlockSpec((9 * Cp, Fp), lambda bb: (0, 0)),
        pl.BlockSpec((1, Fp), lambda bb: (0, 0)),
        pl.BlockSpec((9 * Fp, Fp), lambda bb: (0, 0)),
        pl.BlockSpec((1, Fp), lambda bb: (0, 0)),
    ]
    if has_highway:
        wh = jnp.pad(p["wh"].astype(jnp.bfloat16), ((0, Cp - C), (0, Fp - F)))
        bh = jnp.pad(p["bh"].astype(jnp.float32).reshape(1, F),
                     ((0, 0), (0, Fp - F)))
        args += [wh, bh]
        in_specs += [pl.BlockSpec((Cp, Fp), lambda bb: (0, 0)),
                     pl.BlockSpec((1, Fp), lambda bb: (0, 0))]

    kern = functools.partial(_resblock_kernel, H=H, W=W, Cp=Cp, Fp=Fp,
                             has_highway=has_highway)
    out = pl.pallas_call(
        kern,
        out_shape=jax.ShapeDtypeStruct((B, R, Fp), jnp.float32),
        grid=(B,),
        in_specs=in_specs,
        out_specs=pl.BlockSpec((1, R, Fp), lambda bb: (bb, 0, 0)),
        scratch_shapes=[
            pltpu.VMEM((Rtot, Cp), jnp.float32),   # leaky(x), hoisted
            pltpu.VMEM((Rpad, Fp), jnp.float32),   # leaky(h1)
            pltpu.VMEM((Rtot, Fp), jnp.float32),   # reflect-padded leaky(h1)
        ],
        compiler_params=_COMPILER_PARAMS_B,
    )(*args)
    return out.reshape(B, H, Wp, Fp)[:, :, :W, :F]


# --------------------------------------------------------------------------
# Conv wrappers built on the tiled matmul
# --------------------------------------------------------------------------
def patch_conv(x, w, b, kh, kw, post_act="none"):
    """Conv2d(kernel=(kh,kw), stride=(kh,kw), padding='valid') as a patch matmul."""
    B, H, W, C = x.shape
    F = w.shape[-1]
    Ho, Wo = H // kh, W // kw
    # Non-overlapping patches -> pure permutation (no data duplication).
    patches = (
        x.reshape(B, Ho, kh, Wo, kw, C)
        .transpose(0, 1, 3, 2, 4, 5)
        .reshape(B * Ho * Wo, kh * kw * C)
    )
    out = fused_matmul(patches, w.reshape(kh * kw * C, F), b, post_act=post_act)
    return out.reshape(B, Ho, Wo, F)


def conv1x1(x, w, b, post_act="none"):
    B, H, W, C = x.shape
    F = w.shape[-1]
    out = fused_matmul(x.reshape(B * H * W, C), w, b, post_act=post_act)
    return out.reshape(B, H, W, F)


# --------------------------------------------------------------------------
# Fused head: spatial mean (tiled over H*W) -> Linear -> ReLU -> Linear
# --------------------------------------------------------------------------
def _head_kernel(x_ref, w1_ref, b1_ref, w2_ref, b2_ref, o_ref, acc_ref, *, inv_s):
    s = pl.program_id(0)

    @pl.when(s == 0)
    def _init():
        acc_ref[...] = jnp.zeros_like(acc_ref)

    acc_ref[...] += jnp.sum(x_ref[...], axis=1)

    @pl.when(s == pl.num_programs(0) - 1)
    def _finalize():
        m = acc_ref[...] * inv_s
        h = jnp.dot(m.astype(jnp.bfloat16), w1_ref[...],
                    preferred_element_type=jnp.float32)
        h = jnp.maximum(h + b1_ref[...], 0.0)
        y = jnp.dot(h.astype(jnp.bfloat16), w2_ref[...],
                    preferred_element_type=jnp.float32)
        o_ref[...] = (y + b2_ref[...]).astype(o_ref.dtype)


def head(x, w1, b1, w2, b2):
    B, H, W, C = x.shape
    S = H * W
    ts = min(_round_up(S, 8), 512)
    Sp = _round_up(S, ts)
    xf = jnp.pad(x.astype(jnp.float32).reshape(B, S, C),
                 ((0, 0), (0, Sp - S), (0, 0)))

    H1 = w1.shape[1]
    H1p = _round_up(H1, _LANE)
    N2 = w2.shape[1]
    N2p = _round_up(N2, _LANE)
    w1p = jnp.pad(w1.astype(jnp.bfloat16), ((0, 0), (0, H1p - H1)))
    b1p = jnp.pad(b1.astype(jnp.float32).reshape(1, H1), ((0, 0), (0, H1p - H1)))
    w2p = jnp.pad(w2.astype(jnp.bfloat16), ((0, H1p - H1), (0, N2p - N2)))
    b2p = jnp.pad(b2.astype(jnp.float32).reshape(1, N2), ((0, 0), (0, N2p - N2)))

    kern = functools.partial(_head_kernel, inv_s=1.0 / S)
    out = pl.pallas_call(
        kern,
        out_shape=jax.ShapeDtypeStruct((B, N2p), jnp.float32),
        grid=(Sp // ts,),
        in_specs=[
            pl.BlockSpec((B, ts, C), lambda s: (0, s, 0)),
            pl.BlockSpec((C, H1p), lambda s: (0, 0)),
            pl.BlockSpec((1, H1p), lambda s: (0, 0)),
            pl.BlockSpec((H1p, N2p), lambda s: (0, 0)),
            pl.BlockSpec((1, N2p), lambda s: (0, 0)),
        ],
        out_specs=pl.BlockSpec((B, N2p), lambda s: (0, 0)),
        scratch_shapes=[pltpu.VMEM((B, C), jnp.float32)],
        compiler_params=pltpu.CompilerParams(
            dimension_semantics=("arbitrary",),
            vmem_limit_bytes=_VMEM_LIMIT),
    )(xf, w1p, b1p, w2p, b2p)
    return out[:, :N2]


# --------------------------------------------------------------------------
# Deterministic parameter initialization (xavier-uniform, as in the module)
# --------------------------------------------------------------------------
def _xavier_conv(key, kh, kw, cin, cout):
    fan_in = cin * kh * kw
    fan_out = cout * kh * kw
    bound = math.sqrt(6.0 / (fan_in + fan_out))
    return jax.random.uniform(key, (kh, kw, cin, cout), jnp.float32, -bound, bound)


def _bias(key, fan_in, n):
    bound = 1.0 / math.sqrt(fan_in)
    return jax.random.uniform(key, (n,), jnp.float32, -bound, bound)


def _init_rb(key, cin, cout, forceconv=False):
    k = jax.random.split(key, 6)
    p = {
        "w1": _xavier_conv(k[0], 3, 3, cin, cout),
        "b1": _bias(k[1], cin * 9, cout),
        "w2": _xavier_conv(k[2], 3, 3, cout, cout),
        "b2": _bias(k[3], cout * 9, cout),
    }
    if cin != cout or forceconv:
        p["wh"] = _xavier_conv(k[4], 1, 1, cin, cout).reshape(cin, cout)
        p["bh"] = _bias(k[5], cin, cout)
    return p


def init_params(key, fd):
    ks = jax.random.split(key, 16)
    p = {}
    # inp_conv_cf: Conv2d(1, fd, (5,7), stride (5,7))
    p["cf_w"] = _xavier_conv(ks[0], 5, 7, 1, fd)
    p["cf_b"] = _bias(ks[1], 35, fd)
    # residual_block_field: RB(fd+6 -> fd), RB(fd -> 2*fd)
    p["rbf"] = [_init_rb(ks[2], fd + 6, fd), _init_rb(ks[3], fd, 2 * fd)]
    # ds_resid_block_img
    p["img_c1_w"] = _xavier_conv(ks[4], 5, 7, 2, fd)
    p["img_c1_b"] = _bias(ks[5], 2 * 35, fd)
    p["img_rb1"] = _init_rb(ks[6], fd, 2 * fd)
    p["img_c2_w"] = _xavier_conv(ks[7], 1, 1, 2 * fd, 2 * fd).reshape(2 * fd, 2 * fd)
    p["img_c2_b"] = _bias(ks[8], 2 * fd, 2 * fd)
    p["img_rb2"] = _init_rb(ks[9], 2 * fd, 2 * fd)
    # outp_residual_block: RB(4*fd -> fd), RB(fd -> fd)
    p["outp"] = [_init_rb(ks[10], 4 * fd, fd), _init_rb(ks[11], fd, fd)]
    # output_layer: Linear(fd, fd//2) -> ReLU -> Linear(fd//2, 1)
    p["fc1_w"] = _xavier_conv(ks[12], 1, 1, fd, fd // 2).reshape(fd, fd // 2)
    p["fc1_b"] = _bias(ks[13], fd, fd // 2)
    p["fc2_w"] = _xavier_conv(ks[14], 1, 1, fd // 2, 1).reshape(fd // 2, 1)
    p["fc2_b"] = _bias(ks[15], fd // 2, 1)
    return p


# --------------------------------------------------------------------------
# Full forward pass (mask=None path)
# --------------------------------------------------------------------------
def vaegan_discriminator(params, image, variable_fields, constant_fields):
    # Public inputs are NCHW (PyTorch); kernels use NHWC.
    img = jnp.transpose(image, (0, 2, 3, 1))
    vf = jnp.transpose(variable_fields, (0, 2, 3, 1))
    cf = jnp.transpose(constant_fields, (0, 2, 3, 1))

    # constant_fields_conv = inp_conv_cf(constant_fields)
    cf_conv = patch_conv(cf, params["cf_w"], params["cf_b"], 5, 7)

    # fields = cat([variable_fields, constant_fields_conv], channel)
    fields = jnp.concatenate([vf, cf_conv], axis=-1)
    # image = cat([image, constant_fields], channel)
    img = jnp.concatenate([img, cf], axis=-1)

    # residual_block_field (each block = one fused pallas_call)
    for rb in params["rbf"]:
        fields = residual_block(fields, rb)

    # ds_resid_block_img
    img = patch_conv(img, params["img_c1_w"], params["img_c1_b"], 5, 7,
                     post_act="relu")
    img = residual_block(img, params["img_rb1"])
    img = conv1x1(img, params["img_c2_w"], params["img_c2_b"], post_act="relu")
    img = residual_block(img, params["img_rb2"])

    # cat + output residual blocks
    x = jnp.concatenate([img, fields], axis=-1)
    for rb in params["outp"]:
        x = residual_block(x, rb)

    # TODO(synk): masked avg-pool branch (mask is not None) not implemented;
    # this forward covers the mask=None path (global spatial mean).
    # TODO(synk): a single persistent-VMEM "megakernel" over all layers would
    # remove the remaining launch/concat glue; kept as per-block fusion here.
    return head(x, params["fc1_w"], params["fc1_b"],
                params["fc2_w"], params["fc2_b"])  # (B, 1)


if __name__ == "__main__":
    key = jax.random.PRNGKey(0)
    k_param, k_img, k_vf, k_cf = jax.random.split(key, 4)

    filters_disc = 16  # small but structurally identical to the module (default 64)
    B, H, W = 2, 20, 28  # spatial divisible by (5, 7) -> downsampled 4 x 4

    params = init_params(k_param, filters_disc)

    image = jax.random.normal(k_img, (B, 1, H, W), jnp.float32)
    variable_fields = jax.random.normal(k_vf, (B, 6, H // 5, W // 7), jnp.float32)
    constant_fields = jax.random.normal(k_cf, (B, 1, H, W), jnp.float32)

    fwd = jax.jit(vaegan_discriminator)
    out = jax.block_until_ready(fwd(params, image, variable_fields, constant_fields))
    assert out.shape == (B, 1), out.shape
    assert bool(jnp.all(jnp.isfinite(out)))
    print("KERNEL_OK")
</pallas_src>

<mosaic_0001>
module attributes {stable_mosaic.version = 11 : i64} {
  func.func @_matmul_kernel_single(%arg0: i32, %arg1: i32, %arg2: i32, %arg3: memref<16x35xbf16, #tpu.memory_space<vmem>>, %arg4: memref<35x128xbf16, #tpu.memory_space<vmem>>, %arg5: memref<1x128xf32, #tpu.memory_space<vmem>>, %arg6: memref<16x128xf32, #tpu.memory_space<vmem>>) attributes {dimension_semantics = [#tpu.dimension_semantics<parallel>, #tpu.dimension_semantics<parallel>, #tpu.dimension_semantics<arbitrary>], iteration_bounds = array<i64: 2, 1, 1>, scalar_prefetch = 0 : i64, scratch_operands = 0 : i64, tpu.core_type = #tpu.core_type<tc>, window_params = [{transform_indices = @transform_0, window_bounds = array<i64: 16, 35>}, {transform_indices = @transform_1, window_bounds = array<i64: 35, 128>}, {transform_indices = @transform_2, window_bounds = array<i64: 1, 128>}, {transform_indices = @transform_3, window_bounds = array<i64: 16, 128>}]} {
    %c0 = arith.constant 0 : index
    %c0_0 = arith.constant 0 : index
    %0 = vector.load %arg3[%c0, %c0_0] : memref<16x35xbf16, #tpu.memory_space<vmem>>, vector<16x35xbf16>
    %c0_1 = arith.constant 0 : index
    %c0_2 = arith.constant 0 : index
    %1 = vector.load %arg4[%c0_1, %c0_2] : memref<35x128xbf16, #tpu.memory_space<vmem>>, vector<35x128xbf16>
    %cst = arith.constant dense<0.000000e+00> : vector<16x128xf32>
    %2 = tpu.matmul %0, %1, %cst {dimension_numbers = #tpu.dot_dimension_numbers<[1], [0], [0], [1], [0, 0, 1, 1], [], []>} : vector<16x35xbf16>, vector<35x128xbf16>, vector<16x128xf32> -> vector<16x128xf32>
    %c0_3 = arith.constant 0 : index
    %c0_4 = arith.constant 0 : index
    %3 = vector.load %arg5[%c0_3, %c0_4] : memref<1x128xf32, #tpu.memory_space<vmem>>, vector<1x128xf32>
    %4 = vector.broadcast %3 : vector<1x128xf32> to vector<16x128xf32>
    %5 = arith.addf %2, %4 : vector<16x128xf32>
    %c0_5 = arith.constant 0 : index
    %c0_6 = arith.constant 0 : index
    %6 = vector.load %arg6[%c0_5, %c0_6] : memref<16x128xf32, #tpu.memory_space<vmem>>, vector<16x128xf32>
    tpu.vector_store %arg6[%c0_5, %c0_6], %5 {strides = array<i32>} : memref<16x128xf32, #tpu.memory_space<vmem>>, vector<16x128xf32>,
    return
  }
  func.func @transform_0(%arg0: i32, %arg1: i32, %arg2: i32) -> (i32, i32) {
    %c0_i32 = arith.constant 0 : i32
    return %arg0, %arg2 : i32, i32
  }
  func.func @transform_1(%arg0: i32, %arg1: i32, %arg2: i32) -> (i32, i32) {
    %c0_i32 = arith.constant 0 : i32
    return %arg2, %arg1 : i32, i32
  }
  func.func @transform_2(%arg0: i32, %arg1: i32, %arg2: i32) -> (i32, i32) {
    %c0_i32 = arith.constant 0 : i32
    %c0_i32_0 = arith.constant 0 : i32
    return %c0_i32, %arg1 : i32, i32
  }
  func.func @transform_3(%arg0: i32, %arg1: i32, %arg2: i32) -> (i32, i32) {
    %c0_i32 = arith.constant 0 : i32
    return %arg0, %arg1 : i32, i32
  }
}

module attributes {stable_mosaic.version = 11 : i64} {
  func.func @_resblock_kernel(%arg0: i32, %arg1: memref<1x40x128xf32, #tpu.memory_space<vmem>>, %arg2: memref<1152x128xbf16, #tpu.memory_space<vmem>>, %arg3: memref<1x128xf32, #tpu.memory_space<vmem>>, %arg4: memref<1152x128xbf16, #tpu.memory_space<vmem>>, %arg5: memref<1x128xf32, #tpu.memory_space<vmem>>, %arg6: memref<128x128xbf16, #tpu.memory_space<vmem>>, %arg7: memref<1x128xf32, #tpu.memory_space<vmem>>, %arg8: memref<1x24x128xf32, #tpu.memory_space<vmem>>, %arg9: memref<40x128xf32, #tpu.memory_space<vmem>>, %arg10: memref<24x128xf32, #tpu.memory_space<vmem>>, %arg11: memref<40x128xf32, #tpu.memory_space<vmem>>) attributes {dimension_semantics = [#tpu.dimension_semantics<parallel>], iteration_bounds = array<i64: 2>, scalar_prefetch = 0 : i64, scratch_operands = 3 : i64, tpu.core_type = #tpu.core_type<tc>, window_params = [{transform_indices = @transform_0, window_bounds = array<i64: 1, 40, 128>}, {pipeline_mode = #tpu.pipeline_mode<synchronous>, transform_indices = @transform_1, window_bounds = array<i64: 1152, 128>}, {pipeline_mode = #tpu.pipeline_mode<synchronous>, transform_indices = @transform_2, window_bounds = array<i64: 1, 128>}, {pipeline_mode = #tpu.pipeline_mode<synchronous>, transform_indices = @transform_3, window_bounds = array<i64: 1152, 128>}, {pipeline_mode = #tpu.pipeline_mode<synchronous>, transform_indices = @transform_4, window_bounds = array<i64: 1, 128>}, {pipeline_mode = #tpu.pipeline_mode<synchronous>, transform_indices = @transform_5, window_bounds = array<i64: 128, 128>}, {pipeline_mode = #tpu.pipeline_mode<synchronous>, transform_indices = @transform_6, window_bounds = array<i64: 1, 128>}, {transform_indices = @transform_7, window_bounds = array<i64: 1, 24, 128>}]} {
    %c0 = arith.constant 0 : index
    %c0_0 = arith.constant 0 : index
    %c0_1 = arith.constant 0 : index
    %0 = vector.load %arg1[%c0, %c0_0, %c0_1] : memref<1x40x128xf32, #tpu.memory_space<vmem>>, vector<1x40x128xf32>
    %1 = vector.shape_cast %0 : vector<1x40x128xf32> to vector<40x128xf32>
    %cst = arith.constant 0.000000e+00 : f32
    %2 = vector.broadcast %cst : f32 to vector<40x128xf32>
    %3 = arith.cmpf ogt, %1, %2 : vector<40x128xf32>
    %cst_2 = arith.constant 2.000000e-01 : f32
    %4 = vector.broadcast %cst_2 : f32 to vector<40x128xf32>
    %5 = arith.mulf %4, %1 : vector<40x128xf32>
    %6 = arith.select %3, %1, %5 : vector<40x128xi1>, vector<40x128xf32>
    %c0_3 = arith.constant 0 : index
    %c0_4 = arith.constant 0 : index
    %7 = vector.load %arg9[%c0_3, %c0_4] : memref<40x128xf32, #tpu.memory_space<vmem>>, vector<40x128xf32>
    tpu.vector_store %arg9[%c0_3, %c0_4], %6 {strides = array<i32>} : memref<40x128xf32, #tpu.memory_space<vmem>>, vector<40x128xf32>,
    %c0_5 = arith.constant 0 : index
    %c0_6 = arith.constant 0 : index
    %8 = vector.load %arg9[%c0_5, %c0_6] : memref<40x128xf32, #tpu.memory_space<vmem>>, vector<24x128xf32>
    %c1 = arith.constant 1 : index
    %c0_7 = arith.constant 0 : index
    %9 = vector.load %arg9[%c1, %c0_7] : memref<40x128xf32, #tpu.memory_space<vmem>>, vector<24x128xf32>
    %c2 = arith.constant 2 : index
    %c0_8 = arith.constant 0 : index
    %10 = vector.load %arg9[%c2, %c0_8] : memref<40x128xf32, #tpu.memory_space<vmem>>, vector<24x128xf32>
    %c6 = arith.constant 6 : index
    %c0_9 = arith.constant 0 : index
    %11 = vector.load %arg9[%c6, %c0_9] : memref<40x128xf32, #tpu.memory_space<vmem>>, vector<24x128xf32>
    %c7 = arith.constant 7 : index
    %c0_10 = arith.constant 0 : index
    %12 = vector.load %arg9[%c7, %c0_10] : memref<40x128xf32, #tpu.memory_space<vmem>>, vector<24x128xf32>
    %c8 = arith.constant 8 : index
    %c0_11 = arith.constant 0 : index
    %13 = vector.load %arg9[%c8, %c0_11] : memref<40x128xf32, #tpu.memory_space<vmem>>, vector<24x128xf32>
    %c12 = arith.constant 12 : index
    %c0_12 = arith.constant 0 : index
    %14 = vector.load %arg9[%c12, %c0_12] : memref<40x128xf32, #tpu.memory_space<vmem>>, vector<24x128xf32>
    %c13 = arith.constant 13 : index
    %c0_13 = arith.constant 0 : index
    %15 = vector.load %arg9[%c13, %c0_13] : memref<40x128xf32, #tpu.memory_space<vmem>>, vector<24x128xf32>
    %c14 = arith.constant 14 : index
    %c0_14 = arith.constant 0 : index
    %16 = vector.load %arg9[%c14, %c0_14] : memref<40x128xf32, #tpu.memory_space<vmem>>, vector<24x128xf32>
    %17 = tpu.concatenate %8, %9, %10, %11, %12, %13, %14, %15, %16 in 1 : vector<24x128xf32>, vector<24x128xf32>, vector<24x128xf32>, vector<24x128xf32>, vector<24x128xf32>, vector<24x128xf32>, vector<24x128xf32>, vector<24x128xf32>, vector<24x128xf32> -> vector<24x1152xf32>
    %18 = arith.truncf %17 : vector<24x1152xf32> to vector<24x1152xbf16>
    %c0_15 = arith.constant 0 : index
    %c0_16 = arith.constant 0 : index
    %19 = vector.load %arg2[%c0_15, %c0_16] : memref<1152x128xbf16, #tpu.memory_space<vmem>>, vector<1152x128xbf16>
    %cst_17 = arith.constant dense<0.000000e+00> : vector<24x128xf32>
    %20 = tpu.matmul %18, %19, %cst_17 {dimension_numbers = #tpu.dot_dimension_numbers<[1], [0], [0], [1], [0, 0, 1, 1], [], []>} : vector<24x1152xbf16>, vector<1152x128xbf16>, vector<24x128xf32> -> vector<24x128xf32>
    %c0_18 = arith.constant 0 : index
    %c0_19 = arith.constant 0 : index
    %21 = vector.load %arg3[%c0_18, %c0_19] : memref<1x128xf32, #tpu.memory_space<vmem>>, vector<1x128xf32>
    %22 = vector.broadcast %21 : vector<1x128xf32> to vector<24x128xf32>
    %23 = arith.addf %20, %22 : vector<24x128xf32>
    %cst_20 = arith.constant 0.000000e+00 : f32
    %24 = vector.broadcast %cst_20 : f32 to vector<24x128xf32>
    %25 = arith.cmpf ogt, %23, %24 : vector<24x128xf32>
    %cst_21 = arith.constant 2.000000e-01 : f32
    %26 = vector.broadcast %cst_21 : f32 to vector<24x128xf32>
    %27 = arith.mulf %26, %23 : vector<24x128xf32>
    %28 = arith.select %25, %23, %27 : vector<24x128xi1>, vector<24x128xf32>
    %c0_22 = arith.constant 0 : index
    %c0_23 = arith.constant 0 : index
    %29 = vector.load %arg10[%c0_22, %c0_23] : memref<24x128xf32, #tpu.memory_space<vmem>>, vector<24x128xf32>
    tpu.vector_store %arg10[%c0_22, %c0_23], %28 {strides = array<i32>} : memref<24x128xf32, #tpu.memory_space<vmem>>, vector<24x128xf32>,
    %cst_24 = arith.constant 0.000000e+00 : f32
    %30 = vector.broadcast %cst_24 : f32 to vector<4x128xf32>
    %c36 = arith.constant 36 : index
    %c0_25 = arith.constant 0 : index
    %31 = vector.load %arg11[%c36, %c0_25] : memref<40x128xf32, #tpu.memory_space<vmem>>, vector<4x128xf32>
    tpu.vector_store %arg11[%c36, %c0_25], %30 {strides = array<i32>} : memref<40x128xf32, #tpu.memory_space<vmem>>, vector<4x128xf32>,
    %c6_26 = arith.constant 6 : index
    %c0_27 = arith.constant 0 : index
    %32 = vector.load %arg10[%c6_26, %c0_27] : memref<24x128xf32, #tpu.memory_space<vmem>>, vector<4x128xf32>
    %c1_28 = arith.constant 1 : index
    %c0_29 = arith.constant 0 : index
    %33 = vector.load %arg11[%c1_28, %c0_29] : memref<40x128xf32, #tpu.memory_space<vmem>>, vector<4x128xf32>
    tpu.vector_store %arg11[%c1_28, %c0_29], %32 {strides = array<i32>} : memref<40x128xf32, #tpu.memory_space<vmem>>, vector<4x128xf32>,
    %c7_30 = arith.constant 7 : index
    %c0_31 = arith.constant 0 : index
    %34 = vector.load %arg10[%c7_30, %c0_31] : memref<24x128xf32, #tpu.memory_space<vmem>>, vector<1x128xf32>
    %c0_32 = arith.constant 0 : index
    %c0_33 = arith.constant 0 : index
    %35 = vector.load %arg11[%c0_32, %c0_33] : memref<40x128xf32, #tpu.memory_space<vmem>>, vector<1x128xf32>
    tpu.vector_store %arg11[%c0_32, %c0_33], %34 {strides = array<i32>} : memref<40x128xf32, #tpu.memory_space<vmem>>, vector<1x128xf32>,
    %c8_34 = arith.constant 8 : index
    %c0_35 = arith.constant 0 : index
    %36 = vector.load %arg10[%c8_34, %c0_35] : memref<24x128xf32, #tpu.memory_space<vmem>>, vector<1x128xf32>
    %c5 = arith.constant 5 : index
    %c0_36 = arith.constant 0 : index
    %37 = vector.load %arg11[%c5, %c0_36] : memref<40x128xf32, #tpu.memory_space<vmem>>, vector<1x128xf32>
    tpu.vector_store %arg11[%c5, %c0_36], %36 {strides = array<i32>} : memref<40x128xf32, #tpu.memory_space<vmem>>, vector<1x128xf32>,
    %c0_37 = arith.constant 0 : index
    %c0_38 = arith.constant 0 : index
    %38 = vector.load %arg10[%c0_37, %c0_38] : memref<24x128xf32, #tpu.memory_space<vmem>>, vector<4x128xf32>
    %c7_39 = arith.constant 7 : index
    %c0_40 = arith.constant 0 : index
    %39 = vector.load %arg11[%c7_39, %c0_40] : memref<40x128xf32, #tpu.memory_space<vmem>>, vector<4x128xf32>
    tpu.vector_store %arg11[%c7_39, %c0_40], %38 {strides = array<i32>} : memref<40x128xf32, #tpu.memory_space<vmem>>, vector<4x128xf32>,
    %c1_41 = arith.constant 1 : index
    %c0_42 = arith.constant 0 : index
    %40 = vector.load %arg10[%c1_41, %c0_42] : memref<24x128xf32, #tpu.memory_space<vmem>>, vector<1x128xf32>
    %c6_43 = arith.constant 6 : index
    %c0_44 = arith.constant 0 : index
    %41 = vector.load %arg11[%c6_43, %c0_44] : memref<40x128xf32, #tpu.memory_space<vmem>>, vector<1x128xf32>
    tpu.vector_store %arg11[%c6_43, %c0_44], %40 {strides = array<i32>} : memref<40x128xf32, #tpu.memory_space<vmem>>, vector<1x128xf32>,
    %c2_45 = arith.constant 2 : index
    %c0_46 = arith.constant 0 : index
    %42 = vector.load %arg10[%c2_45, %c0_46] : memref<24x128xf32, #tpu.memory_space<vmem>>, vector<1x128xf32>
    %c11 = arith.constant 11 : index
    %c0_47 = arith.constant 0 : index
    %43 = vector.load %arg11[%c11, %c0_47] : memref<40x128xf32, #tpu.memory_space<vmem>>, vector<1x128xf32>
    tpu.vector_store %arg11[%c11, %c0_47], %42 {strides = array<i32>} : memref<40x128xf32, #tpu.memory_space<vmem>>, vector<1x128xf32>,
    %c6_48 = arith.constant 6 : index
    %c0_49 = arith.constant 0 : index
    %44 = vector.load %arg10[%c6_48, %c0_49] : memref<24x128xf32, #tpu.memory_space<vmem>>, vector<4x128xf32>
    %c13_50 = arith.constant 13 : index
    %c0_51 = arith.constant 0 : index
    %45 = vector.load %arg11[%c13_50, %c0_51] : memref<40x128xf32, #tpu.memory_space<vmem>>, vector<4x128xf32>
    tpu.vector_store %arg11[%c13_50, %c0_51], %44 {strides = array<i32>} : memref<40x128xf32, #tpu.memory_space<vmem>>, vector<4x128xf32>,
    %c7_52 = arith.constant 7 : index
    %c0_53 = arith.constant 0 : index
    %46 = vector.load %arg10[%c7_52, %c0_53] : memref<24x128xf32, #tpu.memory_space<vmem>>, vector<1x128xf32>
    %c12_54 = arith.constant 12 : index
    %c0_55 = arith.constant 0 : index
    %47 = vector.load %arg11[%c12_54, %c0_55] : memref<40x128xf32, #tpu.memory_space<vmem>>, vector<1x128xf32>
    tpu.vector_store %arg11[%c12_54, %c0_55], %46 {strides = array<i32>} : memref<40x128xf32, #tpu.memory_space<vmem>>, vector<1x128xf32>,
    %c8_56 = arith.constant 8 : index
    %c0_57 = arith.constant 0 : index
    %48 = vector.load %arg10[%c8_56, %c0_57] : memref<24x128xf32, #tpu.memory_space<vmem>>, vector<1x128xf32>
    %c17 = arith.constant 17 : index
    %c0_58 = arith.constant 0 : index
    %49 = vector.load %arg11[%c17, %c0_58] : memref<40x128xf32, #tpu.memory_space<vmem>>, vector<1x128xf32>
    tpu.vector_store %arg11[%c17, %c0_58], %48 {strides = array<i32>} : memref<40x128xf32, #tpu.memory_space<vmem>>, vector<1x128xf32>,
    %c12_59 = arith.constant 12 : index
    %c0_60 = arith.constant 0 : index
    %50 = vector.load %arg10[%c12_59, %c0_60] : memref<24x128xf32, #tpu.memory_space<vmem>>, vector<4x128xf32>
    %c19 = arith.constant 19 : index
    %c0_61 = arith.constant 0 : index
    %51 = vector.load %arg11[%c19, %c0_61] : memref<40x128xf32, #tpu.memory_space<vmem>>, vector<4x128xf32>
    tpu.vector_store %arg11[%c19, %c0_61], %50 {strides = array<i32>} : memref<40x128xf32, #tpu.memory_space<vmem>>, vector<4x128xf32>,
    %c13_62 = arith.constant 13 : index
    %c0_63 = arith.constant 0 : index
    %52 = vector.load %arg10[%c13_62, %c0_63] : memref<24x128xf32, #tpu.memory_space<vmem>>, vector<1x128xf32>
    %c18 = arith.constant 18 : index
    %c0_64 = arith.constant 0 : index
    %53 = vector.load %arg11[%c18, %c0_64] : memref<40x128xf32, #tpu.memory_space<vmem>>, vector<1x128xf32>
    tpu.vector_store %arg11[%c18, %c0_64], %52 {strides = array<i32>} : memref<40x128xf32, #tpu.memory_space<vmem>>, vector<1x128xf32>,
    %c14_65 = arith.constant 14 : index
    %c0_66 = arith.constant 0 : index
    %54 = vector.load %arg10[%c14_65, %c0_66] : memref<24x128xf32, #tpu.memory_space<vmem>>, vector<1x128xf32>
    %c23 = arith.constant 23 : index
    %c0_67 = arith.constant 0 : index
    %55 = vector.load %arg11[%c23, %c0_67] : memref<40x128xf32, #tpu.memory_space<vmem>>, vector<1x128xf32>
    tpu.vector_store %arg11[%c23, %c0_67], %54 {strides = array<i32>} : memref<40x128xf32, #tpu.memory_space<vmem>>, vector<1x128xf32>,
    %c18_68 = arith.constant 18 : index
    %c0_69 = arith.constant 0 : index
    %56 = vector.load %arg10[%c18_68, %c0_69] : memref<24x128xf32, #tpu.memory_space<vmem>>, vector<4x128xf32>
    %c25 = arith.constant 25 : index
    %c0_70 = arith.constant 0 : index
    %57 = vector.load %arg11[%c25, %c0_70] : memref<40x128xf32, #tpu.memory_space<vmem>>, vector<4x128xf32>
    tpu.vector_store %arg11[%c25, %c0_70], %56 {strides = array<i32>} : memref<40x128xf32, #tpu.memory_space<vmem>>, vector<4x128xf32>,
    %c19_71 = arith.constant 19 : index
    %c0_72 = arith.constant 0 : index
    %58 = vector.load %arg10[%c19_71, %c0_72] : memref<24x128xf32, #tpu.memory_space<vmem>>, vector<1x128xf32>
    %c24 = arith.constant 24 : index
    %c0_73 = arith.constant 0 : index
    %59 = vector.load %arg11[%c24, %c0_73] : memref<40x128xf32, #tpu.memory_space<vmem>>, vector<1x128xf32>
    tpu.vector_store %arg11[%c24, %c0_73], %58 {strides = array<i32>} : memref<40x128xf32, #tpu.memory_space<vmem>>, vector<1x128xf32>,
    %c20 = arith.constant 20 : index
    %c0_74 = arith.constant 0 : index
    %60 = vector.load %arg10[%c20, %c0_74] : memref<24x128xf32, #tpu.memory_space<vmem>>, vector<1x128xf32>
    %c29 = arith.constant 29 : index
    %c0_75 = arith.constant 0 : index
    %61 = vector.load %arg11[%c29, %c0_75] : memref<40x128xf32, #tpu.memory_space<vmem>>, vector<1x128xf32>
    tpu.vector_store %arg11[%c29, %c0_75], %60 {strides = array<i32>} : memref<40x128xf32, #tpu.memory_space<vmem>>, vector<1x128xf32>,
    %c12_76 = arith.constant 12 : index
    %c0_77 = arith.constant 0 : index
    %62 = vector.load %arg10[%c12_76, %c0_77] : memref<24x128xf32, #tpu.memory_space<vmem>>, vector<4x128xf32>
    %c31 = arith.constant 31 : index
    %c0_78 = arith.constant 0 : index
    %63 = vector.load %arg11[%c31, %c0_78] : memref<40x128xf32, #tpu.memory_space<vmem>>, vector<4x128xf32>
    tpu.vector_store %arg11[%c31, %c0_78], %62 {strides = array<i32>} : memref<40x128xf32, #tpu.memory_space<vmem>>, vector<4x128xf32>,
    %c13_79 = arith.constant 13 : index
    %c0_80 = arith.constant 0 : index
    %64 = vector.load %arg10[%c13_79, %c0_80] : memref<24x128xf32, #tpu.memory_space<vmem>>, vector<1x128xf32>
    %c30 = arith.constant 30 : index
    %c0_81 = arith.constant 0 : index
    %65 = vector.load %arg11[%c30, %c0_81] : memref<40x128xf32, #tpu.memory_space<vmem>>, vector<1x128xf32>
    tpu.vector_store %arg11[%c30, %c0_81], %64 {strides = array<i32>} : memref<40x128xf32, #tpu.memory_space<vmem>>, vector<1x128xf32>,
    %c14_82 = arith.constant 14 : index
    %c0_83 = arith.constant 0 : index
    %66 = vector.load %arg10[%c14_82, %c0_83] : memref<24x128xf32, #tpu.memory_space<vmem>>, vector<1x128xf32>
    %c35 = arith.constant 35 : index
    %c0_84 = arith.constant 0 : index
    %67 = vector.load %arg11[%c35, %c0_84] : memref<40x128xf32, #tpu.memory_space<vmem>>, vector<1x128xf32>
    tpu.vector_store %arg11[%c35, %c0_84], %66 {strides = array<i32>} : memref<40x128xf32, #tpu.memory_space<vmem>>, vector<1x128xf32>,
    %c0_85 = arith.constant 0 : index
    %c0_86 = arith.constant 0 : index
    %68 = vector.load %arg11[%c0_85, %c0_86] : memref<40x128xf32, #tpu.memory_space<vmem>>, vector<24x128xf32>
    %c1_87 = arith.constant 1 : index
    %c0_88 = arith.constant 0 : index
    %69 = vector.load %arg11[%c1_87, %c0_88] : memref<40x128xf32, #tpu.memory_space<vmem>>, vector<24x128xf32>
    %c2_89 = arith.constant 2 : index
    %c0_90 = arith.constant 0 : index
    %70 = vector.load %arg11[%c2_89, %c0_90] : memref<40x128xf32, #tpu.memory_space<vmem>>, vector<24x128xf32>
    %c6_91 = arith.constant 6 : index
    %c0_92 = arith.constant 0 : index
    %71 = vector.load %arg11[%c6_91, %c0_92] : memref<40x128xf32, #tpu.memory_space<vmem>>, vector<24x128xf32>
    %c7_93 = arith.constant 7 : index
    %c0_94 = arith.constant 0 : index
    %72 = vector.load %arg11[%c7_93, %c0_94] : memref<40x128xf32, #tpu.memory_space<vmem>>, vector<24x128xf32>
    %c8_95 = arith.constant 8 : index
    %c0_96 = arith.constant 0 : index
    %73 = vector.load %arg11[%c8_95, %c0_96] : memref<40x128xf32, #tpu.memory_space<vmem>>, vector<24x128xf32>
    %c12_97 = arith.constant 12 : index
    %c0_98 = arith.constant 0 : index
    %74 = vector.load %arg11[%c12_97, %c0_98] : memref<40x128xf32, #tpu.memory_space<vmem>>, vector<24x128xf32>
    %c13_99 = arith.constant 13 : index
    %c0_100 = arith.constant 0 : index
    %75 = vector.load %arg11[%c13_99, %c0_100] : memref<40x128xf32, #tpu.memory_space<vmem>>, vector<24x128xf32>
    %c14_101 = arith.constant 14 : index
    %c0_102 = arith.constant 0 : index
    %76 = vector.load %arg11[%c14_101, %c0_102] : memref<40x128xf32, #tpu.memory_space<vmem>>, vector<24x128xf32>
    %77 = tpu.concatenate %68, %69, %70, %71, %72, %73, %74, %75, %76 in 1 : vector<24x128xf32>, vector<24x128xf32>, vector<24x128xf32>, vector<24x128xf32>, vector<24x128xf32>, vector<24x128xf32>, vector<24x128xf32>, vector<24x128xf32>, vector<24x128xf32> -> vector<24x1152xf32>
    %78 = arith.truncf %77 : vector<24x1152xf32> to vector<24x1152xbf16>
    %c0_103 = arith.constant 0 : index
    %c0_104 = arith.constant 0 : index
    %79 = vector.load %arg4[%c0_103, %c0_104] : memref<1152x128xbf16, #tpu.memory_space<vmem>>, vector<1152x128xbf16>
    %cst_105 = arith.constant dense<0.000000e+00> : vector<24x128xf32>
    %80 = tpu.matmul %78, %79, %cst_105 {dimension_numbers = #tpu.dot_dimension_numbers<[1], [0], [0], [1], [0, 0, 1, 1], [], []>} : vector<24x1152xbf16>, vector<1152x128xbf16>, vector<24x128xf32> -> vector<24x128xf32>
    %c0_106 = arith.constant 0 : index
    %c0_107 = arith.constant 0 : index
    %81 = vector.load %arg5[%c0_106, %c0_107] : memref<1x128xf32, #tpu.memory_space<vmem>>, vector<1x128xf32>
    %82 = vector.broadcast %81 : vector<1x128xf32> to vector<24x128xf32>
    %83 = arith.addf %80, %82 : vector<24x128xf32>
    %c0_108 = arith.constant 0 : index
    %c7_109 = arith.constant 7 : index
    %c0_110 = arith.constant 0 : index
    %84 = vector.load %arg1[%c0_108, %c7_109, %c0_110] : memref<1x40x128xf32, #tpu.memory_space<vmem>>, vector<1x24x128xf32>
    %85 = vector.shape_cast %84 : vector<1x24x128xf32> to vector<24x128xf32>
    %86 = arith.truncf %85 : vector<24x128xf32> to vector<24x128xbf16>
    %c0_111 = arith.constant 0 : index
    %c0_112 = arith.constant 0 : index
    %87 = vector.load %arg6[%c0_111, %c0_112] : memref<128x128xbf16, #tpu.memory_space<vmem>>, vector<128x128xbf16>
    %cst_113 = arith.constant dense<0.000000e+00> : vector<24x128xf32>
    %88 = tpu.matmul %86, %87, %cst_113 {dimension_numbers = #tpu.dot_dimension_numbers<[1], [0], [0], [1], [0, 0, 1, 1], [], []>} : vector<24x128xbf16>, vector<128x128xbf16>, vector<24x128xf32> -> vector<24x128xf32>
    %c0_114 = arith.constant 0 : index
    %c0_115 = arith.constant 0 : index
    %89 = vector.load %arg7[%c0_114, %c0_115] : memref<1x128xf32, #tpu.memory_space<vmem>>, vector<1x128xf32>
    %90 = vector.broadcast %89 : vector<1x128xf32> to vector<24x128xf32>
    %91 = arith.addf %88, %90 : vector<24x128xf32>
    %92 = arith.addf %83, %91 : vector<24x128xf32>
    %c0_116 = arith.constant 0 : index
    %c0_117 = arith.constant 0 : index
    %c0_118 = arith.constant 0 : index
    %93 = vector.load %arg8[%c0_116, %c0_117, %c0_118] : memref<1x24x128xf32, #tpu.memory_space<vmem>>, vector<1x24x128xf32>
    %94 = vector.shape_cast %93 : vector<1x24x128xf32> to vector<24x128xf32>
    %95 = vector.shape_cast %92 : vector<24x128xf32> to vector<1x24x128xf32>
    tpu.vector_store %arg8[%c0_116, %c0_117, %c0_118], %95 {strides = array<i32>} : memref<1x24x128xf32, #tpu.memory_space<vmem>>, vector<1x24x128xf32>,
    return
  }
  func.func @transform_0(%arg0: i32) -> (i32, i32, i32) {
    %c0_i32 = arith.constant 0 : i32
    %c0_i32_0 = arith.constant 0 : i32
    %c0_i32_1 = arith.constant 0 : i32
    return %arg0, %c0_i32, %c0_i32_0 : i32, i32, i32
  }
  func.func @transform_1(%arg0: i32) -> (i32, i32) {
    %c0_i32 = arith.constant 0 : i32
    %c0_i32_0 = arith.constant 0 : i32
    %c0_i32_1 = arith.constant 0 : i32
    return %c0_i32, %c0_i32_0 : i32, i32
  }
  func.func @transform_2(%arg0: i32) -> (i32, i32) {
    %c0_i32 = arith.constant 0 : i32
    %c0_i32_0 = arith.constant 0 : i32
    %c0_i32_1 = arith.constant 0 : i32
    return %c0_i32, %c0_i32_0 : i32, i32
  }
  func.func @transform_3(%arg0: i32) -> (i32, i32) {
    %c0_i32 = arith.constant 0 : i32
    %c0_i32_0 = arith.constant 0 : i32
    %c0_i32_1 = arith.constant 0 : i32
    return %c0_i32, %c0_i32_0 : i32, i32
  }
  func.func @transform_4(%arg0: i32) -> (i32, i32) {
    %c0_i32 = arith.constant 0 : i32
    %c0_i32_0 = arith.constant 0 : i32
    %c0_i32_1 = arith.constant 0 : i32
    return %c0_i32, %c0_i32_0 : i32, i32
  }
  func.func @transform_5(%arg0: i32) -> (i32, i32) {
    %c0_i32 = arith.constant 0 : i32
    %c0_i32_0 = arith.constant 0 : i32
    %c0_i32_1 = arith.constant 0 : i32
    return %c0_i32, %c0_i32_0 : i32, i32
  }
  func.func @transform_6(%arg0: i32) -> (i32, i32) {
    %c0_i32 = arith.constant 0 : i32
    %c0_i32_0 = arith.constant 0 : i32
    %c0_i32_1 = arith.constant 0 : i32
    return %c0_i32, %c0_i32_0 : i32, i32
  }
  func.func @transform_7(%arg0: i32) -> (i32, i32, i32) {
    %c0_i32 = arith.constant 0 : i32
    %c0_i32_0 = arith.constant 0 : i32
    %c0_i32_1 = arith.constant 0 : i32
    return %arg0, %c0_i32, %c0_i32_0 : i32, i32, i32
  }
}

module attributes {stable_mosaic.version = 11 : i64} {
  func.func @_matmul_kernel_single(%arg0: i32, %arg1: i32, %arg2: i32, %arg3: memref<16x70xbf16, #tpu.memory_space<vmem>>, %arg4: memref<70x128xbf16, #tpu.memory_space<vmem>>, %arg5: memref<1x128xf32, #tpu.memory_space<vmem>>, %arg6: memref<16x128xf32, #tpu.memory_space<vmem>>) attributes {dimension_semantics = [#tpu.dimension_semantics<parallel>, #tpu.dimension_semantics<parallel>, #tpu.dimension_semantics<arbitrary>], iteration_bounds = array<i64: 2, 1, 1>, scalar_prefetch = 0 : i64, scratch_operands = 0 : i64, tpu.core_type = #tpu.core_type<tc>, window_params = [{transform_indices = @transform_0, window_bounds = array<i64: 16, 70>}, {transform_indices = @transform_1, window_bounds = array<i64: 70, 128>}, {transform_indices = @transform_2, window_bounds = array<i64: 1, 128>}, {transform_indices = @transform_3, window_bounds = array<i64: 16, 128>}]} {
    %c0 = arith.constant 0 : index
    %c0_0 = arith.constant 0 : index
    %0 = vector.load %arg3[%c0, %c0_0] : memref<16x70xbf16, #tpu.memory_space<vmem>>, vector<16x70xbf16>
    %c0_1 = arith.constant 0 : index
    %c0_2 = arith.constant 0 : index
    %1 = vector.load %arg4[%c0_1, %c0_2] : memref<70x128xbf16, #tpu.memory_space<vmem>>, vector<70x128xbf16>
    %cst = arith.constant dense<0.000000e+00> : vector<16x128xf32>
    %2 = tpu.matmul %0, %1, %cst {dimension_numbers = #tpu.dot_dimension_numbers<[1], [0], [0], [1], [0, 0, 1, 1], [], []>} : vector<16x70xbf16>, vector<70x128xbf16>, vector<16x128xf32> -> vector<16x128xf32>
    %c0_3 = arith.constant 0 : index
    %c0_4 = arith.constant 0 : index
    %3 = vector.load %arg5[%c0_3, %c0_4] : memref<1x128xf32, #tpu.memory_space<vmem>>, vector<1x128xf32>
    %4 = vector.broadcast %3 : vector<1x128xf32> to vector<16x128xf32>
    %5 = arith.addf %2, %4 : vector<16x128xf32>
    %cst_5 = arith.constant 0.000000e+00 : f32
    %6 = vector.broadcast %cst_5 : f32 to vector<16x128xf32>
    %7 = arith.maximumf %5, %6 : vector<16x128xf32>
    %c0_6 = arith.constant 0 : index
    %c0_7 = arith.constant 0 : index
    %8 = vector.load %arg6[%c0_6, %c0_7] : memref<16x128xf32, #tpu.memory_space<vmem>>, vector<16x128xf32>
    tpu.vector_store %arg6[%c0_6, %c0_7], %7 {strides = array<i32>} : memref<16x128xf32, #tpu.memory_space<vmem>>, vector<16x128xf32>,
    return
  }
  func.func @transform_0(%arg0: i32, %arg1: i32, %arg2: i32) -> (i32, i32) {
    %c0_i32 = arith.constant 0 : i32
    return %arg0, %arg2 : i32, i32
  }
  func.func @transform_1(%arg0: i32, %arg1: i32, %arg2: i32) -> (i32, i32) {
    %c0_i32 = arith.constant 0 : i32
    return %arg2, %arg1 : i32, i32
  }
  func.func @transform_2(%arg0: i32, %arg1: i32, %arg2: i32) -> (i32, i32) {
    %c0_i32 = arith.constant 0 : i32
    %c0_i32_0 = arith.constant 0 : i32
    return %c0_i32, %arg1 : i32, i32
  }
  func.func @transform_3(%arg0: i32, %arg1: i32, %arg2: i32) -> (i32, i32) {
    %c0_i32 = arith.constant 0 : i32
    return %arg0, %arg1 : i32, i32
  }
}

module attributes {stable_mosaic.version = 11 : i64} {
  func.func @_matmul_kernel_single(%arg0: i32, %arg1: i32, %arg2: i32, %arg3: memref<16x32xbf16, #tpu.memory_space<vmem>>, %arg4: memref<32x128xbf16, #tpu.memory_space<vmem>>, %arg5: memref<1x128xf32, #tpu.memory_space<vmem>>, %arg6: memref<16x128xf32, #tpu.memory_space<vmem>>) attributes {dimension_semantics = [#tpu.dimension_semantics<parallel>, #tpu.dimension_semantics<parallel>, #tpu.dimension_semantics<arbitrary>], iteration_bounds = array<i64: 2, 1, 1>, scalar_prefetch = 0 : i64, scratch_operands = 0 : i64, tpu.core_type = #tpu.core_type<tc>, window_params = [{transform_indices = @transform_0, window_bounds = array<i64: 16, 32>}, {transform_indices = @transform_1, window_bounds = array<i64: 32, 128>}, {transform_indices = @transform_2, window_bounds = array<i64: 1, 128>}, {transform_indices = @transform_3, window_bounds = array<i64: 16, 128>}]} {
    %c0 = arith.constant 0 : index
    %c0_0 = arith.constant 0 : index
    %0 = vector.load %arg3[%c0, %c0_0] : memref<16x32xbf16, #tpu.memory_space<vmem>>, vector<16x32xbf16>
    %c0_1 = arith.constant 0 : index
    %c0_2 = arith.constant 0 : index
    %1 = vector.load %arg4[%c0_1, %c0_2] : memref<32x128xbf16, #tpu.memory_space<vmem>>, vector<32x128xbf16>
    %cst = arith.constant dense<0.000000e+00> : vector<16x128xf32>
    %2 = tpu.matmul %0, %1, %cst {dimension_numbers = #tpu.dot_dimension_numbers<[1], [0], [0], [1], [0, 0, 1, 1], [], []>} : vector<16x32xbf16>, vector<32x128xbf16>, vector<16x128xf32> -> vector<16x128xf32>
    %c0_3 = arith.constant 0 : index
    %c0_4 = arith.constant 0 : index
    %3 = vector.load %arg5[%c0_3, %c0_4] : memref<1x128xf32, #tpu.memory_space<vmem>>, vector<1x128xf32>
    %4 = vector.broadcast %3 : vector<1x128xf32> to vector<16x128xf32>
    %5 = arith.addf %2, %4 : vector<16x128xf32>
    %cst_5 = arith.constant 0.000000e+00 : f32
    %6 = vector.broadcast %cst_5 : f32 to vector<16x128xf32>
    %7 = arith.maximumf %5, %6 : vector<16x128xf32>
    %c0_6 = arith.constant 0 : index
    %c0_7 = arith.constant 0 : index
    %8 = vector.load %arg6[%c0_6, %c0_7] : memref<16x128xf32, #tpu.memory_space<vmem>>, vector<16x128xf32>
    tpu.vector_store %arg6[%c0_6, %c0_7], %7 {strides = array<i32>} : memref<16x128xf32, #tpu.memory_space<vmem>>, vector<16x128xf32>,
    return
  }
  func.func @transform_0(%arg0: i32, %arg1: i32, %arg2: i32) -> (i32, i32) {
    %c0_i32 = arith.constant 0 : i32
    return %arg0, %arg2 : i32, i32
  }
  func.func @transform_1(%arg0: i32, %arg1: i32, %arg2: i32) -> (i32, i32) {
    %c0_i32 = arith.constant 0 : i32
    return %arg2, %arg1 : i32, i32
  }
  func.func @transform_2(%arg0: i32, %arg1: i32, %arg2: i32) -> (i32, i32) {
    %c0_i32 = arith.constant 0 : i32
    %c0_i32_0 = arith.constant 0 : i32
    return %c0_i32, %arg1 : i32, i32
  }
  func.func @transform_3(%arg0: i32, %arg1: i32, %arg2: i32) -> (i32, i32) {
    %c0_i32 = arith.constant 0 : i32
    return %arg0, %arg1 : i32, i32
  }
}

module attributes {stable_mosaic.version = 11 : i64} {
  func.func @_resblock_kernel(%arg0: i32, %arg1: memref<1x40x128xf32, #tpu.memory_space<vmem>>, %arg2: memref<1152x128xbf16, #tpu.memory_space<vmem>>, %arg3: memref<1x128xf32, #tpu.memory_space<vmem>>, %arg4: memref<1152x128xbf16, #tpu.memory_space<vmem>>, %arg5: memref<1x128xf32, #tpu.memory_space<vmem>>, %arg6: memref<1x24x128xf32, #tpu.memory_space<vmem>>, %arg7: memref<40x128xf32, #tpu.memory_space<vmem>>, %arg8: memref<24x128xf32, #tpu.memory_space<vmem>>, %arg9: memref<40x128xf32, #tpu.memory_space<vmem>>) attributes {dimension_semantics = [#tpu.dimension_semantics<parallel>], iteration_bounds = array<i64: 2>, scalar_prefetch = 0 : i64, scratch_operands = 3 : i64, tpu.core_type = #tpu.core_type<tc>, window_params = [{transform_indices = @transform_0, window_bounds = array<i64: 1, 40, 128>}, {pipeline_mode = #tpu.pipeline_mode<synchronous>, transform_indices = @transform_1, window_bounds = array<i64: 1152, 128>}, {pipeline_mode = #tpu.pipeline_mode<synchronous>, transform_indices = @transform_2, window_bounds = array<i64: 1, 128>}, {pipeline_mode = #tpu.pipeline_mode<synchronous>, transform_indices = @transform_3, window_bounds = array<i64: 1152, 128>}, {pipeline_mode = #tpu.pipeline_mode<synchronous>, transform_indices = @transform_4, window_bounds = array<i64: 1, 128>}, {transform_indices = @transform_5, window_bounds = array<i64: 1, 24, 128>}]} {
    %c0 = arith.constant 0 : index
    %c0_0 = arith.constant 0 : index
    %c0_1 = arith.constant 0 : index
    %0 = vector.load %arg1[%c0, %c0_0, %c0_1] : memref<1x40x128xf32, #tpu.memory_space<vmem>>, vector<1x40x128xf32>
    %1 = vector.shape_cast %0 : vector<1x40x128xf32> to vector<40x128xf32>
    %cst = arith.constant 0.000000e+00 : f32
    %2 = vector.broadcast %cst : f32 to vector<40x128xf32>
    %3 = arith.cmpf ogt, %1, %2 : vector<40x128xf32>
    %cst_2 = arith.constant 2.000000e-01 : f32
    %4 = vector.broadcast %cst_2 : f32 to vector<40x128xf32>
    %5 = arith.mulf %4, %1 : vector<40x128xf32>
    %6 = arith.select %3, %1, %5 : vector<40x128xi1>, vector<40x128xf32>
    %c0_3 = arith.constant 0 : index
    %c0_4 = arith.constant 0 : index
    %7 = vector.load %arg7[%c0_3, %c0_4] : memref<40x128xf32, #tpu.memory_space<vmem>>, vector<40x128xf32>
    tpu.vector_store %arg7[%c0_3, %c0_4], %6 {strides = array<i32>} : memref<40x128xf32, #tpu.memory_space<vmem>>, vector<40x128xf32>,
    %c0_5 = arith.constant 0 : index
    %c0_6 = arith.constant 0 : index
    %8 = vector.load %arg7[%c0_5, %c0_6] : memref<40x128xf32, #tpu.memory_space<vmem>>, vector<24x128xf32>
    %c1 = arith.constant 1 : index
    %c0_7 = arith.constant 0 : index
    %9 = vector.load %arg7[%c1, %c0_7] : memref<40x128xf32, #tpu.memory_space<vmem>>, vector<24x128xf32>
    %c2 = arith.constant 2 : index
    %c0_8 = arith.constant 0 : index
    %10 = vector.load %arg7[%c2, %c0_8] : memref<40x128xf32, #tpu.memory_space<vmem>>, vector<24x128xf32>
    %c6 = arith.constant 6 : index
    %c0_9 = arith.constant 0 : index
    %11 = vector.load %arg7[%c6, %c0_9] : memref<40x128xf32, #tpu.memory_space<vmem>>, vector<24x128xf32>
    %c7 = arith.constant 7 : index
    %c0_10 = arith.constant 0 : index
    %12 = vector.load %arg7[%c7, %c0_10] : memref<40x128xf32, #tpu.memory_space<vmem>>, vector<24x128xf32>
    %c8 = arith.constant 8 : index
    %c0_11 = arith.constant 0 : index
    %13 = vector.load %arg7[%c8, %c0_11] : memref<40x128xf32, #tpu.memory_space<vmem>>, vector<24x128xf32>
    %c12 = arith.constant 12 : index
    %c0_12 = arith.constant 0 : index
    %14 = vector.load %arg7[%c12, %c0_12] : memref<40x128xf32, #tpu.memory_space<vmem>>, vector<24x128xf32>
    %c13 = arith.constant 13 : index
    %c0_13 = arith.constant 0 : index
    %15 = vector.load %arg7[%c13, %c0_13] : memref<40x128xf32, #tpu.memory_space<vmem>>, vector<24x128xf32>
    %c14 = arith.constant 14 : index
    %c0_14 = arith.constant 0 : index
    %16 = vector.load %arg7[%c14, %c0_14] : memref<40x128xf32, #tpu.memory_space<vmem>>, vector<24x128xf32>
    %17 = tpu.concatenate %8, %9, %10, %11, %12, %13, %14, %15, %16 in 1 : vector<24x128xf32>, vector<24x128xf32>, vector<24x128xf32>, vector<24x128xf32>, vector<24x128xf32>, vector<24x128xf32>, vector<24x128xf32>, vector<24x128xf32>, vector<24x128xf32> -> vector<24x1152xf32>
    %18 = arith.truncf %17 : vector<24x1152xf32> to vector<24x1152xbf16>
    %c0_15 = arith.constant 0 : index
    %c0_16 = arith.constant 0 : index
    %19 = vector.load %arg2[%c0_15, %c0_16] : memref<1152x128xbf16, #tpu.memory_space<vmem>>, vector<1152x128xbf16>
    %cst_17 = arith.constant dense<0.000000e+00> : vector<24x128xf32>
    %20 = tpu.matmul %18, %19, %cst_17 {dimension_numbers = #tpu.dot_dimension_numbers<[1], [0], [0], [1], [0, 0, 1, 1], [], []>} : vector<24x1152xbf16>, vector<1152x128xbf16>, vector<24x128xf32> -> vector<24x128xf32>
    %c0_18 = arith.constant 0 : index
    %c0_19 = arith.constant 0 : index
    %21 = vector.load %arg3[%c0_18, %c0_19] : memref<1x128xf32, #tpu.memory_space<vmem>>, vector<1x128xf32>
    %22 = vector.broadcast %21 : vector<1x128xf32> to vector<24x128xf32>
    %23 = arith.addf %20, %22 : vector<24x128xf32>
    %cst_20 = arith.constant 0.000000e+00 : f32
    %24 = vector.broadcast %cst_20 : f32 to vector<24x128xf32>
    %25 = arith.cmpf ogt, %23, %24 : vector<24x128xf32>
    %cst_21 = arith.constant 2.000000e-01 : f32
    %26 = vector.broadcast %cst_21 : f32 to vector<24x128xf32>
    %27 = arith.mulf %26, %23 : vector<24x128xf32>
    %28 = arith.select %25, %23, %27 : vector<24x128xi1>, vector<24x128xf32>
    %c0_22 = arith.constant 0 : index
    %c0_23 = arith.constant 0 : index
    %29 = vector.load %arg8[%c0_22, %c0_23] : memref<24x128xf32, #tpu.memory_space<vmem>>, vector<24x128xf32>
    tpu.vector_store %arg8[%c0_22, %c0_23], %28 {strides = array<i32>} : memref<24x128xf32, #tpu.memory_space<vmem>>, vector<24x128xf32>,
    %cst_24 = arith.constant 0.000000e+00 : f32
    %30 = vector.broadcast %cst_24 : f32 to vector<4x128xf32>
    %c36 = arith.constant 36 : index
    %c0_25 = arith.constant 0 : index
    %31 = vector.load %arg9[%c36, %c0_25] : memref<40x128xf32, #tpu.memory_space<vmem>>, vector<4x128xf32>
    tpu.vector_store %arg9[%c36, %c0_25], %30 {strides = array<i32>} : memref<40x128xf32, #tpu.memory_space<vmem>>, vector<4x128xf32>,
    %c6_26 = arith.constant 6 : index
    %c0_27 = arith.constant 0 : index
    %32 = vector.load %arg8[%c6_26, %c0_27] : memref<24x128xf32, #tpu.memory_space<vmem>>, vector<4x128xf32>
    %c1_28 = arith.constant 1 : index
    %c0_29 = arith.constant 0 : index
    %33 = vector.load %arg9[%c1_28, %c0_29] : memref<40x128xf32, #tpu.memory_space<vmem>>, vector<4x128xf32>
    tpu.vector_store %arg9[%c1_28, %c0_29], %32 {strides = array<i32>} : memref<40x128xf32, #tpu.memory_space<vmem>>, vector<4x128xf32>,
    %c7_30 = arith.constant 7 : index
    %c0_31 = arith.constant 0 : index
    %34 = vector.load %arg8[%c7_30, %c0_31] : memref<24x128xf32, #tpu.memory_space<vmem>>, vector<1x128xf32>
    %c0_32 = arith.constant 0 : index
    %c0_33 = arith.constant 0 : index
    %35 = vector.load %arg9[%c0_32, %c0_33] : memref<40x128xf32, #tpu.memory_space<vmem>>, vector<1x128xf32>
    tpu.vector_store %arg9[%c0_32, %c0_33], %34 {strides = array<i32>} : memref<40x128xf32, #tpu.memory_space<vmem>>, vector<1x128xf32>,
    %c8_34 = arith.constant 8 : index
    %c0_35 = arith.constant 0 : index
    %36 = vector.load %arg8[%c8_34, %c0_35] : memref<24x128xf32, #tpu.memory_space<vmem>>, vector<1x128xf32>
    %c5 = arith.constant 5 : index
    %c0_36 = arith.constant 0 : index
    %37 = vector.load %arg9[%c5, %c0_36] : memref<40x128xf32, #tpu.memory_space<vmem>>, vector<1x128xf32>
    tpu.vector_store %arg9[%c5, %c0_36], %36 {strides = array<i32>} : memref<40x128xf32, #tpu.memory_space<vmem>>, vector<1x128xf32>,
    %c0_37 = arith.constant 0 : index
    %c0_38 = arith.constant 0 : index
    %38 = vector.load %arg8[%c0_37, %c0_38] : memref<24x128xf32, #tpu.memory_space<vmem>>, vector<4x128xf32>
    %c7_39 = arith.constant 7 : index
    %c0_40 = arith.constant 0 : index
    %39 = vector.load %arg9[%c7_39, %c0_40] : memref<40x128xf32, #tpu.memory_space<vmem>>, vector<4x128xf32>
    tpu.vector_store %arg9[%c7_39, %c0_40], %38 {strides = array<i32>} : memref<40x128xf32, #tpu.memory_space<vmem>>, vector<4x128xf32>,
    %c1_41 = arith.constant 1 : index
    %c0_42 = arith.constant 0 : index
    %40 = vector.load %arg8[%c1_41, %c0_42] : memref<24x128xf32, #tpu.memory_space<vmem>>, vector<1x128xf32>
    %c6_43 = arith.constant 6 : index
    %c0_44 = arith.constant 0 : index
    %41 = vector.load %arg9[%c6_43, %c0_44] : memref<40x128xf32, #tpu.memory_space<vmem>>, vector<1x128xf32>
    tpu.vector_store %arg9[%c6_43, %c0_44], %40 {strides = array<i32>} : memref<40x128xf32, #tpu.memory_space<vmem>>, vector<1x128xf32>,
    %c2_45 = arith.constant 2 : index
    %c0_46 = arith.constant 0 : index
    %42 = vector.load %arg8[%c2_45, %c0_46] : memref<24x128xf32, #tpu.memory_space<vmem>>, vector<1x128xf32>
    %c11 = arith.constant 11 : index
    %c0_47 = arith.constant 0 : index
    %43 = vector.load %arg9[%c11, %c0_47] : memref<40x128xf32, #tpu.memory_space<vmem>>, vector<1x128xf32>
    tpu.vector_store %arg9[%c11, %c0_47], %42 {strides = array<i32>} : memref<40x128xf32, #tpu.memory_space<vmem>>, vector<1x128xf32>,
    %c6_48 = arith.constant 6 : index
    %c0_49 = arith.constant 0 : index
    %44 = vector.load %arg8[%c6_48, %c0_49] : memref<24x128xf32, #tpu.memory_space<vmem>>, vector<4x128xf32>
    %c13_50 = arith.constant 13 : index
    %c0_51 = arith.constant 0 : index
    %45 = vector.load %arg9[%c13_50, %c0_51] : memref<40x128xf32, #tpu.memory_space<vmem>>, vector<4x128xf32>
    tpu.vector_store %arg9[%c13_50, %c0_51], %44 {strides = array<i32>} : memref<40x128xf32, #tpu.memory_space<vmem>>, vector<4x128xf32>,
    %c7_52 = arith.constant 7 : index
    %c0_53 = arith.constant 0 : index
    %46 = vector.load %arg8[%c7_52, %c0_53] : memref<24x128xf32, #tpu.memory_space<vmem>>, vector<1x128xf32>
    %c12_54 = arith.constant 12 : index
    %c0_55 = arith.constant 0 : index
    %47 = vector.load %arg9[%c12_54, %c0_55] : memref<40x128xf32, #tpu.memory_space<vmem>>, vector<1x128xf32>
    tpu.vector_store %arg9[%c12_54, %c0_55], %46 {strides = array<i32>} : memref<40x128xf32, #tpu.memory_space<vmem>>, vector<1x128xf32>,
    %c8_56 = arith.constant 8 : index
    %c0_57 = arith.constant 0 : index
    %48 = vector.load %arg8[%c8_56, %c0_57] : memref<24x128xf32, #tpu.memory_space<vmem>>, vector<1x128xf32>
    %c17 = arith.constant 17 : index
    %c0_58 = arith.constant 0 : index
    %49 = vector.load %arg9[%c17, %c0_58] : memref<40x128xf32, #tpu.memory_space<vmem>>, vector<1x128xf32>
    tpu.vector_store %arg9[%c17, %c0_58], %48 {strides = array<i32>} : memref<40x128xf32, #tpu.memory_space<vmem>>, vector<1x128xf32>,
    %c12_59 = arith.constant 12 : index
    %c0_60 = arith.constant 0 : index
    %50 = vector.load %arg8[%c12_59, %c0_60] : memref<24x128xf32, #tpu.memory_space<vmem>>, vector<4x128xf32>
    %c19 = arith.constant 19 : index
    %c0_61 = arith.constant 0 : index
    %51 = vector.load %arg9[%c19, %c0_61] : memref<40x128xf32, #tpu.memory_space<vmem>>, vector<4x128xf32>
    tpu.vector_store %arg9[%c19, %c0_61], %50 {strides = array<i32>} : memref<40x128xf32, #tpu.memory_space<vmem>>, vector<4x128xf32>,
    %c13_62 = arith.constant 13 : index
    %c0_63 = arith.constant 0 : index
    %52 = vector.load %arg8[%c13_62, %c0_63] : memref<24x128xf32, #tpu.memory_space<vmem>>, vector<1x128xf32>
    %c18 = arith.constant 18 : index
    %c0_64 = arith.constant 0 : index
    %53 = vector.load %arg9[%c18, %c0_64] : memref<40x128xf32, #tpu.memory_space<vmem>>, vector<1x128xf32>
    tpu.vector_store %arg9[%c18, %c0_64], %52 {strides = array<i32>} : memref<40x128xf32, #tpu.memory_space<vmem>>, vector<1x128xf32>,
    %c14_65 = arith.constant 14 : index
    %c0_66 = arith.constant 0 : index
    %54 = vector.load %arg8[%c14_65, %c0_66] : memref<24x128xf32, #tpu.memory_space<vmem>>, vector<1x128xf32>
    %c23 = arith.constant 23 : index
    %c0_67 = arith.constant 0 : index
    %55 = vector.load %arg9[%c23, %c0_67] : memref<40x128xf32, #tpu.memory_space<vmem>>, vector<1x128xf32>
    tpu.vector_store %arg9[%c23, %c0_67], %54 {strides = array<i32>} : memref<40x128xf32, #tpu.memory_space<vmem>>, vector<1x128xf32>,
    %c18_68 = arith.constant 18 : index
    %c0_69 = arith.constant 0 : index
    %56 = vector.load %arg8[%c18_68, %c0_69] : memref<24x128xf32, #tpu.memory_space<vmem>>, vector<4x128xf32>
    %c25 = arith.constant 25 : index
    %c0_70 = arith.constant 0 : index
    %57 = vector.load %arg9[%c25, %c0_70] : memref<40x128xf32, #tpu.memory_space<vmem>>, vector<4x128xf32>
    tpu.vector_store %arg9[%c25, %c0_70], %56 {strides = array<i32>} : memref<40x128xf32, #tpu.memory_space<vmem>>, vector<4x128xf32>,
    %c19_71 = arith.constant 19 : index
    %c0_72 = arith.constant 0 : index
    %58 = vector.load %arg8[%c19_71, %c0_72] : memref<24x128xf32, #tpu.memory_space<vmem>>, vector<1x128xf32>
    %c24 = arith.constant 24 : index
    %c0_73 = arith.constant 0 : index
    %59 = vector.load %arg9[%c24, %c0_73] : memref<40x128xf32, #tpu.memory_space<vmem>>, vector<1x128xf32>
    tpu.vector_store %arg9[%c24, %c0_73], %58 {strides = array<i32>} : memref<40x128xf32, #tpu.memory_space<vmem>>, vector<1x128xf32>,
    %c20 = arith.constant 20 : index
    %c0_74 = arith.constant 0 : index
    %60 = vector.load %arg8[%c20, %c0_74] : memref<24x128xf32, #tpu.memory_space<vmem>>, vector<1x128xf32>
    %c29 = arith.constant 29 : index
    %c0_75 = arith.constant 0 : index
    %61 = vector.load %arg9[%c29, %c0_75] : memref<40x128xf32, #tpu.memory_space<vmem>>, vector<1x128xf32>
    tpu.vector_store %arg9[%c29, %c0_75], %60 {strides = array<i32>} : memref<40x128xf32, #tpu.memory_space<vmem>>, vector<1x128xf32>,
    %c12_76 = arith.constant 12 : index
    %c0_77 = arith.constant 0 : index
    %62 = vector.load %arg8[%c12_76, %c0_77] : memref<24x128xf32, #tpu.memory_space<vmem>>, vector<4x128xf32>
    %c31 = arith.constant 31 : index
    %c0_78 = arith.constant 0 : index
    %63 = vector.load %arg9[%c31, %c0_78] : memref<40x128xf32, #tpu.memory_space<vmem>>, vector<4x128xf32>
    tpu.vector_store %arg9[%c31, %c0_78], %62 {strides = array<i32>} : memref<40x128xf32, #tpu.memory_space<vmem>>, vector<4x128xf32>,
    %c13_79 = arith.constant 13 : index
    %c0_80 = arith.constant 0 : index
    %64 = vector.load %arg8[%c13_79, %c0_80] : memref<24x128xf32, #tpu.memory_space<vmem>>, vector<1x128xf32>
    %c30 = arith.constant 30 : index
    %c0_81 = arith.constant 0 : index
    %65 = vector.load %arg9[%c30, %c0_81] : memref<40x128xf32, #tpu.memory_space<vmem>>, vector<1x128xf32>
    tpu.vector_store %arg9[%c30, %c0_81], %64 {strides = array<i32>} : memref<40x128xf32, #tpu.memory_space<vmem>>, vector<1x128xf32>,
    %c14_82 = arith.constant 14 : index
    %c0_83 = arith.constant 0 : index
    %66 = vector.load %arg8[%c14_82, %c0_83] : memref<24x128xf32, #tpu.memory_space<vmem>>, vector<1x128xf32>
    %c35 = arith.constant 35 : index
    %c0_84 = arith.constant 0 : index
    %67 = vector.load %arg9[%c35, %c0_84] : memref<40x128xf32, #tpu.memory_space<vmem>>, vector<1x128xf32>
    tpu.vector_store %arg9[%c35, %c0_84], %66 {strides = array<i32>} : memref<40x128xf32, #tpu.memory_space<vmem>>, vector<1x128xf32>,
    %c0_85 = arith.constant 0 : index
    %c0_86 = arith.constant 0 : index
    %68 = vector.load %arg9[%c0_85, %c0_86] : memref<40x128xf32, #tpu.memory_space<vmem>>, vector<24x128xf32>
    %c1_87 = arith.constant 1 : index
    %c0_88 = arith.constant 0 : index
    %69 = vector.load %arg9[%c1_87, %c0_88] : memref<40x128xf32, #tpu.memory_space<vmem>>, vector<24x128xf32>
    %c2_89 = arith.constant 2 : index
    %c0_90 = arith.constant 0 : index
    %70 = vector.load %arg9[%c2_89, %c0_90] : memref<40x128xf32, #tpu.memory_space<vmem>>, vector<24x128xf32>
    %c6_91 = arith.constant 6 : index
    %c0_92 = arith.constant 0 : index
    %71 = vector.load %arg9[%c6_91, %c0_92] : memref<40x128xf32, #tpu.memory_space<vmem>>, vector<24x128xf32>
    %c7_93 = arith.constant 7 : index
    %c0_94 = arith.constant 0 : index
    %72 = vector.load %arg9[%c7_93, %c0_94] : memref<40x128xf32, #tpu.memory_space<vmem>>, vector<24x128xf32>
    %c8_95 = arith.constant 8 : index
    %c0_96 = arith.constant 0 : index
    %73 = vector.load %arg9[%c8_95, %c0_96] : memref<40x128xf32, #tpu.memory_space<vmem>>, vector<24x128xf32>
    %c12_97 = arith.constant 12 : index
    %c0_98 = arith.constant 0 : index
    %74 = vector.load %arg9[%c12_97, %c0_98] : memref<40x128xf32, #tpu.memory_space<vmem>>, vector<24x128xf32>
    %c13_99 = arith.constant 13 : index
    %c0_100 = arith.constant 0 : index
    %75 = vector.load %arg9[%c13_99, %c0_100] : memref<40x128xf32, #tpu.memory_space<vmem>>, vector<24x128xf32>
    %c14_101 = arith.constant 14 : index
    %c0_102 = arith.constant 0 : index
    %76 = vector.load %arg9[%c14_101, %c0_102] : memref<40x128xf32, #tpu.memory_space<vmem>>, vector<24x128xf32>
    %77 = tpu.concatenate %68, %69, %70, %71, %72, %73, %74, %75, %76 in 1 : vector<24x128xf32>, vector<24x128xf32>, vector<24x128xf32>, vector<24x128xf32>, vector<24x128xf32>, vector<24x128xf32>, vector<24x128xf32>, vector<24x128xf32>, vector<24x128xf32> -> vector<24x1152xf32>
    %78 = arith.truncf %77 : vector<24x1152xf32> to vector<24x1152xbf16>
    %c0_103 = arith.constant 0 : index
    %c0_104 = arith.constant 0 : index
    %79 = vector.load %arg4[%c0_103, %c0_104] : memref<1152x128xbf16, #tpu.memory_space<vmem>>, vector<1152x128xbf16>
    %cst_105 = arith.constant dense<0.000000e+00> : vector<24x128xf32>
    %80 = tpu.matmul %78, %79, %cst_105 {dimension_numbers = #tpu.dot_dimension_numbers<[1], [0], [0], [1], [0, 0, 1, 1], [], []>} : vector<24x1152xbf16>, vector<1152x128xbf16>, vector<24x128xf32> -> vector<24x128xf32>
    %c0_106 = arith.constant 0 : index
    %c0_107 = arith.constant 0 : index
    %81 = vector.load %arg5[%c0_106, %c0_107] : memref<1x128xf32, #tpu.memory_space<vmem>>, vector<1x128xf32>
    %82 = vector.broadcast %81 : vector<1x128xf32> to vector<24x128xf32>
    %83 = arith.addf %80, %82 : vector<24x128xf32>
    %c0_108 = arith.constant 0 : index
    %c7_109 = arith.constant 7 : index
    %c0_110 = arith.constant 0 : index
    %84 = vector.load %arg1[%c0_108, %c7_109, %c0_110] : memref<1x40x128xf32, #tpu.memory_space<vmem>>, vector<1x24x128xf32>
    %85 = vector.shape_cast %84 : vector<1x24x128xf32> to vector<24x128xf32>
    %86 = arith.addf %83, %85 : vector<24x128xf32>
    %c0_111 = arith.constant 0 : index
    %c0_112 = arith.constant 0 : index
    %c0_113 = arith.constant 0 : index
    %87 = vector.load %arg6[%c0_111, %c0_112, %c0_113] : memref<1x24x128xf32, #tpu.memory_space<vmem>>, vector<1x24x128xf32>
    %88 = vector.shape_cast %87 : vector<1x24x128xf32> to vector<24x128xf32>
    %89 = vector.shape_cast %86 : vector<24x128xf32> to vector<1x24x128xf32>
    tpu.vector_store %arg6[%c0_111, %c0_112, %c0_113], %89 {strides = array<i32>} : memref<1x24x128xf32, #tpu.memory_space<vmem>>, vector<1x24x128xf32>,
    return
  }
  func.func @transform_0(%arg0: i32) -> (i32, i32, i32) {
    %c0_i32 = arith.constant 0 : i32
    %c0_i32_0 = arith.constant 0 : i32
    %c0_i32_1 = arith.constant 0 : i32
    return %arg0, %c0_i32, %c0_i32_0 : i32, i32, i32
  }
  func.func @transform_1(%arg0: i32) -> (i32, i32) {
    %c0_i32 = arith.constant 0 : i32
    %c0_i32_0 = arith.constant 0 : i32
    %c0_i32_1 = arith.constant 0 : i32
    return %c0_i32, %c0_i32_0 : i32, i32
  }
  func.func @transform_2(%arg0: i32) -> (i32, i32) {
    %c0_i32 = arith.constant 0 : i32
    %c0_i32_0 = arith.constant 0 : i32
    %c0_i32_1 = arith.constant 0 : i32
    return %c0_i32, %c0_i32_0 : i32, i32
  }
  func.func @transform_3(%arg0: i32) -> (i32, i32) {
    %c0_i32 = arith.constant 0 : i32
    %c0_i32_0 = arith.constant 0 : i32
    %c0_i32_1 = arith.constant 0 : i32
    return %c0_i32, %c0_i32_0 : i32, i32
  }
  func.func @transform_4(%arg0: i32) -> (i32, i32) {
    %c0_i32 = arith.constant 0 : i32
    %c0_i32_0 = arith.constant 0 : i32
    %c0_i32_1 = arith.constant 0 : i32
    return %c0_i32, %c0_i32_0 : i32, i32
  }
  func.func @transform_5(%arg0: i32) -> (i32, i32, i32) {
    %c0_i32 = arith.constant 0 : i32
    %c0_i32_0 = arith.constant 0 : i32
    %c0_i32_1 = arith.constant 0 : i32
    return %arg0, %c0_i32, %c0_i32_0 : i32, i32, i32
  }
}

module attributes {stable_mosaic.version = 11 : i64} {
  func.func @_head_kernel(%arg0: i32, %arg1: memref<2x16x16xf32, #tpu.memory_space<vmem>>, %arg2: memref<16x128xbf16, #tpu.memory_space<vmem>>, %arg3: memref<1x128xf32, #tpu.memory_space<vmem>>, %arg4: memref<128x128xbf16, #tpu.memory_space<vmem>>, %arg5: memref<1x128xf32, #tpu.memory_space<vmem>>, %arg6: memref<2x128xf32, #tpu.memory_space<vmem>>, %arg7: memref<2x16xf32, #tpu.memory_space<vmem>>) attributes {dimension_semantics = [#tpu.dimension_semantics<arbitrary>], iteration_bounds = array<i64: 1>, scalar_prefetch = 0 : i64, scratch_operands = 1 : i64, tpu.core_type = #tpu.core_type<tc>, window_params = [{transform_indices = @transform_0, window_bounds = array<i64: 2, 16, 16>}, {pipeline_mode = #tpu.pipeline_mode<synchronous>, transform_indices = @transform_1, window_bounds = array<i64: 16, 128>}, {pipeline_mode = #tpu.pipeline_mode<synchronous>, transform_indices = @transform_2, window_bounds = array<i64: 1, 128>}, {pipeline_mode = #tpu.pipeline_mode<synchronous>, transform_indices = @transform_3, window_bounds = array<i64: 128, 128>}, {pipeline_mode = #tpu.pipeline_mode<synchronous>, transform_indices = @transform_4, window_bounds = array<i64: 1, 128>}, {pipeline_mode = #tpu.pipeline_mode<synchronous>, transform_indices = @transform_5, window_bounds = array<i64: 2, 128>}]} {
    %c0_i32 = arith.constant 0 : i32
    %0 = arith.cmpi eq, %arg0, %c0_i32 : i32
    %1 = arith.extui %0 : i1 to i32
    %c0_i32_0 = arith.constant 0 : i32
    %2 = arith.cmpi ne, %1, %c0_i32_0 : i32
    scf.if %2 {
      %cst_9 = arith.constant 0.000000e+00 : f32
      %11 = vector.broadcast %cst_9 : f32 to vector<2x16xf32>
      %c0_10 = arith.constant 0 : index
      %c0_11 = arith.constant 0 : index
      %12 = vector.load %arg7[%c0_10, %c0_11] : memref<2x16xf32, #tpu.memory_space<vmem>>, vector<2x16xf32>
      tpu.vector_store %arg7[%c0_10, %c0_11], %11 {strides = array<i32>} : memref<2x16xf32, #tpu.memory_space<vmem>>, vector<2x16xf32>,
    } else {
    }
    %c0 = arith.constant 0 : index
    %c0_1 = arith.constant 0 : index
    %3 = vector.load %arg7[%c0, %c0_1] : memref<2x16xf32, #tpu.memory_space<vmem>>, vector<2x16xf32>
    %c0_2 = arith.constant 0 : index
    %c0_3 = arith.constant 0 : index
    %c0_4 = arith.constant 0 : index
    %4 = vector.load %arg1[%c0_2, %c0_3, %c0_4] : memref<2x16x16xf32, #tpu.memory_space<vmem>>, vector<2x16x16xf32>
    %cst = arith.constant dense<0.000000e+00> : vector<2x16xf32>
    %5 = vector.multi_reduction <add>, %4, %cst [1] : vector<2x16x16xf32> to vector<2x16xf32>
    %6 = arith.addf %3, %5 : vector<2x16xf32>
    %c0_5 = arith.constant 0 : index
    %c0_6 = arith.constant 0 : index
    %7 = vector.load %arg7[%c0_5, %c0_6] : memref<2x16xf32, #tpu.memory_space<vmem>>, vector<2x16xf32>
    tpu.vector_store %arg7[%c0_5, %c0_6], %6 {strides = array<i32>} : memref<2x16xf32, #tpu.memory_space<vmem>>, vector<2x16xf32>,
    %c0_i32_7 = arith.constant 0 : i32
    %8 = arith.cmpi eq, %arg0, %c0_i32_7 : i32
    %9 = arith.extui %8 : i1 to i32
    %c0_i32_8 = arith.constant 0 : i32
    %10 = arith.cmpi ne, %9, %c0_i32_8 : i32
    scf.if %10 {
      %c0_9 = arith.constant 0 : index
      %c0_10 = arith.constant 0 : index
      %11 = vector.load %arg7[%c0_9, %c0_10] : memref<2x16xf32, #tpu.memory_space<vmem>>, vector<2x16xf32>
      %cst_11 = arith.constant 6.250000e-02 : f32
      %12 = vector.broadcast %cst_11 : f32 to vector<2x16xf32>
      %13 = arith.mulf %11, %12 : vector<2x16xf32>
      %14 = arith.truncf %13 : vector<2x16xf32> to vector<2x16xbf16>
      %c0_12 = arith.constant 0 : index
      %c0_13 = arith.constant 0 : index
      %15 = vector.load %arg2[%c0_12, %c0_13] : memref<16x128xbf16, #tpu.memory_space<vmem>>, vector<16x128xbf16>
      %cst_14 = arith.constant dense<0.000000e+00> : vector<2x128xf32>
      %16 = tpu.matmul %14, %15, %cst_14 {dimension_numbers = #tpu.dot_dimension_numbers<[1], [0], [0], [1], [0, 0, 1, 1], [], []>} : vector<2x16xbf16>, vector<16x128xbf16>, vector<2x128xf32> -> vector<2x128xf32>
      %c0_15 = arith.constant 0 : index
      %c0_16 = arith.constant 0 : index
      %17 = vector.load %arg3[%c0_15, %c0_16] : memref<1x128xf32, #tpu.memory_space<vmem>>, vector<1x128xf32>
      %18 = vector.broadcast %17 : vector<1x128xf32> to vector<2x128xf32>
      %19 = arith.addf %16, %18 : vector<2x128xf32>
      %cst_17 = arith.constant 0.000000e+00 : f32
      %20 = vector.broadcast %cst_17 : f32 to vector<2x128xf32>
      %21 = arith.maximumf %19, %20 : vector<2x128xf32>
      %22 = arith.truncf %21 : vector<2x128xf32> to vector<2x128xbf16>
      %c0_18 = arith.constant 0 : index
      %c0_19 = arith.constant 0 : index
      %23 = vector.load %arg4[%c0_18, %c0_19] : memref<128x128xbf16, #tpu.memory_space<vmem>>, vector<128x128xbf16>
      %cst_20 = arith.constant dense<0.000000e+00> : vector<2x128xf32>
      %24 = tpu.matmul %22, %23, %cst_20 {dimension_numbers = #tpu.dot_dimension_numbers<[1], [0], [0], [1], [0, 0, 1, 1], [], []>} : vector<2x128xbf16>, vector<128x128xbf16>, vector<2x128xf32> -> vector<2x128xf32>
      %c0_21 = arith.constant 0 : index
      %c0_22 = arith.constant 0 : index
      %25 = vector.load %arg5[%c0_21, %c0_22] : memref<1x128xf32, #tpu.memory_space<vmem>>, vector<1x128xf32>
      %26 = vector.broadcast %25 : vector<1x128xf32> to vector<2x128xf32>
      %27 = arith.addf %24, %26 : vector<2x128xf32>
      %c0_23 = arith.constant 0 : index
      %c0_24 = arith.constant 0 : index
      %28 = vector.load %arg6[%c0_23, %c0_24] : memref<2x128xf32, #tpu.memory_space<vmem>>, vector<2x128xf32>
      tpu.vector_store %arg6[%c0_23, %c0_24], %27 {strides = array<i32>} : memref<2x128xf32, #tpu.memory_space<vmem>>, vector<2x128xf32>,
    } else {
    }
    return
  }
  func.func @transform_0(%arg0: i32) -> (i32, i32, i32) {
    %c0_i32 = arith.constant 0 : i32
    %c0_i32_0 = arith.constant 0 : i32
    %c0_i32_1 = arith.constant 0 : i32
    return %c0_i32, %arg0, %c0_i32_0 : i32, i32, i32
  }
  func.func @transform_1(%arg0: i32) -> (i32, i32) {
    %c0_i32 = arith.constant 0 : i32
    %c0_i32_0 = arith.constant 0 : i32
    %c0_i32_1 = arith.constant 0 : i32
    return %c0_i32, %c0_i32_0 : i32, i32
  }
  func.func @transform_2(%arg0: i32) -> (i32, i32) {
    %c0_i32 = arith.constant 0 : i32
    %c0_i32_0 = arith.constant 0 : i32
    %c0_i32_1 = arith.constant 0 : i32
    return %c0_i32, %c0_i32_0 : i32, i32
  }
  func.func @transform_3(%arg0: i32) -> (i32, i32) {
    %c0_i32 = arith.constant 0 : i32
    %c0_i32_0 = arith.constant 0 : i32
    %c0_i32_1 = arith.constant 0 : i32
    return %c0_i32, %c0_i32_0 : i32, i32
  }
  func.func @transform_4(%arg0: i32) -> (i32, i32) {
    %c0_i32 = arith.constant 0 : i32
    %c0_i32_0 = arith.constant 0 : i32
    %c0_i32_1 = arith.constant 0 : i32
    return %c0_i32, %c0_i32_0 : i32, i32
  }
  func.func @transform_5(%arg0: i32) -> (i32, i32) {
    %c0_i32 = arith.constant 0 : i32
    %c0_i32_0 = arith.constant 0 : i32
    %c0_i32_1 = arith.constant 0 : i32
    return %c0_i32, %c0_i32_0 : i32, i32
  }
}

</mosaic_0001>

<llo_original>
// kernel: vaegan_discriminator.10
$region0: #{vaegan_discriminator.10}
  #allocation0 [shape = 'u32[]', space=smem, size = 0x4, offset = 0x4, fixed_abs, tag = 'smem constant byte address 0x4 - core index']
  #allocation1 [shape = 'u32[144,128]{1,0:T(1,128)}', space=vmem, size = 0x12000, scoped, tag = 'internal scratch']
  %s0 = inlined_call_operand.vmem [shape: bf16[32,35], index: 0, kind: input, shape index: {}]
  %s1 = inlined_call_operand.vmem [shape: bf16[35,128], index: 1, kind: input, shape index: {}]
  %s2 = inlined_call_operand.vmem [shape: f32[1,128], index: 2, kind: input, shape index: {}]
  %s3 = inlined_call_operand.vmem [shape: f32[32,128], index: 3, kind: output, shape index: {}]
  %s4 = sld [smem:[#allocation0]]
  $region45: #{vaegan_discriminator.10} parent=0
    _
  %s6 = ssub.s32 1, %s4
  %s7 = scalar_select 0, %s6, %s4
  loop: start=0, step=1, limit=4
  $region2: #{vaegan_discriminator.10} parent=0 // loop_pre_header
    _
  $region3: #{vaegan_discriminator.10} parent=0 // loop_header
    %s9 = sphi 0, %s13
    %p10 = scmp.ge.s32.totalorder %s9, 4
    %s16 = sphi 0, %s35
    %s17 = sphi 0, %s31
    %s18 = sphi 0, %s27
    %s19 = sphi 0, %s16
    %s20 = sphi 0, %s17
    %s21 = sphi 0, %s18
    %s22 = sphi 0, %s19
    %s23 = sphi 0, %s20
    %s24 = sphi 0, %s21
    %s40 = sphi 0, %s42
    %s43 = sphi 0, %s40
    %s44 = sphi 0, %s43
    %s60 = sphi 0, %s44
    %s68 = sphi 0, %s70
    %s71 = sphi 0, %s68
    %s72 = sphi 0, %s71
    %s88 = sphi 0, %s72
    %s94 = sphi 0, %s96
    %s97 = sphi 0, %s94
    %s98 = sphi 0, %s97
    %s114 = sphi 0, %s98
    %s122 = sphi 0, %s124
    %s125 = sphi 0, %s122
    %s126 = sphi 0, %s125
    %s142 = sphi 0, %s126
  $region4: #{vaegan_discriminator.10} parent=0 // loop_header_branch
    %12 = sbr.rel (%p10) target = $region8
  $region5: #{vaegan_discriminator.10} parent=0 // loop_body
    %s14 = ssub.s32 %s9, 1
    %s15 = ssub.s32 %s9, 2
    %s25 = sadd.s32 1, %s18
    %p26 = scmp.ge.s32.totalorder %s25, 1
    %s27 = scalar_select %p26, 0, %s25
    %s28 = sadd.s32 1, %s17
    %s29 = scalar_select %p26, %s28, %s17
    %p30 = scmp.ge.s32.totalorder %s29, 1
    %s31 = scalar_select %p30, 0, %s29
    %s32 = sadd.s32 1, %s16
    %s33 = scalar_select %p30, %s32, %s16
    %p34 = scmp.ge.s32.totalorder %s33, 2
    %s35 = scalar_select %p34, 0, %s33
    %s36 = ssub.s32 %s16, %s35
    %s37 = ssub.s32 %s18, %s27
    %s38 = sor.u32 %s36, %s37
    %p39 = scmp.eq.s32.totalorder %s38, 0
    %s41 = sadd.s32 %s40, 1
    %s42 = scalar_select %p39, %s40, %s41
    %p45 = pneg %p39
    %p46 = scmp.eq.s32.totalorder %s9, 1
    %p47 = por %p45, %p46
    %p48 = scmp.ne.s32.totalorder %s40, %s43
    %p49 = scmp.eq.s32.totalorder %s9, 0
    %p50 = por %p48, %p49
    %p51 = scmp.ne.s32.totalorder %s40, %s43
    %p52 = scmp.eq.s32.totalorder %s14, 1
    %p53 = por %p51, %p52
    %p54 = scmp.ne.s32.totalorder %s43, %s44
    %p55 = scmp.eq.s32.totalorder %s14, 0
    %p56 = por %p54, %p55
    %p57 = scmp.ne.s32.totalorder %s43, %s44
    %p58 = scmp.eq.s32.totalorder %s15, 1
    %p59 = por %p57, %p58
    %p61 = scmp.ne.s32.totalorder %s44, %s60
    %p62 = scmp.eq.s32.totalorder %s15, 0
    %p63 = por %p61, %p62
    %s64 = ssub.s32 %s18, %s27
    %s65 = ssub.s32 %s17, %s31
    %s66 = sor.u32 %s64, %s65
    %p67 = scmp.eq.s32.totalorder %s66, 0
    %s69 = sadd.s32 %s68, 1
    %s70 = scalar_select %p67, %s68, %s69
    %p73 = pneg %p67
    %p74 = scmp.eq.s32.totalorder %s9, 1
    %p75 = por %p73, %p74
    %p76 = scmp.ne.s32.totalorder %s68, %s71
    %p77 = scmp.eq.s32.totalorder %s9, 0
    %p78 = por %p76, %p77
    %p79 = scmp.ne.s32.totalorder %s68, %s71
    %p80 = scmp.eq.s32.totalorder %s14, 1
    %p81 = por %p79, %p80
    %p82 = scmp.ne.s32.totalorder %s71, %s72
    %p83 = scmp.eq.s32.totalorder %s14, 0
    %p84 = por %p82, %p83
    %p85 = scmp.ne.s32.totalorder %s71, %s72
    %p86 = scmp.eq.s32.totalorder %s15, 1
    %p87 = por %p85, %p86
    %p89 = scmp.ne.s32.totalorder %s72, %s88
    %p90 = scmp.eq.s32.totalorder %s15, 0
    %p91 = por %p89, %p90
    %s92 = ssub.s32 %s17, %s31
    %p93 = scmp.eq.s32.totalorder %s92, 0
    %s95 = sadd.s32 %s94, 1
    %s96 = scalar_select %p93, %s94, %s95
    %p99 = pneg %p93
    %p100 = scmp.eq.s32.totalorder %s9, 1
    %p101 = por %p99, %p100
    %p102 = scmp.ne.s32.totalorder %s94, %s97
    %p103 = scmp.eq.s32.totalorder %s9, 0
    %p104 = por %p102, %p103
    %p105 = scmp.ne.s32.totalorder %s94, %s97
    %p106 = scmp.eq.s32.totalorder %s14, 1
    %p107 = por %p105, %p106
    %p108 = scmp.ne.s32.totalorder %s97, %s98
    %p109 = scmp.eq.s32.totalorder %s14, 0
    %p110 = por %p108, %p109
    %p111 = scmp.ne.s32.totalorder %s97, %s98
    %p112 = scmp.eq.s32.totalorder %s15, 1
    %p113 = por %p111, %p112
    %p115 = scmp.ne.s32.totalorder %s98, %s114
    %p116 = scmp.eq.s32.totalorder %s15, 0
    %p117 = por %p115, %p116
    %s118 = ssub.s32 %s16, %s35
    %s119 = ssub.s32 %s17, %s31
    %s120 = sor.u32 %s118, %s119
    %p121 = scmp.eq.s32.totalorder %s120, 0
    %s123 = sadd.s32 %s122, 1
    %s124 = scalar_select %p121, %s122, %s123
    %p127 = pneg %p121
    %p128 = scmp.eq.s32.totalorder %s9, 1
    %p129 = por %p127, %p128
    %p130 = scmp.ne.s32.totalorder %s122, %s125
    %p131 = scmp.eq.s32.totalorder %s9, 0
    %p132 = por %p130, %p131
    %p133 = scmp.ne.s32.totalorder %s122, %s125
    %p134 = scmp.eq.s32.totalorder %s14, 1
    %p135 = por %p133, %p134
    %p136 = scmp.ne.s32.totalorder %s125, %s126
    %p137 = scmp.eq.s32.totalorder %s14, 0
    %p138 = por %p136, %p137
    %p139 = scmp.ne.s32.totalorder %s125, %s126
    %p140 = scmp.eq.s32.totalorder %s15, 1
    %p141 = por %p139, %p140
    %p143 = scmp.ne.s32.totalorder %s126, %s142
    %p144 = scmp.eq.s32.totalorder %s15, 0
    %p145 = por %p143, %p144
    %p146 = scmp.le.s32.totalorder 1, %s9
    %p147 = scmp.lt.s32.totalorder %s9, 3
    %p148 = pnand %p146, %p147
    %p149 = pneg %p148
    // Predicated region
    $region9: #{vaegan_discriminator.10} parent=5 // pred_check
      _
    $region10: #{vaegan_discriminator.10} parent=5 // pred_check_branch
      %151 = sbr.rel (%p148) target = $region12
    $region11: #{vaegan_discriminator.10} parent=5 // pred_region
      %s152 = ssub.s32 %s9, 1
      // Predicated region
      $region13: #{vaegan_discriminator.10} parent=11 // pred_check
        %p153 = pneg %p84
      $region14: #{vaegan_discriminator.10} parent=11 // pred_check_branch
        %155 = sbr.rel (%p153) target = $region16
      $region15: #{vaegan_discriminator.10} parent=11 // pred_region
        %s156 = smul.u32 5, %s21
        %p157 = scmp.lt.s32.totalorder %s156, 4
        %s158 = scalar_select %p157, %s156, 4
        %p159 = scmp.lt.s32.totalorder %s20, 0
        %s160 = scalar_select %p159, %s20, 0
        %s161 = sadd.s32 %s160, %s158
        %s162 = smul.addr %s161, 4
        %s163 = scalar_lea.vmem %s1, %s162
        %s164 = smul.u32 5, %s21
      $region16: #{vaegan_discriminator.10} parent=11 // pred_fallthru
        _
      // Predicated region
      $region17: #{vaegan_discriminator.10} parent=11 // pred_check
        %p165 = pneg %p110
      $region18: #{vaegan_discriminator.10} parent=11 // pred_check_branch
        %167 = sbr.rel (%p165) target = $region20
      $region19: #{vaegan_discriminator.10} parent=11 // pred_region
        %p168 = scmp.lt.s32.totalorder %s20, 0
        %s169 = scalar_select %p168, %s20, 0
        %s170 = scalar_lea.vmem %s2, %s169
      $region20: #{vaegan_discriminator.10} parent=11 // pred_fallthru
        _
    $region12: #{vaegan_discriminator.10} parent=5 // pred_fallthru
      _
    %p171 = scmp.lt.s32.totalorder %s9, 2
    // Predicated region
    $region21: #{vaegan_discriminator.10} parent=5 // pred_check
      %p172 = pneg %p171
    $region22: #{vaegan_discriminator.10} parent=5 // pred_check_branch
      %174 = sbr.rel (%p172) target = $region24
    $region23: #{vaegan_discriminator.10} parent=5 // pred_region
      // Predicated region
      $region25: #{vaegan_discriminator.10} parent=23 // pred_check
        %p175 = pneg %p50
      $region26: #{vaegan_discriminator.10} parent=23 // pred_check_branch
        %177 = sbr.rel (%p175) target = $region28
      $region27: #{vaegan_discriminator.10} parent=23 // pred_region
        %s178 = smul.u32 2, %s16
        %p179 = scmp.lt.s32.totalorder %s178, 3
        %s180 = scalar_select %p179, %s178, 3
        %p181 = scmp.lt.s32.totalorder %s18, 0
        %s182 = scalar_select %p181, %s18, 0
        %s183 = sadd.s32 %s182, %s180
        %s184 = smul.addr %s183, 4
        %s185 = scalar_lea.vmem %s0, %s184
        %s186 = smul.u32 2, %s16
      $region28: #{vaegan_discriminator.10} parent=23 // pred_fallthru
        _
    $region24: #{vaegan_discriminator.10} parent=5 // pred_fallthru
      _
    %p187 = scmp.le.s32.totalorder 1, %s9
    %p188 = scmp.lt.s32.totalorder %s9, 3
    %p189 = pnand %p187, %p188
    %p190 = pneg %p189
    // Predicated region
    $region29: #{vaegan_discriminator.10} parent=5 // pred_check
      _
    $region30: #{vaegan_discriminator.10} parent=5 // pred_check_branch
      %192 = sbr.rel (%p189) target = $region32
    $region31: #{vaegan_discriminator.10} parent=5 // pred_region
      %s193 = ssub.s32 %s9, 1
      %s194 = smul.u32 2, %s19
      %p195 = scmp.lt.s32.totalorder %s194, 3
      %s196 = scalar_select %p195, %s194, 3
      %p197 = scmp.lt.s32.totalorder %s21, 0
      %s198 = scalar_select %p197, %s21, 0
      %s199 = sadd.s32 %s198, %s196
      %s200 = smul.addr %s199, 4
      %s201 = scalar_lea.vmem %s0, %s200
      %p202 = pneg %p56
      %p203 = pneg %p53
      %s204 = smul.u32 5, %s21
      %p205 = scmp.lt.s32.totalorder %s204, 4
      %s206 = scalar_select %p205, %s204, 4
      %p207 = scmp.lt.s32.totalorder %s20, 0
      %s208 = scalar_select %p207, %s20, 0
      %s209 = sadd.s32 %s208, %s206
      %s210 = smul.addr %s209, 4
      %s211 = scalar_lea.vmem %s1, %s210
      %p212 = pneg %p84
      %p213 = pneg %p81
      %p214 = scmp.lt.s32.totalorder %s20, 0
      %s215 = scalar_select %p214, %s20, 0
      %s216 = scalar_lea.vmem %s2, %s215
      %p217 = pneg %p110
      %p218 = pneg %p107
      %p219 = pneg %p138
      %p220 = pneg %p135
      %s221 = smul.u32 2, %s19
      %p222 = scmp.lt.s32.totalorder %s221, 3
      %s223 = scalar_select %p222, %s221, 3
      %p224 = scmp.lt.s32.totalorder %s20, 0
      %s225 = scalar_select %p224, %s20, 0
      %s226 = sadd.s32 %s225, %s223
      %s227 = smul.addr %s226, 8
      %s228 = scalar_lea.vmem %s3, %s227
      %s229 = smul.u32 2, %s19
      %p230 = scmp.lt.s32.totalorder %s229, 3
      %s231 = scalar_select %p230, %s229, 3
      %p232 = scmp.lt.s32.totalorder %s21, 0
      %s233 = scalar_select %p232, %s21, 0
      %s234 = sadd.s32 %s233, %s231
      %s235 = smul.addr %s234, 4
      %s236 = scalar_lea.vmem %s0, %s235
      %s237 = smul.u32 2, %s19
      %s238 = smul.u32 5, %s21
      %p239 = scmp.lt.s32.totalorder %s238, 4
      %s240 = scalar_select %p239, %s238, 4
      %p241 = scmp.lt.s32.totalorder %s20, 0
      %s242 = scalar_select %p241, %s20, 0
      %s243 = sadd.s32 %s242, %s240
      %s244 = smul.addr %s243, 4
      %s245 = scalar_lea.vmem %s1, %s244
      %s246 = smul.u32 5, %s21
      %p247 = scmp.lt.s32.totalorder %s20, 0
      %s248 = scalar_select %p247, %s20, 0
      %s249 = scalar_lea.vmem %s2, %s248
      %s250 = smul.u32 2, %s19
      %p251 = scmp.lt.s32.totalorder %s250, 3
      %s252 = scalar_select %p251, %s250, 3
      %p253 = scmp.lt.s32.totalorder %s20, 0
      %s254 = scalar_select %p253, %s20, 0
      %s255 = sadd.s32 %s254, %s252
      %s256 = smul.addr %s255, 8
      %s257 = scalar_lea.vmem %s3, %s256
      %s258 = smul.u32 2, %s19
      %v260 = vld [vmem:[%s236] sm:$0xf]
      %v261 = vld [vmem:[%s236 + $0x4] sm:$0xf]
      %v262 = vld [vmem:[%s245] sm:$0xf]
      %v263 = vld [vmem:[%s245 + $0x4] sm:$0xf]
      %v264 = vld [vmem:[%s245 + $0x8] sm:$0xf]
      %v265 = vld [vmem:[%s245 + $0xc] sm:$0xf]
      %v266 = vld [vmem:[%s245 + $0x10] sm:$0x3]
      %v267 = vld [vmem:[%s249] sm:$0x1]
      %v269 = vlaneseq
      %v270 = vshrl.u32 %v269, 7
      %v271 = vsub.s32 0, %v270
      %v272 = vrot.slane %v267, %v271
      %v276 = vunpack.c.l.b16 %v260
      %v277 = vunpack.c.l.b16 %v261
      %v278 = vpack.c.b16 %v277, %v276
      %v284 = vunpack.c.l.b16 %v262
      %v285 = vunpack.c.l.b16 %v263
      %v286 = vunpack.c.l.b16 %v264
      %v287 = vunpack.c.l.b16 %v265
      %v288 = vunpack.c.l.b16 %v266
      %v289 = vpack.c.b16 %v285, %v284
      %v290 = vpack.c.b16 %v287, %v286
      %v291 = vpack.c.b16 %v288, %v288
      %vm294 = vcmask 285696
      %v296 = vsel %vm294, %v278, 0
      %vm298 = vcmask 1040384
      %vm299 = vcmask 1041408
      %v300 = vsel %vm298, 4294967295, 65535
      %v301 = vsel %vm299, %v300, 0
      %v303 = vand.u32 %v291, %v301
      %305 = vmatprep.subr.bf16.mxu0 0
      %306 = vmatpush1.bf16.msra.mxu0 0
      %307 = vmatprep.subr.bf16.mxu0 0
      %308 = vmatpush1.bf16.msra.mxu0 0
      %309 = vmatprep.subr.bf16.mxu0 0
      %310 = vmatpush1.bf16.msra.mxu0 0
      %311 = vmatprep.subr.bf16.mxu0 0
      %312 = vmatpush1.bf16.msra.mxu0 0
      %313 = vmatprep.subr.bf16.mxu0 0
      %314 = vmatpush1.bf16.msra.mxu0 0
      %315 = vmatprep.subr.bf16.mxu0 0
      %316 = vmatpush1.bf16.msra.mxu0 %v303
      %317 = vmatprep.subr.bf16.mxu0 0
      %318 = vmatpush1.bf16.msra.mxu0 %v290
      %319 = vmatprep.subr.bf16.mxu0 0
      %320 = vmatpush1.bf16.msra.mxu0 %v289
      %321 = vmatprep.subr.bf16.mxu0 0
      %322 = vmatpush2.bf16.msra.mxu0 0
      %323 = vmatprep.subr.bf16.mxu0 0
      %324 = vmatpush2.bf16.msra.mxu0 0
      %325 = vmatprep.subr.bf16.mxu0 0
      %326 = vmatpush2.bf16.msra.mxu0 0
      %327 = vmatprep.subr.bf16.mxu0 0
      %328 = vmatpush2.bf16.msra.mxu0 0
      %329 = vmatprep.subr.bf16.mxu0 0
      %330 = vmatpush2.bf16.msra.mxu0 0
      %331 = vmatprep.subr.bf16.mxu0 0
      %332 = vmatpush2.bf16.msra.mxu0 0
      %333 = vmatprep.subr.bf16.mxu0 0
      %334 = vmatpush2.bf16.msra.mxu0 0
      %335 = vmatprep.subr.bf16.mxu0 0
      %336 = vmatpush2.bf16.msra.mxu0 0
      %337 = vmatprep.mubr.bf16.mxu0 0
      %338 = vmatmul.mubr.bf16.gmra.mxu0 %v296
      %v339 = vpop.f32.mrf.mxu0
      %v340 = vadd.f32 %v272, %v339
      %v341 = vpop.f32.mrf.mxu0
      %v342 = vpop.f32.mrf.mxu0
      %v343 = vadd.f32 %v272, %v342
      %v344 = vpop.f32.mrf.mxu0
      %345 = vdwg.mxu0
      %346 = vst [vmem:[%s257] sm:$0xff] %v340
      %347 = vst [vmem:[%s257 + $0x8] sm:$0xff] %v343
      %s348 = smul.u32 2, %s19
      %p349 = scmp.lt.s32.totalorder %s348, 3
      %s350 = scalar_select %p349, %s348, 3
      %p351 = scmp.lt.s32.totalorder %s20, 0
      %s352 = scalar_select %p351, %s20, 0
      %s353 = sadd.s32 %s352, %s350
      %s354 = smul.addr %s353, 8
      %s355 = scalar_lea.vmem %s3, %s354
      // Predicated region
      $region33: #{vaegan_discriminator.10} parent=31 // pred_check
        %p356 = pneg %p135
      $region34: #{vaegan_discriminator.10} parent=31 // pred_check_branch
        %358 = sbr.rel (%p356) target = $region36
      $region35: #{vaegan_discriminator.10} parent=31 // pred_region
        %s359 = smul.u32 2, %s19
      $region36: #{vaegan_discriminator.10} parent=31 // pred_fallthru
        _
    $region32: #{vaegan_discriminator.10} parent=5 // pred_fallthru
      _
    %p360 = scmp.le.s32.totalorder 2, %s9
    // Predicated region
    $region37: #{vaegan_discriminator.10} parent=5 // pred_check
      %p361 = pneg %p360
    $region38: #{vaegan_discriminator.10} parent=5 // pred_check_branch
      %363 = sbr.rel (%p361) target = $region40
    $region39: #{vaegan_discriminator.10} parent=5 // pred_region
      %s364 = ssub.s32 %s9, 2
      // Predicated region
      $region41: #{vaegan_discriminator.10} parent=39 // pred_check
        %p365 = pneg %p141
      $region42: #{vaegan_discriminator.10} parent=39 // pred_check_branch
        %367 = sbr.rel (%p365) target = $region44
      $region43: #{vaegan_discriminator.10} parent=39 // pred_region
        %s368 = smul.u32 2, %s22
        %p369 = scmp.lt.s32.totalorder %s368, 3
        %s370 = scalar_select %p369, %s368, 3
        %p371 = scmp.lt.s32.totalorder %s23, 0
        %s372 = scalar_select %p371, %s23, 0
        %s373 = sadd.s32 %s372, %s370
        %s374 = smul.addr %s373, 8
        %s375 = scalar_lea.vmem %s3, %s374
      $region44: #{vaegan_discriminator.10} parent=39 // pred_fallthru
        _
    $region40: #{vaegan_discriminator.10} parent=5 // pred_fallthru
      _
  $region6: #{vaegan_discriminator.10} parent=0 // loop_footer
    %s13 = sadd.s32 1, %s9
  $region7: #{vaegan_discriminator.10} parent=0 // loop_footer_branch
    %8 = sbr.rel target = $region3
  $region8: #{vaegan_discriminator.10} parent=0 // loop_exit
    _

// kernel: vaegan_discriminator.11
$region0: #{vaegan_discriminator.11}
  #allocation0 [shape = 'u32[]', space=smem, size = 0x4, offset = 0x4, fixed_abs, tag = 'smem constant byte address 0x4 - core index']
  #allocation1 [shape = 'u32[144,128]{1,0:T(1,128)}', space=vmem, size = 0x12000, scoped, tag = 'internal scratch']
  #allocation2 [shape = 'f32[40,128]{1,0:T(8,128)}', space=vmem, size = 0x5000, scoped, tag = 'scratch operand']
  #allocation3 [shape = 'f32[24,128]{1,0:T(8,128)}', space=vmem, size = 0x3000, scoped, tag = 'scratch operand']
  #allocation4 [shape = 'f32[40,128]{1,0:T(8,128)}', space=vmem, size = 0x5000, scoped, tag = 'scratch operand']
  %s0 = inlined_call_operand.vmem [shape: f32[2,40,128], index: 0, kind: input, shape index: {}]
  %s1 = inlined_call_operand.vmem [shape: bf16[1152,128], index: 1, kind: input, shape index: {}]
  %s2 = inlined_call_operand.vmem [shape: f32[1,128], index: 2, kind: input, shape index: {}]
  %s3 = inlined_call_operand.vmem [shape: bf16[1152,128], index: 3, kind: input, shape index: {}]
  %s4 = inlined_call_operand.vmem [shape: f32[1,128], index: 4, kind: input, shape index: {}]
  %s5 = inlined_call_operand.vmem [shape: bf16[128,128], index: 5, kind: input, shape index: {}]
  %s6 = inlined_call_operand.vmem [shape: f32[1,128], index: 6, kind: input, shape index: {}]
  %s7 = inlined_call_operand.vmem [shape: f32[2,24,128], index: 7, kind: output, shape index: {}]
  %s8 = sld [smem:[#allocation0]]
  $region61: #{vaegan_discriminator.11} parent=0
    _
  %s10 = ssub.s32 1, %s8
  %s11 = scalar_select 0, %s10, %s8
  loop: start=0, step=1, limit=4
  $region2: #{vaegan_discriminator.11} parent=0 // loop_pre_header
    _
  $region3: #{vaegan_discriminator.11} parent=0 // loop_header
    %s13 = sphi 0, %s17
    %p14 = scmp.ge.s32.totalorder %s13, 4
    %s23 = sphi 0, %s25
    %s26 = sphi 0, %s23
    %s27 = sphi 0, %s26
    %s43 = sphi 0, %s27
    %s47 = sphi 0, %s47
    %s49 = sphi 0, %s47
    %s50 = sphi 0, %s49
    %s64 = sphi 0, %s50
    %s68 = sphi 0, %s68
    %s70 = sphi 0, %s68
    %s71 = sphi 0, %s70
    %s85 = sphi 0, %s71
    %s89 = sphi 0, %s89
    %s91 = sphi 0, %s89
    %s92 = sphi 0, %s91
    %s106 = sphi 0, %s92
    %s110 = sphi 0, %s110
    %s112 = sphi 0, %s110
    %s113 = sphi 0, %s112
    %s127 = sphi 0, %s113
    %s131 = sphi 0, %s131
    %s133 = sphi 0, %s131
    %s134 = sphi 0, %s133
    %s148 = sphi 0, %s134
    %s152 = sphi 0, %s152
    %s154 = sphi 0, %s152
    %s155 = sphi 0, %s154
    %s169 = sphi 0, %s155
    %s175 = sphi 0, %s177
    %s178 = sphi 0, %s175
    %s179 = sphi 0, %s178
    %s195 = sphi 0, %s179
  $region4: #{vaegan_discriminator.11} parent=0 // loop_header_branch
    %16 = sbr.rel (%p14) target = $region8
  $region5: #{vaegan_discriminator.11} parent=0 // loop_body
    %s18 = ssub.s32 %s13, 1
    %s19 = ssub.s32 %s13, 2
    %s20 = sadd.s32 %s13, 1
    %s21 = ssub.s32 %s13, %s20
    %p22 = scmp.eq.s32.totalorder %s21, 0
    %s24 = sadd.s32 %s23, 1
    %s25 = scalar_select %p22, %s23, %s24
    %p28 = pneg %p22
    %p29 = scmp.eq.s32.totalorder %s13, 1
    %p30 = por %p28, %p29
    %p31 = scmp.ne.s32.totalorder %s23, %s26
    %p32 = scmp.eq.s32.totalorder %s13, 0
    %p33 = por %p31, %p32
    %p34 = scmp.ne.s32.totalorder %s23, %s26
    %p35 = scmp.eq.s32.totalorder %s18, 1
    %p36 = por %p34, %p35
    %p37 = scmp.ne.s32.totalorder %s26, %s27
    %p38 = scmp.eq.s32.totalorder %s18, 0
    %p39 = por %p37, %p38
    %p40 = scmp.ne.s32.totalorder %s26, %s27
    %p41 = scmp.eq.s32.totalorder %s19, 1
    %p42 = por %p40, %p41
    %p44 = scmp.ne.s32.totalorder %s27, %s43
    %p45 = scmp.eq.s32.totalorder %s19, 0
    %p46 = por %p44, %p45
    %s48 = sadd.s32 %s47, 1
    %p51 = scmp.eq.s32.totalorder %s13, 1
    %p52 = scmp.ne.s32.totalorder %s47, %s49
    %p53 = scmp.eq.s32.totalorder %s13, 0
    %p54 = por %p52, %p53
    %p55 = scmp.ne.s32.totalorder %s47, %s49
    %p56 = scmp.eq.s32.totalorder %s18, 1
    %p57 = por %p55, %p56
    %p58 = scmp.ne.s32.totalorder %s49, %s50
    %p59 = scmp.eq.s32.totalorder %s18, 0
    %p60 = por %p58, %p59
    %p61 = scmp.ne.s32.totalorder %s49, %s50
    %p62 = scmp.eq.s32.totalorder %s19, 1
    %p63 = por %p61, %p62
    %p65 = scmp.ne.s32.totalorder %s50, %s64
    %p66 = scmp.eq.s32.totalorder %s19, 0
    %p67 = por %p65, %p66
    %s69 = sadd.s32 %s68, 1
    %p72 = scmp.eq.s32.totalorder %s13, 1
    %p73 = scmp.ne.s32.totalorder %s68, %s70
    %p74 = scmp.eq.s32.totalorder %s13, 0
    %p75 = por %p73, %p74
    %p76 = scmp.ne.s32.totalorder %s68, %s70
    %p77 = scmp.eq.s32.totalorder %s18, 1
    %p78 = por %p76, %p77
    %p79 = scmp.ne.s32.totalorder %s70, %s71
    %p80 = scmp.eq.s32.totalorder %s18, 0
    %p81 = por %p79, %p80
    %p82 = scmp.ne.s32.totalorder %s70, %s71
    %p83 = scmp.eq.s32.totalorder %s19, 1
    %p84 = por %p82, %p83
    %p86 = scmp.ne.s32.totalorder %s71, %s85
    %p87 = scmp.eq.s32.totalorder %s19, 0
    %p88 = por %p86, %p87
    %s90 = sadd.s32 %s89, 1
    %p93 = scmp.eq.s32.totalorder %s13, 1
    %p94 = scmp.ne.s32.totalorder %s89, %s91
    %p95 = scmp.eq.s32.totalorder %s13, 0
    %p96 = por %p94, %p95
    %p97 = scmp.ne.s32.totalorder %s89, %s91
    %p98 = scmp.eq.s32.totalorder %s18, 1
    %p99 = por %p97, %p98
    %p100 = scmp.ne.s32.totalorder %s91, %s92
    %p101 = scmp.eq.s32.totalorder %s18, 0
    %p102 = por %p100, %p101
    %p103 = scmp.ne.s32.totalorder %s91, %s92
    %p104 = scmp.eq.s32.totalorder %s19, 1
    %p105 = por %p103, %p104
    %p107 = scmp.ne.s32.totalorder %s92, %s106
    %p108 = scmp.eq.s32.totalorder %s19, 0
    %p109 = por %p107, %p108
    %s111 = sadd.s32 %s110, 1
    %p114 = scmp.eq.s32.totalorder %s13, 1
    %p115 = scmp.ne.s32.totalorder %s110, %s112
    %p116 = scmp.eq.s32.totalorder %s13, 0
    %p117 = por %p115, %p116
    %p118 = scmp.ne.s32.totalorder %s110, %s112
    %p119 = scmp.eq.s32.totalorder %s18, 1
    %p120 = por %p118, %p119
    %p121 = scmp.ne.s32.totalorder %s112, %s113
    %p122 = scmp.eq.s32.totalorder %s18, 0
    %p123 = por %p121, %p122
    %p124 = scmp.ne.s32.totalorder %s112, %s113
    %p125 = scmp.eq.s32.totalorder %s19, 1
    %p126 = por %p124, %p125
    %p128 = scmp.ne.s32.totalorder %s113, %s127
    %p129 = scmp.eq.s32.totalorder %s19, 0
    %p130 = por %p128, %p129
    %s132 = sadd.s32 %s131, 1
    %p135 = scmp.eq.s32.totalorder %s13, 1
    %p136 = scmp.ne.s32.totalorder %s131, %s133
    %p137 = scmp.eq.s32.totalorder %s13, 0
    %p138 = por %p136, %p137
    %p139 = scmp.ne.s32.totalorder %s131, %s133
    %p140 = scmp.eq.s32.totalorder %s18, 1
    %p141 = por %p139, %p140
    %p142 = scmp.ne.s32.totalorder %s133, %s134
    %p143 = scmp.eq.s32.totalorder %s18, 0
    %p144 = por %p142, %p143
    %p145 = scmp.ne.s32.totalorder %s133, %s134
    %p146 = scmp.eq.s32.totalorder %s19, 1
    %p147 = por %p145, %p146
    %p149 = scmp.ne.s32.totalorder %s134, %s148
    %p150 = scmp.eq.s32.totalorder %s19, 0
    %p151 = por %p149, %p150
    %s153 = sadd.s32 %s152, 1
    %p156 = scmp.eq.s32.totalorder %s13, 1
    %p157 = scmp.ne.s32.totalorder %s152, %s154
    %p158 = scmp.eq.s32.totalorder %s13, 0
    %p159 = por %p157, %p158
    %p160 = scmp.ne.s32.totalorder %s152, %s154
    %p161 = scmp.eq.s32.totalorder %s18, 1
    %p162 = por %p160, %p161
    %p163 = scmp.ne.s32.totalorder %s154, %s155
    %p164 = scmp.eq.s32.totalorder %s18, 0
    %p165 = por %p163, %p164
    %p166 = scmp.ne.s32.totalorder %s154, %s155
    %p167 = scmp.eq.s32.totalorder %s19, 1
    %p168 = por %p166, %p167
    %p170 = scmp.ne.s32.totalorder %s155, %s169
    %p171 = scmp.eq.s32.totalorder %s19, 0
    %p172 = por %p170, %p171
    %s173 = ssub.s32 %s13, %s20
    %p174 = scmp.eq.s32.totalorder %s173, 0
    %s176 = sadd.s32 %s175, 1
    %s177 = scalar_select %p174, %s175, %s176
    %p180 = pneg %p174
    %p181 = scmp.eq.s32.totalorder %s13, 1
    %p182 = por %p180, %p181
    %p183 = scmp.ne.s32.totalorder %s175, %s178
    %p184 = scmp.eq.s32.totalorder %s13, 0
    %p185 = por %p183, %p184
    %p186 = scmp.ne.s32.totalorder %s175, %s178
    %p187 = scmp.eq.s32.totalorder %s18, 1
    %p188 = por %p186, %p187
    %p189 = scmp.ne.s32.totalorder %s178, %s179
    %p190 = scmp.eq.s32.totalorder %s18, 0
    %p191 = por %p189, %p190
    %p192 = scmp.ne.s32.totalorder %s178, %s179
    %p193 = scmp.eq.s32.totalorder %s19, 1
    %p194 = por %p192, %p193
    %p196 = scmp.ne.s32.totalorder %s179, %s195
    %p197 = scmp.eq.s32.totalorder %s19, 0
    %p198 = por %p196, %p197
    %p199 = scmp.le.s32.totalorder 1, %s13
    %p200 = scmp.lt.s32.totalorder %s13, 3
    %p201 = pnand %p199, %p200
    %p202 = pneg %p201
    // Predicated region
    $region9: #{vaegan_discriminator.11} parent=5 // pred_check
      _
    $region10: #{vaegan_discriminator.11} parent=5 // pred_check_branch
      %204 = sbr.rel (%p201) target = $region12
    $region11: #{vaegan_discriminator.11} parent=5 // pred_region
      %s205 = ssub.s32 %s13, 1
      // Predicated region
      $region13: #{vaegan_discriminator.11} parent=11 // pred_check
        %p206 = pneg %p60
      $region14: #{vaegan_discriminator.11} parent=11 // pred_check_branch
        %208 = sbr.rel (%p206) target = $region16
      $region15: #{vaegan_discriminator.11} parent=11 // pred_region
        _
      $region16: #{vaegan_discriminator.11} parent=11 // pred_fallthru
        _
      // Predicated region
      $region17: #{vaegan_discriminator.11} parent=11 // pred_check
        %p209 = pneg %p81
      $region18: #{vaegan_discriminator.11} parent=11 // pred_check_branch
        %211 = sbr.rel (%p209) target = $region20
      $region19: #{vaegan_discriminator.11} parent=11 // pred_region
        _
      $region20: #{vaegan_discriminator.11} parent=11 // pred_fallthru
        _
      // Predicated region
      $region21: #{vaegan_discriminator.11} parent=11 // pred_check
        %p212 = pneg %p102
      $region22: #{vaegan_discriminator.11} parent=11 // pred_check_branch
        %214 = sbr.rel (%p212) target = $region24
      $region23: #{vaegan_discriminator.11} parent=11 // pred_region
        _
      $region24: #{vaegan_discriminator.11} parent=11 // pred_fallthru
        _
      // Predicated region
      $region25: #{vaegan_discriminator.11} parent=11 // pred_check
        %p215 = pneg %p123
      $region26: #{vaegan_discriminator.11} parent=11 // pred_check_branch
        %217 = sbr.rel (%p215) target = $region28
      $region27: #{vaegan_discriminator.11} parent=11 // pred_region
        _
      $region28: #{vaegan_discriminator.11} parent=11 // pred_fallthru
        _
      // Predicated region
      $region29: #{vaegan_discriminator.11} parent=11 // pred_check
        %p218 = pneg %p144
      $region30: #{vaegan_discriminator.11} parent=11 // pred_check_branch
        %220 = sbr.rel (%p218) target = $region32
      $region31: #{vaegan_discriminator.11} parent=11 // pred_region
        _
      $region32: #{vaegan_discriminator.11} parent=11 // pred_fallthru
        _
      // Predicated region
      $region33: #{vaegan_discriminator.11} parent=11 // pred_check
        %p221 = pneg %p165
      $region34: #{vaegan_discriminator.11} parent=11 // pred_check_branch
        %223 = sbr.rel (%p221) target = $region36
      $region35: #{vaegan_discriminator.11} parent=11 // pred_region
        _
      $region36: #{vaegan_discriminator.11} parent=11 // pred_fallthru
        _
    $region12: #{vaegan_discriminator.11} parent=5 // pred_fallthru
      _
    %p224 = scmp.lt.s32.totalorder %s13, 2
    // Predicated region
    $region37: #{vaegan_discriminator.11} parent=5 // pred_check
      %p225 = pneg %p224
    $region38: #{vaegan_discriminator.11} parent=5 // pred_check_branch
      %227 = sbr.rel (%p225) target = $region40
    $region39: #{vaegan_discriminator.11} parent=5 // pred_region
      // Predicated region
      $region41: #{vaegan_discriminator.11} parent=39 // pred_check
        %p228 = pneg %p33
      $region42: #{vaegan_discriminator.11} parent=39 // pred_check_branch
        %230 = sbr.rel (%p228) target = $region44
      $region43: #{vaegan_discriminator.11} parent=39 // pred_region
        %p231 = scmp.lt.s32.totalorder %s13, 1
        %s232 = scalar_select %p231, %s13, 1
        %s233 = smul.addr %s232, 5
        %s234 = smul.addr %s233, 8
        %s235 = scalar_lea.vmem %s0, %s234
      $region44: #{vaegan_discriminator.11} parent=39 // pred_fallthru
        _
    $region40: #{vaegan_discriminator.11} parent=5 // pred_fallthru
      _
    %p236 = scmp.le.s32.totalorder 1, %s13
    %p237 = scmp.lt.s32.totalorder %s13, 3
    %p238 = pnand %p236, %p237
    %p239 = pneg %p238
    // Predicated region
    $region45: #{vaegan_discriminator.11} parent=5 // pred_check
      _
    $region46: #{vaegan_discriminator.11} parent=5 // pred_check_branch
      %241 = sbr.rel (%p238) target = $region48
    $region47: #{vaegan_discriminator.11} parent=5 // pred_region
      %s242 = ssub.s32 %s13, 1
      %p243 = scmp.lt.s32.totalorder %s18, 1
      %s244 = scalar_select %p243, %s18, 1
      %s245 = smul.addr %s244, 5
      %s246 = smul.addr %s245, 8
      %s247 = scalar_lea.vmem %s0, %s246
      %p248 = pneg %p39
      %p249 = pneg %p36
      %p250 = pneg %p60
      %p251 = pneg %p57
      %p252 = pneg %p81
      %p253 = pneg %p78
      %p254 = pneg %p102
      %p255 = pneg %p99
      %p256 = pneg %p123
      %p257 = pneg %p120
      %p258 = pneg %p144
      %p259 = pneg %p141
      %p260 = pneg %p165
      %p261 = pneg %p162
      %p262 = pneg %p191
      %p263 = pneg %p188
      %p264 = scmp.lt.s32.totalorder %s18, 1
      %s265 = scalar_select %p264, %s18, 1
      %s266 = smul.addr %s265, 3
      %s267 = smul.addr %s266, 8
      %s268 = scalar_lea.vmem %s7, %s267
      %p269 = scmp.lt.s32.totalorder %s18, 1
      %s270 = scalar_select %p269, %s18, 1
      %s271 = smul.addr %s270, 5
      %s272 = smul.addr %s271, 8
      %s273 = scalar_lea.vmem %s0, %s272
      %p274 = scmp.lt.s32.totalorder %s18, 1
      %s275 = scalar_select %p274, %s18, 1
      %s276 = smul.addr %s275, 3
      %s277 = smul.addr %s276, 8
      %s278 = scalar_lea.vmem %s7, %s277
      %v280 = vld [vmem:[%s273] sm:$0xff]
      %v281 = vld [vmem:[%s273 + $0x8] sm:$0xff]
      %v282 = vld [vmem:[%s273 + $0x10] sm:$0xff]
      %v283 = vld [vmem:[%s273 + $0x18] sm:$0xff]
      %v284 = vld [vmem:[%s273 + $0x20] sm:$0xff]
      %vm285 = vcmp.gt.f32.partialorder %v280, 0.0
      %vm286 = vcmp.gt.f32.partialorder %v281, 0.0
      %vm287 = vcmp.gt.f32.partialorder %v282, 0.0
      %vm288 = vcmp.gt.f32.partialorder %v283, 0.0
      %vm289 = vcmp.gt.f32.partialorder %v284, 0.0
      %v290 = vmul.f32 %v280, 0.2
      %v291 = vmul.f32 %v281, 0.2
      %v292 = vmul.f32 %v282, 0.2
      %v293 = vmul.f32 %v283, 0.2
      %v294 = vmul.f32 %v284, 0.2
      %v295 = vsel %vm285, %v280, %v290
      %v296 = vsel %vm286, %v281, %v291
      %v297 = vsel %vm287, %v282, %v292
      %v298 = vsel %vm288, %v283, %v293
      %v299 = vsel %vm289, %v284, %v294
      %300 = vst [vmem:[#allocation2] sm:$0xff] %v295
      %301 = vst [vmem:[#allocation2 + $0x8] sm:$0xff] %v296
      %302 = vst [vmem:[#allocation2 + $0x10] sm:$0xff] %v297
      %303 = vst [vmem:[#allocation2 + $0x18] sm:$0xff] %v298
      %304 = vst [vmem:[#allocation2 + $0x20] sm:$0xff] %v299
      %v305 = vld [vmem:[#allocation2] sm:$0xff]
      %v306 = vld [vmem:[#allocation2 + $0x8] sm:$0xff]
      %v307 = vld [vmem:[#allocation2 + $0x10] sm:$0xff]
      %v308 = vld [vmem:[#allocation2 + $0x1] sm:$0xff]
      %v309 = vld [vmem:[#allocation2 + $0x9] sm:$0xff]
      %v310 = vld [vmem:[#allocation2 + $0x11] sm:$0xff]
      %v311 = vld [vmem:[#allocation2 + $0x2] sm:$0xff]
      %v312 = vld [vmem:[#allocation2 + $0xa] sm:$0xff]
      %v313 = vld [vmem:[#allocation2 + $0x12] sm:$0xff]
      %v314 = vld [vmem:[#allocation2 + $0x6] sm:$0xff]
      %v315 = vld [vmem:[#allocation2 + $0xe] sm:$0xff]
      %v316 = vld [vmem:[#allocation2 + $0x16] sm:$0xff]
      %v317 = vld [vmem:[#allocation2 + $0x7] sm:$0xff]
      %v318 = vld [vmem:[#allocation2 + $0xf] sm:$0xff]
      %v319 = vld [vmem:[#allocation2 + $0x17] sm:$0xff]
      %v320 = vld [vmem:[#allocation2 + $0x18] sm:$0xff]
      %v321 = vld [vmem:[#allocation2 + $0xc] sm:$0xff]
      %v322 = vld [vmem:[#allocation2 + $0x14] sm:$0xff]
      %v323 = vld [vmem:[#allocation2 + $0x1c] sm:$0xff]
      %v324 = vld [vmem:[#allocation2 + $0xd] sm:$0xff]
      %v325 = vld [vmem:[#allocation2 + $0x15] sm:$0xff]
      %v326 = vld [vmem:[#allocation2 + $0x1d] sm:$0xff]
      %v327 = vld [vmem:[#allocation2 + $0x1e] sm:$0xff]
      %v328 = vpack.c.bf16 %v306, %v305
      %v329 = vpack.c.bf16 %v309, %v308
      %v330 = vpack.c.bf16 %v312, %v311
      %v331 = vpack.c.bf16 %v315, %v314
      %v332 = vpack.c.bf16 %v318, %v317
      %v333 = vpack.c.bf16 %v307, %v306
      %v334 = vpack.c.bf16 %v322, %v321
      %v335 = vpack.c.bf16 %v325, %v324
      %v336 = vpack.c.bf16 %v316, %v315
      %v337 = vpack.c.bf16 %v307, %v307
      %v338 = vpack.c.bf16 %v310, %v310
      %v339 = vpack.c.bf16 %v313, %v313
      %v340 = vpack.c.bf16 %v316, %v316
      %v341 = vpack.c.bf16 %v319, %v319
      %v342 = vpack.c.bf16 %v320, %v320
      %v343 = vpack.c.bf16 %v323, %v323
      %v344 = vpack.c.bf16 %v326, %v326
      %v345 = vpack.c.bf16 %v327, %v327
      %v346 = vld [vmem:[%s1] sm:$0xf]
      %v347 = vld [vmem:[%s1 + $0x4] sm:$0xf]
      %v348 = vld [vmem:[%s1 + $0x8] sm:$0xf]
      %v349 = vld [vmem:[%s1 + $0xc] sm:$0xf]
      %v350 = vld [vmem:[%s1 + $0x10] sm:$0xf]
      %v351 = vld [vmem:[%s1 + $0x14] sm:$0xf]
      %v352 = vld [vmem:[%s1 + $0x18] sm:$0xf]
      %v353 = vld [vmem:[%s1 + $0x1c] sm:$0xf]
      %v354 = vld [vmem:[%s1 + $0x20] sm:$0xf]
      %v355 = vld [vmem:[%s1 + $0x24] sm:$0xf]
      %v356 = vld [vmem:[%s1 + $0x28] sm:$0xf]
      %v357 = vld [vmem:[%s1 + $0x2c] sm:$0xf]
      %v358 = vld [vmem:[%s1 + $0x30] sm:$0xf]
      %v359 = vld [vmem:[%s1 + $0x34] sm:$0xf]
      %v360 = vld [vmem:[%s1 + $0x38] sm:$0xf]
      %v361 = vld [vmem:[%s1 + $0x3c] sm:$0xf]
      %v362 = vld [vmem:[%s1 + $0x40] sm:$0xf]
      %v363 = vld [vmem:[%s1 + $0x44] sm:$0xf]
      %v364 = vld [vmem:[%s1 + $0x48] sm:$0xf]
      %v365 = vld [vmem:[%s1 + $0x4c] sm:$0xf]
      %v366 = vld [vmem:[%s1 + $0x50] sm:$0xf]
      %v367 = vld [vmem:[%s1 + $0x54] sm:$0xf]
      %v368 = vld [vmem:[%s1 + $0x58] sm:$0xf]
      %v369 = vld [vmem:[%s1 + $0x5c] sm:$0xf]
      %v370 = vld [vmem:[%s1 + $0x60] sm:$0xf]
      %v371 = vld [vmem:[%s1 + $0x64] sm:$0xf]
      %v372 = vld [vmem:[%s1 + $0x68] sm:$0xf]
      %v373 = vld [vmem:[%s1 + $0x6c] sm:$0xf]
      %v374 = vld [vmem:[%s1 + $0x70] sm:$0xf]
      %v375 = vld [vmem:[%s1 + $0x74] sm:$0xf]
      %v376 = vld [vmem:[%s1 + $0x78] sm:$0xf]
      %v377 = vld [vmem:[%s1 + $0x7c] sm:$0xf]
      %v378 = vld [vmem:[%s1 + $0x80] sm:$0xf]
      %v379 = vld [vmem:[%s1 + $0x84] sm:$0xf]
      %v380 = vld [vmem:[%s1 + $0x88] sm:$0xf]
      %v381 = vld [vmem:[%s1 + $0x8c] sm:$0xf]
      %v382 = vld [vmem:[%s1 + $0x90] sm:$0xf]
      %v383 = vld [vmem:[%s1 + $0x94] sm:$0xf]
      %v384 = vld [vmem:[%s1 + $0x98] sm:$0xf]
      %v385 = vld [vmem:[%s1 + $0x9c] sm:$0xf]
      %v386 = vld [vmem:[%s1 + $0xa0] sm:$0xf]
      %v387 = vld [vmem:[%s1 + $0xa4] sm:$0xf]
      %v388 = vld [vmem:[%s1 + $0xa8] sm:$0xf]
      %v389 = vld [vmem:[%s1 + $0xac] sm:$0xf]
      %v390 = vld [vmem:[%s1 + $0xb0] sm:$0xf]
      %v391 = vld [vmem:[%s1 + $0xb4] sm:$0xf]
      %v392 = vld [vmem:[%s1 + $0xb8] sm:$0xf]
      %v393 = vld [vmem:[%s1 + $0xbc] sm:$0xf]
      %v394 = vld [vmem:[%s1 + $0xc0] sm:$0xf]
      %v395 = vld [vmem:[%s1 + $0xc4] sm:$0xf]
      %v396 = vld [vmem:[%s1 + $0xc8] sm:$0xf]
      %v397 = vld [vmem:[%s1 + $0xcc] sm:$0xf]
      %v398 = vld [vmem:[%s1 + $0xd0] sm:$0xf]
      %v399 = vld [vmem:[%s1 + $0xd4] sm:$0xf]
      %v400 = vld [vmem:[%s1 + $0xd8] sm:$0xf]
      %v401 = vld [vmem:[%s1 + $0xdc] sm:$0xf]
      %v402 = vld [vmem:[%s1 + $0xe0] sm:$0xf]
      %v403 = vld [vmem:[%s1 + $0xe4] sm:$0xf]
      %v404 = vld [vmem:[%s1 + $0xe8] sm:$0xf]
      %v405 = vld [vmem:[%s1 + $0xec] sm:$0xf]
      %v406 = vld [vmem:[%s1 + $0xf0] sm:$0xf]
      %v407 = vld [vmem:[%s1 + $0xf4] sm:$0xf]
      %v408 = vld [vmem:[%s1 + $0xf8] sm:$0xf]
      %v409 = vld [vmem:[%s1 + $0xfc] sm:$0xf]
      %v410 = vld [vmem:[%s1 + $0x100] sm:$0xf]
      %v411 = vld [vmem:[%s1 + $0x104] sm:$0xf]
      %v412 = vld [vmem:[%s1 + $0x108] sm:$0xf]
      %v413 = vld [vmem:[%s1 + $0x10c] sm:$0xf]
      %v414 = vld [vmem:[%s1 + $0x110] sm:$0xf]
      %v415 = vld [vmem:[%s1 + $0x114] sm:$0xf]
      %v416 = vld [vmem:[%s1 + $0x118] sm:$0xf]
      %v417 = vld [vmem:[%s1 + $0x11c] sm:$0xf]
      %v418 = vld [vmem:[%s1 + $0x120] sm:$0xf]
      %v419 = vld [vmem:[%s1 + $0x124] sm:$0xf]
      %v420 = vld [vmem:[%s1 + $0x128] sm:$0xf]
      %v421 = vld [vmem:[%s1 + $0x12c] sm:$0xf]
      %v422 = vld [vmem:[%s1 + $0x130] sm:$0xf]
      %v423 = vld [vmem:[%s1 + $0x134] sm:$0xf]
      %v424 = vld [vmem:[%s1 + $0x138] sm:$0xf]
      %v425 = vld [vmem:[%s1 + $0x13c] sm:$0xf]
      %v426 = vld [vmem:[%s1 + $0x140] sm:$0xf]
      %v427 = vld [vmem:[%s1 + $0x144] sm:$0xf]
      %v428 = vld [vmem:[%s1 + $0x148] sm:$0xf]
      %v429 = vld [vmem:[%s1 + $0x14c] sm:$0xf]
      %v430 = vld [vmem:[%s1 + $0x150] sm:$0xf]
      %v431 = vld [vmem:[%s1 + $0x154] sm:$0xf]
      %v432 = vld [vmem:[%s1 + $0x158] sm:$0xf]
      %v433 = vld [vmem:[%s1 + $0x15c] sm:$0xf]
      %v434 = vld [vmem:[%s1 + $0x160] sm:$0xf]
      %v435 = vld [vmem:[%s1 + $0x164] sm:$0xf]
      %v436 = vld [vmem:[%s1 + $0x168] sm:$0xf]
      %v437 = vld [vmem:[%s1 + $0x16c] sm:$0xf]
      %v438 = vld [vmem:[%s1 + $0x170] sm:$0xf]
      %v439 = vld [vmem:[%s1 + $0x174] sm:$0xf]
      %v440 = vld [vmem:[%s1 + $0x178] sm:$0xf]
      %v441 = vld [vmem:[%s1 + $0x17c] sm:$0xf]
      %v442 = vld [vmem:[%s1 + $0x180] sm:$0xf]
      %v443 = vld [vmem:[%s1 + $0x184] sm:$0xf]
      %v444 = vld [vmem:[%s1 + $0x188] sm:$0xf]
      %v445 = vld [vmem:[%s1 + $0x18c] sm:$0xf]
      %v446 = vld [vmem:[%s1 + $0x190] sm:$0xf]
      %v447 = vld [vmem:[%s1 + $0x194] sm:$0xf]
      %v448 = vld [vmem:[%s1 + $0x198] sm:$0xf]
      %v449 = vld [vmem:[%s1 + $0x19c] sm:$0xf]
      %v450 = vld [vmem:[%s1 + $0x1a0] sm:$0xf]
      %v451 = vld [vmem:[%s1 + $0x1a4] sm:$0xf]
      %v452 = vld [vmem:[%s1 + $0x1a8] sm:$0xf]
      %v453 = vld [vmem:[%s1 + $0x1ac] sm:$0xf]
      %v454 = vld [vmem:[%s1 + $0x1b0] sm:$0xf]
      %v455 = vld [vmem:[%s1 + $0x1b4] sm:$0xf]
      %v456 = vld [vmem:[%s1 + $0x1b8] sm:$0xf]
      %v457 = vld [vmem:[%s1 + $0x1bc] sm:$0xf]
      %v458 = vld [vmem:[%s1 + $0x1c0] sm:$0xf]
      %v459 = vld [vmem:[%s1 + $0x1c4] sm:$0xf]
      %v460 = vld [vmem:[%s1 + $0x1c8] sm:$0xf]
      %v461 = vld [vmem:[%s1 + $0x1cc] sm:$0xf]
      %v462 = vld [vmem:[%s1 + $0x1d0] sm:$0xf]
      %v463 = vld [vmem:[%s1 + $0x1d4] sm:$0xf]
      %v464 = vld [vmem:[%s1 + $0x1d8] sm:$0xf]
      %v465 = vld [vmem:[%s1 + $0x1dc] sm:$0xf]
      %v466 = vld [vmem:[%s1 + $0x1e0] sm:$0xf]
      %v467 = vld [vmem:[%s1 + $0x1e4] sm:$0xf]
      %v468 = vld [vmem:[%s1 + $0x1e8] sm:$0xf]
      %v469 = vld [vmem:[%s1 + $0x1ec] sm:$0xf]
      %v470 = vld [vmem:[%s1 + $0x1f0] sm:$0xf]
      %v471 = vld [vmem:[%s1 + $0x1f4] sm:$0xf]
      %v472 = vld [vmem:[%s1 + $0x1f8] sm:$0xf]
      %v473 = vld [vmem:[%s1 + $0x1fc] sm:$0xf]
      %v474 = vld [vmem:[%s1 + $0x200] sm:$0xf]
      %v475 = vld [vmem:[%s1 + $0x204] sm:$0xf]
      %v476 = vld [vmem:[%s1 + $0x208] sm:$0xf]
      %v477 = vld [vmem:[%s1 + $0x20c] sm:$0xf]
      %v478 = vld [vmem:[%s1 + $0x210] sm:$0xf]
      %v479 = vld [vmem:[%s1 + $0x214] sm:$0xf]
      %v480 = vld [vmem:[%s1 + $0x218] sm:$0xf]
      %v481 = vld [vmem:[%s1 + $0x21c] sm:$0xf]
      %v482 = vld [vmem:[%s1 + $0x220] sm:$0xf]
      %v483 = vld [vmem:[%s1 + $0x224] sm:$0xf]
      %v484 = vld [vmem:[%s1 + $0x228] sm:$0xf]
      %v485 = vld [vmem:[%s1 + $0x22c] sm:$0xf]
      %v486 = vld [vmem:[%s1 + $0x230] sm:$0xf]
      %v487 = vld [vmem:[%s1 + $0x234] sm:$0xf]
      %v488 = vld [vmem:[%s1 + $0x238] sm:$0xf]
      %v489 = vld [vmem:[%s1 + $0x23c] sm:$0xf]
      %v490 = vld [vmem:[%s2] sm:$0x1]
      %v492 = vlaneseq
      %v493 = vshrl.u32 %v492, 7
      %v494 = vsub.s32 0, %v493
      %v495 = vrot.slane %v490, %v494
      %v641 = vunpack.c.l.b16 %v346
      %v642 = vunpack.c.l.b16 %v347
      %v643 = vunpack.c.l.b16 %v348
      %v644 = vunpack.c.l.b16 %v349
      %v645 = vunpack.c.l.b16 %v350
      %v646 = vunpack.c.l.b16 %v351
      %v647 = vunpack.c.l.b16 %v352
      %v648 = vunpack.c.l.b16 %v353
      %v649 = vunpack.c.l.b16 %v354
      %v650 = vunpack.c.l.b16 %v355
      %v651 = vunpack.c.l.b16 %v356
      %v652 = vunpack.c.l.b16 %v357
      %v653 = vunpack.c.l.b16 %v358
      %v654 = vunpack.c.l.b16 %v359
      %v655 = vunpack.c.l.b16 %v360
      %v656 = vunpack.c.l.b16 %v361
      %v657 = vunpack.c.l.b16 %v362
      %v658 = vunpack.c.l.b16 %v363
      %v659 = vunpack.c.l.b16 %v364
      %v660 = vunpack.c.l.b16 %v365
      %v661 = vunpack.c.l.b16 %v366
      %v662 = vunpack.c.l.b16 %v367
      %v663 = vunpack.c.l.b16 %v368
      %v664 = vunpack.c.l.b16 %v369
      %v665 = vunpack.c.l.b16 %v370
      %v666 = vunpack.c.l.b16 %v371
      %v667 = vunpack.c.l.b16 %v372
      %v668 = vunpack.c.l.b16 %v373
      %v669 = vunpack.c.l.b16 %v374
      %v670 = vunpack.c.l.b16 %v375
      %v671 = vunpack.c.l.b16 %v376
      %v672 = vunpack.c.l.b16 %v377
      %v673 = vunpack.c.l.b16 %v378
      %v674 = vunpack.c.l.b16 %v379
      %v675 = vunpack.c.l.b16 %v380
      %v676 = vunpack.c.l.b16 %v381
      %v677 = vunpack.c.l.b16 %v382
      %v678 = vunpack.c.l.b16 %v383
      %v679 = vunpack.c.l.b16 %v384
      %v680 = vunpack.c.l.b16 %v385
      %v681 = vunpack.c.l.b16 %v386
      %v682 = vunpack.c.l.b16 %v387
      %v683 = vunpack.c.l.b16 %v388
      %v684 = vunpack.c.l.b16 %v389
      %v685 = vunpack.c.l.b16 %v390
      %v686 = vunpack.c.l.b16 %v391
      %v687 = vunpack.c.l.b16 %v392
      %v688 = vunpack.c.l.b16 %v393
      %v689 = vunpack.c.l.b16 %v394
      %v690 = vunpack.c.l.b16 %v395
      %v691 = vunpack.c.l.b16 %v396
      %v692 = vunpack.c.l.b16 %v397
      %v693 = vunpack.c.l.b16 %v398
      %v694 = vunpack.c.l.b16 %v399
      %v695 = vunpack.c.l.b16 %v400
      %v696 = vunpack.c.l.b16 %v401
      %v697 = vunpack.c.l.b16 %v402
      %v698 = vunpack.c.l.b16 %v403
      %v699 = vunpack.c.l.b16 %v404
      %v700 = vunpack.c.l.b16 %v405
      %v701 = vunpack.c.l.b16 %v406
      %v702 = vunpack.c.l.b16 %v407
      %v703 = vunpack.c.l.b16 %v408
      %v704 = vunpack.c.l.b16 %v409
      %v705 = vunpack.c.l.b16 %v410
      %v706 = vunpack.c.l.b16 %v411
      %v707 = vunpack.c.l.b16 %v412
      %v708 = vunpack.c.l.b16 %v413
      %v709 = vunpack.c.l.b16 %v414
      %v710 = vunpack.c.l.b16 %v415
      %v711 = vunpack.c.l.b16 %v416
      %v712 = vunpack.c.l.b16 %v417
      %v713 = vunpack.c.l.b16 %v418
      %v714 = vunpack.c.l.b16 %v419
      %v715 = vunpack.c.l.b16 %v420
      %v716 = vunpack.c.l.b16 %v421
      %v717 = vunpack.c.l.b16 %v422
      %v718 = vunpack.c.l.b16 %v423
      %v719 = vunpack.c.l.b16 %v424
      %v720 = vunpack.c.l.b16 %v425
      %v721 = vunpack.c.l.b16 %v426
      %v722 = vunpack.c.l.b16 %v427
      %v723 = vunpack.c.l.b16 %v428
      %v724 = vunpack.c.l.b16 %v429
      %v725 = vunpack.c.l.b16 %v430
      %v726 = vunpack.c.l.b16 %v431
      %v727 = vunpack.c.l.b16 %v432
      %v728 = vunpack.c.l.b16 %v433
      %v729 = vunpack.c.l.b16 %v434
      %v730 = vunpack.c.l.b16 %v435
      %v731 = vunpack.c.l.b16 %v436
      %v732 = vunpack.c.l.b16 %v437
      %v733 = vunpack.c.l.b16 %v438
      %v734 = vunpack.c.l.b16 %v439
      %v735 = vunpack.c.l.b16 %v440
      %v736 = vunpack.c.l.b16 %v441
      %v737 = vunpack.c.l.b16 %v442
      %v738 = vunpack.c.l.b16 %v443
      %v739 = vunpack.c.l.b16 %v444
      %v740 = vunpack.c.l.b16 %v445
      %v741 = vunpack.c.l.b16 %v446
      %v742 = vunpack.c.l.b16 %v447
      %v743 = vunpack.c.l.b16 %v448
      %v744 = vunpack.c.l.b16 %v449
      %v745 = vunpack.c.l.b16 %v450
      %v746 = vunpack.c.l.b16 %v451
      %v747 = vunpack.c.l.b16 %v452
      %v748 = vunpack.c.l.b16 %v453
      %v749 = vunpack.c.l.b16 %v454
      %v750 = vunpack.c.l.b16 %v455
      %v751 = vunpack.c.l.b16 %v456
      %v752 = vunpack.c.l.b16 %v457
      %v753 = vunpack.c.l.b16 %v458
      %v754 = vunpack.c.l.b16 %v459
      %v755 = vunpack.c.l.b16 %v460
      %v756 = vunpack.c.l.b16 %v461
      %v757 = vunpack.c.l.b16 %v462
      %v758 = vunpack.c.l.b16 %v463
      %v759 = vunpack.c.l.b16 %v464
      %v760 = vunpack.c.l.b16 %v465
      %v761 = vunpack.c.l.b16 %v466
      %v762 = vunpack.c.l.b16 %v467
      %v763 = vunpack.c.l.b16 %v468
      %v764 = vunpack.c.l.b16 %v469
      %v765 = vunpack.c.l.b16 %v470
      %v766 = vunpack.c.l.b16 %v471
      %v767 = vunpack.c.l.b16 %v472
      %v768 = vunpack.c.l.b16 %v473
      %v769 = vunpack.c.l.b16 %v474
      %v770 = vunpack.c.l.b16 %v475
      %v771 = vunpack.c.l.b16 %v476
      %v772 = vunpack.c.l.b16 %v477
      %v773 = vunpack.c.l.b16 %v478
      %v774 = vunpack.c.l.b16 %v479
      %v775 = vunpack.c.l.b16 %v480
      %v776 = vunpack.c.l.b16 %v481
      %v777 = vunpack.c.l.b16 %v482
      %v778 = vunpack.c.l.b16 %v483
      %v779 = vunpack.c.l.b16 %v484
      %v780 = vunpack.c.l.b16 %v485
      %v781 = vunpack.c.l.b16 %v486
      %v782 = vunpack.c.l.b16 %v487
      %v783 = vunpack.c.l.b16 %v488
      %v784 = vunpack.c.l.b16 %v489
      %v785 = vpack.c.b16 %v642, %v641
      %v786 = vpack.c.b16 %v644, %v643
      %v787 = vpack.c.b16 %v646, %v645
      %v788 = vpack.c.b16 %v648, %v647
      %v789 = vpack.c.b16 %v650, %v649
      %v790 = vpack.c.b16 %v652, %v651
      %v791 = vpack.c.b16 %v654, %v653
      %v792 = vpack.c.b16 %v656, %v655
      %v793 = vpack.c.b16 %v658, %v657
      %v794 = vpack.c.b16 %v660, %v659
      %v795 = vpack.c.b16 %v662, %v661
      %v796 = vpack.c.b16 %v664, %v663
      %v797 = vpack.c.b16 %v666, %v665
      %v798 = vpack.c.b16 %v668, %v667
      %v799 = vpack.c.b16 %v670, %v669
      %v800 = vpack.c.b16 %v672, %v671
      %v801 = vpack.c.b16 %v674, %v673
      %v802 = vpack.c.b16 %v676, %v675
      %v803 = vpack.c.b16 %v678, %v677
      %v804 = vpack.c.b16 %v680, %v679
      %v805 = vpack.c.b16 %v682, %v681
      %v806 = vpack.c.b16 %v684, %v683
      %v807 = vpack.c.b16 %v686, %v685
      %v808 = vpack.c.b16 %v688, %v687
      %v809 = vpack.c.b16 %v690, %v689
      %v810 = vpack.c.b16 %v692, %v691
      %v811 = vpack.c.b16 %v694, %v693
      %v812 = vpack.c.b16 %v696, %v695
      %v813 = vpack.c.b16 %v698, %v697
      %v814 = vpack.c.b16 %v700, %v699
      %v815 = vpack.c.b16 %v702, %v701
      %v816 = vpack.c.b16 %v704, %v703
      %v817 = vpack.c.b16 %v706, %v705
      %v818 = vpack.c.b16 %v708, %v707
      %v819 = vpack.c.b16 %v710, %v709
      %v820 = vpack.c.b16 %v712, %v711
      %v821 = vpack.c.b16 %v714, %v713
      %v822 = vpack.c.b16 %v716, %v715
      %v823 = vpack.c.b16 %v718, %v717
      %v824 = vpack.c.b16 %v720, %v719
      %v825 = vpack.c.b16 %v722, %v721
      %v826 = vpack.c.b16 %v724, %v723
      %v827 = vpack.c.b16 %v726, %v725
      %v828 = vpack.c.b16 %v728, %v727
      %v829 = vpack.c.b16 %v730, %v729
      %v830 = vpack.c.b16 %v732, %v731
      %v831 = vpack.c.b16 %v734, %v733
      %v832 = vpack.c.b16 %v736, %v735
      %v833 = vpack.c.b16 %v738, %v737
      %v834 = vpack.c.b16 %v740, %v739
      %v835 = vpack.c.b16 %v742, %v741
      %v836 = vpack.c.b16 %v744, %v743
      %v837 = vpack.c.b16 %v746, %v745
      %v838 = vpack.c.b16 %v748, %v747
      %v839 = vpack.c.b16 %v750, %v749
      %v840 = vpack.c.b16 %v752, %v751
      %v841 = vpack.c.b16 %v754, %v753
      %v842 = vpack.c.b16 %v756, %v755
      %v843 = vpack.c.b16 %v758, %v757
      %v844 = vpack.c.b16 %v760, %v759
      %v845 = vpack.c.b16 %v762, %v761
      %v846 = vpack.c.b16 %v764, %v763
      %v847 = vpack.c.b16 %v766, %v765
      %v848 = vpack.c.b16 %v768, %v767
      %v849 = vpack.c.b16 %v770, %v769
      %v850 = vpack.c.b16 %v772, %v771
      %v851 = vpack.c.b16 %v774, %v773
      %v852 = vpack.c.b16 %v776, %v775
      %v853 = vpack.c.b16 %v778, %v777
      %v854 = vpack.c.b16 %v780, %v779
      %v855 = vpack.c.b16 %v782, %v781
      %v856 = vpack.c.b16 %v784, %v783
      %929 = vmatprep.subr.bf16.mxu0 0
      %930 = vmatpush1.bf16.msra.mxu0 %v792
      %931 = vmatprep.subr.bf16.mxu0 0
      %932 = vmatpush1.bf16.msra.mxu0 %v791
      %933 = vmatprep.subr.bf16.mxu0 0
      %934 = vmatpush1.bf16.msra.mxu0 %v790
      %935 = vmatprep.subr.bf16.mxu0 0
      %936 = vmatpush1.bf16.msra.mxu0 %v789
      %937 = vmatprep.subr.bf16.mxu0 0
      %938 = vmatpush1.bf16.msra.mxu0 %v788
      %939 = vmatprep.subr.bf16.mxu0 0
      %940 = vmatpush1.bf16.msra.mxu0 %v787
      %941 = vmatprep.subr.bf16.mxu0 0
      %942 = vmatpush1.bf16.msra.mxu0 %v786
      %943 = vmatprep.subr.bf16.mxu0 0
      %944 = vmatpush1.bf16.msra.mxu0 %v785
      %945 = vmatprep.subr.bf16.mxu0 0
      %946 = vmatpush2.bf16.msra.mxu0 %v800
      %947 = vmatprep.subr.bf16.mxu0 0
      %948 = vmatpush2.bf16.msra.mxu0 %v799
      %949 = vmatprep.subr.bf16.mxu0 0
      %950 = vmatpush2.bf16.msra.mxu0 %v798
      %951 = vmatprep.subr.bf16.mxu0 0
      %952 = vmatpush2.bf16.msra.mxu0 %v797
      %953 = vmatprep.subr.bf16.mxu0 0
      %954 = vmatpush2.bf16.msra.mxu0 %v796
      %955 = vmatprep.subr.bf16.mxu0 0
      %956 = vmatpush2.bf16.msra.mxu0 %v795
      %957 = vmatprep.subr.bf16.mxu0 0
      %958 = vmatpush2.bf16.msra.mxu0 %v794
      %959 = vmatprep.subr.bf16.mxu0 0
      %960 = vmatpush2.bf16.msra.mxu0 %v793
      %961 = vmatprep.mubr.bf16.mxu0 %v329
      %962 = vmatmul.mubr.bf16.gmra.mxu0 %v328
      %v963 = vpop.f32.mrf.mxu0
      %v964 = vadd.f32 %v495, %v963
      %v965 = vpop.f32.mrf.mxu0
      %v966 = vpop.f32.mrf.mxu0
      %v967 = vadd.f32 %v495, %v966
      %v968 = vpop.f32.mrf.mxu0
      %969 = vmatprep.mubr.bf16.mxu0 %v338
      %970 = vmatmul.mubr.bf16.gmra.mxu0 %v337
      %v971 = vpop.f32.mrf.mxu0
      %v972 = vadd.f32 %v495, %v971
      %v973 = vpop.f32.mrf.mxu0
      %v974 = vpop.f32.mrf.mxu0
      %v975 = vpop.f32.mrf.mxu0
      %976 = vdwg.mxu0
      %977 = vmatprep.subr.bf16.mxu0 0
      %978 = vmatpush1.bf16.msra.mxu0 %v808
      %979 = vmatprep.subr.bf16.mxu0 0
      %980 = vmatpush1.bf16.msra.mxu0 %v807
      %981 = vmatprep.subr.bf16.mxu0 0
      %982 = vmatpush1.bf16.msra.mxu0 %v806
      %983 = vmatprep.subr.bf16.mxu0 0
      %984 = vmatpush1.bf16.msra.mxu0 %v805
      %985 = vmatprep.subr.bf16.mxu0 0
      %986 = vmatpush1.bf16.msra.mxu0 %v804
      %987 = vmatprep.subr.bf16.mxu0 0
      %988 = vmatpush1.bf16.msra.mxu0 %v803
      %989 = vmatprep.subr.bf16.mxu0 0
      %990 = vmatpush1.bf16.msra.mxu0 %v802
      %991 = vmatprep.subr.bf16.mxu0 0
      %992 = vmatpush1.bf16.msra.mxu0 %v801
      %993 = vmatprep.subr.bf16.mxu0 0
      %994 = vmatpush2.bf16.msra.mxu0 %v816
      %995 = vmatprep.subr.bf16.mxu0 0
      %996 = vmatpush2.bf16.msra.mxu0 %v815
      %997 = vmatprep.subr.bf16.mxu0 0
      %998 = vmatpush2.bf16.msra.mxu0 %v814
      %999 = vmatprep.subr.bf16.mxu0 0
      %1000 = vmatpush2.bf16.msra.mxu0 %v813
      %1001 = vmatprep.subr.bf16.mxu0 0
      %1002 = vmatpush2.bf16.msra.mxu0 %v812
      %1003 = vmatprep.subr.bf16.mxu0 0
      %1004 = vmatpush2.bf16.msra.mxu0 %v811
      %1005 = vmatprep.subr.bf16.mxu0 0
      %1006 = vmatpush2.bf16.msra.mxu0 %v810
      %1007 = vmatprep.subr.bf16.mxu0 0
      %1008 = vmatpush2.bf16.msra.mxu0 %v809
      %1009 = vmatprep.mubr.bf16.mxu0 %v331
      %1010 = vmatmul.mubr.bf16.gmra.mxu0 %v330
      %v1011 = vpop.f32.mrf.mxu0
      %v1012 = vadd.f32 %v964, %v1011
      %v1013 = vpop.f32.mrf.mxu0
      %v1014 = vpop.f32.mrf.mxu0
      %v1015 = vadd.f32 %v967, %v1014
      %v1016 = vpop.f32.mrf.mxu0
      %1017 = vmatprep.mubr.bf16.mxu0 %v340
      %1018 = vmatmul.mubr.bf16.gmra.mxu0 %v339
      %v1019 = vpop.f32.mrf.mxu0
      %v1020 = vadd.f32 %v972, %v1019
      %v1021 = vpop.f32.mrf.mxu0
      %v1022 = vpop.f32.mrf.mxu0
      %v1023 = vpop.f32.mrf.mxu0
      %1024 = vdwg.mxu0
      %1025 = vmatprep.subr.bf16.mxu0 0
      %1026 = vmatpush1.bf16.msra.mxu0 %v824
      %1027 = vmatprep.subr.bf16.mxu0 0
      %1028 = vmatpush1.bf16.msra.mxu0 %v823
      %1029 = vmatprep.subr.bf16.mxu0 0
      %1030 = vmatpush1.bf16.msra.mxu0 %v822
      %1031 = vmatprep.subr.bf16.mxu0 0
      %1032 = vmatpush1.bf16.msra.mxu0 %v821
      %1033 = vmatprep.subr.bf16.mxu0 0
      %1034 = vmatpush1.bf16.msra.mxu0 %v820
      %1035 = vmatprep.subr.bf16.mxu0 0
      %1036 = vmatpush1.bf16.msra.mxu0 %v819
      %1037 = vmatprep.subr.bf16.mxu0 0
      %1038 = vmatpush1.bf16.msra.mxu0 %v818
      %1039 = vmatprep.subr.bf16.mxu0 0
      %1040 = vmatpush1.bf16.msra.mxu0 %v817
      %1041 = vmatprep.subr.bf16.mxu0 0
      %1042 = vmatpush2.bf16.msra.mxu0 %v832
      %1043 = vmatprep.subr.bf16.mxu0 0
      %1044 = vmatpush2.bf16.msra.mxu0 %v831
      %1045 = vmatprep.subr.bf16.mxu0 0
      %1046 = vmatpush2.bf16.msra.mxu0 %v830
      %1047 = vmatprep.subr.bf16.mxu0 0
      %1048 = vmatpush2.bf16.msra.mxu0 %v829
      %1049 = vmatprep.subr.bf16.mxu0 0
      %1050 = vmatpush2.bf16.msra.mxu0 %v828
      %1051 = vmatprep.subr.bf16.mxu0 0
      %1052 = vmatpush2.bf16.msra.mxu0 %v827
      %1053 = vmatprep.subr.bf16.mxu0 0
      %1054 = vmatpush2.bf16.msra.mxu0 %v826
      %1055 = vmatprep.subr.bf16.mxu0 0
      %1056 = vmatpush2.bf16.msra.mxu0 %v825
      %1057 = vmatprep.mubr.bf16.mxu0 %v333
      %1058 = vmatmul.mubr.bf16.gmra.mxu0 %v332
      %v1059 = vpop.f32.mrf.mxu0
      %v1060 = vadd.f32 %v1012, %v1059
      %v1061 = vpop.f32.mrf.mxu0
      %v1062 = vpop.f32.mrf.mxu0
      %v1063 = vadd.f32 %v1015, %v1062
      %v1064 = vpop.f32.mrf.mxu0
      %1065 = vmatprep.mubr.bf16.mxu0 %v342
      %1066 = vmatmul.mubr.bf16.gmra.mxu0 %v341
      %v1067 = vpop.f32.mrf.mxu0
      %v1068 = vadd.f32 %v1020, %v1067
      %v1069 = vpop.f32.mrf.mxu0
      %v1070 = vpop.f32.mrf.mxu0
      %v1071 = vpop.f32.mrf.mxu0
      %1072 = vdwg.mxu0
      %1073 = vmatprep.subr.bf16.mxu0 0
      %1074 = vmatpush1.bf16.msra.mxu0 %v840
      %1075 = vmatprep.subr.bf16.mxu0 0
      %1076 = vmatpush1.bf16.msra.mxu0 %v839
      %1077 = vmatprep.subr.bf16.mxu0 0
      %1078 = vmatpush1.bf16.msra.mxu0 %v838
      %1079 = vmatprep.subr.bf16.mxu0 0
      %1080 = vmatpush1.bf16.msra.mxu0 %v837
      %1081 = vmatprep.subr.bf16.mxu0 0
      %1082 = vmatpush1.bf16.msra.mxu0 %v836
      %1083 = vmatprep.subr.bf16.mxu0 0
      %1084 = vmatpush1.bf16.msra.mxu0 %v835
      %1085 = vmatprep.subr.bf16.mxu0 0
      %1086 = vmatpush1.bf16.msra.mxu0 %v834
      %1087 = vmatprep.subr.bf16.mxu0 0
      %1088 = vmatpush1.bf16.msra.mxu0 %v833
      %1089 = vmatprep.subr.bf16.mxu0 0
      %1090 = vmatpush2.bf16.msra.mxu0 %v848
      %1091 = vmatprep.subr.bf16.mxu0 0
      %1092 = vmatpush2.bf16.msra.mxu0 %v847
      %1093 = vmatprep.subr.bf16.mxu0 0
      %1094 = vmatpush2.bf16.msra.mxu0 %v846
      %1095 = vmatprep.subr.bf16.mxu0 0
      %1096 = vmatpush2.bf16.msra.mxu0 %v845
      %1097 = vmatprep.subr.bf16.mxu0 0
      %1098 = vmatpush2.bf16.msra.mxu0 %v844
      %1099 = vmatprep.subr.bf16.mxu0 0
      %1100 = vmatpush2.bf16.msra.mxu0 %v843
      %1101 = vmatprep.subr.bf16.mxu0 0
      %1102 = vmatpush2.bf16.msra.mxu0 %v842
      %1103 = vmatprep.subr.bf16.mxu0 0
      %1104 = vmatpush2.bf16.msra.mxu0 %v841
      %1105 = vmatprep.mubr.bf16.mxu0 %v335
      %1106 = vmatmul.mubr.bf16.gmra.mxu0 %v334
      %v1107 = vpop.f32.mrf.mxu0
      %v1108 = vadd.f32 %v1060, %v1107
      %v1109 = vpop.f32.mrf.mxu0
      %v1110 = vpop.f32.mrf.mxu0
      %v1111 = vadd.f32 %v1063, %v1110
      %v1112 = vpop.f32.mrf.mxu0
      %1113 = vmatprep.mubr.bf16.mxu0 %v344
      %1114 = vmatmul.mubr.bf16.gmra.mxu0 %v343
      %v1115 = vpop.f32.mrf.mxu0
      %v1116 = vadd.f32 %v1068, %v1115
      %v1117 = vpop.f32.mrf.mxu0
      %v1118 = vpop.f32.mrf.mxu0
      %v1119 = vpop.f32.mrf.mxu0
      %1120 = vdwg.mxu0
      %1121 = vmatprep.subr.bf16.mxu0 0
      %1122 = vmatpush1.bf16.msra.mxu0 %v856
      %1123 = vmatprep.subr.bf16.mxu0 0
      %1124 = vmatpush1.bf16.msra.mxu0 %v855
      %1125 = vmatprep.subr.bf16.mxu0 0
      %1126 = vmatpush1.bf16.msra.mxu0 %v854
      %1127 = vmatprep.subr.bf16.mxu0 0
      %1128 = vmatpush1.bf16.msra.mxu0 %v853
      %1129 = vmatprep.subr.bf16.mxu0 0
      %1130 = vmatpush1.bf16.msra.mxu0 %v852
      %1131 = vmatprep.subr.bf16.mxu0 0
      %1132 = vmatpush1.bf16.msra.mxu0 %v851
      %1133 = vmatprep.subr.bf16.mxu0 0
      %1134 = vmatpush1.bf16.msra.mxu0 %v850
      %1135 = vmatprep.subr.bf16.mxu0 0
      %1136 = vmatpush1.bf16.msra.mxu0 %v849
      %1137 = vmatprep.subr.bf16.mxu0 0
      %1138 = vmatpush2.bf16.msra.mxu0 0
      %1139 = vmatprep.subr.bf16.mxu0 0
      %1140 = vmatpush2.bf16.msra.mxu0 0
      %1141 = vmatprep.subr.bf16.mxu0 0
      %1142 = vmatpush2.bf16.msra.mxu0 0
      %1143 = vmatprep.subr.bf16.mxu0 0
      %1144 = vmatpush2.bf16.msra.mxu0 0
      %1145 = vmatprep.subr.bf16.mxu0 0
      %1146 = vmatpush2.bf16.msra.mxu0 0
      %1147 = vmatprep.subr.bf16.mxu0 0
      %1148 = vmatpush2.bf16.msra.mxu0 0
      %1149 = vmatprep.subr.bf16.mxu0 0
      %1150 = vmatpush2.bf16.msra.mxu0 0
      %1151 = vmatprep.subr.bf16.mxu0 0
      %1152 = vmatpush2.bf16.msra.mxu0 0
      %1153 = vmatprep.mubr.bf16.mxu0 0
      %1154 = vmatmul.mubr.bf16.gmra.mxu0 %v336
      %v1155 = vpop.f32.mrf.mxu0
      %v1156 = vadd.f32 %v1108, %v1155
      %v1157 = vpop.f32.mrf.mxu0
      %v1158 = vpop.f32.mrf.mxu0
      %v1159 = vadd.f32 %v1111, %v1158
      %v1160 = vpop.f32.mrf.mxu0
      %1161 = vmatprep.mubr.bf16.mxu0 0
      %1162 = vmatmul.mubr.bf16.gmra.mxu0 %v345
      %v1163 = vpop.f32.mrf.mxu0
      %v1164 = vadd.f32 %v1116, %v1163
      %v1165 = vpop.f32.mrf.mxu0
      %v1166 = vpop.f32.mrf.mxu0
      %v1167 = vpop.f32.mrf.mxu0
      %1168 = vdwg.mxu0
      %vm1169 = vcmp.gt.f32.partialorder %v1156, 0.0
      %vm1170 = vcmp.gt.f32.partialorder %v1159, 0.0
      %vm1171 = vcmp.gt.f32.partialorder %v1164, 0.0
      %v1172 = vmul.f32 %v1156, 0.2
      %v1173 = vmul.f32 %v1159, 0.2
      %v1174 = vmul.f32 %v1164, 0.2
      %v1175 = vsel %vm1169, %v1156, %v1172
      %v1176 = vsel %vm1170, %v1159, %v1173
      %v1177 = vsel %vm1171, %v1164, %v1174
      %1178 = vst [vmem:[#allocation3] sm:$0xff] %v1175
      %1179 = vst [vmem:[#allocation3 + $0x8] sm:$0xff] %v1176
      %1180 = vst [vmem:[#allocation3 + $0x10] sm:$0xff] %v1177
      %1181 = vst [vmem:[#allocation4 + $0x24] sm:$0xf] 0.0
      %v1182 = vld [vmem:[#allocation3 + $0x6] sm:$0xf]
      %1183 = vst [vmem:[#allocation4 + $0x1] sm:$0xf] %v1182
      %v1184 = vld [vmem:[#allocation3 + $0x7] sm:$0x1]
      %1185 = vst [vmem:[#allocation4] sm:$0x1] %v1184
      %v1186 = vld [vmem:[#allocation3 + $0x8] sm:$0x1]
      %1187 = vst [vmem:[#allocation4 + $0x5] sm:$0x1] %v1186
      %v1188 = vld [vmem:[#allocation3] sm:$0xf]
      %1189 = vst [vmem:[#allocation4 + $0x7] sm:$0xf] %v1188
      %v1190 = vld [vmem:[#allocation3 + $0x1] sm:$0x1]
      %1191 = vst [vmem:[#allocation4 + $0x6] sm:$0x1] %v1190
      %v1192 = vld [vmem:[#allocation3 + $0x2] sm:$0x1]
      %1193 = vst [vmem:[#allocation4 + $0xb] sm:$0x1] %v1192
      %v1194 = vld [vmem:[#allocation3 + $0x6] sm:$0xf]
      %1195 = vst [vmem:[#allocation4 + $0xd] sm:$0xf] %v1194
      %v1196 = vld [vmem:[#allocation3 + $0x7] sm:$0x1]
      %1197 = vst [vmem:[#allocation4 + $0xc] sm:$0x1] %v1196
      %v1198 = vld [vmem:[#allocation3 + $0x8] sm:$0x1]
      %1199 = vst [vmem:[#allocation4 + $0x11] sm:$0x1] %v1198
      %v1200 = vld [vmem:[#allocation3 + $0xc] sm:$0xf]
      %1201 = vst [vmem:[#allocation4 + $0x13] sm:$0xf] %v1200
      %v1202 = vld [vmem:[#allocation3 + $0xd] sm:$0x1]
      %1203 = vst [vmem:[#allocation4 + $0x12] sm:$0x1] %v1202
      %v1204 = vld [vmem:[#allocation3 + $0xe] sm:$0x1]
      %1205 = vst [vmem:[#allocation4 + $0x17] sm:$0x1] %v1204
      %v1206 = vld [vmem:[#allocation3 + $0x12] sm:$0xf]
      %1207 = vst [vmem:[#allocation4 + $0x19] sm:$0xf] %v1206
      %v1208 = vld [vmem:[#allocation3 + $0x13] sm:$0x1]
      %1209 = vst [vmem:[#allocation4 + $0x18] sm:$0x1] %v1208
      %v1210 = vld [vmem:[#allocation3 + $0x14] sm:$0x1]
      %1211 = vst [vmem:[#allocation4 + $0x1d] sm:$0x1] %v1210
      %v1212 = vld [vmem:[#allocation3 + $0xc] sm:$0xf]
      %1213 = vst [vmem:[#allocation4 + $0x1f] sm:$0xf] %v1212
      %v1214 = vld [vmem:[#allocation3 + $0xd] sm:$0x1]
      %1215 = vst [vmem:[#allocation4 + $0x1e] sm:$0x1] %v1214
      %v1216 = vld [vmem:[#allocation3 + $0xe] sm:$0x1]
      %1217 = vst [vmem:[#allocation4 + $0x23] sm:$0x1] %v1216
      %v1218 = vld [vmem:[#allocation4] sm:$0xff]
      %v1219 = vld [vmem:[#allocation4 + $0x8] sm:$0xff]
      %v1220 = vld [vmem:[#allocation4 + $0x10] sm:$0xff]
      %v1221 = vld [vmem:[#allocation4 + $0x1] sm:$0xff]
      %v1222 = vld [vmem:[#allocation4 + $0x9] sm:$0xff]
      %v1223 = vld [vmem:[#allocation4 + $0x11] sm:$0xff]
      %v1224 = vld [vmem:[#allocation4 + $0x2] sm:$0xff]
      %v1225 = vld [vmem:[#allocation4 + $0xa] sm:$0xff]
      %v1226 = vld [vmem:[#allocation4 + $0x12] sm:$0xff]
      %v1227 = vld [vmem:[#allocation4 + $0x6] sm:$0xff]
      %v1228 = vld [vmem:[#allocation4 + $0xe] sm:$0xff]
      %v1229 = vld [vmem:[#allocation4 + $0x16] sm:$0xff]
      %v1230 = vld [vmem:[#allocation4 + $0x7] sm:$0xff]
      %v1231 = vld [vmem:[#allocation4 + $0xf] sm:$0xff]
      %v1232 = vld [vmem:[#allocation4 + $0x17] sm:$0xff]
      %v1233 = vld [vmem:[#allocation4 + $0x18] sm:$0xff]
      %v1234 = vld [vmem:[#allocation4 + $0xc] sm:$0xff]
      %v1235 = vld [vmem:[#allocation4 + $0x14] sm:$0xff]
      %v1236 = vld [vmem:[#allocation4 + $0x1c] sm:$0xff]
      %v1237 = vld [vmem:[#allocation4 + $0xd] sm:$0xff]
      %v1238 = vld [vmem:[#allocation4 + $0x15] sm:$0xff]
      %v1239 = vld [vmem:[#allocation4 + $0x1d] sm:$0xff]
      %v1240 = vld [vmem:[#allocation4 + $0x1e] sm:$0xff]
      %v1241 = vpack.c.bf16 %v1219, %v1218
      %v1242 = vpack.c.bf16 %v1222, %v1221
      %v1243 = vpack.c.bf16 %v1225, %v1224
      %v1244 = vpack.c.bf16 %v1228, %v1227
      %v1245 = vpack.c.bf16 %v1231, %v1230
      %v1246 = vpack.c.bf16 %v1220, %v1219
      %v1247 = vpack.c.bf16 %v1235, %v1234
      %v1248 = vpack.c.bf16 %v1238, %v1237
      %v1249 = vpack.c.bf16 %v1229, %v1228
      %v1250 = vpack.c.bf16 %v1220, %v1220
      %v1251 = vpack.c.bf16 %v1223, %v1223
      %v1252 = vpack.c.bf16 %v1226, %v1226
      %v1253 = vpack.c.bf16 %v1229, %v1229
      %v1254 = vpack.c.bf16 %v1232, %v1232
      %v1255 = vpack.c.bf16 %v1233, %v1233
      %v1256 = vpack.c.bf16 %v1236, %v1236
      %v1257 = vpack.c.bf16 %v1239, %v1239
      %v1258 = vpack.c.bf16 %v1240, %v1240
      %v1259 = vld [vmem:[%s3] sm:$0xf]
      %v1260 = vld [vmem:[%s3 + $0x4] sm:$0xf]
      %v1261 = vld [vmem:[%s3 + $0x8] sm:$0xf]
      %v1262 = vld [vmem:[%s3 + $0xc] sm:$0xf]
      %v1263 = vld [vmem:[%s3 + $0x10] sm:$0xf]
      %v1264 = vld [vmem:[%s3 + $0x14] sm:$0xf]
      %v1265 = vld [vmem:[%s3 + $0x18] sm:$0xf]
      %v1266 = vld [vmem:[%s3 + $0x1c] sm:$0xf]
      %v1267 = vld [vmem:[%s3 + $0x20] sm:$0xf]
      %v1268 = vld [vmem:[%s3 + $0x24] sm:$0xf]
      %v1269 = vld [vmem:[%s3 + $0x28] sm:$0xf]
      %v1270 = vld [vmem:[%s3 + $0x2c] sm:$0xf]
      %v1271 = vld [vmem:[%s3 + $0x30] sm:$0xf]
      %v1272 = vld [vmem:[%s3 + $0x34] sm:$0xf]
      %v1273 = vld [vmem:[%s3 + $0x38] sm:$0xf]
      %v1274 = vld [vmem:[%s3 + $0x3c] sm:$0xf]
      %v1275 = vld [vmem:[%s3 + $0x40] sm:$0xf]
      %v1276 = vld [vmem:[%s3 + $0x44] sm:$0xf]
      %v1277 = vld [vmem:[%s3 + $0x48] sm:$0xf]
      %v1278 = vld [vmem:[%s3 + $0x4c] sm:$0xf]
      %v1279 = vld [vmem:[%s3 + $0x50] sm:$0xf]
      %v1280 = vld [vmem:[%s3 + $0x54] sm:$0xf]
      %v1281 = vld [vmem:[%s3 + $0x58] sm:$0xf]
      %v1282 = vld [vmem:[%s3 + $0x5c] sm:$0xf]
      %v1283 = vld [vmem:[%s3 + $0x60] sm:$0xf]
      %v1284 = vld [vmem:[%s3 + $0x64] sm:$0xf]
      %v1285 = vld [vmem:[%s3 + $0x68] sm:$0xf]
      %v1286 = vld [vmem:[%s3 + $0x6c] sm:$0xf]
      %v1287 = vld [vmem:[%s3 + $0x70] sm:$0xf]
      %v1288 = vld [vmem:[%s3 + $0x74] sm:$0xf]
      %v1289 = vld [vmem:[%s3 + $0x78] sm:$0xf]
      %v1290 = vld [vmem:[%s3 + $0x7c] sm:$0xf]
      %v1291 = vld [vmem:[%s3 + $0x80] sm:$0xf]
      %v1292 = vld [vmem:[%s3 + $0x84] sm:$0xf]
      %v1293 = vld [vmem:[%s3 + $0x88] sm:$0xf]
      %v1294 = vld [vmem:[%s3 + $0x8c] sm:$0xf]
      %v1295 = vld [vmem:[%s3 + $0x90] sm:$0xf]
      %v1296 = vld [vmem:[%s3 + $0x94] sm:$0xf]
      %v1297 = vld [vmem:[%s3 + $0x98] sm:$0xf]
      %v1298 = vld [vmem:[%s3 + $0x9c] sm:$0xf]
      %v1299 = vld [vmem:[%s3 + $0xa0] sm:$0xf]
      %v1300 = vld [vmem:[%s3 + $0xa4] sm:$0xf]
      %v1301 = vld [vmem:[%s3 + $0xa8] sm:$0xf]
      %v1302 = vld [vmem:[%s3 + $0xac] sm:$0xf]
      %v1303 = vld [vmem:[%s3 + $0xb0] sm:$0xf]
      %v1304 = vld [vmem:[%s3 + $0xb4] sm:$0xf]
      %v1305 = vld [vmem:[%s3 + $0xb8] sm:$0xf]
      %v1306 = vld [vmem:[%s3 + $0xbc] sm:$0xf]
      %v1307 = vld [vmem:[%s3 + $0xc0] sm:$0xf]
      %v1308 = vld [vmem:[%s3 + $0xc4] sm:$0xf]
      %v1309 = vld [vmem:[%s3 + $0xc8] sm:$0xf]
      %v1310 = vld [vmem:[%s3 + $0xcc] sm:$0xf]
      %v1311 = vld [vmem:[%s3 + $0xd0] sm:$0xf]
      %v1312 = vld [vmem:[%s3 + $0xd4] sm:$0xf]
      %v1313 = vld [vmem:[%s3 + $0xd8] sm:$0xf]
      %v1314 = vld [vmem:[%s3 + $0xdc] sm:$0xf]
      %v1315 = vld [vmem:[%s3 + $0xe0] sm:$0xf]
      %v1316 = vld [vmem:[%s3 + $0xe4] sm:$0xf]
      %v1317 = vld [vmem:[%s3 + $0xe8] sm:$0xf]
      %v1318 = vld [vmem:[%s3 + $0xec] sm:$0xf]
      %v1319 = vld [vmem:[%s3 + $0xf0] sm:$0xf]
      %v1320 = vld [vmem:[%s3 + $0xf4] sm:$0xf]
      %v1321 = vld [vmem:[%s3 + $0xf8] sm:$0xf]
      %v1322 = vld [vmem:[%s3 + $0xfc] sm:$0xf]
      %v1323 = vld [vmem:[%s3 + $0x100] sm:$0xf]
      %v1324 = vld [vmem:[%s3 + $0x104] sm:$0xf]
      %v1325 = vld [vmem:[%s3 + $0x108] sm:$0xf]
      %v1326 = vld [vmem:[%s3 + $0x10c] sm:$0xf]
      %v1327 = vld [vmem:[%s3 + $0x110] sm:$0xf]
      %v1328 = vld [vmem:[%s3 + $0x114] sm:$0xf]
      %v1329 = vld [vmem:[%s3 + $0x118] sm:$0xf]
      %v1330 = vld [vmem:[%s3 + $0x11c] sm:$0xf]
      %v1331 = vld [vmem:[%s3 + $0x120] sm:$0xf]
      %v1332 = vld [vmem:[%s3 + $0x124] sm:$0xf]
      %v1333 = vld [vmem:[%s3 + $0x128] sm:$0xf]
      %v1334 = vld [vmem:[%s3 + $0x12c] sm:$0xf]
      %v1335 = vld [vmem:[%s3 + $0x130] sm:$0xf]
      %v1336 = vld [vmem:[%s3 + $0x134] sm:$0xf]
      %v1337 = vld [vmem:[%s3 + $0x138] sm:$0xf]
      %v1338 = vld [vmem:[%s3 + $0x13c] sm:$0xf]
      %v1339 = vld [vmem:[%s3 + $0x140] sm:$0xf]
      %v1340 = vld [vmem:[%s3 + $0x144] sm:$0xf]
      %v1341 = vld [vmem:[%s3 + $0x148] sm:$0xf]
      %v1342 = vld [vmem:[%s3 + $0x14c] sm:$0xf]
      %v1343 = vld [vmem:[%s3 + $0x150] sm:$0xf]
      %v1344 = vld [vmem:[%s3 + $0x154] sm:$0xf]
      %v1345 = vld [vmem:[%s3 + $0x158] sm:$0xf]
      %v1346 = vld [vmem:[%s3 + $0x15c] sm:$0xf]
      %v1347 = vld [vmem:[%s3 + $0x160] sm:$0xf]
      %v1348 = vld [vmem:[%s3 + $0x164] sm:$0xf]
      %v1349 = vld [vmem:[%s3 + $0x168] sm:$0xf]
      %v1350 = vld [vmem:[%s3 + $0x16c] sm:$0xf]
      %v1351 = vld [vmem:[%s3 + $0x170] sm:$0xf]
      %v1352 = vld [vmem:[%s3 + $0x174] sm:$0xf]
      %v1353 = vld [vmem:[%s3 + $0x178] sm:$0xf]
      %v1354 = vld [vmem:[%s3 + $0x17c] sm:$0xf]
      %v1355 = vld [vmem:[%s3 + $0x180] sm:$0xf]
      %v1356 = vld [vmem:[%s3 + $0x184] sm:$0xf]
      %v1357 = vld [vmem:[%s3 + $0x188] sm:$0xf]
      %v1358 = vld [vmem:[%s3 + $0x18c] sm:$0xf]
      %v1359 = vld [vmem:[%s3 + $0x190] sm:$0xf]
      %v1360 = vld [vmem:[%s3 + $0x194] sm:$0xf]
      %v1361 = vld [vmem:[%s3 + $0x198] sm:$0xf]
      %v1362 = vld [vmem:[%s3 + $0x19c] sm:$0xf]
      %v1363 = vld [vmem:[%s3 + $0x1a0] sm:$0xf]
      %v1364 = vld [vmem:[%s3 + $0x1a4] sm:$0xf]
      %v1365 = vld [vmem:[%s3 + $0x1a8] sm:$0xf]
      %v1366 = vld [vmem:[%s3 + $0x1ac] sm:$0xf]
      %v1367 = vld [vmem:[%s3 + $0x1b0] sm:$0xf]
      %v1368 = vld [vmem:[%s3 + $0x1b4] sm:$0xf]
      %v1369 = vld [vmem:[%s3 + $0x1b8] sm:$0xf]
      %v1370 = vld [vmem:[%s3 + $0x1bc] sm:$0xf]
      %v1371 = vld [vmem:[%s3 + $0x1c0] sm:$0xf]
      %v1372 = vld [vmem:[%s3 + $0x1c4] sm:$0xf]
      %v1373 = vld [vmem:[%s3 + $0x1c8] sm:$0xf]
      %v1374 = vld [vmem:[%s3 + $0x1cc] sm:$0xf]
      %v1375 = vld [vmem:[%s3 + $0x1d0] sm:$0xf]
      %v1376 = vld [vmem:[%s3 + $0x1d4] sm:$0xf]
      %v1377 = vld [vmem:[%s3 + $0x1d8] sm:$0xf]
      %v1378 = vld [vmem:[%s3 + $0x1dc] sm:$0xf]
      %v1379 = vld [vmem:[%s3 + $0x1e0] sm:$0xf]
      %v1380 = vld [vmem:[%s3 + $0x1e4] sm:$0xf]
      %v1381 = vld [vmem:[%s3 + $0x1e8] sm:$0xf]
      %v1382 = vld [vmem:[%s3 + $0x1ec] sm:$0xf]
      %v1383 = vld [vmem:[%s3 + $0x1f0] sm:$0xf]
      %v1384 = vld [vmem:[%s3 + $0x1f4] sm:$0xf]
      %v1385 = vld [vmem:[%s3 + $0x1f8] sm:$0xf]
      %v1386 = vld [vmem:[%s3 + $0x1fc] sm:$0xf]
      %v1387 = vld [vmem:[%s3 + $0x200] sm:$0xf]
      %v1388 = vld [vmem:[%s3 + $0x204] sm:$0xf]
      %v1389 = vld [vmem:[%s3 + $0x208] sm:$0xf]
      %v1390 = vld [vmem:[%s3 + $0x20c] sm:$0xf]
      %v1391 = vld [vmem:[%s3 + $0x210] sm:$0xf]
      %v1392 = vld [vmem:[%s3 + $0x214] sm:$0xf]
      %v1393 = vld [vmem:[%s3 + $0x218] sm:$0xf]
      %v1394 = vld [vmem:[%s3 + $0x21c] sm:$0xf]
      %v1395 = vld [vmem:[%s3 + $0x220] sm:$0xf]
      %v1396 = vld [vmem:[%s3 + $0x224] sm:$0xf]
      %v1397 = vld [vmem:[%s3 + $0x228] sm:$0xf]
      %v1398 = vld [vmem:[%s3 + $0x22c] sm:$0xf]
      %v1399 = vld [vmem:[%s3 + $0x230] sm:$0xf]
      %v1400 = vld [vmem:[%s3 + $0x234] sm:$0xf]
      %v1401 = vld [vmem:[%s3 + $0x238] sm:$0xf]
      %v1402 = vld [vmem:[%s3 + $0x23c] sm:$0xf]
      %v1403 = vld [vmem:[%s4] sm:$0x1]
      %v1405 = vlaneseq
      %v1406 = vshrl.u32 %v1405, 7
      %v1407 = vsub.s32 0, %v1406
      %v1408 = vrot.slane %v1403, %v1407
      %v1554 = vunpack.c.l.b16 %v1259
      %v1555 = vunpack.c.l.b16 %v1260
      %v1556 = vunpack.c.l.b16 %v1261
      %v1557 = vunpack.c.l.b16 %v1262
      %v1558 = vunpack.c.l.b16 %v1263
      %v1559 = vunpack.c.l.b16 %v1264
      %v1560 = vunpack.c.l.b16 %v1265
      %v1561 = vunpack.c.l.b16 %v1266
      %v1562 = vunpack.c.l.b16 %v1267
      %v1563 = vunpack.c.l.b16 %v1268
      %v1564 = vunpack.c.l.b16 %v1269
      %v1565 = vunpack.c.l.b16 %v1270
      %v1566 = vunpack.c.l.b16 %v1271
      %v1567 = vunpack.c.l.b16 %v1272
      %v1568 = vunpack.c.l.b16 %v1273
      %v1569 = vunpack.c.l.b16 %v1274
      %v1570 = vunpack.c.l.b16 %v1275
      %v1571 = vunpack.c.l.b16 %v1276
      %v1572 = vunpack.c.l.b16 %v1277
      %v1573 = vunpack.c.l.b16 %v1278
      %v1574 = vunpack.c.l.b16 %v1279
      %v1575 = vunpack.c.l.b16 %v1280
      %v1576 = vunpack.c.l.b16 %v1281
      %v1577 = vunpack.c.l.b16 %v1282
      %v1578 = vunpack.c.l.b16 %v1283
      %v1579 = vunpack.c.l.b16 %v1284
      %v1580 = vunpack.c.l.b16 %v1285
      %v1581 = vunpack.c.l.b16 %v1286
      %v1582 = vunpack.c.l.b16 %v1287
      %v1583 = vunpack.c.l.b16 %v1288
      %v1584 = vunpack.c.l.b16 %v1289
      %v1585 = vunpack.c.l.b16 %v1290
      %v1586 = vunpack.c.l.b16 %v1291
      %v1587 = vunpack.c.l.b16 %v1292
      %v1588 = vunpack.c.l.b16 %v1293
      %v1589 = vunpack.c.l.b16 %v1294
      %v1590 = vunpack.c.l.b16 %v1295
      %v1591 = vunpack.c.l.b16 %v1296
      %v1592 = vunpack.c.l.b16 %v1297
      %v1593 = vunpack.c.l.b16 %v1298
      %v1594 = vunpack.c.l.b16 %v1299
      %v1595 = vunpack.c.l.b16 %v1300
      %v1596 = vunpack.c.l.b16 %v1301
      %v1597 = vunpack.c.l.b16 %v1302
      %v1598 = vunpack.c.l.b16 %v1303
      %v1599 = vunpack.c.l.b16 %v1304
      %v1600 = vunpack.c.l.b16 %v1305
      %v1601 = vunpack.c.l.b16 %v1306
      %v1602 = vunpack.c.l.b16 %v1307
      %v1603 = vunpack.c.l.b16 %v1308
      %v1604 = vunpack.c.l.b16 %v1309
      %v1605 = vunpack.c.l.b16 %v1310
      %v1606 = vunpack.c.l.b16 %v1311
      %v1607 = vunpack.c.l.b16 %v1312
      %v1608 = vunpack.c.l.b16 %v1313
      %v1609 = vunpack.c.l.b16 %v1314
      %v1610 = vunpack.c.l.b16 %v1315
      %v1611 = vunpack.c.l.b16 %v1316
      %v1612 = vunpack.c.l.b16 %v1317
      %v1613 = vunpack.c.l.b16 %v1318
      %v1614 = vunpack.c.l.b16 %v1319
      %v1615 = vunpack.c.l.b16 %v1320
      %v1616 = vunpack.c.l.b16 %v1321
      %v1617 = vunpack.c.l.b16 %v1322
      %v1618 = vunpack.c.l.b16 %v1323
      %v1619 = vunpack.c.l.b16 %v1324
      %v1620 = vunpack.c.l.b16 %v1325
      %v1621 = vunpack.c.l.b16 %v1326
      %v1622 = vunpack.c.l.b16 %v1327
      %v1623 = vunpack.c.l.b16 %v1328
      %v1624 = vunpack.c.l.b16 %v1329
      %v1625 = vunpack.c.l.b16 %v1330
      %v1626 = vunpack.c.l.b16 %v1331
      %v1627 = vunpack.c.l.b16 %v1332
      %v1628 = vunpack.c.l.b16 %v1333
      %v1629 = vunpack.c.l.b16 %v1334
      %v1630 = vunpack.c.l.b16 %v1335
      %v1631 = vunpack.c.l.b16 %v1336
      %v1632 = vunpack.c.l.b16 %v1337
      %v1633 = vunpack.c.l.b16 %v1338
      %v1634 = vunpack.c.l.b16 %v1339
      %v1635 = vunpack.c.l.b16 %v1340
      %v1636 = vunpack.c.l.b16 %v1341
      %v1637 = vunpack.c.l.b16 %v1342
      %v1638 = vunpack.c.l.b16 %v1343
      %v1639 = vunpack.c.l.b16 %v1344
      %v1640 = vunpack.c.l.b16 %v1345
      %v1641 = vunpack.c.l.b16 %v1346
      %v1642 = vunpack.c.l.b16 %v1347
      %v1643 = vunpack.c.l.b16 %v1348
      %v1644 = vunpack.c.l.b16 %v1349
      %v1645 = vunpack.c.l.b16 %v1350
      %v1646 = vunpack.c.l.b16 %v1351
      %v1647 = vunpack.c.l.b16 %v1352
      %v1648 = vunpack.c.l.b16 %v1353
      %v1649 = vunpack.c.l.b16 %v1354
      %v1650 = vunpack.c.l.b16 %v1355
      %v1651 = vunpack.c.l.b16 %v1356
      %v1652 = vunpack.c.l.b16 %v1357
      %v1653 = vunpack.c.l.b16 %v1358
      %v1654 = vunpack.c.l.b16 %v1359
      %v1655 = vunpack.c.l.b16 %v1360
      %v1656 = vunpack.c.l.b16 %v1361
      %v1657 = vunpack.c.l.b16 %v1362
      %v1658 = vunpack.c.l.b16 %v1363
      %v1659 = vunpack.c.l.b16 %v1364
      %v1660 = vunpack.c.l.b16 %v1365
      %v1661 = vunpack.c.l.b16 %v1366
      %v1662 = vunpack.c.l.b16 %v1367
      %v1663 = vunpack.c.l.b16 %v1368
      %v1664 = vunpack.c.l.b16 %v1369
      %v1665 = vunpack.c.l.b16 %v1370
      %v1666 = vunpack.c.l.b16 %v1371
      %v1667 = vunpack.c.l.b16 %v1372
      %v1668 = vunpack.c.l.b16 %v1373
      %v1669 = vunpack.c.l.b16 %v1374
      %v1670 = vunpack.c.l.b16 %v1375
      %v1671 = vunpack.c.l.b16 %v1376
      %v1672 = vunpack.c.l.b16 %v1377
      %v1673 = vunpack.c.l.b16 %v1378
      %v1674 = vunpack.c.l.b16 %v1379
      %v1675 = vunpack.c.l.b16 %v1380
      %v1676 = vunpack.c.l.b16 %v1381
      %v1677 = vunpack.c.l.b16 %v1382
      %v1678 = vunpack.c.l.b16 %v1383
      %v1679 = vunpack.c.l.b16 %v1384
      %v1680 = vunpack.c.l.b16 %v1385
      %v1681 = vunpack.c.l.b16 %v1386
      %v1682 = vunpack.c.l.b16 %v1387
      %v1683 = vunpack.c.l.b16 %v1388
      %v1684 = vunpack.c.l.b16 %v1389
      %v1685 = vunpack.c.l.b16 %v1390
      %v1686 = vunpack.c.l.b16 %v1391
      %v1687 = vunpack.c.l.b16 %v1392
      %v1688 = vunpack.c.l.b16 %v1393
      %v1689 = vunpack.c.l.b16 %v1394
      %v1690 = vunpack.c.l.b16 %v1395
      %v1691 = vunpack.c.l.b16 %v1396
      %v1692 = vunpack.c.l.b16 %v1397
      %v1693 = vunpack.c.l.b16 %v1398
      %v1694 = vunpack.c.l.b16 %v1399
      %v1695 = vunpack.c.l.b16 %v1400
      %v1696 = vunpack.c.l.b16 %v1401
      %v1697 = vunpack.c.l.b16 %v1402
      %v1698 = vpack.c.b16 %v1555, %v1554
      %v1699 = vpack.c.b16 %v1557, %v1556
      %v1700 = vpack.c.b16 %v1559, %v1558
      %v1701 = vpack.c.b16 %v1561, %v1560
      %v1702 = vpack.c.b16 %v1563, %v1562
      %v1703 = vpack.c.b16 %v1565, %v1564
      %v1704 = vpack.c.b16 %v1567, %v1566
      %v1705 = vpack.c.b16 %v1569, %v1568
      %v1706 = vpack.c.b16 %v1571, %v1570
      %v1707 = vpack.c.b16 %v1573, %v1572
      %v1708 = vpack.c.b16 %v1575, %v1574
      %v1709 = vpack.c.b16 %v1577, %v1576
      %v1710 = vpack.c.b16 %v1579, %v1578
      %v1711 = vpack.c.b16 %v1581, %v1580
      %v1712 = vpack.c.b16 %v1583, %v1582
      %v1713 = vpack.c.b16 %v1585, %v1584
      %v1714 = vpack.c.b16 %v1587, %v1586
      %v1715 = vpack.c.b16 %v1589, %v1588
      %v1716 = vpack.c.b16 %v1591, %v1590
      %v1717 = vpack.c.b16 %v1593, %v1592
      %v1718 = vpack.c.b16 %v1595, %v1594
      %v1719 = vpack.c.b16 %v1597, %v1596
      %v1720 = vpack.c.b16 %v1599, %v1598
      %v1721 = vpack.c.b16 %v1601, %v1600
      %v1722 = vpack.c.b16 %v1603, %v1602
      %v1723 = vpack.c.b16 %v1605, %v1604
      %v1724 = vpack.c.b16 %v1607, %v1606
      %v1725 = vpack.c.b16 %v1609, %v1608
      %v1726 = vpack.c.b16 %v1611, %v1610
      %v1727 = vpack.c.b16 %v1613, %v1612
      %v1728 = vpack.c.b16 %v1615, %v1614
      %v1729 = vpack.c.b16 %v1617, %v1616
      %v1730 = vpack.c.b16 %v1619, %v1618
      %v1731 = vpack.c.b16 %v1621, %v1620
      %v1732 = vpack.c.b16 %v1623, %v1622
      %v1733 = vpack.c.b16 %v1625, %v1624
      %v1734 = vpack.c.b16 %v1627, %v1626
      %v1735 = vpack.c.b16 %v1629, %v1628
      %v1736 = vpack.c.b16 %v1631, %v1630
      %v1737 = vpack.c.b16 %v1633, %v1632
      %v1738 = vpack.c.b16 %v1635, %v1634
      %v1739 = vpack.c.b16 %v1637, %v1636
      %v1740 = vpack.c.b16 %v1639, %v1638
      %v1741 = vpack.c.b16 %v1641, %v1640
      %v1742 = vpack.c.b16 %v1643, %v1642
      %v1743 = vpack.c.b16 %v1645, %v1644
      %v1744 = vpack.c.b16 %v1647, %v1646
      %v1745 = vpack.c.b16 %v1649, %v1648
      %v1746 = vpack.c.b16 %v1651, %v1650
      %v1747 = vpack.c.b16 %v1653, %v1652
      %v1748 = vpack.c.b16 %v1655, %v1654
      %v1749 = vpack.c.b16 %v1657, %v1656
      %v1750 = vpack.c.b16 %v1659, %v1658
      %v1751 = vpack.c.b16 %v1661, %v1660
      %v1752 = vpack.c.b16 %v1663, %v1662
      %v1753 = vpack.c.b16 %v1665, %v1664
      %v1754 = vpack.c.b16 %v1667, %v1666
      %v1755 = vpack.c.b16 %v1669, %v1668
      %v1756 = vpack.c.b16 %v1671, %v1670
      %v1757 = vpack.c.b16 %v1673, %v1672
      %v1758 = vpack.c.b16 %v1675, %v1674
      %v1759 = vpack.c.b16 %v1677, %v1676
      %v1760 = vpack.c.b16 %v1679, %v1678
      %v1761 = vpack.c.b16 %v1681, %v1680
      %v1762 = vpack.c.b16 %v1683, %v1682
      %v1763 = vpack.c.b16 %v1685, %v1684
      %v1764 = vpack.c.b16 %v1687, %v1686
      %v1765 = vpack.c.b16 %v1689, %v1688
      %v1766 = vpack.c.b16 %v1691, %v1690
      %v1767 = vpack.c.b16 %v1693, %v1692
      %v1768 = vpack.c.b16 %v1695, %v1694
      %v1769 = vpack.c.b16 %v1697, %v1696
      %1842 = vmatprep.subr.bf16.mxu0 0
      %1843 = vmatpush1.bf16.msra.mxu0 %v1705
      %1844 = vmatprep.subr.bf16.mxu0 0
      %1845 = vmatpush1.bf16.msra.mxu0 %v1704
      %1846 = vmatprep.subr.bf16.mxu0 0
      %1847 = vmatpush1.bf16.msra.mxu0 %v1703
      %1848 = vmatprep.subr.bf16.mxu0 0
      %1849 = vmatpush1.bf16.msra.mxu0 %v1702
      %1850 = vmatprep.subr.bf16.mxu0 0
      %1851 = vmatpush1.bf16.msra.mxu0 %v1701
      %1852 = vmatprep.subr.bf16.mxu0 0
      %1853 = vmatpush1.bf16.msra.mxu0 %v1700
      %1854 = vmatprep.subr.bf16.mxu0 0
      %1855 = vmatpush1.bf16.msra.mxu0 %v1699
      %1856 = vmatprep.subr.bf16.mxu0 0
      %1857 = vmatpush1.bf16.msra.mxu0 %v1698
      %1858 = vmatprep.subr.bf16.mxu0 0
      %1859 = vmatpush2.bf16.msra.mxu0 %v1713
      %1860 = vmatprep.subr.bf16.mxu0 0
      %1861 = vmatpush2.bf16.msra.mxu0 %v1712
      %1862 = vmatprep.subr.bf16.mxu0 0
      %1863 = vmatpush2.bf16.msra.mxu0 %v1711
      %1864 = vmatprep.subr.bf16.mxu0 0
      %1865 = vmatpush2.bf16.msra.mxu0 %v1710
      %1866 = vmatprep.subr.bf16.mxu0 0
      %1867 = vmatpush2.bf16.msra.mxu0 %v1709
      %1868 = vmatprep.subr.bf16.mxu0 0
      %1869 = vmatpush2.bf16.msra.mxu0 %v1708
      %1870 = vmatprep.subr.bf16.mxu0 0
      %1871 = vmatpush2.bf16.msra.mxu0 %v1707
      %1872 = vmatprep.subr.bf16.mxu0 0
      %1873 = vmatpush2.bf16.msra.mxu0 %v1706
      %1874 = vmatprep.mubr.bf16.mxu0 %v1242
      %1875 = vmatmul.mubr.bf16.gmra.mxu0 %v1241
      %v1876 = vpop.f32.mrf.mxu0
      %v1877 = vadd.f32 %v1408, %v1876
      %v1878 = vpop.f32.mrf.mxu0
      %v1879 = vpop.f32.mrf.mxu0
      %v1880 = vadd.f32 %v1408, %v1879
      %v1881 = vpop.f32.mrf.mxu0
      %1882 = vmatprep.mubr.bf16.mxu0 %v1251
      %1883 = vmatmul.mubr.bf16.gmra.mxu0 %v1250
      %v1884 = vpop.f32.mrf.mxu0
      %v1885 = vadd.f32 %v1408, %v1884
      %v1886 = vpop.f32.mrf.mxu0
      %v1887 = vpop.f32.mrf.mxu0
      %v1888 = vpop.f32.mrf.mxu0
      %1889 = vdwg.mxu0
      %1890 = vmatprep.subr.bf16.mxu0 0
      %1891 = vmatpush1.bf16.msra.mxu0 %v1721
      %1892 = vmatprep.subr.bf16.mxu0 0
      %1893 = vmatpush1.bf16.msra.mxu0 %v1720
      %1894 = vmatprep.subr.bf16.mxu0 0
      %1895 = vmatpush1.bf16.msra.mxu0 %v1719
      %1896 = vmatprep.subr.bf16.mxu0 0
      %1897 = vmatpush1.bf16.msra.mxu0 %v1718
      %1898 = vmatprep.subr.bf16.mxu0 0
      %1899 = vmatpush1.bf16.msra.mxu0 %v1717
      %1900 = vmatprep.subr.bf16.mxu0 0
      %1901 = vmatpush1.bf16.msra.mxu0 %v1716
      %1902 = vmatprep.subr.bf16.mxu0 0
      %1903 = vmatpush1.bf16.msra.mxu0 %v1715
      %1904 = vmatprep.subr.bf16.mxu0 0
      %1905 = vmatpush1.bf16.msra.mxu0 %v1714
      %1906 = vmatprep.subr.bf16.mxu0 0
      %1907 = vmatpush2.bf16.msra.mxu0 %v1729
      %1908 = vmatprep.subr.bf16.mxu0 0
      %1909 = vmatpush2.bf16.msra.mxu0 %v1728
      %1910 = vmatprep.subr.bf16.mxu0 0
      %1911 = vmatpush2.bf16.msra.mxu0 %v1727
      %1912 = vmatprep.subr.bf16.mxu0 0
      %1913 = vmatpush2.bf16.msra.mxu0 %v1726
      %1914 = vmatprep.subr.bf16.mxu0 0
      %1915 = vmatpush2.bf16.msra.mxu0 %v1725
      %1916 = vmatprep.subr.bf16.mxu0 0
      %1917 = vmatpush2.bf16.msra.mxu0 %v1724
      %1918 = vmatprep.subr.bf16.mxu0 0
      %1919 = vmatpush2.bf16.msra.mxu0 %v1723
      %1920 = vmatprep.subr.bf16.mxu0 0
      %1921 = vmatpush2.bf16.msra.mxu0 %v1722
      %1922 = vmatprep.mubr.bf16.mxu0 %v1244
      %1923 = vmatmul.mubr.bf16.gmra.mxu0 %v1243
      %v1924 = vpop.f32.mrf.mxu0
      %v1925 = vadd.f32 %v1877, %v1924
      %v1926 = vpop.f32.mrf.mxu0
      %v1927 = vpop.f32.mrf.mxu0
      %v1928 = vadd.f32 %v1880, %v1927
      %v1929 = vpop.f32.mrf.mxu0
      %1930 = vmatprep.mubr.bf16.mxu0 %v1253
      %1931 = vmatmul.mubr.bf16.gmra.mxu0 %v1252
      %v1932 = vpop.f32.mrf.mxu0
      %v1933 = vadd.f32 %v1885, %v1932
      %v1934 = vpop.f32.mrf.mxu0
      %v1935 = vpop.f32.mrf.mxu0
      %v1936 = vpop.f32.mrf.mxu0
      %1937 = vdwg.mxu0
      %1938 = vmatprep.subr.bf16.mxu0 0
      %1939 = vmatpush1.bf16.msra.mxu0 %v1737
      %1940 = vmatprep.subr.bf16.mxu0 0
      %1941 = vmatpush1.bf16.msra.mxu0 %v1736
      %1942 = vmatprep.subr.bf16.mxu0 0
      %1943 = vmatpush1.bf16.msra.mxu0 %v1735
      %1944 = vmatprep.subr.bf16.mxu0 0
      %1945 = vmatpush1.bf16.msra.mxu0 %v1734
      %1946 = vmatprep.subr.bf16.mxu0 0
      %1947 = vmatpush1.bf16.msra.mxu0 %v1733
      %1948 = vmatprep.subr.bf16.mxu0 0
      %1949 = vmatpush1.bf16.msra.mxu0 %v1732
      %1950 = vmatprep.subr.bf16.mxu0 0
      %1951 = vmatpush1.bf16.msra.mxu0 %v1731
      %1952 = vmatprep.subr.bf16.mxu0 0
      %1953 = vmatpush1.bf16.msra.mxu0 %v1730
      %1954 = vmatprep.subr.bf16.mxu0 0
      %1955 = vmatpush2.bf16.msra.mxu0 %v1745
      %1956 = vmatprep.subr.bf16.mxu0 0
      %1957 = vmatpush2.bf16.msra.mxu0 %v1744
      %1958 = vmatprep.subr.bf16.mxu0 0
      %1959 = vmatpush2.bf16.msra.mxu0 %v1743
      %1960 = vmatprep.subr.bf16.mxu0 0
      %1961 = vmatpush2.bf16.msra.mxu0 %v1742
      %1962 = vmatprep.subr.bf16.mxu0 0
      %1963 = vmatpush2.bf16.msra.mxu0 %v1741
      %1964 = vmatprep.subr.bf16.mxu0 0
      %1965 = vmatpush2.bf16.msra.mxu0 %v1740
      %1966 = vmatprep.subr.bf16.mxu0 0
      %1967 = vmatpush2.bf16.msra.mxu0 %v1739
      %1968 = vmatprep.subr.bf16.mxu0 0
      %1969 = vmatpush2.bf16.msra.mxu0 %v1738
      %1970 = vmatprep.mubr.bf16.mxu0 %v1246
      %1971 = vmatmul.mubr.bf16.gmra.mxu0 %v1245
      %v1972 = vpop.f32.mrf.mxu0
      %v1973 = vadd.f32 %v1925, %v1972
      %v1974 = vpop.f32.mrf.mxu0
      %v1975 = vpop.f32.mrf.mxu0
      %v1976 = vadd.f32 %v1928, %v1975
      %v1977 = vpop.f32.mrf.mxu0
      %1978 = vmatprep.mubr.bf16.mxu0 %v1255
      %1979 = vmatmul.mubr.bf16.gmra.mxu0 %v1254
      %v1980 = vpop.f32.mrf.mxu0
      %v1981 = vadd.f32 %v1933, %v1980
      %v1982 = vpop.f32.mrf.mxu0
      %v1983 = vpop.f32.mrf.mxu0
      %v1984 = vpop.f32.mrf.mxu0
      %1985 = vdwg.mxu0
      %1986 = vmatprep.subr.bf16.mxu0 0
      %1987 = vmatpush1.bf16.msra.mxu0 %v1753
      %1988 = vmatprep.subr.bf16.mxu0 0
      %1989 = vmatpush1.bf16.msra.mxu0 %v1752
      %1990 = vmatprep.subr.bf16.mxu0 0
      %1991 = vmatpush1.bf16.msra.mxu0 %v1751
      %1992 = vmatprep.subr.bf16.mxu0 0
      %1993 = vmatpush1.bf16.msra.mxu0 %v1750
      %1994 = vmatprep.subr.bf16.mxu0 0
      %1995 = vmatpush1.bf16.msra.mxu0 %v1749
      %1996 = vmatprep.subr.bf16.mxu0 0
      %1997 = vmatpush1.bf16.msra.mxu0 %v1748
      %1998 = vmatprep.subr.bf16.mxu0 0
      %1999 = vmatpush1.bf16.msra.mxu0 %v1747
      %2000 = vmatprep.subr.bf16.mxu0 0
      %2001 = vmatpush1.bf16.msra.mxu0 %v1746
      %2002 = vmatprep.subr.bf16.mxu0 0
      %2003 = vmatpush2.bf16.msra.mxu0 %v1761
      %2004 = vmatprep.subr.bf16.mxu0 0
      %2005 = vmatpush2.bf16.msra.mxu0 %v1760
      %2006 = vmatprep.subr.bf16.mxu0 0
      %2007 = vmatpush2.bf16.msra.mxu0 %v1759
      %2008 = vmatprep.subr.bf16.mxu0 0
      %2009 = vmatpush2.bf16.msra.mxu0 %v1758
      %2010 = vmatprep.subr.bf16.mxu0 0
      %2011 = vmatpush2.bf16.msra.mxu0 %v1757
      %2012 = vmatprep.subr.bf16.mxu0 0
      %2013 = vmatpush2.bf16.msra.mxu0 %v1756
      %2014 = vmatprep.subr.bf16.mxu0 0
      %2015 = vmatpush2.bf16.msra.mxu0 %v1755
      %2016 = vmatprep.subr.bf16.mxu0 0
      %2017 = vmatpush2.bf16.msra.mxu0 %v1754
      %2018 = vmatprep.mubr.bf16.mxu0 %v1248
      %2019 = vmatmul.mubr.bf16.gmra.mxu0 %v1247
      %v2020 = vpop.f32.mrf.mxu0
      %v2021 = vadd.f32 %v1973, %v2020
      %v2022 = vpop.f32.mrf.mxu0
      %v2023 = vpop.f32.mrf.mxu0
      %v2024 = vadd.f32 %v1976, %v2023
      %v2025 = vpop.f32.mrf.mxu0
      %2026 = vmatprep.mubr.bf16.mxu0 %v1257
      %2027 = vmatmul.mubr.bf16.gmra.mxu0 %v1256
      %v2028 = vpop.f32.mrf.mxu0
      %v2029 = vadd.f32 %v1981, %v2028
      %v2030 = vpop.f32.mrf.mxu0
      %v2031 = vpop.f32.mrf.mxu0
      %v2032 = vpop.f32.mrf.mxu0
      %2033 = vdwg.mxu0
      %2034 = vmatprep.subr.bf16.mxu0 0
      %2035 = vmatpush1.bf16.msra.mxu0 %v1769
      %2036 = vmatprep.subr.bf16.mxu0 0
      %2037 = vmatpush1.bf16.msra.mxu0 %v1768
      %2038 = vmatprep.subr.bf16.mxu0 0
      %2039 = vmatpush1.bf16.msra.mxu0 %v1767
      %2040 = vmatprep.subr.bf16.mxu0 0
      %2041 = vmatpush1.bf16.msra.mxu0 %v1766
      %2042 = vmatprep.subr.bf16.mxu0 0
      %2043 = vmatpush1.bf16.msra.mxu0 %v1765
      %2044 = vmatprep.subr.bf16.mxu0 0
      %2045 = vmatpush1.bf16.msra.mxu0 %v1764
      %2046 = vmatprep.subr.bf16.mxu0 0
      %2047 = vmatpush1.bf16.msra.mxu0 %v1763
      %2048 = vmatprep.subr.bf16.mxu0 0
      %2049 = vmatpush1.bf16.msra.mxu0 %v1762
      %2050 = vmatprep.subr.bf16.mxu0 0
      %2051 = vmatpush2.bf16.msra.mxu0 0
      %2052 = vmatprep.subr.bf16.mxu0 0
      %2053 = vmatpush2.bf16.msra.mxu0 0
      %2054 = vmatprep.subr.bf16.mxu0 0
      %2055 = vmatpush2.bf16.msra.mxu0 0
      %2056 = vmatprep.subr.bf16.mxu0 0
      %2057 = vmatpush2.bf16.msra.mxu0 0
      %2058 = vmatprep.subr.bf16.mxu0 0
      %2059 = vmatpush2.bf16.msra.mxu0 0
      %2060 = vmatprep.subr.bf16.mxu0 0
      %2061 = vmatpush2.bf16.msra.mxu0 0
      %2062 = vmatprep.subr.bf16.mxu0 0
      %2063 = vmatpush2.bf16.msra.mxu0 0
      %2064 = vmatprep.subr.bf16.mxu0 0
      %2065 = vmatpush2.bf16.msra.mxu0 0
      %2066 = vmatprep.mubr.bf16.mxu0 0
      %2067 = vmatmul.mubr.bf16.gmra.mxu0 %v1249
      %v2068 = vpop.f32.mrf.mxu0
      %v2069 = vadd.f32 %v2021, %v2068
      %v2070 = vpop.f32.mrf.mxu0
      %v2071 = vpop.f32.mrf.mxu0
      %v2072 = vadd.f32 %v2024, %v2071
      %v2073 = vpop.f32.mrf.mxu0
      %2074 = vmatprep.mubr.bf16.mxu0 0
      %2075 = vmatmul.mubr.bf16.gmra.mxu0 %v1258
      %v2076 = vpop.f32.mrf.mxu0
      %v2077 = vadd.f32 %v2029, %v2076
      %v2078 = vpop.f32.mrf.mxu0
      %v2079 = vpop.f32.mrf.mxu0
      %v2080 = vpop.f32.mrf.mxu0
      %2081 = vdwg.mxu0
      %v2082 = vld [vmem:[%s273 + $0x7] sm:$0xff]
      %v2083 = vld [vmem:[%s273 + $0xf] sm:$0xff]
      %v2084 = vld [vmem:[%s273 + $0x17] sm:$0xff]
      %v2085 = vpack.c.bf16 %v2083, %v2082
      %v2086 = vpack.c.bf16 %v2084, %v2084
      %v2087 = vld [vmem:[%s5] sm:$0xf]
      %v2088 = vld [vmem:[%s5 + $0x4] sm:$0xf]
      %v2089 = vld [vmem:[%s5 + $0x8] sm:$0xf]
      %v2090 = vld [vmem:[%s5 + $0xc] sm:$0xf]
      %v2091 = vld [vmem:[%s5 + $0x10] sm:$0xf]
      %v2092 = vld [vmem:[%s5 + $0x14] sm:$0xf]
      %v2093 = vld [vmem:[%s5 + $0x18] sm:$0xf]
      %v2094 = vld [vmem:[%s5 + $0x1c] sm:$0xf]
      %v2095 = vld [vmem:[%s5 + $0x20] sm:$0xf]
      %v2096 = vld [vmem:[%s5 + $0x24] sm:$0xf]
      %v2097 = vld [vmem:[%s5 + $0x28] sm:$0xf]
      %v2098 = vld [vmem:[%s5 + $0x2c] sm:$0xf]
      %v2099 = vld [vmem:[%s5 + $0x30] sm:$0xf]
      %v2100 = vld [vmem:[%s5 + $0x34] sm:$0xf]
      %v2101 = vld [vmem:[%s5 + $0x38] sm:$0xf]
      %v2102 = vld [vmem:[%s5 + $0x3c] sm:$0xf]
      %v2103 = vld [vmem:[%s6] sm:$0x1]
      %v2105 = vlaneseq
      %v2106 = vshrl.u32 %v2105, 7
      %v2107 = vsub.s32 0, %v2106
      %v2108 = vrot.slane %v2103, %v2107
      %v2126 = vunpack.c.l.b16 %v2087
      %v2127 = vunpack.c.l.b16 %v2088
      %v2128 = vunpack.c.l.b16 %v2089
      %v2129 = vunpack.c.l.b16 %v2090
      %v2130 = vunpack.c.l.b16 %v2091
      %v2131 = vunpack.c.l.b16 %v2092
      %v2132 = vunpack.c.l.b16 %v2093
      %v2133 = vunpack.c.l.b16 %v2094
      %v2134 = vunpack.c.l.b16 %v2095
      %v2135 = vunpack.c.l.b16 %v2096
      %v2136 = vunpack.c.l.b16 %v2097
      %v2137 = vunpack.c.l.b16 %v2098
      %v2138 = vunpack.c.l.b16 %v2099
      %v2139 = vunpack.c.l.b16 %v2100
      %v2140 = vunpack.c.l.b16 %v2101
      %v2141 = vunpack.c.l.b16 %v2102
      %v2142 = vpack.c.b16 %v2127, %v2126
      %v2143 = vpack.c.b16 %v2129, %v2128
      %v2144 = vpack.c.b16 %v2131, %v2130
      %v2145 = vpack.c.b16 %v2133, %v2132
      %v2146 = vpack.c.b16 %v2135, %v2134
      %v2147 = vpack.c.b16 %v2137, %v2136
      %v2148 = vpack.c.b16 %v2139, %v2138
      %v2149 = vpack.c.b16 %v2141, %v2140
      %2158 = vmatprep.subr.bf16.mxu0 0
      %2159 = vmatpush1.bf16.msra.mxu0 %v2149
      %2160 = vmatprep.subr.bf16.mxu0 0
      %2161 = vmatpush1.bf16.msra.mxu0 %v2148
      %2162 = vmatprep.subr.bf16.mxu0 0
      %2163 = vmatpush1.bf16.msra.mxu0 %v2147
      %2164 = vmatprep.subr.bf16.mxu0 0
      %2165 = vmatpush1.bf16.msra.mxu0 %v2146
      %2166 = vmatprep.subr.bf16.mxu0 0
      %2167 = vmatpush1.bf16.msra.mxu0 %v2145
      %2168 = vmatprep.subr.bf16.mxu0 0
      %2169 = vmatpush1.bf16.msra.mxu0 %v2144
      %2170 = vmatprep.subr.bf16.mxu0 0
      %2171 = vmatpush1.bf16.msra.mxu0 %v2143
      %2172 = vmatprep.subr.bf16.mxu0 0
      %2173 = vmatpush1.bf16.msra.mxu0 %v2142
      %2174 = vmatprep.subr.bf16.mxu0 0
      %2175 = vmatpush2.bf16.msra.mxu0 0
      %2176 = vmatprep.subr.bf16.mxu0 0
      %2177 = vmatpush2.bf16.msra.mxu0 0
      %2178 = vmatprep.subr.bf16.mxu0 0
      %2179 = vmatpush2.bf16.msra.mxu0 0
      %2180 = vmatprep.subr.bf16.mxu0 0
      %2181 = vmatpush2.bf16.msra.mxu0 0
      %2182 = vmatprep.subr.bf16.mxu0 0
      %2183 = vmatpush2.bf16.msra.mxu0 0
      %2184 = vmatprep.subr.bf16.mxu0 0
      %2185 = vmatpush2.bf16.msra.mxu0 0
      %2186 = vmatprep.subr.bf16.mxu0 0
      %2187 = vmatpush2.bf16.msra.mxu0 0
      %2188 = vmatprep.subr.bf16.mxu0 0
      %2189 = vmatpush2.bf16.msra.mxu0 0
      %2190 = vmatprep.mubr.bf16.mxu0 0
      %2191 = vmatmul.mubr.bf16.gmra.mxu0 %v2085
      %v2192 = vpop.f32.mrf.mxu0
      %v2193 = vadd.f32 %v2108, %v2192
      %v2194 = vpop.f32.mrf.mxu0
      %v2195 = vpop.f32.mrf.mxu0
      %v2196 = vadd.f32 %v2108, %v2195
      %v2197 = vpop.f32.mrf.mxu0
      %2198 = vmatprep.mubr.bf16.mxu0 0
      %2199 = vmatmul.mubr.bf16.gmra.mxu0 %v2086
      %v2200 = vpop.f32.mrf.mxu0
      %v2201 = vadd.f32 %v2108, %v2200
      %v2202 = vpop.f32.mrf.mxu0
      %v2203 = vpop.f32.mrf.mxu0
      %v2204 = vpop.f32.mrf.mxu0
      %2205 = vdwg.mxu0
      %v2206 = vadd.f32 %v2069, %v2193
      %v2207 = vadd.f32 %v2072, %v2196
      %v2208 = vadd.f32 %v2077, %v2201
      %2209 = vst [vmem:[%s278] sm:$0xff] %v2206
      %2210 = vst [vmem:[%s278 + $0x8] sm:$0xff] %v2207
      %2211 = vst [vmem:[%s278 + $0x10] sm:$0xff] %v2208
      %p2212 = scmp.lt.s32.totalorder %s18, 1
      %s2213 = scalar_select %p2212, %s18, 1
      %s2214 = smul.addr %s2213, 3
      %s2215 = smul.addr %s2214, 8
      %s2216 = scalar_lea.vmem %s7, %s2215
      // Predicated region
      $region49: #{vaegan_discriminator.11} parent=47 // pred_check
        %p2217 = pneg %p188
      $region50: #{vaegan_discriminator.11} parent=47 // pred_check_branch
        %2219 = sbr.rel (%p2217) target = $region52
      $region51: #{vaegan_discriminator.11} parent=47 // pred_region
        _
      $region52: #{vaegan_discriminator.11} parent=47 // pred_fallthru
        _
    $region48: #{vaegan_discriminator.11} parent=5 // pred_fallthru
      _
    %p2220 = scmp.le.s32.totalorder 2, %s13
    // Predicated region
    $region53: #{vaegan_discriminator.11} parent=5 // pred_check
      %p2221 = pneg %p2220
    $region54: #{vaegan_discriminator.11} parent=5 // pred_check_branch
      %2223 = sbr.rel (%p2221) target = $region56
    $region55: #{vaegan_discriminator.11} parent=5 // pred_region
      %s2224 = ssub.s32 %s13, 2
      // Predicated region
      $region57: #{vaegan_discriminator.11} parent=55 // pred_check
        %p2225 = pneg %p194
      $region58: #{vaegan_discriminator.11} parent=55 // pred_check_branch
        %2227 = sbr.rel (%p2225) target = $region60
      $region59: #{vaegan_discriminator.11} parent=55 // pred_region
        %p2228 = scmp.lt.s32.totalorder %s19, 1
        %s2229 = scalar_select %p2228, %s19, 1
        %s2230 = smul.addr %s2229, 3
        %s2231 = smul.addr %s2230, 8
        %s2232 = scalar_lea.vmem %s7, %s2231
      $region60: #{vaegan_discriminator.11} parent=55 // pred_fallthru
        _
    $region56: #{vaegan_discriminator.11} parent=5 // pred_fallthru
      _
  $region6: #{vaegan_discriminator.11} parent=0 // loop_footer
    %s17 = sadd.s32 1, %s13
  $region7: #{vaegan_discriminator.11} parent=0 // loop_footer_branch
    %12 = sbr.rel target = $region3
  $region8: #{vaegan_discriminator.11} parent=0 // loop_exit
    _

// kernel: vaegan_discriminator.13
$region0: #{vaegan_discriminator.13}
  #allocation0 [shape = 'u32[]', space=smem, size = 0x4, offset = 0x4, fixed_abs, tag = 'smem constant byte address 0x4 - core index']
  #allocation1 [shape = 'u32[144,128]{1,0:T(1,128)}', space=vmem, size = 0x12000, scoped, tag = 'internal scratch']
  %s0 = inlined_call_operand.vmem [shape: bf16[32,70], index: 0, kind: input, shape index: {}]
  %s1 = inlined_call_operand.vmem [shape: bf16[70,128], index: 1, kind: input, shape index: {}]
  %s2 = inlined_call_operand.vmem [shape: f32[1,128], index: 2, kind: input, shape index: {}]
  %s3 = inlined_call_operand.vmem [shape: f32[32,128], index: 3, kind: output, shape index: {}]
  %s4 = sld [smem:[#allocation0]]
  $region45: #{vaegan_discriminator.13} parent=0
    _
  %s6 = ssub.s32 1, %s4
  %s7 = scalar_select 0, %s6, %s4
  loop: start=0, step=1, limit=4
  $region2: #{vaegan_discriminator.13} parent=0 // loop_pre_header
    _
  $region3: #{vaegan_discriminator.13} parent=0 // loop_header
    %s9 = sphi 0, %s13
    %p10 = scmp.ge.s32.totalorder %s9, 4
    %s16 = sphi 0, %s35
    %s17 = sphi 0, %s31
    %s18 = sphi 0, %s27
    %s19 = sphi 0, %s16
    %s20 = sphi 0, %s17
    %s21 = sphi 0, %s18
    %s22 = sphi 0, %s19
    %s23 = sphi 0, %s20
    %s24 = sphi 0, %s21
    %s40 = sphi 0, %s42
    %s43 = sphi 0, %s40
    %s44 = sphi 0, %s43
    %s60 = sphi 0, %s44
    %s68 = sphi 0, %s70
    %s71 = sphi 0, %s68
    %s72 = sphi 0, %s71
    %s88 = sphi 0, %s72
    %s94 = sphi 0, %s96
    %s97 = sphi 0, %s94
    %s98 = sphi 0, %s97
    %s114 = sphi 0, %s98
    %s122 = sphi 0, %s124
    %s125 = sphi 0, %s122
    %s126 = sphi 0, %s125
    %s142 = sphi 0, %s126
  $region4: #{vaegan_discriminator.13} parent=0 // loop_header_branch
    %12 = sbr.rel (%p10) target = $region8
  $region5: #{vaegan_discriminator.13} parent=0 // loop_body
    %s14 = ssub.s32 %s9, 1
    %s15 = ssub.s32 %s9, 2
    %s25 = sadd.s32 1, %s18
    %p26 = scmp.ge.s32.totalorder %s25, 1
    %s27 = scalar_select %p26, 0, %s25
    %s28 = sadd.s32 1, %s17
    %s29 = scalar_select %p26, %s28, %s17
    %p30 = scmp.ge.s32.totalorder %s29, 1
    %s31 = scalar_select %p30, 0, %s29
    %s32 = sadd.s32 1, %s16
    %s33 = scalar_select %p30, %s32, %s16
    %p34 = scmp.ge.s32.totalorder %s33, 2
    %s35 = scalar_select %p34, 0, %s33
    %s36 = ssub.s32 %s16, %s35
    %s37 = ssub.s32 %s18, %s27
    %s38 = sor.u32 %s36, %s37
    %p39 = scmp.eq.s32.totalorder %s38, 0
    %s41 = sadd.s32 %s40, 1
    %s42 = scalar_select %p39, %s40, %s41
    %p45 = pneg %p39
    %p46 = scmp.eq.s32.totalorder %s9, 1
    %p47 = por %p45, %p46
    %p48 = scmp.ne.s32.totalorder %s40, %s43
    %p49 = scmp.eq.s32.totalorder %s9, 0
    %p50 = por %p48, %p49
    %p51 = scmp.ne.s32.totalorder %s40, %s43
    %p52 = scmp.eq.s32.totalorder %s14, 1
    %p53 = por %p51, %p52
    %p54 = scmp.ne.s32.totalorder %s43, %s44
    %p55 = scmp.eq.s32.totalorder %s14, 0
    %p56 = por %p54, %p55
    %p57 = scmp.ne.s32.totalorder %s43, %s44
    %p58 = scmp.eq.s32.totalorder %s15, 1
    %p59 = por %p57, %p58
    %p61 = scmp.ne.s32.totalorder %s44, %s60
    %p62 = scmp.eq.s32.totalorder %s15, 0
    %p63 = por %p61, %p62
    %s64 = ssub.s32 %s18, %s27
    %s65 = ssub.s32 %s17, %s31
    %s66 = sor.u32 %s64, %s65
    %p67 = scmp.eq.s32.totalorder %s66, 0
    %s69 = sadd.s32 %s68, 1
    %s70 = scalar_select %p67, %s68, %s69
    %p73 = pneg %p67
    %p74 = scmp.eq.s32.totalorder %s9, 1
    %p75 = por %p73, %p74
    %p76 = scmp.ne.s32.totalorder %s68, %s71
    %p77 = scmp.eq.s32.totalorder %s9, 0
    %p78 = por %p76, %p77
    %p79 = scmp.ne.s32.totalorder %s68, %s71
    %p80 = scmp.eq.s32.totalorder %s14, 1
    %p81 = por %p79, %p80
    %p82 = scmp.ne.s32.totalorder %s71, %s72
    %p83 = scmp.eq.s32.totalorder %s14, 0
    %p84 = por %p82, %p83
    %p85 = scmp.ne.s32.totalorder %s71, %s72
    %p86 = scmp.eq.s32.totalorder %s15, 1
    %p87 = por %p85, %p86
    %p89 = scmp.ne.s32.totalorder %s72, %s88
    %p90 = scmp.eq.s32.totalorder %s15, 0
    %p91 = por %p89, %p90
    %s92 = ssub.s32 %s17, %s31
    %p93 = scmp.eq.s32.totalorder %s92, 0
    %s95 = sadd.s32 %s94, 1
    %s96 = scalar_select %p93, %s94, %s95
    %p99 = pneg %p93
    %p100 = scmp.eq.s32.totalorder %s9, 1
    %p101 = por %p99, %p100
    %p102 = scmp.ne.s32.totalorder %s94, %s97
    %p103 = scmp.eq.s32.totalorder %s9, 0
    %p104 = por %p102, %p103
    %p105 = scmp.ne.s32.totalorder %s94, %s97
    %p106 = scmp.eq.s32.totalorder %s14, 1
    %p107 = por %p105, %p106
    %p108 = scmp.ne.s32.totalorder %s97, %s98
    %p109 = scmp.eq.s32.totalorder %s14, 0
    %p110 = por %p108, %p109
    %p111 = scmp.ne.s32.totalorder %s97, %s98
    %p112 = scmp.eq.s32.totalorder %s15, 1
    %p113 = por %p111, %p112
    %p115 = scmp.ne.s32.totalorder %s98, %s114
    %p116 = scmp.eq.s32.totalorder %s15, 0
    %p117 = por %p115, %p116
    %s118 = ssub.s32 %s16, %s35
    %s119 = ssub.s32 %s17, %s31
    %s120 = sor.u32 %s118, %s119
    %p121 = scmp.eq.s32.totalorder %s120, 0
    %s123 = sadd.s32 %s122, 1
    %s124 = scalar_select %p121, %s122, %s123
    %p127 = pneg %p121
    %p128 = scmp.eq.s32.totalorder %s9, 1
    %p129 = por %p127, %p128
    %p130 = scmp.ne.s32.totalorder %s122, %s125
    %p131 = scmp.eq.s32.totalorder %s9, 0
    %p132 = por %p130, %p131
    %p133 = scmp.ne.s32.totalorder %s122, %s125
    %p134 = scmp.eq.s32.totalorder %s14, 1
    %p135 = por %p133, %p134
    %p136 = scmp.ne.s32.totalorder %s125, %s126
    %p137 = scmp.eq.s32.totalorder %s14, 0
    %p138 = por %p136, %p137
    %p139 = scmp.ne.s32.totalorder %s125, %s126
    %p140 = scmp.eq.s32.totalorder %s15, 1
    %p141 = por %p139, %p140
    %p143 = scmp.ne.s32.totalorder %s126, %s142
    %p144 = scmp.eq.s32.totalorder %s15, 0
    %p145 = por %p143, %p144
    %p146 = scmp.le.s32.totalorder 1, %s9
    %p147 = scmp.lt.s32.totalorder %s9, 3
    %p148 = pnand %p146, %p147
    %p149 = pneg %p148
    // Predicated region
    $region9: #{vaegan_discriminator.13} parent=5 // pred_check
      _
    $region10: #{vaegan_discriminator.13} parent=5 // pred_check_branch
      %151 = sbr.rel (%p148) target = $region12
    $region11: #{vaegan_discriminator.13} parent=5 // pred_region
      %s152 = ssub.s32 %s9, 1
      // Predicated region
      $region13: #{vaegan_discriminator.13} parent=11 // pred_check
        %p153 = pneg %p84
      $region14: #{vaegan_discriminator.13} parent=11 // pred_check_branch
        %155 = sbr.rel (%p153) target = $region16
      $region15: #{vaegan_discriminator.13} parent=11 // pred_region
        %s156 = smul.u32 9, %s21
        %p157 = scmp.lt.s32.totalorder %s156, 8
        %s158 = scalar_select %p157, %s156, 8
        %p159 = scmp.lt.s32.totalorder %s20, 0
        %s160 = scalar_select %p159, %s20, 0
        %s161 = sadd.s32 %s160, %s158
        %s162 = smul.addr %s161, 4
        %s163 = scalar_lea.vmem %s1, %s162
        %s164 = smul.u32 9, %s21
      $region16: #{vaegan_discriminator.13} parent=11 // pred_fallthru
        _
      // Predicated region
      $region17: #{vaegan_discriminator.13} parent=11 // pred_check
        %p165 = pneg %p110
      $region18: #{vaegan_discriminator.13} parent=11 // pred_check_branch
        %167 = sbr.rel (%p165) target = $region20
      $region19: #{vaegan_discriminator.13} parent=11 // pred_region
        %p168 = scmp.lt.s32.totalorder %s20, 0
        %s169 = scalar_select %p168, %s20, 0
        %s170 = scalar_lea.vmem %s2, %s169
      $region20: #{vaegan_discriminator.13} parent=11 // pred_fallthru
        _
    $region12: #{vaegan_discriminator.13} parent=5 // pred_fallthru
      _
    %p171 = scmp.lt.s32.totalorder %s9, 2
    // Predicated region
    $region21: #{vaegan_discriminator.13} parent=5 // pred_check
      %p172 = pneg %p171
    $region22: #{vaegan_discriminator.13} parent=5 // pred_check_branch
      %174 = sbr.rel (%p172) target = $region24
    $region23: #{vaegan_discriminator.13} parent=5 // pred_region
      // Predicated region
      $region25: #{vaegan_discriminator.13} parent=23 // pred_check
        %p175 = pneg %p50
      $region26: #{vaegan_discriminator.13} parent=23 // pred_check_branch
        %177 = sbr.rel (%p175) target = $region28
      $region27: #{vaegan_discriminator.13} parent=23 // pred_region
        %s178 = smul.u32 2, %s16
        %p179 = scmp.lt.s32.totalorder %s178, 3
        %s180 = scalar_select %p179, %s178, 3
        %p181 = scmp.lt.s32.totalorder %s18, 0
        %s182 = scalar_select %p181, %s18, 0
        %s183 = sadd.s32 %s182, %s180
        %s184 = smul.addr %s183, 4
        %s185 = scalar_lea.vmem %s0, %s184
        %s186 = smul.u32 2, %s16
      $region28: #{vaegan_discriminator.13} parent=23 // pred_fallthru
        _
    $region24: #{vaegan_discriminator.13} parent=5 // pred_fallthru
      _
    %p187 = scmp.le.s32.totalorder 1, %s9
    %p188 = scmp.lt.s32.totalorder %s9, 3
    %p189 = pnand %p187, %p188
    %p190 = pneg %p189
    // Predicated region
    $region29: #{vaegan_discriminator.13} parent=5 // pred_check
      _
    $region30: #{vaegan_discriminator.13} parent=5 // pred_check_branch
      %192 = sbr.rel (%p189) target = $region32
    $region31: #{vaegan_discriminator.13} parent=5 // pred_region
      %s193 = ssub.s32 %s9, 1
      %s194 = smul.u32 2, %s19
      %p195 = scmp.lt.s32.totalorder %s194, 3
      %s196 = scalar_select %p195, %s194, 3
      %p197 = scmp.lt.s32.totalorder %s21, 0
      %s198 = scalar_select %p197, %s21, 0
      %s199 = sadd.s32 %s198, %s196
      %s200 = smul.addr %s199, 4
      %s201 = scalar_lea.vmem %s0, %s200
      %p202 = pneg %p56
      %p203 = pneg %p53
      %s204 = smul.u32 9, %s21
      %p205 = scmp.lt.s32.totalorder %s204, 8
      %s206 = scalar_select %p205, %s204, 8
      %p207 = scmp.lt.s32.totalorder %s20, 0
      %s208 = scalar_select %p207, %s20, 0
      %s209 = sadd.s32 %s208, %s206
      %s210 = smul.addr %s209, 4
      %s211 = scalar_lea.vmem %s1, %s210
      %p212 = pneg %p84
      %p213 = pneg %p81
      %p214 = scmp.lt.s32.totalorder %s20, 0
      %s215 = scalar_select %p214, %s20, 0
      %s216 = scalar_lea.vmem %s2, %s215
      %p217 = pneg %p110
      %p218 = pneg %p107
      %p219 = pneg %p138
      %p220 = pneg %p135
      %s221 = smul.u32 2, %s19
      %p222 = scmp.lt.s32.totalorder %s221, 3
      %s223 = scalar_select %p222, %s221, 3
      %p224 = scmp.lt.s32.totalorder %s20, 0
      %s225 = scalar_select %p224, %s20, 0
      %s226 = sadd.s32 %s225, %s223
      %s227 = smul.addr %s226, 8
      %s228 = scalar_lea.vmem %s3, %s227
      %s229 = smul.u32 2, %s19
      %p230 = scmp.lt.s32.totalorder %s229, 3
      %s231 = scalar_select %p230, %s229, 3
      %p232 = scmp.lt.s32.totalorder %s21, 0
      %s233 = scalar_select %p232, %s21, 0
      %s234 = sadd.s32 %s233, %s231
      %s235 = smul.addr %s234, 4
      %s236 = scalar_lea.vmem %s0, %s235
      %s237 = smul.u32 2, %s19
      %s238 = smul.u32 9, %s21
      %p239 = scmp.lt.s32.totalorder %s238, 8
      %s240 = scalar_select %p239, %s238, 8
      %p241 = scmp.lt.s32.totalorder %s20, 0
      %s242 = scalar_select %p241, %s20, 0
      %s243 = sadd.s32 %s242, %s240
      %s244 = smul.addr %s243, 4
      %s245 = scalar_lea.vmem %s1, %s244
      %s246 = smul.u32 9, %s21
      %p247 = scmp.lt.s32.totalorder %s20, 0
      %s248 = scalar_select %p247, %s20, 0
      %s249 = scalar_lea.vmem %s2, %s248
      %s250 = smul.u32 2, %s19
      %p251 = scmp.lt.s32.totalorder %s250, 3
      %s252 = scalar_select %p251, %s250, 3
      %p253 = scmp.lt.s32.totalorder %s20, 0
      %s254 = scalar_select %p253, %s20, 0
      %s255 = sadd.s32 %s254, %s252
      %s256 = smul.addr %s255, 8
      %s257 = scalar_lea.vmem %s3, %s256
      %s258 = smul.u32 2, %s19
      %v260 = vld [vmem:[%s236] sm:$0xf]
      %v261 = vld [vmem:[%s236 + $0x4] sm:$0xf]
      %v262 = vld [vmem:[%s245] sm:$0xf]
      %v263 = vld [vmem:[%s245 + $0x4] sm:$0xf]
      %v264 = vld [vmem:[%s245 + $0x8] sm:$0xf]
      %v265 = vld [vmem:[%s245 + $0xc] sm:$0xf]
      %v266 = vld [vmem:[%s245 + $0x10] sm:$0xf]
      %v267 = vld [vmem:[%s245 + $0x14] sm:$0xf]
      %v268 = vld [vmem:[%s245 + $0x18] sm:$0xf]
      %v269 = vld [vmem:[%s245 + $0x1c] sm:$0xf]
      %v270 = vld [vmem:[%s245 + $0x20] sm:$0x7]
      %v271 = vld [vmem:[%s249] sm:$0x1]
      %v273 = vlaneseq
      %v274 = vshrl.u32 %v273, 7
      %v275 = vsub.s32 0, %v274
      %v276 = vrot.slane %v271, %v275
      %v280 = vunpack.c.l.b16 %v260
      %v281 = vunpack.c.l.b16 %v261
      %v282 = vpack.c.b16 %v281, %v280
      %v292 = vunpack.c.l.b16 %v262
      %v293 = vunpack.c.l.b16 %v263
      %v294 = vunpack.c.l.b16 %v264
      %v295 = vunpack.c.l.b16 %v265
      %v296 = vunpack.c.l.b16 %v266
      %v297 = vunpack.c.l.b16 %v267
      %v298 = vunpack.c.l.b16 %v268
      %v299 = vunpack.c.l.b16 %v269
      %v300 = vunpack.c.l.b16 %v270
      %v301 = vpack.c.b16 %v293, %v292
      %v302 = vpack.c.b16 %v295, %v294
      %v303 = vpack.c.b16 %v297, %v296
      %v304 = vpack.c.b16 %v299, %v298
      %v305 = vpack.c.b16 %v300, %v300
      %vm310 = vcmask 572416
      %v312 = vsel %vm310, %v282, 0
      %vm314 = vcmask 1042432
      %v316 = vsel %vm314, %v305, 0
      %318 = vmatprep.subr.bf16.mxu0 0
      %319 = vmatpush1.bf16.msra.mxu0 0
      %320 = vmatprep.subr.bf16.mxu0 0
      %321 = vmatpush1.bf16.msra.mxu0 0
      %322 = vmatprep.subr.bf16.mxu0 0
      %323 = vmatpush1.bf16.msra.mxu0 0
      %324 = vmatprep.subr.bf16.mxu0 0
      %325 = vmatpush1.bf16.msra.mxu0 %v316
      %326 = vmatprep.subr.bf16.mxu0 0
      %327 = vmatpush1.bf16.msra.mxu0 %v304
      %328 = vmatprep.subr.bf16.mxu0 0
      %329 = vmatpush1.bf16.msra.mxu0 %v303
      %330 = vmatprep.subr.bf16.mxu0 0
      %331 = vmatpush1.bf16.msra.mxu0 %v302
      %332 = vmatprep.subr.bf16.mxu0 0
      %333 = vmatpush1.bf16.msra.mxu0 %v301
      %334 = vmatprep.subr.bf16.mxu0 0
      %335 = vmatpush2.bf16.msra.mxu0 0
      %336 = vmatprep.subr.bf16.mxu0 0
      %337 = vmatpush2.bf16.msra.mxu0 0
      %338 = vmatprep.subr.bf16.mxu0 0
      %339 = vmatpush2.bf16.msra.mxu0 0
      %340 = vmatprep.subr.bf16.mxu0 0
      %341 = vmatpush2.bf16.msra.mxu0 0
      %342 = vmatprep.subr.bf16.mxu0 0
      %343 = vmatpush2.bf16.msra.mxu0 0
      %344 = vmatprep.subr.bf16.mxu0 0
      %345 = vmatpush2.bf16.msra.mxu0 0
      %346 = vmatprep.subr.bf16.mxu0 0
      %347 = vmatpush2.bf16.msra.mxu0 0
      %348 = vmatprep.subr.bf16.mxu0 0
      %349 = vmatpush2.bf16.msra.mxu0 0
      %350 = vmatprep.mubr.bf16.mxu0 0
      %351 = vmatmul.mubr.bf16.gmra.mxu0 %v312
      %v352 = vpop.f32.mrf.mxu0
      %v353 = vadd.f32 %v276, %v352
      %v354 = vpop.f32.mrf.mxu0
      %v355 = vpop.f32.mrf.mxu0
      %v356 = vadd.f32 %v276, %v355
      %v357 = vpop.f32.mrf.mxu0
      %358 = vdwg.mxu0
      %v359 = vmax.f32 %v353, 0.0
      %v360 = vmax.f32 %v356, 0.0
      %361 = vst [vmem:[%s257] sm:$0xff] %v359
      %362 = vst [vmem:[%s257 + $0x8] sm:$0xff] %v360
      %s363 = smul.u32 2, %s19
      %p364 = scmp.lt.s32.totalorder %s363, 3
      %s365 = scalar_select %p364, %s363, 3
      %p366 = scmp.lt.s32.totalorder %s20, 0
      %s367 = scalar_select %p366, %s20, 0
      %s368 = sadd.s32 %s367, %s365
      %s369 = smul.addr %s368, 8
      %s370 = scalar_lea.vmem %s3, %s369
      // Predicated region
      $region33: #{vaegan_discriminator.13} parent=31 // pred_check
        %p371 = pneg %p135
      $region34: #{vaegan_discriminator.13} parent=31 // pred_check_branch
        %373 = sbr.rel (%p371) target = $region36
      $region35: #{vaegan_discriminator.13} parent=31 // pred_region
        %s374 = smul.u32 2, %s19
      $region36: #{vaegan_discriminator.13} parent=31 // pred_fallthru
        _
    $region32: #{vaegan_discriminator.13} parent=5 // pred_fallthru
      _
    %p375 = scmp.le.s32.totalorder 2, %s9
    // Predicated region
    $region37: #{vaegan_discriminator.13} parent=5 // pred_check
      %p376 = pneg %p375
    $region38: #{vaegan_discriminator.13} parent=5 // pred_check_branch
      %378 = sbr.rel (%p376) target = $region40
    $region39: #{vaegan_discriminator.13} parent=5 // pred_region
      %s379 = ssub.s32 %s9, 2
      // Predicated region
      $region41: #{vaegan_discriminator.13} parent=39 // pred_check
        %p380 = pneg %p141
      $region42: #{vaegan_discriminator.13} parent=39 // pred_check_branch
        %382 = sbr.rel (%p380) target = $region44
      $region43: #{vaegan_discriminator.13} parent=39 // pred_region
        %s383 = smul.u32 2, %s22
        %p384 = scmp.lt.s32.totalorder %s383, 3
        %s385 = scalar_select %p384, %s383, 3
        %p386 = scmp.lt.s32.totalorder %s23, 0
        %s387 = scalar_select %p386, %s23, 0
        %s388 = sadd.s32 %s387, %s385
        %s389 = smul.addr %s388, 8
        %s390 = scalar_lea.vmem %s3, %s389
      $region44: #{vaegan_discriminator.13} parent=39 // pred_fallthru
        _
    $region40: #{vaegan_discriminator.13} parent=5 // pred_fallthru
      _
  $region6: #{vaegan_discriminator.13} parent=0 // loop_footer
    %s13 = sadd.s32 1, %s9
  $region7: #{vaegan_discriminator.13} parent=0 // loop_footer_branch
    %8 = sbr.rel target = $region3
  $region8: #{vaegan_discriminator.13} parent=0 // loop_exit
    _

// kernel: vaegan_discriminator.15
$region0: #{vaegan_discriminator.15}
  #allocation0 [shape = 'u32[]', space=smem, size = 0x4, offset = 0x4, fixed_abs, tag = 'smem constant byte address 0x4 - core index']
  #allocation1 [shape = 'u32[144,128]{1,0:T(1,128)}', space=vmem, size = 0x12000, scoped, tag = 'internal scratch']
  %s0 = inlined_call_operand.vmem [shape: bf16[32,32], index: 0, kind: input, shape index: {}]
  %s1 = inlined_call_operand.vmem [shape: bf16[32,128], index: 1, kind: input, shape index: {}]
  %s2 = inlined_call_operand.vmem [shape: f32[1,128], index: 2, kind: input, shape index: {}]
  %s3 = inlined_call_operand.vmem [shape: f32[32,128], index: 3, kind: output, shape index: {}]
  %s4 = sld [smem:[#allocation0]]
  $region45: #{vaegan_discriminator.15} parent=0
    _
  %s6 = ssub.s32 1, %s4
  %s7 = scalar_select 0, %s6, %s4
  loop: start=0, step=1, limit=4
  $region2: #{vaegan_discriminator.15} parent=0 // loop_pre_header
    _
  $region3: #{vaegan_discriminator.15} parent=0 // loop_header
    %s9 = sphi 0, %s13
    %p10 = scmp.ge.s32.totalorder %s9, 4
    %s16 = sphi 0, %s35
    %s17 = sphi 0, %s31
    %s18 = sphi 0, %s27
    %s19 = sphi 0, %s16
    %s20 = sphi 0, %s17
    %s21 = sphi 0, %s18
    %s22 = sphi 0, %s19
    %s23 = sphi 0, %s20
    %s24 = sphi 0, %s21
    %s40 = sphi 0, %s42
    %s43 = sphi 0, %s40
    %s44 = sphi 0, %s43
    %s60 = sphi 0, %s44
    %s68 = sphi 0, %s70
    %s71 = sphi 0, %s68
    %s72 = sphi 0, %s71
    %s88 = sphi 0, %s72
    %s94 = sphi 0, %s96
    %s97 = sphi 0, %s94
    %s98 = sphi 0, %s97
    %s114 = sphi 0, %s98
    %s122 = sphi 0, %s124
    %s125 = sphi 0, %s122
    %s126 = sphi 0, %s125
    %s142 = sphi 0, %s126
  $region4: #{vaegan_discriminator.15} parent=0 // loop_header_branch
    %12 = sbr.rel (%p10) target = $region8
  $region5: #{vaegan_discriminator.15} parent=0 // loop_body
    %s14 = ssub.s32 %s9, 1
    %s15 = ssub.s32 %s9, 2
    %s25 = sadd.s32 1, %s18
    %p26 = scmp.ge.s32.totalorder %s25, 1
    %s27 = scalar_select %p26, 0, %s25
    %s28 = sadd.s32 1, %s17
    %s29 = scalar_select %p26, %s28, %s17
    %p30 = scmp.ge.s32.totalorder %s29, 1
    %s31 = scalar_select %p30, 0, %s29
    %s32 = sadd.s32 1, %s16
    %s33 = scalar_select %p30, %s32, %s16
    %p34 = scmp.ge.s32.totalorder %s33, 2
    %s35 = scalar_select %p34, 0, %s33
    %s36 = ssub.s32 %s16, %s35
    %s37 = ssub.s32 %s18, %s27
    %s38 = sor.u32 %s36, %s37
    %p39 = scmp.eq.s32.totalorder %s38, 0
    %s41 = sadd.s32 %s40, 1
    %s42 = scalar_select %p39, %s40, %s41
    %p45 = pneg %p39
    %p46 = scmp.eq.s32.totalorder %s9, 1
    %p47 = por %p45, %p46
    %p48 = scmp.ne.s32.totalorder %s40, %s43
    %p49 = scmp.eq.s32.totalorder %s9, 0
    %p50 = por %p48, %p49
    %p51 = scmp.ne.s32.totalorder %s40, %s43
    %p52 = scmp.eq.s32.totalorder %s14, 1
    %p53 = por %p51, %p52
    %p54 = scmp.ne.s32.totalorder %s43, %s44
    %p55 = scmp.eq.s32.totalorder %s14, 0
    %p56 = por %p54, %p55
    %p57 = scmp.ne.s32.totalorder %s43, %s44
    %p58 = scmp.eq.s32.totalorder %s15, 1
    %p59 = por %p57, %p58
    %p61 = scmp.ne.s32.totalorder %s44, %s60
    %p62 = scmp.eq.s32.totalorder %s15, 0
    %p63 = por %p61, %p62
    %s64 = ssub.s32 %s18, %s27
    %s65 = ssub.s32 %s17, %s31
    %s66 = sor.u32 %s64, %s65
    %p67 = scmp.eq.s32.totalorder %s66, 0
    %s69 = sadd.s32 %s68, 1
    %s70 = scalar_select %p67, %s68, %s69
    %p73 = pneg %p67
    %p74 = scmp.eq.s32.totalorder %s9, 1
    %p75 = por %p73, %p74
    %p76 = scmp.ne.s32.totalorder %s68, %s71
    %p77 = scmp.eq.s32.totalorder %s9, 0
    %p78 = por %p76, %p77
    %p79 = scmp.ne.s32.totalorder %s68, %s71
    %p80 = scmp.eq.s32.totalorder %s14, 1
    %p81 = por %p79, %p80
    %p82 = scmp.ne.s32.totalorder %s71, %s72
    %p83 = scmp.eq.s32.totalorder %s14, 0
    %p84 = por %p82, %p83
    %p85 = scmp.ne.s32.totalorder %s71, %s72
    %p86 = scmp.eq.s32.totalorder %s15, 1
    %p87 = por %p85, %p86
    %p89 = scmp.ne.s32.totalorder %s72, %s88
    %p90 = scmp.eq.s32.totalorder %s15, 0
    %p91 = por %p89, %p90
    %s92 = ssub.s32 %s17, %s31
    %p93 = scmp.eq.s32.totalorder %s92, 0
    %s95 = sadd.s32 %s94, 1
    %s96 = scalar_select %p93, %s94, %s95
    %p99 = pneg %p93
    %p100 = scmp.eq.s32.totalorder %s9, 1
    %p101 = por %p99, %p100
    %p102 = scmp.ne.s32.totalorder %s94, %s97
    %p103 = scmp.eq.s32.totalorder %s9, 0
    %p104 = por %p102, %p103
    %p105 = scmp.ne.s32.totalorder %s94, %s97
    %p106 = scmp.eq.s32.totalorder %s14, 1
    %p107 = por %p105, %p106
    %p108 = scmp.ne.s32.totalorder %s97, %s98
    %p109 = scmp.eq.s32.totalorder %s14, 0
    %p110 = por %p108, %p109
    %p111 = scmp.ne.s32.totalorder %s97, %s98
    %p112 = scmp.eq.s32.totalorder %s15, 1
    %p113 = por %p111, %p112
    %p115 = scmp.ne.s32.totalorder %s98, %s114
    %p116 = scmp.eq.s32.totalorder %s15, 0
    %p117 = por %p115, %p116
    %s118 = ssub.s32 %s16, %s35
    %s119 = ssub.s32 %s17, %s31
    %s120 = sor.u32 %s118, %s119
    %p121 = scmp.eq.s32.totalorder %s120, 0
    %s123 = sadd.s32 %s122, 1
    %s124 = scalar_select %p121, %s122, %s123
    %p127 = pneg %p121
    %p128 = scmp.eq.s32.totalorder %s9, 1
    %p129 = por %p127, %p128
    %p130 = scmp.ne.s32.totalorder %s122, %s125
    %p131 = scmp.eq.s32.totalorder %s9, 0
    %p132 = por %p130, %p131
    %p133 = scmp.ne.s32.totalorder %s122, %s125
    %p134 = scmp.eq.s32.totalorder %s14, 1
    %p135 = por %p133, %p134
    %p136 = scmp.ne.s32.totalorder %s125, %s126
    %p137 = scmp.eq.s32.totalorder %s14, 0
    %p138 = por %p136, %p137
    %p139 = scmp.ne.s32.totalorder %s125, %s126
    %p140 = scmp.eq.s32.totalorder %s15, 1
    %p141 = por %p139, %p140
    %p143 = scmp.ne.s32.totalorder %s126, %s142
    %p144 = scmp.eq.s32.totalorder %s15, 0
    %p145 = por %p143, %p144
    %p146 = scmp.le.s32.totalorder 1, %s9
    %p147 = scmp.lt.s32.totalorder %s9, 3
    %p148 = pnand %p146, %p147
    %p149 = pneg %p148
    // Predicated region
    $region9: #{vaegan_discriminator.15} parent=5 // pred_check
      _
    $region10: #{vaegan_discriminator.15} parent=5 // pred_check_branch
      %151 = sbr.rel (%p148) target = $region12
    $region11: #{vaegan_discriminator.15} parent=5 // pred_region
      %s152 = ssub.s32 %s9, 1
      // Predicated region
      $region13: #{vaegan_discriminator.15} parent=11 // pred_check
        %p153 = pneg %p84
      $region14: #{vaegan_discriminator.15} parent=11 // pred_check_branch
        %155 = sbr.rel (%p153) target = $region16
      $region15: #{vaegan_discriminator.15} parent=11 // pred_region
        %s156 = smul.u32 4, %s21
        %p157 = scmp.lt.s32.totalorder %s156, 3
        %s158 = scalar_select %p157, %s156, 3
        %p159 = scmp.lt.s32.totalorder %s20, 0
        %s160 = scalar_select %p159, %s20, 0
        %s161 = sadd.s32 %s160, %s158
        %s162 = smul.addr %s161, 4
        %s163 = scalar_lea.vmem %s1, %s162
        %s164 = smul.u32 4, %s21
      $region16: #{vaegan_discriminator.15} parent=11 // pred_fallthru
        _
      // Predicated region
      $region17: #{vaegan_discriminator.15} parent=11 // pred_check
        %p165 = pneg %p110
      $region18: #{vaegan_discriminator.15} parent=11 // pred_check_branch
        %167 = sbr.rel (%p165) target = $region20
      $region19: #{vaegan_discriminator.15} parent=11 // pred_region
        %p168 = scmp.lt.s32.totalorder %s20, 0
        %s169 = scalar_select %p168, %s20, 0
        %s170 = scalar_lea.vmem %s2, %s169
      $region20: #{vaegan_discriminator.15} parent=11 // pred_fallthru
        _
    $region12: #{vaegan_discriminator.15} parent=5 // pred_fallthru
      _
    %p171 = scmp.lt.s32.totalorder %s9, 2
    // Predicated region
    $region21: #{vaegan_discriminator.15} parent=5 // pred_check
      %p172 = pneg %p171
    $region22: #{vaegan_discriminator.15} parent=5 // pred_check_branch
      %174 = sbr.rel (%p172) target = $region24
    $region23: #{vaegan_discriminator.15} parent=5 // pred_region
      // Predicated region
      $region25: #{vaegan_discriminator.15} parent=23 // pred_check
        %p175 = pneg %p50
      $region26: #{vaegan_discriminator.15} parent=23 // pred_check_branch
        %177 = sbr.rel (%p175) target = $region28
      $region27: #{vaegan_discriminator.15} parent=23 // pred_region
        %s178 = smul.u32 2, %s16
        %p179 = scmp.lt.s32.totalorder %s178, 3
        %s180 = scalar_select %p179, %s178, 3
        %p181 = scmp.lt.s32.totalorder %s18, 0
        %s182 = scalar_select %p181, %s18, 0
        %s183 = sadd.s32 %s182, %s180
        %s184 = smul.addr %s183, 4
        %s185 = scalar_lea.vmem %s0, %s184
        %s186 = smul.u32 2, %s16
      $region28: #{vaegan_discriminator.15} parent=23 // pred_fallthru
        _
    $region24: #{vaegan_discriminator.15} parent=5 // pred_fallthru
      _
    %p187 = scmp.le.s32.totalorder 1, %s9
    %p188 = scmp.lt.s32.totalorder %s9, 3
    %p189 = pnand %p187, %p188
    %p190 = pneg %p189
    // Predicated region
    $region29: #{vaegan_discriminator.15} parent=5 // pred_check
      _
    $region30: #{vaegan_discriminator.15} parent=5 // pred_check_branch
      %192 = sbr.rel (%p189) target = $region32
    $region31: #{vaegan_discriminator.15} parent=5 // pred_region
      %s193 = ssub.s32 %s9, 1
      %s194 = smul.u32 2, %s19
      %p195 = scmp.lt.s32.totalorder %s194, 3
      %s196 = scalar_select %p195, %s194, 3
      %p197 = scmp.lt.s32.totalorder %s21, 0
      %s198 = scalar_select %p197, %s21, 0
      %s199 = sadd.s32 %s198, %s196
      %s200 = smul.addr %s199, 4
      %s201 = scalar_lea.vmem %s0, %s200
      %p202 = pneg %p56
      %p203 = pneg %p53
      %s204 = smul.u32 4, %s21
      %p205 = scmp.lt.s32.totalorder %s204, 3
      %s206 = scalar_select %p205, %s204, 3
      %p207 = scmp.lt.s32.totalorder %s20, 0
      %s208 = scalar_select %p207, %s20, 0
      %s209 = sadd.s32 %s208, %s206
      %s210 = smul.addr %s209, 4
      %s211 = scalar_lea.vmem %s1, %s210
      %p212 = pneg %p84
      %p213 = pneg %p81
      %p214 = scmp.lt.s32.totalorder %s20, 0
      %s215 = scalar_select %p214, %s20, 0
      %s216 = scalar_lea.vmem %s2, %s215
      %p217 = pneg %p110
      %p218 = pneg %p107
      %p219 = pneg %p138
      %p220 = pneg %p135
      %s221 = smul.u32 2, %s19
      %p222 = scmp.lt.s32.totalorder %s221, 3
      %s223 = scalar_select %p222, %s221, 3
      %p224 = scmp.lt.s32.totalorder %s20, 0
      %s225 = scalar_select %p224, %s20, 0
      %s226 = sadd.s32 %s225, %s223
      %s227 = smul.addr %s226, 8
      %s228 = scalar_lea.vmem %s3, %s227
      %s229 = smul.u32 2, %s19
      %p230 = scmp.lt.s32.totalorder %s229, 3
      %s231 = scalar_select %p230, %s229, 3
      %p232 = scmp.lt.s32.totalorder %s21, 0
      %s233 = scalar_select %p232, %s21, 0
      %s234 = sadd.s32 %s233, %s231
      %s235 = smul.addr %s234, 4
      %s236 = scalar_lea.vmem %s0, %s235
      %s237 = smul.u32 2, %s19
      %s238 = smul.u32 4, %s21
      %p239 = scmp.lt.s32.totalorder %s238, 3
      %s240 = scalar_select %p239, %s238, 3
      %p241 = scmp.lt.s32.totalorder %s20, 0
      %s242 = scalar_select %p241, %s20, 0
      %s243 = sadd.s32 %s242, %s240
      %s244 = smul.addr %s243, 4
      %s245 = scalar_lea.vmem %s1, %s244
      %s246 = smul.u32 4, %s21
      %p247 = scmp.lt.s32.totalorder %s20, 0
      %s248 = scalar_select %p247, %s20, 0
      %s249 = scalar_lea.vmem %s2, %s248
      %s250 = smul.u32 2, %s19
      %p251 = scmp.lt.s32.totalorder %s250, 3
      %s252 = scalar_select %p251, %s250, 3
      %p253 = scmp.lt.s32.totalorder %s20, 0
      %s254 = scalar_select %p253, %s20, 0
      %s255 = sadd.s32 %s254, %s252
      %s256 = smul.addr %s255, 8
      %s257 = scalar_lea.vmem %s3, %s256
      %s258 = smul.u32 2, %s19
      %v260 = vld [vmem:[%s236] sm:$0xf]
      %v261 = vld [vmem:[%s236 + $0x4] sm:$0xf]
      %v262 = vld [vmem:[%s245] sm:$0xf]
      %v263 = vld [vmem:[%s245 + $0x4] sm:$0xf]
      %v264 = vld [vmem:[%s245 + $0x8] sm:$0xf]
      %v265 = vld [vmem:[%s245 + $0xc] sm:$0xf]
      %v266 = vld [vmem:[%s249] sm:$0x1]
      %v268 = vlaneseq
      %v269 = vshrl.u32 %v268, 7
      %v270 = vsub.s32 0, %v269
      %v271 = vrot.slane %v266, %v270
      %v275 = vunpack.c.l.b16 %v260
      %v276 = vunpack.c.l.b16 %v261
      %v277 = vpack.c.b16 %v276, %v275
      %v282 = vunpack.c.l.b16 %v262
      %v283 = vunpack.c.l.b16 %v263
      %v284 = vunpack.c.l.b16 %v264
      %v285 = vunpack.c.l.b16 %v265
      %v286 = vpack.c.b16 %v283, %v282
      %v287 = vpack.c.b16 %v285, %v284
      %vm290 = vcmask 261120
      %v292 = vsel %vm290, %v277, 0
      %294 = vmatprep.subr.bf16.mxu0 0
      %295 = vmatpush1.bf16.msra.mxu0 0
      %296 = vmatprep.subr.bf16.mxu0 0
      %297 = vmatpush1.bf16.msra.mxu0 0
      %298 = vmatprep.subr.bf16.mxu0 0
      %299 = vmatpush1.bf16.msra.mxu0 0
      %300 = vmatprep.subr.bf16.mxu0 0
      %301 = vmatpush1.bf16.msra.mxu0 0
      %302 = vmatprep.subr.bf16.mxu0 0
      %303 = vmatpush1.bf16.msra.mxu0 0
      %304 = vmatprep.subr.bf16.mxu0 0
      %305 = vmatpush1.bf16.msra.mxu0 0
      %306 = vmatprep.subr.bf16.mxu0 0
      %307 = vmatpush1.bf16.msra.mxu0 %v287
      %308 = vmatprep.subr.bf16.mxu0 0
      %309 = vmatpush1.bf16.msra.mxu0 %v286
      %310 = vmatprep.subr.bf16.mxu0 0
      %311 = vmatpush2.bf16.msra.mxu0 0
      %312 = vmatprep.subr.bf16.mxu0 0
      %313 = vmatpush2.bf16.msra.mxu0 0
      %314 = vmatprep.subr.bf16.mxu0 0
      %315 = vmatpush2.bf16.msra.mxu0 0
      %316 = vmatprep.subr.bf16.mxu0 0
      %317 = vmatpush2.bf16.msra.mxu0 0
      %318 = vmatprep.subr.bf16.mxu0 0
      %319 = vmatpush2.bf16.msra.mxu0 0
      %320 = vmatprep.subr.bf16.mxu0 0
      %321 = vmatpush2.bf16.msra.mxu0 0
      %322 = vmatprep.subr.bf16.mxu0 0
      %323 = vmatpush2.bf16.msra.mxu0 0
      %324 = vmatprep.subr.bf16.mxu0 0
      %325 = vmatpush2.bf16.msra.mxu0 0
      %326 = vmatprep.mubr.bf16.mxu0 0
      %327 = vmatmul.mubr.bf16.gmra.mxu0 %v292
      %v328 = vpop.f32.mrf.mxu0
      %v329 = vadd.f32 %v271, %v328
      %v330 = vpop.f32.mrf.mxu0
      %v331 = vpop.f32.mrf.mxu0
      %v332 = vadd.f32 %v271, %v331
      %v333 = vpop.f32.mrf.mxu0
      %334 = vdwg.mxu0
      %v335 = vmax.f32 %v329, 0.0
      %v336 = vmax.f32 %v332, 0.0
      %337 = vst [vmem:[%s257] sm:$0xff] %v335
      %338 = vst [vmem:[%s257 + $0x8] sm:$0xff] %v336
      %s339 = smul.u32 2, %s19
      %p340 = scmp.lt.s32.totalorder %s339, 3
      %s341 = scalar_select %p340, %s339, 3
      %p342 = scmp.lt.s32.totalorder %s20, 0
      %s343 = scalar_select %p342, %s20, 0
      %s344 = sadd.s32 %s343, %s341
      %s345 = smul.addr %s344, 8
      %s346 = scalar_lea.vmem %s3, %s345
      // Predicated region
      $region33: #{vaegan_discriminator.15} parent=31 // pred_check
        %p347 = pneg %p135
      $region34: #{vaegan_discriminator.15} parent=31 // pred_check_branch
        %349 = sbr.rel (%p347) target = $region36
      $region35: #{vaegan_discriminator.15} parent=31 // pred_region
        %s350 = smul.u32 2, %s19
      $region36: #{vaegan_discriminator.15} parent=31 // pred_fallthru
        _
    $region32: #{vaegan_discriminator.15} parent=5 // pred_fallthru
      _
    %p351 = scmp.le.s32.totalorder 2, %s9
    // Predicated region
    $region37: #{vaegan_discriminator.15} parent=5 // pred_check
      %p352 = pneg %p351
    $region38: #{vaegan_discriminator.15} parent=5 // pred_check_branch
      %354 = sbr.rel (%p352) target = $region40
    $region39: #{vaegan_discriminator.15} parent=5 // pred_region
      %s355 = ssub.s32 %s9, 2
      // Predicated region
      $region41: #{vaegan_discriminator.15} parent=39 // pred_check
        %p356 = pneg %p141
      $region42: #{vaegan_discriminator.15} parent=39 // pred_check_branch
        %358 = sbr.rel (%p356) target = $region44
      $region43: #{vaegan_discriminator.15} parent=39 // pred_region
        %s359 = smul.u32 2, %s22
        %p360 = scmp.lt.s32.totalorder %s359, 3
        %s361 = scalar_select %p360, %s359, 3
        %p362 = scmp.lt.s32.totalorder %s23, 0
        %s363 = scalar_select %p362, %s23, 0
        %s364 = sadd.s32 %s363, %s361
        %s365 = smul.addr %s364, 8
        %s366 = scalar_lea.vmem %s3, %s365
      $region44: #{vaegan_discriminator.15} parent=39 // pred_fallthru
        _
    $region40: #{vaegan_discriminator.15} parent=5 // pred_fallthru
      _
  $region6: #{vaegan_discriminator.15} parent=0 // loop_footer
    %s13 = sadd.s32 1, %s9
  $region7: #{vaegan_discriminator.15} parent=0 // loop_footer_branch
    %8 = sbr.rel target = $region3
  $region8: #{vaegan_discriminator.15} parent=0 // loop_exit
    _

// kernel: vaegan_discriminator.19
$region0: #{vaegan_discriminator.19}
  #allocation0 [shape = 'u32[]', space=smem, size = 0x4, offset = 0x4, fixed_abs, tag = 'smem constant byte address 0x4 - core index']
  #allocation1 [shape = 'u32[144,128]{1,0:T(1,128)}', space=vmem, size = 0x12000, scoped, tag = 'internal scratch']
  #allocation2 [shape = 'f32[2,16]{1,0:T(2,128)}', space=vmem, size = 0x400, scoped, tag = 'scratch operand']
  %s0 = inlined_call_operand.vmem [shape: f32[2,16,16], index: 0, kind: input, shape index: {}]
  %s1 = inlined_call_operand.vmem [shape: bf16[16,128], index: 1, kind: input, shape index: {}]
  %s2 = inlined_call_operand.vmem [shape: f32[1,128], index: 2, kind: input, shape index: {}]
  %s3 = inlined_call_operand.vmem [shape: bf16[128,128], index: 3, kind: input, shape index: {}]
  %s4 = inlined_call_operand.vmem [shape: f32[1,128], index: 4, kind: input, shape index: {}]
  %s5 = inlined_call_operand.vmem [shape: f32[2,128], index: 5, kind: output, shape index: {}]
  %s6 = sld [smem:[#allocation0]]
  $region38: #{vaegan_discriminator.19} parent=0
    _
  %s8 = ssub.s32 1, %s6
  %s9 = scalar_select 0, %s8, %s6
  // Predicated region
  $region2: #{vaegan_discriminator.19} parent=0 // pred_check
    _
  $region3: #{vaegan_discriminator.19} parent=0 // pred_check_branch
    %11 = sbr.rel (0) target = $region5
  $region4: #{vaegan_discriminator.19} parent=0 // pred_region
    _
  $region5: #{vaegan_discriminator.19} parent=0 // pred_fallthru
    _
  // Predicated region
  $region6: #{vaegan_discriminator.19} parent=0 // pred_check
    _
  $region7: #{vaegan_discriminator.19} parent=0 // pred_check_branch
    %13 = sbr.rel (0) target = $region9
  $region8: #{vaegan_discriminator.19} parent=0 // pred_region
    _
  $region9: #{vaegan_discriminator.19} parent=0 // pred_fallthru
    _
  // Predicated region
  $region10: #{vaegan_discriminator.19} parent=0 // pred_check
    _
  $region11: #{vaegan_discriminator.19} parent=0 // pred_check_branch
    %15 = sbr.rel (0) target = $region13
  $region12: #{vaegan_discriminator.19} parent=0 // pred_region
    _
  $region13: #{vaegan_discriminator.19} parent=0 // pred_fallthru
    _
  // Predicated region
  $region14: #{vaegan_discriminator.19} parent=0 // pred_check
    _
  $region15: #{vaegan_discriminator.19} parent=0 // pred_check_branch
    %17 = sbr.rel (0) target = $region17
  $region16: #{vaegan_discriminator.19} parent=0 // pred_region
    _
  $region17: #{vaegan_discriminator.19} parent=0 // pred_fallthru
    _
  // Predicated region
  $region18: #{vaegan_discriminator.19} parent=0 // pred_check
    _
  $region19: #{vaegan_discriminator.19} parent=0 // pred_check_branch
    %19 = sbr.rel (0) target = $region21
  $region20: #{vaegan_discriminator.19} parent=0 // pred_region
    _
  $region21: #{vaegan_discriminator.19} parent=0 // pred_fallthru
    _
  %p21 = scmp.eq.s32.totalorder 0, 0
  // Predicated region
  $region22: #{vaegan_discriminator.19} parent=0 // pred_check
    %p22 = pneg %p21
  $region23: #{vaegan_discriminator.19} parent=0 // pred_check_branch
    %24 = sbr.rel (%p22) target = $region25
  $region24: #{vaegan_discriminator.19} parent=0 // pred_region
    %vm25 = vcmask 123904
    %26 = vst.msk [vmem:[#allocation2] sm:$0x3] %vm25, 0.0
  $region25: #{vaegan_discriminator.19} parent=0 // pred_fallthru
    _
  %v27 = vld [vmem:[#allocation2] sm:$0x3]
  %v28 = vld [vmem:[%s0] sm:$0xff]
  %v29 = vld [vmem:[%s0 + $0x8] sm:$0xff]
  %v30 = vld [vmem:[%s0 + $0x10] sm:$0xff]
  %v31 = vld [vmem:[%s0 + $0x18] sm:$0xff]
  %vm32 = vcmask 130048
  %v33 = vsel %vm32, %v28, 0.0
  %v34 = vsel %vm32, %v29, 0.0
  %v35 = vadd.f32 %v33, %v34
  %v36 = vrot.slane %v35, 4
  %v37 = vadd.f32 %v35, %v36
  %v38 = vrot.slane %v37, 2
  %v39 = vadd.f32 %v37, %v38
  %v40 = vrot.slane %v39, 1
  %v41 = vadd.f32 %v39, %v40
  %v42 = vsel %vm32, %v30, 0.0
  %v43 = vsel %vm32, %v31, 0.0
  %v44 = vadd.f32 %v42, %v43
  %v45 = vrot.slane %v44, 4
  %v46 = vadd.f32 %v44, %v45
  %v47 = vrot.slane %v46, 2
  %v48 = vadd.f32 %v46, %v47
  %v49 = vrot.slane %v48, 1
  %v50 = vadd.f32 %v48, %v49
  %vm53 = vcmask 1041409
  %v54 = vsel %vm53, %v50, %v41
  %v56 = vadd.f32 %v27, %v54
  %vm57 = vcmask 123904
  %58 = vst.msk [vmem:[#allocation2] sm:$0x3] %vm57, %v56
  // Predicated region
  $region26: #{vaegan_discriminator.19} parent=0 // pred_check
    %p59 = pneg %p21
  $region27: #{vaegan_discriminator.19} parent=0 // pred_check_branch
    %61 = sbr.rel (%p59) target = $region29
  $region28: #{vaegan_discriminator.19} parent=0 // pred_region
    %v62 = vld [vmem:[#allocation2] sm:$0x3]
    %v63 = vmul.f32 %v62, 0.0625
    %v64 = vpack.c.bf16 %v63, %v63
    %v65 = vld [vmem:[%s1] sm:$0xf]
    %v66 = vld [vmem:[%s1 + $0x4] sm:$0xf]
    %v67 = vld [vmem:[%s2] sm:$0x1]
    %v69 = vlaneseq
    %v70 = vshrl.u32 %v69, 7
    %v71 = vsub.s32 0, %v70
    %v72 = vrot.slane %v67, %v71
    %v76 = vunpack.c.l.b16 %v65
    %v77 = vunpack.c.l.b16 %v66
    %v78 = vpack.c.b16 %v77, %v76
    %v81 = vsel %vm32, %v64, 0
    %83 = vmatprep.subr.bf16.mxu0 0
    %84 = vmatpush1.bf16.msra.mxu0 0
    %85 = vmatprep.subr.bf16.mxu0 0
    %86 = vmatpush1.bf16.msra.mxu0 0
    %87 = vmatprep.subr.bf16.mxu0 0
    %88 = vmatpush1.bf16.msra.mxu0 0
    %89 = vmatprep.subr.bf16.mxu0 0
    %90 = vmatpush1.bf16.msra.mxu0 0
    %91 = vmatprep.subr.bf16.mxu0 0
    %92 = vmatpush1.bf16.msra.mxu0 0
    %93 = vmatprep.subr.bf16.mxu0 0
    %94 = vmatpush1.bf16.msra.mxu0 0
    %95 = vmatprep.subr.bf16.mxu0 0
    %96 = vmatpush1.bf16.msra.mxu0 0
    %97 = vmatprep.subr.bf16.mxu0 0
    %98 = vmatpush1.bf16.msra.mxu0 %v78
    %99 = vmatprep.subr.bf16.mxu0 0
    %100 = vmatpush2.bf16.msra.mxu0 0
    %101 = vmatprep.subr.bf16.mxu0 0
    %102 = vmatpush2.bf16.msra.mxu0 0
    %103 = vmatprep.subr.bf16.mxu0 0
    %104 = vmatpush2.bf16.msra.mxu0 0
    %105 = vmatprep.subr.bf16.mxu0 0
    %106 = vmatpush2.bf16.msra.mxu0 0
    %107 = vmatprep.subr.bf16.mxu0 0
    %108 = vmatpush2.bf16.msra.mxu0 0
    %109 = vmatprep.subr.bf16.mxu0 0
    %110 = vmatpush2.bf16.msra.mxu0 0
    %111 = vmatprep.subr.bf16.mxu0 0
    %112 = vmatpush2.bf16.msra.mxu0 0
    %113 = vmatprep.subr.bf16.mxu0 0
    %114 = vmatpush2.bf16.msra.mxu0 0
    %115 = vmatprep.mubr.bf16.mxu0 0
    %116 = vmatmul.mubr.bf16.gmra.mxu0 %v81
    %v117 = vpop.f32.mrf.mxu0
    %v118 = vadd.f32 %v72, %v117
    %v119 = vpop.f32.mrf.mxu0
    %v120 = vpop.f32.mrf.mxu0
    %v121 = vpop.f32.mrf.mxu0
    %122 = vdwg.mxu0
    %v123 = vmax.f32 %v118, 0.0
    %v124 = vpack.c.bf16 %v123, %v123
    %v125 = vld [vmem:[%s3] sm:$0xf]
    %v126 = vld [vmem:[%s3 + $0x4] sm:$0xf]
    %v127 = vld [vmem:[%s3 + $0x8] sm:$0xf]
    %v128 = vld [vmem:[%s3 + $0xc] sm:$0xf]
    %v129 = vld [vmem:[%s3 + $0x10] sm:$0xf]
    %v130 = vld [vmem:[%s3 + $0x14] sm:$0xf]
    %v131 = vld [vmem:[%s3 + $0x18] sm:$0xf]
    %v132 = vld [vmem:[%s3 + $0x1c] sm:$0xf]
    %v133 = vld [vmem:[%s3 + $0x20] sm:$0xf]
    %v134 = vld [vmem:[%s3 + $0x24] sm:$0xf]
    %v135 = vld [vmem:[%s3 + $0x28] sm:$0xf]
    %v136 = vld [vmem:[%s3 + $0x2c] sm:$0xf]
    %v137 = vld [vmem:[%s3 + $0x30] sm:$0xf]
    %v138 = vld [vmem:[%s3 + $0x34] sm:$0xf]
    %v139 = vld [vmem:[%s3 + $0x38] sm:$0xf]
    %v140 = vld [vmem:[%s3 + $0x3c] sm:$0xf]
    %v141 = vld [vmem:[%s4] sm:$0x1]
    %v143 = vlaneseq
    %v144 = vshrl.u32 %v143, 7
    %v145 = vsub.s32 0, %v144
    %v146 = vrot.slane %v141, %v145
    %v164 = vunpack.c.l.b16 %v125
    %v165 = vunpack.c.l.b16 %v126
    %v166 = vunpack.c.l.b16 %v127
    %v167 = vunpack.c.l.b16 %v128
    %v168 = vunpack.c.l.b16 %v129
    %v169 = vunpack.c.l.b16 %v130
    %v170 = vunpack.c.l.b16 %v131
    %v171 = vunpack.c.l.b16 %v132
    %v172 = vunpack.c.l.b16 %v133
    %v173 = vunpack.c.l.b16 %v134
    %v174 = vunpack.c.l.b16 %v135
    %v175 = vunpack.c.l.b16 %v136
    %v176 = vunpack.c.l.b16 %v137
    %v177 = vunpack.c.l.b16 %v138
    %v178 = vunpack.c.l.b16 %v139
    %v179 = vunpack.c.l.b16 %v140
    %v180 = vpack.c.b16 %v165, %v164
    %v181 = vpack.c.b16 %v167, %v166
    %v182 = vpack.c.b16 %v169, %v168
    %v183 = vpack.c.b16 %v171, %v170
    %v184 = vpack.c.b16 %v173, %v172
    %v185 = vpack.c.b16 %v175, %v174
    %v186 = vpack.c.b16 %v177, %v176
    %v187 = vpack.c.b16 %v179, %v178
    %196 = vmatprep.subr.bf16.mxu0 0
    %197 = vmatpush1.bf16.msra.mxu0 %v187
    %198 = vmatprep.subr.bf16.mxu0 0
    %199 = vmatpush1.bf16.msra.mxu0 %v186
    %200 = vmatprep.subr.bf16.mxu0 0
    %201 = vmatpush1.bf16.msra.mxu0 %v185
    %202 = vmatprep.subr.bf16.mxu0 0
    %203 = vmatpush1.bf16.msra.mxu0 %v184
    %204 = vmatprep.subr.bf16.mxu0 0
    %205 = vmatpush1.bf16.msra.mxu0 %v183
    %206 = vmatprep.subr.bf16.mxu0 0
    %207 = vmatpush1.bf16.msra.mxu0 %v182
    %208 = vmatprep.subr.bf16.mxu0 0
    %209 = vmatpush1.bf16.msra.mxu0 %v181
    %210 = vmatprep.subr.bf16.mxu0 0
    %211 = vmatpush1.bf16.msra.mxu0 %v180
    %212 = vmatprep.subr.bf16.mxu0 0
    %213 = vmatpush2.bf16.msra.mxu0 0
    %214 = vmatprep.subr.bf16.mxu0 0
    %215 = vmatpush2.bf16.msra.mxu0 0
    %216 = vmatprep.subr.bf16.mxu0 0
    %217 = vmatpush2.bf16.msra.mxu0 0
    %218 = vmatprep.subr.bf16.mxu0 0
    %219 = vmatpush2.bf16.msra.mxu0 0
    %220 = vmatprep.subr.bf16.mxu0 0
    %221 = vmatpush2.bf16.msra.mxu0 0
    %222 = vmatprep.subr.bf16.mxu0 0
    %223 = vmatpush2.bf16.msra.mxu0 0
    %224 = vmatprep.subr.bf16.mxu0 0
    %225 = vmatpush2.bf16.msra.mxu0 0
    %226 = vmatprep.subr.bf16.mxu0 0
    %227 = vmatpush2.bf16.msra.mxu0 0
    %228 = vmatprep.mubr.bf16.mxu0 0
    %229 = vmatmul.mubr.bf16.gmra.mxu0 %v124
    %v230 = vpop.f32.mrf.mxu0
    %v231 = vadd.f32 %v146, %v230
    %v232 = vpop.f32.mrf.mxu0
    %v233 = vpop.f32.mrf.mxu0
    %v234 = vpop.f32.mrf.mxu0
    %235 = vdwg.mxu0
    %236 = vst [vmem:[%s5] sm:$0x3] %v231
  $region29: #{vaegan_discriminator.19} parent=0 // pred_fallthru
    _
  // Predicated region
  $region30: #{vaegan_discriminator.19} parent=0 // pred_check
    _
  $region31: #{vaegan_discriminator.19} parent=0 // pred_check_branch
    %238 = sbr.rel (0) target = $region33
  $region32: #{vaegan_discriminator.19} parent=0 // pred_region
    _
  $region33: #{vaegan_discriminator.19} parent=0 // pred_fallthru
    _
  // Predicated region
  $region34: #{vaegan_discriminator.19} parent=0 // pred_check
    _
  $region35: #{vaegan_discriminator.19} parent=0 // pred_check_branch
    %240 = sbr.rel (0) target = $region37
  $region36: #{vaegan_discriminator.19} parent=0 // pred_region
    _
  $region37: #{vaegan_discriminator.19} parent=0 // pred_fallthru
    _

// kernel: vaegan_discriminator.16
$region0: #{vaegan_discriminator.16}
  #allocation0 [shape = 'u32[]', space=smem, size = 0x4, offset = 0x4, fixed_abs, tag = 'smem constant byte address 0x4 - core index']
  #allocation1 [shape = 'u32[144,128]{1,0:T(1,128)}', space=vmem, size = 0x12000, scoped, tag = 'internal scratch']
  #allocation2 [shape = 'f32[40,128]{1,0:T(8,128)}', space=vmem, size = 0x5000, scoped, tag = 'scratch operand']
  #allocation3 [shape = 'f32[24,128]{1,0:T(8,128)}', space=vmem, size = 0x3000, scoped, tag = 'scratch operand']
  #allocation4 [shape = 'f32[40,128]{1,0:T(8,128)}', space=vmem, size = 0x5000, scoped, tag = 'scratch operand']
  %s0 = inlined_call_operand.vmem [shape: f32[2,40,128], index: 0, kind: input, shape index: {}]
  %s1 = inlined_call_operand.vmem [shape: bf16[1152,128], index: 1, kind: input, shape index: {}]
  %s2 = inlined_call_operand.vmem [shape: f32[1,128], index: 2, kind: input, shape index: {}]
  %s3 = inlined_call_operand.vmem [shape: bf16[1152,128], index: 3, kind: input, shape index: {}]
  %s4 = inlined_call_operand.vmem [shape: f32[1,128], index: 4, kind: input, shape index: {}]
  %s5 = inlined_call_operand.vmem [shape: f32[2,24,128], index: 5, kind: output, shape index: {}]
  %s6 = sld [smem:[#allocation0]]
  $region53: #{vaegan_discriminator.16} parent=0
    _
  %s8 = ssub.s32 1, %s6
  %s9 = scalar_select 0, %s8, %s6
  loop: start=0, step=1, limit=4
  $region2: #{vaegan_discriminator.16} parent=0 // loop_pre_header
    _
  $region3: #{vaegan_discriminator.16} parent=0 // loop_header
    %s11 = sphi 0, %s15
    %p12 = scmp.ge.s32.totalorder %s11, 4
    %s21 = sphi 0, %s23
    %s24 = sphi 0, %s21
    %s25 = sphi 0, %s24
    %s41 = sphi 0, %s25
    %s45 = sphi 0, %s45
    %s47 = sphi 0, %s45
    %s48 = sphi 0, %s47
    %s62 = sphi 0, %s48
    %s66 = sphi 0, %s66
    %s68 = sphi 0, %s66
    %s69 = sphi 0, %s68
    %s83 = sphi 0, %s69
    %s87 = sphi 0, %s87
    %s89 = sphi 0, %s87
    %s90 = sphi 0, %s89
    %s104 = sphi 0, %s90
    %s108 = sphi 0, %s108
    %s110 = sphi 0, %s108
    %s111 = sphi 0, %s110
    %s125 = sphi 0, %s111
    %s131 = sphi 0, %s133
    %s134 = sphi 0, %s131
    %s135 = sphi 0, %s134
    %s151 = sphi 0, %s135
  $region4: #{vaegan_discriminator.16} parent=0 // loop_header_branch
    %14 = sbr.rel (%p12) target = $region8
  $region5: #{vaegan_discriminator.16} parent=0 // loop_body
    %s16 = ssub.s32 %s11, 1
    %s17 = ssub.s32 %s11, 2
    %s18 = sadd.s32 %s11, 1
    %s19 = ssub.s32 %s11, %s18
    %p20 = scmp.eq.s32.totalorder %s19, 0
    %s22 = sadd.s32 %s21, 1
    %s23 = scalar_select %p20, %s21, %s22
    %p26 = pneg %p20
    %p27 = scmp.eq.s32.totalorder %s11, 1
    %p28 = por %p26, %p27
    %p29 = scmp.ne.s32.totalorder %s21, %s24
    %p30 = scmp.eq.s32.totalorder %s11, 0
    %p31 = por %p29, %p30
    %p32 = scmp.ne.s32.totalorder %s21, %s24
    %p33 = scmp.eq.s32.totalorder %s16, 1
    %p34 = por %p32, %p33
    %p35 = scmp.ne.s32.totalorder %s24, %s25
    %p36 = scmp.eq.s32.totalorder %s16, 0
    %p37 = por %p35, %p36
    %p38 = scmp.ne.s32.totalorder %s24, %s25
    %p39 = scmp.eq.s32.totalorder %s17, 1
    %p40 = por %p38, %p39
    %p42 = scmp.ne.s32.totalorder %s25, %s41
    %p43 = scmp.eq.s32.totalorder %s17, 0
    %p44 = por %p42, %p43
    %s46 = sadd.s32 %s45, 1
    %p49 = scmp.eq.s32.totalorder %s11, 1
    %p50 = scmp.ne.s32.totalorder %s45, %s47
    %p51 = scmp.eq.s32.totalorder %s11, 0
    %p52 = por %p50, %p51
    %p53 = scmp.ne.s32.totalorder %s45, %s47
    %p54 = scmp.eq.s32.totalorder %s16, 1
    %p55 = por %p53, %p54
    %p56 = scmp.ne.s32.totalorder %s47, %s48
    %p57 = scmp.eq.s32.totalorder %s16, 0
    %p58 = por %p56, %p57
    %p59 = scmp.ne.s32.totalorder %s47, %s48
    %p60 = scmp.eq.s32.totalorder %s17, 1
    %p61 = por %p59, %p60
    %p63 = scmp.ne.s32.totalorder %s48, %s62
    %p64 = scmp.eq.s32.totalorder %s17, 0
    %p65 = por %p63, %p64
    %s67 = sadd.s32 %s66, 1
    %p70 = scmp.eq.s32.totalorder %s11, 1
    %p71 = scmp.ne.s32.totalorder %s66, %s68
    %p72 = scmp.eq.s32.totalorder %s11, 0
    %p73 = por %p71, %p72
    %p74 = scmp.ne.s32.totalorder %s66, %s68
    %p75 = scmp.eq.s32.totalorder %s16, 1
    %p76 = por %p74, %p75
    %p77 = scmp.ne.s32.totalorder %s68, %s69
    %p78 = scmp.eq.s32.totalorder %s16, 0
    %p79 = por %p77, %p78
    %p80 = scmp.ne.s32.totalorder %s68, %s69
    %p81 = scmp.eq.s32.totalorder %s17, 1
    %p82 = por %p80, %p81
    %p84 = scmp.ne.s32.totalorder %s69, %s83
    %p85 = scmp.eq.s32.totalorder %s17, 0
    %p86 = por %p84, %p85
    %s88 = sadd.s32 %s87, 1
    %p91 = scmp.eq.s32.totalorder %s11, 1
    %p92 = scmp.ne.s32.totalorder %s87, %s89
    %p93 = scmp.eq.s32.totalorder %s11, 0
    %p94 = por %p92, %p93
    %p95 = scmp.ne.s32.totalorder %s87, %s89
    %p96 = scmp.eq.s32.totalorder %s16, 1
    %p97 = por %p95, %p96
    %p98 = scmp.ne.s32.totalorder %s89, %s90
    %p99 = scmp.eq.s32.totalorder %s16, 0
    %p100 = por %p98, %p99
    %p101 = scmp.ne.s32.totalorder %s89, %s90
    %p102 = scmp.eq.s32.totalorder %s17, 1
    %p103 = por %p101, %p102
    %p105 = scmp.ne.s32.totalorder %s90, %s104
    %p106 = scmp.eq.s32.totalorder %s17, 0
    %p107 = por %p105, %p106
    %s109 = sadd.s32 %s108, 1
    %p112 = scmp.eq.s32.totalorder %s11, 1
    %p113 = scmp.ne.s32.totalorder %s108, %s110
    %p114 = scmp.eq.s32.totalorder %s11, 0
    %p115 = por %p113, %p114
    %p116 = scmp.ne.s32.totalorder %s108, %s110
    %p117 = scmp.eq.s32.totalorder %s16, 1
    %p118 = por %p116, %p117
    %p119 = scmp.ne.s32.totalorder %s110, %s111
    %p120 = scmp.eq.s32.totalorder %s16, 0
    %p121 = por %p119, %p120
    %p122 = scmp.ne.s32.totalorder %s110, %s111
    %p123 = scmp.eq.s32.totalorder %s17, 1
    %p124 = por %p122, %p123
    %p126 = scmp.ne.s32.totalorder %s111, %s125
    %p127 = scmp.eq.s32.totalorder %s17, 0
    %p128 = por %p126, %p127
    %s129 = ssub.s32 %s11, %s18
    %p130 = scmp.eq.s32.totalorder %s129, 0
    %s132 = sadd.s32 %s131, 1
    %s133 = scalar_select %p130, %s131, %s132
    %p136 = pneg %p130
    %p137 = scmp.eq.s32.totalorder %s11, 1
    %p138 = por %p136, %p137
    %p139 = scmp.ne.s32.totalorder %s131, %s134
    %p140 = scmp.eq.s32.totalorder %s11, 0
    %p141 = por %p139, %p140
    %p142 = scmp.ne.s32.totalorder %s131, %s134
    %p143 = scmp.eq.s32.totalorder %s16, 1
    %p144 = por %p142, %p143
    %p145 = scmp.ne.s32.totalorder %s134, %s135
    %p146 = scmp.eq.s32.totalorder %s16, 0
    %p147 = por %p145, %p146
    %p148 = scmp.ne.s32.totalorder %s134, %s135
    %p149 = scmp.eq.s32.totalorder %s17, 1
    %p150 = por %p148, %p149
    %p152 = scmp.ne.s32.totalorder %s135, %s151
    %p153 = scmp.eq.s32.totalorder %s17, 0
    %p154 = por %p152, %p153
    %p155 = scmp.le.s32.totalorder 1, %s11
    %p156 = scmp.lt.s32.totalorder %s11, 3
    %p157 = pnand %p155, %p156
    %p158 = pneg %p157
    // Predicated region
    $region9: #{vaegan_discriminator.16} parent=5 // pred_check
      _
    $region10: #{vaegan_discriminator.16} parent=5 // pred_check_branch
      %160 = sbr.rel (%p157) target = $region12
    $region11: #{vaegan_discriminator.16} parent=5 // pred_region
      %s161 = ssub.s32 %s11, 1
      // Predicated region
      $region13: #{vaegan_discriminator.16} parent=11 // pred_check
        %p162 = pneg %p58
      $region14: #{vaegan_discriminator.16} parent=11 // pred_check_branch
        %164 = sbr.rel (%p162) target = $region16
      $region15: #{vaegan_discriminator.16} parent=11 // pred_region
        _
      $region16: #{vaegan_discriminator.16} parent=11 // pred_fallthru
        _
      // Predicated region
      $region17: #{vaegan_discriminator.16} parent=11 // pred_check
        %p165 = pneg %p79
      $region18: #{vaegan_discriminator.16} parent=11 // pred_check_branch
        %167 = sbr.rel (%p165) target = $region20
      $region19: #{vaegan_discriminator.16} parent=11 // pred_region
        _
      $region20: #{vaegan_discriminator.16} parent=11 // pred_fallthru
        _
      // Predicated region
      $region21: #{vaegan_discriminator.16} parent=11 // pred_check
        %p168 = pneg %p100
      $region22: #{vaegan_discriminator.16} parent=11 // pred_check_branch
        %170 = sbr.rel (%p168) target = $region24
      $region23: #{vaegan_discriminator.16} parent=11 // pred_region
        _
      $region24: #{vaegan_discriminator.16} parent=11 // pred_fallthru
        _
      // Predicated region
      $region25: #{vaegan_discriminator.16} parent=11 // pred_check
        %p171 = pneg %p121
      $region26: #{vaegan_discriminator.16} parent=11 // pred_check_branch
        %173 = sbr.rel (%p171) target = $region28
      $region27: #{vaegan_discriminator.16} parent=11 // pred_region
        _
      $region28: #{vaegan_discriminator.16} parent=11 // pred_fallthru
        _
    $region12: #{vaegan_discriminator.16} parent=5 // pred_fallthru
      _
    %p174 = scmp.lt.s32.totalorder %s11, 2
    // Predicated region
    $region29: #{vaegan_discriminator.16} parent=5 // pred_check
      %p175 = pneg %p174
    $region30: #{vaegan_discriminator.16} parent=5 // pred_check_branch
      %177 = sbr.rel (%p175) target = $region32
    $region31: #{vaegan_discriminator.16} parent=5 // pred_region
      // Predicated region
      $region33: #{vaegan_discriminator.16} parent=31 // pred_check
        %p178 = pneg %p31
      $region34: #{vaegan_discriminator.16} parent=31 // pred_check_branch
        %180 = sbr.rel (%p178) target = $region36
      $region35: #{vaegan_discriminator.16} parent=31 // pred_region
        %p181 = scmp.lt.s32.totalorder %s11, 1
        %s182 = scalar_select %p181, %s11, 1
        %s183 = smul.addr %s182, 5
        %s184 = smul.addr %s183, 8
        %s185 = scalar_lea.vmem %s0, %s184
      $region36: #{vaegan_discriminator.16} parent=31 // pred_fallthru
        _
    $region32: #{vaegan_discriminator.16} parent=5 // pred_fallthru
      _
    %p186 = scmp.le.s32.totalorder 1, %s11
    %p187 = scmp.lt.s32.totalorder %s11, 3
    %p188 = pnand %p186, %p187
    %p189 = pneg %p188
    // Predicated region
    $region37: #{vaegan_discriminator.16} parent=5 // pred_check
      _
    $region38: #{vaegan_discriminator.16} parent=5 // pred_check_branch
      %191 = sbr.rel (%p188) target = $region40
    $region39: #{vaegan_discriminator.16} parent=5 // pred_region
      %s192 = ssub.s32 %s11, 1
      %p193 = scmp.lt.s32.totalorder %s16, 1
      %s194 = scalar_select %p193, %s16, 1
      %s195 = smul.addr %s194, 5
      %s196 = smul.addr %s195, 8
      %s197 = scalar_lea.vmem %s0, %s196
      %p198 = pneg %p37
      %p199 = pneg %p34
      %p200 = pneg %p58
      %p201 = pneg %p55
      %p202 = pneg %p79
      %p203 = pneg %p76
      %p204 = pneg %p100
      %p205 = pneg %p97
      %p206 = pneg %p121
      %p207 = pneg %p118
      %p208 = pneg %p147
      %p209 = pneg %p144
      %p210 = scmp.lt.s32.totalorder %s16, 1
      %s211 = scalar_select %p210, %s16, 1
      %s212 = smul.addr %s211, 3
      %s213 = smul.addr %s212, 8
      %s214 = scalar_lea.vmem %s5, %s213
      %p215 = scmp.lt.s32.totalorder %s16, 1
      %s216 = scalar_select %p215, %s16, 1
      %s217 = smul.addr %s216, 5
      %s218 = smul.addr %s217, 8
      %s219 = scalar_lea.vmem %s0, %s218
      %p220 = scmp.lt.s32.totalorder %s16, 1
      %s221 = scalar_select %p220, %s16, 1
      %s222 = smul.addr %s221, 3
      %s223 = smul.addr %s222, 8
      %s224 = scalar_lea.vmem %s5, %s223
      %v226 = vld [vmem:[%s219] sm:$0xff]
      %v227 = vld [vmem:[%s219 + $0x8] sm:$0xff]
      %v228 = vld [vmem:[%s219 + $0x10] sm:$0xff]
      %v229 = vld [vmem:[%s219 + $0x18] sm:$0xff]
      %v230 = vld [vmem:[%s219 + $0x20] sm:$0xff]
      %vm231 = vcmp.gt.f32.partialorder %v226, 0.0
      %vm232 = vcmp.gt.f32.partialorder %v227, 0.0
      %vm233 = vcmp.gt.f32.partialorder %v228, 0.0
      %vm234 = vcmp.gt.f32.partialorder %v229, 0.0
      %vm235 = vcmp.gt.f32.partialorder %v230, 0.0
      %v236 = vmul.f32 %v226, 0.2
      %v237 = vmul.f32 %v227, 0.2
      %v238 = vmul.f32 %v228, 0.2
      %v239 = vmul.f32 %v229, 0.2
      %v240 = vmul.f32 %v230, 0.2
      %v241 = vsel %vm231, %v226, %v236
      %v242 = vsel %vm232, %v227, %v237
      %v243 = vsel %vm233, %v228, %v238
      %v244 = vsel %vm234, %v229, %v239
      %v245 = vsel %vm235, %v230, %v240
      %246 = vst [vmem:[#allocation2] sm:$0xff] %v241
      %247 = vst [vmem:[#allocation2 + $0x8] sm:$0xff] %v242
      %248 = vst [vmem:[#allocation2 + $0x10] sm:$0xff] %v243
      %249 = vst [vmem:[#allocation2 + $0x18] sm:$0xff] %v244
      %250 = vst [vmem:[#allocation2 + $0x20] sm:$0xff] %v245
      %v251 = vld [vmem:[#allocation2] sm:$0xff]
      %v252 = vld [vmem:[#allocation2 + $0x8] sm:$0xff]
      %v253 = vld [vmem:[#allocation2 + $0x10] sm:$0xff]
      %v254 = vld [vmem:[#allocation2 + $0x1] sm:$0xff]
      %v255 = vld [vmem:[#allocation2 + $0x9] sm:$0xff]
      %v256 = vld [vmem:[#allocation2 + $0x11] sm:$0xff]
      %v257 = vld [vmem:[#allocation2 + $0x2] sm:$0xff]
      %v258 = vld [vmem:[#allocation2 + $0xa] sm:$0xff]
      %v259 = vld [vmem:[#allocation2 + $0x12] sm:$0xff]
      %v260 = vld [vmem:[#allocation2 + $0x6] sm:$0xff]
      %v261 = vld [vmem:[#allocation2 + $0xe] sm:$0xff]
      %v262 = vld [vmem:[#allocation2 + $0x16] sm:$0xff]
      %v263 = vld [vmem:[#allocation2 + $0x7] sm:$0xff]
      %v264 = vld [vmem:[#allocation2 + $0xf] sm:$0xff]
      %v265 = vld [vmem:[#allocation2 + $0x17] sm:$0xff]
      %v266 = vld [vmem:[#allocation2 + $0x18] sm:$0xff]
      %v267 = vld [vmem:[#allocation2 + $0xc] sm:$0xff]
      %v268 = vld [vmem:[#allocation2 + $0x14] sm:$0xff]
      %v269 = vld [vmem:[#allocation2 + $0x1c] sm:$0xff]
      %v270 = vld [vmem:[#allocation2 + $0xd] sm:$0xff]
      %v271 = vld [vmem:[#allocation2 + $0x15] sm:$0xff]
      %v272 = vld [vmem:[#allocation2 + $0x1d] sm:$0xff]
      %v273 = vld [vmem:[#allocation2 + $0x1e] sm:$0xff]
      %v274 = vpack.c.bf16 %v252, %v251
      %v275 = vpack.c.bf16 %v255, %v254
      %v276 = vpack.c.bf16 %v258, %v257
      %v277 = vpack.c.bf16 %v261, %v260
      %v278 = vpack.c.bf16 %v264, %v263
      %v279 = vpack.c.bf16 %v253, %v252
      %v280 = vpack.c.bf16 %v268, %v267
      %v281 = vpack.c.bf16 %v271, %v270
      %v282 = vpack.c.bf16 %v262, %v261
      %v283 = vpack.c.bf16 %v253, %v253
      %v284 = vpack.c.bf16 %v256, %v256
      %v285 = vpack.c.bf16 %v259, %v259
      %v286 = vpack.c.bf16 %v262, %v262
      %v287 = vpack.c.bf16 %v265, %v265
      %v288 = vpack.c.bf16 %v266, %v266
      %v289 = vpack.c.bf16 %v269, %v269
      %v290 = vpack.c.bf16 %v272, %v272
      %v291 = vpack.c.bf16 %v273, %v273
      %v292 = vld [vmem:[%s1] sm:$0xf]
      %v293 = vld [vmem:[%s1 + $0x4] sm:$0xf]
      %v294 = vld [vmem:[%s1 + $0x8] sm:$0xf]
      %v295 = vld [vmem:[%s1 + $0xc] sm:$0xf]
      %v296 = vld [vmem:[%s1 + $0x10] sm:$0xf]
      %v297 = vld [vmem:[%s1 + $0x14] sm:$0xf]
      %v298 = vld [vmem:[%s1 + $0x18] sm:$0xf]
      %v299 = vld [vmem:[%s1 + $0x1c] sm:$0xf]
      %v300 = vld [vmem:[%s1 + $0x20] sm:$0xf]
      %v301 = vld [vmem:[%s1 + $0x24] sm:$0xf]
      %v302 = vld [vmem:[%s1 + $0x28] sm:$0xf]
      %v303 = vld [vmem:[%s1 + $0x2c] sm:$0xf]
      %v304 = vld [vmem:[%s1 + $0x30] sm:$0xf]
      %v305 = vld [vmem:[%s1 + $0x34] sm:$0xf]
      %v306 = vld [vmem:[%s1 + $0x38] sm:$0xf]
      %v307 = vld [vmem:[%s1 + $0x3c] sm:$0xf]
      %v308 = vld [vmem:[%s1 + $0x40] sm:$0xf]
      %v309 = vld [vmem:[%s1 + $0x44] sm:$0xf]
      %v310 = vld [vmem:[%s1 + $0x48] sm:$0xf]
      %v311 = vld [vmem:[%s1 + $0x4c] sm:$0xf]
      %v312 = vld [vmem:[%s1 + $0x50] sm:$0xf]
      %v313 = vld [vmem:[%s1 + $0x54] sm:$0xf]
      %v314 = vld [vmem:[%s1 + $0x58] sm:$0xf]
      %v315 = vld [vmem:[%s1 + $0x5c] sm:$0xf]
      %v316 = vld [vmem:[%s1 + $0x60] sm:$0xf]
      %v317 = vld [vmem:[%s1 + $0x64] sm:$0xf]
      %v318 = vld [vmem:[%s1 + $0x68] sm:$0xf]
      %v319 = vld [vmem:[%s1 + $0x6c] sm:$0xf]
      %v320 = vld [vmem:[%s1 + $0x70] sm:$0xf]
      %v321 = vld [vmem:[%s1 + $0x74] sm:$0xf]
      %v322 = vld [vmem:[%s1 + $0x78] sm:$0xf]
      %v323 = vld [vmem:[%s1 + $0x7c] sm:$0xf]
      %v324 = vld [vmem:[%s1 + $0x80] sm:$0xf]
      %v325 = vld [vmem:[%s1 + $0x84] sm:$0xf]
      %v326 = vld [vmem:[%s1 + $0x88] sm:$0xf]
      %v327 = vld [vmem:[%s1 + $0x8c] sm:$0xf]
      %v328 = vld [vmem:[%s1 + $0x90] sm:$0xf]
      %v329 = vld [vmem:[%s1 + $0x94] sm:$0xf]
      %v330 = vld [vmem:[%s1 + $0x98] sm:$0xf]
      %v331 = vld [vmem:[%s1 + $0x9c] sm:$0xf]
      %v332 = vld [vmem:[%s1 + $0xa0] sm:$0xf]
      %v333 = vld [vmem:[%s1 + $0xa4] sm:$0xf]
      %v334 = vld [vmem:[%s1 + $0xa8] sm:$0xf]
      %v335 = vld [vmem:[%s1 + $0xac] sm:$0xf]
      %v336 = vld [vmem:[%s1 + $0xb0] sm:$0xf]
      %v337 = vld [vmem:[%s1 + $0xb4] sm:$0xf]
      %v338 = vld [vmem:[%s1 + $0xb8] sm:$0xf]
      %v339 = vld [vmem:[%s1 + $0xbc] sm:$0xf]
      %v340 = vld [vmem:[%s1 + $0xc0] sm:$0xf]
      %v341 = vld [vmem:[%s1 + $0xc4] sm:$0xf]
      %v342 = vld [vmem:[%s1 + $0xc8] sm:$0xf]
      %v343 = vld [vmem:[%s1 + $0xcc] sm:$0xf]
      %v344 = vld [vmem:[%s1 + $0xd0] sm:$0xf]
      %v345 = vld [vmem:[%s1 + $0xd4] sm:$0xf]
      %v346 = vld [vmem:[%s1 + $0xd8] sm:$0xf]
      %v347 = vld [vmem:[%s1 + $0xdc] sm:$0xf]
      %v348 = vld [vmem:[%s1 + $0xe0] sm:$0xf]
      %v349 = vld [vmem:[%s1 + $0xe4] sm:$0xf]
      %v350 = vld [vmem:[%s1 + $0xe8] sm:$0xf]
      %v351 = vld [vmem:[%s1 + $0xec] sm:$0xf]
      %v352 = vld [vmem:[%s1 + $0xf0] sm:$0xf]
      %v353 = vld [vmem:[%s1 + $0xf4] sm:$0xf]
      %v354 = vld [vmem:[%s1 + $0xf8] sm:$0xf]
      %v355 = vld [vmem:[%s1 + $0xfc] sm:$0xf]
      %v356 = vld [vmem:[%s1 + $0x100] sm:$0xf]
      %v357 = vld [vmem:[%s1 + $0x104] sm:$0xf]
      %v358 = vld [vmem:[%s1 + $0x108] sm:$0xf]
      %v359 = vld [vmem:[%s1 + $0x10c] sm:$0xf]
      %v360 = vld [vmem:[%s1 + $0x110] sm:$0xf]
      %v361 = vld [vmem:[%s1 + $0x114] sm:$0xf]
      %v362 = vld [vmem:[%s1 + $0x118] sm:$0xf]
      %v363 = vld [vmem:[%s1 + $0x11c] sm:$0xf]
      %v364 = vld [vmem:[%s1 + $0x120] sm:$0xf]
      %v365 = vld [vmem:[%s1 + $0x124] sm:$0xf]
      %v366 = vld [vmem:[%s1 + $0x128] sm:$0xf]
      %v367 = vld [vmem:[%s1 + $0x12c] sm:$0xf]
      %v368 = vld [vmem:[%s1 + $0x130] sm:$0xf]
      %v369 = vld [vmem:[%s1 + $0x134] sm:$0xf]
      %v370 = vld [vmem:[%s1 + $0x138] sm:$0xf]
      %v371 = vld [vmem:[%s1 + $0x13c] sm:$0xf]
      %v372 = vld [vmem:[%s1 + $0x140] sm:$0xf]
      %v373 = vld [vmem:[%s1 + $0x144] sm:$0xf]
      %v374 = vld [vmem:[%s1 + $0x148] sm:$0xf]
      %v375 = vld [vmem:[%s1 + $0x14c] sm:$0xf]
      %v376 = vld [vmem:[%s1 + $0x150] sm:$0xf]
      %v377 = vld [vmem:[%s1 + $0x154] sm:$0xf]
      %v378 = vld [vmem:[%s1 + $0x158] sm:$0xf]
      %v379 = vld [vmem:[%s1 + $0x15c] sm:$0xf]
      %v380 = vld [vmem:[%s1 + $0x160] sm:$0xf]
      %v381 = vld [vmem:[%s1 + $0x164] sm:$0xf]
      %v382 = vld [vmem:[%s1 + $0x168] sm:$0xf]
      %v383 = vld [vmem:[%s1 + $0x16c] sm:$0xf]
      %v384 = vld [vmem:[%s1 + $0x170] sm:$0xf]
      %v385 = vld [vmem:[%s1 + $0x174] sm:$0xf]
      %v386 = vld [vmem:[%s1 + $0x178] sm:$0xf]
      %v387 = vld [vmem:[%s1 + $0x17c] sm:$0xf]
      %v388 = vld [vmem:[%s1 + $0x180] sm:$0xf]
      %v389 = vld [vmem:[%s1 + $0x184] sm:$0xf]
      %v390 = vld [vmem:[%s1 + $0x188] sm:$0xf]
      %v391 = vld [vmem:[%s1 + $0x18c] sm:$0xf]
      %v392 = vld [vmem:[%s1 + $0x190] sm:$0xf]
      %v393 = vld [vmem:[%s1 + $0x194] sm:$0xf]
      %v394 = vld [vmem:[%s1 + $0x198] sm:$0xf]
      %v395 = vld [vmem:[%s1 + $0x19c] sm:$0xf]
      %v396 = vld [vmem:[%s1 + $0x1a0] sm:$0xf]
      %v397 = vld [vmem:[%s1 + $0x1a4] sm:$0xf]
      %v398 = vld [vmem:[%s1 + $0x1a8] sm:$0xf]
      %v399 = vld [vmem:[%s1 + $0x1ac] sm:$0xf]
      %v400 = vld [vmem:[%s1 + $0x1b0] sm:$0xf]
      %v401 = vld [vmem:[%s1 + $0x1b4] sm:$0xf]
      %v402 = vld [vmem:[%s1 + $0x1b8] sm:$0xf]
      %v403 = vld [vmem:[%s1 + $0x1bc] sm:$0xf]
      %v404 = vld [vmem:[%s1 + $0x1c0] sm:$0xf]
      %v405 = vld [vmem:[%s1 + $0x1c4] sm:$0xf]
      %v406 = vld [vmem:[%s1 + $0x1c8] sm:$0xf]
      %v407 = vld [vmem:[%s1 + $0x1cc] sm:$0xf]
      %v408 = vld [vmem:[%s1 + $0x1d0] sm:$0xf]
      %v409 = vld [vmem:[%s1 + $0x1d4] sm:$0xf]
      %v410 = vld [vmem:[%s1 + $0x1d8] sm:$0xf]
      %v411 = vld [vmem:[%s1 + $0x1dc] sm:$0xf]
      %v412 = vld [vmem:[%s1 + $0x1e0] sm:$0xf]
      %v413 = vld [vmem:[%s1 + $0x1e4] sm:$0xf]
      %v414 = vld [vmem:[%s1 + $0x1e8] sm:$0xf]
      %v415 = vld [vmem:[%s1 + $0x1ec] sm:$0xf]
      %v416 = vld [vmem:[%s1 + $0x1f0] sm:$0xf]
      %v417 = vld [vmem:[%s1 + $0x1f4] sm:$0xf]
      %v418 = vld [vmem:[%s1 + $0x1f8] sm:$0xf]
      %v419 = vld [vmem:[%s1 + $0x1fc] sm:$0xf]
      %v420 = vld [vmem:[%s1 + $0x200] sm:$0xf]
      %v421 = vld [vmem:[%s1 + $0x204] sm:$0xf]
      %v422 = vld [vmem:[%s1 + $0x208] sm:$0xf]
      %v423 = vld [vmem:[%s1 + $0x20c] sm:$0xf]
      %v424 = vld [vmem:[%s1 + $0x210] sm:$0xf]
      %v425 = vld [vmem:[%s1 + $0x214] sm:$0xf]
      %v426 = vld [vmem:[%s1 + $0x218] sm:$0xf]
      %v427 = vld [vmem:[%s1 + $0x21c] sm:$0xf]
      %v428 = vld [vmem:[%s1 + $0x220] sm:$0xf]
      %v429 = vld [vmem:[%s1 + $0x224] sm:$0xf]
      %v430 = vld [vmem:[%s1 + $0x228] sm:$0xf]
      %v431 = vld [vmem:[%s1 + $0x22c] sm:$0xf]
      %v432 = vld [vmem:[%s1 + $0x230] sm:$0xf]
      %v433 = vld [vmem:[%s1 + $0x234] sm:$0xf]
      %v434 = vld [vmem:[%s1 + $0x238] sm:$0xf]
      %v435 = vld [vmem:[%s1 + $0x23c] sm:$0xf]
      %v436 = vld [vmem:[%s2] sm:$0x1]
      %v438 = vlaneseq
      %v439 = vshrl.u32 %v438, 7
      %v440 = vsub.s32 0, %v439
      %v441 = vrot.slane %v436, %v440
      %v587 = vunpack.c.l.b16 %v292
      %v588 = vunpack.c.l.b16 %v293
      %v589 = vunpack.c.l.b16 %v294
      %v590 = vunpack.c.l.b16 %v295
      %v591 = vunpack.c.l.b16 %v296
      %v592 = vunpack.c.l.b16 %v297
      %v593 = vunpack.c.l.b16 %v298
      %v594 = vunpack.c.l.b16 %v299
      %v595 = vunpack.c.l.b16 %v300
      %v596 = vunpack.c.l.b16 %v301
      %v597 = vunpack.c.l.b16 %v302
      %v598 = vunpack.c.l.b16 %v303
      %v599 = vunpack.c.l.b16 %v304
      %v600 = vunpack.c.l.b16 %v305
      %v601 = vunpack.c.l.b16 %v306
      %v602 = vunpack.c.l.b16 %v307
      %v603 = vunpack.c.l.b16 %v308
      %v604 = vunpack.c.l.b16 %v309
      %v605 = vunpack.c.l.b16 %v310
      %v606 = vunpack.c.l.b16 %v311
      %v607 = vunpack.c.l.b16 %v312
      %v608 = vunpack.c.l.b16 %v313
      %v609 = vunpack.c.l.b16 %v314
      %v610 = vunpack.c.l.b16 %v315
      %v611 = vunpack.c.l.b16 %v316
      %v612 = vunpack.c.l.b16 %v317
      %v613 = vunpack.c.l.b16 %v318
      %v614 = vunpack.c.l.b16 %v319
      %v615 = vunpack.c.l.b16 %v320
      %v616 = vunpack.c.l.b16 %v321
      %v617 = vunpack.c.l.b16 %v322
      %v618 = vunpack.c.l.b16 %v323
      %v619 = vunpack.c.l.b16 %v324
      %v620 = vunpack.c.l.b16 %v325
      %v621 = vunpack.c.l.b16 %v326
      %v622 = vunpack.c.l.b16 %v327
      %v623 = vunpack.c.l.b16 %v328
      %v624 = vunpack.c.l.b16 %v329
      %v625 = vunpack.c.l.b16 %v330
      %v626 = vunpack.c.l.b16 %v331
      %v627 = vunpack.c.l.b16 %v332
      %v628 = vunpack.c.l.b16 %v333
      %v629 = vunpack.c.l.b16 %v334
      %v630 = vunpack.c.l.b16 %v335
      %v631 = vunpack.c.l.b16 %v336
      %v632 = vunpack.c.l.b16 %v337
      %v633 = vunpack.c.l.b16 %v338
      %v634 = vunpack.c.l.b16 %v339
      %v635 = vunpack.c.l.b16 %v340
      %v636 = vunpack.c.l.b16 %v341
      %v637 = vunpack.c.l.b16 %v342
      %v638 = vunpack.c.l.b16 %v343
      %v639 = vunpack.c.l.b16 %v344
      %v640 = vunpack.c.l.b16 %v345
      %v641 = vunpack.c.l.b16 %v346
      %v642 = vunpack.c.l.b16 %v347
      %v643 = vunpack.c.l.b16 %v348
      %v644 = vunpack.c.l.b16 %v349
      %v645 = vunpack.c.l.b16 %v350
      %v646 = vunpack.c.l.b16 %v351
      %v647 = vunpack.c.l.b16 %v352
      %v648 = vunpack.c.l.b16 %v353
      %v649 = vunpack.c.l.b16 %v354
      %v650 = vunpack.c.l.b16 %v355
      %v651 = vunpack.c.l.b16 %v356
      %v652 = vunpack.c.l.b16 %v357
      %v653 = vunpack.c.l.b16 %v358
      %v654 = vunpack.c.l.b16 %v359
      %v655 = vunpack.c.l.b16 %v360
      %v656 = vunpack.c.l.b16 %v361
      %v657 = vunpack.c.l.b16 %v362
      %v658 = vunpack.c.l.b16 %v363
      %v659 = vunpack.c.l.b16 %v364
      %v660 = vunpack.c.l.b16 %v365
      %v661 = vunpack.c.l.b16 %v366
      %v662 = vunpack.c.l.b16 %v367
      %v663 = vunpack.c.l.b16 %v368
      %v664 = vunpack.c.l.b16 %v369
      %v665 = vunpack.c.l.b16 %v370
      %v666 = vunpack.c.l.b16 %v371
      %v667 = vunpack.c.l.b16 %v372
      %v668 = vunpack.c.l.b16 %v373
      %v669 = vunpack.c.l.b16 %v374
      %v670 = vunpack.c.l.b16 %v375
      %v671 = vunpack.c.l.b16 %v376
      %v672 = vunpack.c.l.b16 %v377
      %v673 = vunpack.c.l.b16 %v378
      %v674 = vunpack.c.l.b16 %v379
      %v675 = vunpack.c.l.b16 %v380
      %v676 = vunpack.c.l.b16 %v381
      %v677 = vunpack.c.l.b16 %v382
      %v678 = vunpack.c.l.b16 %v383
      %v679 = vunpack.c.l.b16 %v384
      %v680 = vunpack.c.l.b16 %v385
      %v681 = vunpack.c.l.b16 %v386
      %v682 = vunpack.c.l.b16 %v387
      %v683 = vunpack.c.l.b16 %v388
      %v684 = vunpack.c.l.b16 %v389
      %v685 = vunpack.c.l.b16 %v390
      %v686 = vunpack.c.l.b16 %v391
      %v687 = vunpack.c.l.b16 %v392
      %v688 = vunpack.c.l.b16 %v393
      %v689 = vunpack.c.l.b16 %v394
      %v690 = vunpack.c.l.b16 %v395
      %v691 = vunpack.c.l.b16 %v396
      %v692 = vunpack.c.l.b16 %v397
      %v693 = vunpack.c.l.b16 %v398
      %v694 = vunpack.c.l.b16 %v399
      %v695 = vunpack.c.l.b16 %v400
      %v696 = vunpack.c.l.b16 %v401
      %v697 = vunpack.c.l.b16 %v402
      %v698 = vunpack.c.l.b16 %v403
      %v699 = vunpack.c.l.b16 %v404
      %v700 = vunpack.c.l.b16 %v405
      %v701 = vunpack.c.l.b16 %v406
      %v702 = vunpack.c.l.b16 %v407
      %v703 = vunpack.c.l.b16 %v408
      %v704 = vunpack.c.l.b16 %v409
      %v705 = vunpack.c.l.b16 %v410
      %v706 = vunpack.c.l.b16 %v411
      %v707 = vunpack.c.l.b16 %v412
      %v708 = vunpack.c.l.b16 %v413
      %v709 = vunpack.c.l.b16 %v414
      %v710 = vunpack.c.l.b16 %v415
      %v711 = vunpack.c.l.b16 %v416
      %v712 = vunpack.c.l.b16 %v417
      %v713 = vunpack.c.l.b16 %v418
      %v714 = vunpack.c.l.b16 %v419
      %v715 = vunpack.c.l.b16 %v420
      %v716 = vunpack.c.l.b16 %v421
      %v717 = vunpack.c.l.b16 %v422
      %v718 = vunpack.c.l.b16 %v423
      %v719 = vunpack.c.l.b16 %v424
      %v720 = vunpack.c.l.b16 %v425
      %v721 = vunpack.c.l.b16 %v426
      %v722 = vunpack.c.l.b16 %v427
      %v723 = vunpack.c.l.b16 %v428
      %v724 = vunpack.c.l.b16 %v429
      %v725 = vunpack.c.l.b16 %v430
      %v726 = vunpack.c.l.b16 %v431
      %v727 = vunpack.c.l.b16 %v432
      %v728 = vunpack.c.l.b16 %v433
      %v729 = vunpack.c.l.b16 %v434
      %v730 = vunpack.c.l.b16 %v435
      %v731 = vpack.c.b16 %v588, %v587
      %v732 = vpack.c.b16 %v590, %v589
      %v733 = vpack.c.b16 %v592, %v591
      %v734 = vpack.c.b16 %v594, %v593
      %v735 = vpack.c.b16 %v596, %v595
      %v736 = vpack.c.b16 %v598, %v597
      %v737 = vpack.c.b16 %v600, %v599
      %v738 = vpack.c.b16 %v602, %v601
      %v739 = vpack.c.b16 %v604, %v603
      %v740 = vpack.c.b16 %v606, %v605
      %v741 = vpack.c.b16 %v608, %v607
      %v742 = vpack.c.b16 %v610, %v609
      %v743 = vpack.c.b16 %v612, %v611
      %v744 = vpack.c.b16 %v614, %v613
      %v745 = vpack.c.b16 %v616, %v615
      %v746 = vpack.c.b16 %v618, %v617
      %v747 = vpack.c.b16 %v620, %v619
      %v748 = vpack.c.b16 %v622, %v621
      %v749 = vpack.c.b16 %v624, %v623
      %v750 = vpack.c.b16 %v626, %v625
      %v751 = vpack.c.b16 %v628, %v627
      %v752 = vpack.c.b16 %v630, %v629
      %v753 = vpack.c.b16 %v632, %v631
      %v754 = vpack.c.b16 %v634, %v633
      %v755 = vpack.c.b16 %v636, %v635
      %v756 = vpack.c.b16 %v638, %v637
      %v757 = vpack.c.b16 %v640, %v639
      %v758 = vpack.c.b16 %v642, %v641
      %v759 = vpack.c.b16 %v644, %v643
      %v760 = vpack.c.b16 %v646, %v645
      %v761 = vpack.c.b16 %v648, %v647
      %v762 = vpack.c.b16 %v650, %v649
      %v763 = vpack.c.b16 %v652, %v651
      %v764 = vpack.c.b16 %v654, %v653
      %v765 = vpack.c.b16 %v656, %v655
      %v766 = vpack.c.b16 %v658, %v657
      %v767 = vpack.c.b16 %v660, %v659
      %v768 = vpack.c.b16 %v662, %v661
      %v769 = vpack.c.b16 %v664, %v663
      %v770 = vpack.c.b16 %v666, %v665
      %v771 = vpack.c.b16 %v668, %v667
      %v772 = vpack.c.b16 %v670, %v669
      %v773 = vpack.c.b16 %v672, %v671
      %v774 = vpack.c.b16 %v674, %v673
      %v775 = vpack.c.b16 %v676, %v675
      %v776 = vpack.c.b16 %v678, %v677
      %v777 = vpack.c.b16 %v680, %v679
      %v778 = vpack.c.b16 %v682, %v681
      %v779 = vpack.c.b16 %v684, %v683
      %v780 = vpack.c.b16 %v686, %v685
      %v781 = vpack.c.b16 %v688, %v687
      %v782 = vpack.c.b16 %v690, %v689
      %v783 = vpack.c.b16 %v692, %v691
      %v784 = vpack.c.b16 %v694, %v693
      %v785 = vpack.c.b16 %v696, %v695
      %v786 = vpack.c.b16 %v698, %v697
      %v787 = vpack.c.b16 %v700, %v699
      %v788 = vpack.c.b16 %v702, %v701
      %v789 = vpack.c.b16 %v704, %v703
      %v790 = vpack.c.b16 %v706, %v705
      %v791 = vpack.c.b16 %v708, %v707
      %v792 = vpack.c.b16 %v710, %v709
      %v793 = vpack.c.b16 %v712, %v711
      %v794 = vpack.c.b16 %v714, %v713
      %v795 = vpack.c.b16 %v716, %v715
      %v796 = vpack.c.b16 %v718, %v717
      %v797 = vpack.c.b16 %v720, %v719
      %v798 = vpack.c.b16 %v722, %v721
      %v799 = vpack.c.b16 %v724, %v723
      %v800 = vpack.c.b16 %v726, %v725
      %v801 = vpack.c.b16 %v728, %v727
      %v802 = vpack.c.b16 %v730, %v729
      %875 = vmatprep.subr.bf16.mxu0 0
      %876 = vmatpush1.bf16.msra.mxu0 %v738
      %877 = vmatprep.subr.bf16.mxu0 0
      %878 = vmatpush1.bf16.msra.mxu0 %v737
      %879 = vmatprep.subr.bf16.mxu0 0
      %880 = vmatpush1.bf16.msra.mxu0 %v736
      %881 = vmatprep.subr.bf16.mxu0 0
      %882 = vmatpush1.bf16.msra.mxu0 %v735
      %883 = vmatprep.subr.bf16.mxu0 0
      %884 = vmatpush1.bf16.msra.mxu0 %v734
      %885 = vmatprep.subr.bf16.mxu0 0
      %886 = vmatpush1.bf16.msra.mxu0 %v733
      %887 = vmatprep.subr.bf16.mxu0 0
      %888 = vmatpush1.bf16.msra.mxu0 %v732
      %889 = vmatprep.subr.bf16.mxu0 0
      %890 = vmatpush1.bf16.msra.mxu0 %v731
      %891 = vmatprep.subr.bf16.mxu0 0
      %892 = vmatpush2.bf16.msra.mxu0 %v746
      %893 = vmatprep.subr.bf16.mxu0 0
      %894 = vmatpush2.bf16.msra.mxu0 %v745
      %895 = vmatprep.subr.bf16.mxu0 0
      %896 = vmatpush2.bf16.msra.mxu0 %v744
      %897 = vmatprep.subr.bf16.mxu0 0
      %898 = vmatpush2.bf16.msra.mxu0 %v743
      %899 = vmatprep.subr.bf16.mxu0 0
      %900 = vmatpush2.bf16.msra.mxu0 %v742
      %901 = vmatprep.subr.bf16.mxu0 0
      %902 = vmatpush2.bf16.msra.mxu0 %v741
      %903 = vmatprep.subr.bf16.mxu0 0
      %904 = vmatpush2.bf16.msra.mxu0 %v740
      %905 = vmatprep.subr.bf16.mxu0 0
      %906 = vmatpush2.bf16.msra.mxu0 %v739
      %907 = vmatprep.mubr.bf16.mxu0 %v275
      %908 = vmatmul.mubr.bf16.gmra.mxu0 %v274
      %v909 = vpop.f32.mrf.mxu0
      %v910 = vadd.f32 %v441, %v909
      %v911 = vpop.f32.mrf.mxu0
      %v912 = vpop.f32.mrf.mxu0
      %v913 = vadd.f32 %v441, %v912
      %v914 = vpop.f32.mrf.mxu0
      %915 = vmatprep.mubr.bf16.mxu0 %v284
      %916 = vmatmul.mubr.bf16.gmra.mxu0 %v283
      %v917 = vpop.f32.mrf.mxu0
      %v918 = vadd.f32 %v441, %v917
      %v919 = vpop.f32.mrf.mxu0
      %v920 = vpop.f32.mrf.mxu0
      %v921 = vpop.f32.mrf.mxu0
      %922 = vdwg.mxu0
      %923 = vmatprep.subr.bf16.mxu0 0
      %924 = vmatpush1.bf16.msra.mxu0 %v754
      %925 = vmatprep.subr.bf16.mxu0 0
      %926 = vmatpush1.bf16.msra.mxu0 %v753
      %927 = vmatprep.subr.bf16.mxu0 0
      %928 = vmatpush1.bf16.msra.mxu0 %v752
      %929 = vmatprep.subr.bf16.mxu0 0
      %930 = vmatpush1.bf16.msra.mxu0 %v751
      %931 = vmatprep.subr.bf16.mxu0 0
      %932 = vmatpush1.bf16.msra.mxu0 %v750
      %933 = vmatprep.subr.bf16.mxu0 0
      %934 = vmatpush1.bf16.msra.mxu0 %v749
      %935 = vmatprep.subr.bf16.mxu0 0
      %936 = vmatpush1.bf16.msra.mxu0 %v748
      %937 = vmatprep.subr.bf16.mxu0 0
      %938 = vmatpush1.bf16.msra.mxu0 %v747
      %939 = vmatprep.subr.bf16.mxu0 0
      %940 = vmatpush2.bf16.msra.mxu0 %v762
      %941 = vmatprep.subr.bf16.mxu0 0
      %942 = vmatpush2.bf16.msra.mxu0 %v761
      %943 = vmatprep.subr.bf16.mxu0 0
      %944 = vmatpush2.bf16.msra.mxu0 %v760
      %945 = vmatprep.subr.bf16.mxu0 0
      %946 = vmatpush2.bf16.msra.mxu0 %v759
      %947 = vmatprep.subr.bf16.mxu0 0
      %948 = vmatpush2.bf16.msra.mxu0 %v758
      %949 = vmatprep.subr.bf16.mxu0 0
      %950 = vmatpush2.bf16.msra.mxu0 %v757
      %951 = vmatprep.subr.bf16.mxu0 0
      %952 = vmatpush2.bf16.msra.mxu0 %v756
      %953 = vmatprep.subr.bf16.mxu0 0
      %954 = vmatpush2.bf16.msra.mxu0 %v755
      %955 = vmatprep.mubr.bf16.mxu0 %v277
      %956 = vmatmul.mubr.bf16.gmra.mxu0 %v276
      %v957 = vpop.f32.mrf.mxu0
      %v958 = vadd.f32 %v910, %v957
      %v959 = vpop.f32.mrf.mxu0
      %v960 = vpop.f32.mrf.mxu0
      %v961 = vadd.f32 %v913, %v960
      %v962 = vpop.f32.mrf.mxu0
      %963 = vmatprep.mubr.bf16.mxu0 %v286
      %964 = vmatmul.mubr.bf16.gmra.mxu0 %v285
      %v965 = vpop.f32.mrf.mxu0
      %v966 = vadd.f32 %v918, %v965
      %v967 = vpop.f32.mrf.mxu0
      %v968 = vpop.f32.mrf.mxu0
      %v969 = vpop.f32.mrf.mxu0
      %970 = vdwg.mxu0
      %971 = vmatprep.subr.bf16.mxu0 0
      %972 = vmatpush1.bf16.msra.mxu0 %v770
      %973 = vmatprep.subr.bf16.mxu0 0
      %974 = vmatpush1.bf16.msra.mxu0 %v769
      %975 = vmatprep.subr.bf16.mxu0 0
      %976 = vmatpush1.bf16.msra.mxu0 %v768
      %977 = vmatprep.subr.bf16.mxu0 0
      %978 = vmatpush1.bf16.msra.mxu0 %v767
      %979 = vmatprep.subr.bf16.mxu0 0
      %980 = vmatpush1.bf16.msra.mxu0 %v766
      %981 = vmatprep.subr.bf16.mxu0 0
      %982 = vmatpush1.bf16.msra.mxu0 %v765
      %983 = vmatprep.subr.bf16.mxu0 0
      %984 = vmatpush1.bf16.msra.mxu0 %v764
      %985 = vmatprep.subr.bf16.mxu0 0
      %986 = vmatpush1.bf16.msra.mxu0 %v763
      %987 = vmatprep.subr.bf16.mxu0 0
      %988 = vmatpush2.bf16.msra.mxu0 %v778
      %989 = vmatprep.subr.bf16.mxu0 0
      %990 = vmatpush2.bf16.msra.mxu0 %v777
      %991 = vmatprep.subr.bf16.mxu0 0
      %992 = vmatpush2.bf16.msra.mxu0 %v776
      %993 = vmatprep.subr.bf16.mxu0 0
      %994 = vmatpush2.bf16.msra.mxu0 %v775
      %995 = vmatprep.subr.bf16.mxu0 0
      %996 = vmatpush2.bf16.msra.mxu0 %v774
      %997 = vmatprep.subr.bf16.mxu0 0
      %998 = vmatpush2.bf16.msra.mxu0 %v773
      %999 = vmatprep.subr.bf16.mxu0 0
      %1000 = vmatpush2.bf16.msra.mxu0 %v772
      %1001 = vmatprep.subr.bf16.mxu0 0
      %1002 = vmatpush2.bf16.msra.mxu0 %v771
      %1003 = vmatprep.mubr.bf16.mxu0 %v279
      %1004 = vmatmul.mubr.bf16.gmra.mxu0 %v278
      %v1005 = vpop.f32.mrf.mxu0
      %v1006 = vadd.f32 %v958, %v1005
      %v1007 = vpop.f32.mrf.mxu0
      %v1008 = vpop.f32.mrf.mxu0
      %v1009 = vadd.f32 %v961, %v1008
      %v1010 = vpop.f32.mrf.mxu0
      %1011 = vmatprep.mubr.bf16.mxu0 %v288
      %1012 = vmatmul.mubr.bf16.gmra.mxu0 %v287
      %v1013 = vpop.f32.mrf.mxu0
      %v1014 = vadd.f32 %v966, %v1013
      %v1015 = vpop.f32.mrf.mxu0
      %v1016 = vpop.f32.mrf.mxu0
      %v1017 = vpop.f32.mrf.mxu0
      %1018 = vdwg.mxu0
      %1019 = vmatprep.subr.bf16.mxu0 0
      %1020 = vmatpush1.bf16.msra.mxu0 %v786
      %1021 = vmatprep.subr.bf16.mxu0 0
      %1022 = vmatpush1.bf16.msra.mxu0 %v785
      %1023 = vmatprep.subr.bf16.mxu0 0
      %1024 = vmatpush1.bf16.msra.mxu0 %v784
      %1025 = vmatprep.subr.bf16.mxu0 0
      %1026 = vmatpush1.bf16.msra.mxu0 %v783
      %1027 = vmatprep.subr.bf16.mxu0 0
      %1028 = vmatpush1.bf16.msra.mxu0 %v782
      %1029 = vmatprep.subr.bf16.mxu0 0
      %1030 = vmatpush1.bf16.msra.mxu0 %v781
      %1031 = vmatprep.subr.bf16.mxu0 0
      %1032 = vmatpush1.bf16.msra.mxu0 %v780
      %1033 = vmatprep.subr.bf16.mxu0 0
      %1034 = vmatpush1.bf16.msra.mxu0 %v779
      %1035 = vmatprep.subr.bf16.mxu0 0
      %1036 = vmatpush2.bf16.msra.mxu0 %v794
      %1037 = vmatprep.subr.bf16.mxu0 0
      %1038 = vmatpush2.bf16.msra.mxu0 %v793
      %1039 = vmatprep.subr.bf16.mxu0 0
      %1040 = vmatpush2.bf16.msra.mxu0 %v792
      %1041 = vmatprep.subr.bf16.mxu0 0
      %1042 = vmatpush2.bf16.msra.mxu0 %v791
      %1043 = vmatprep.subr.bf16.mxu0 0
      %1044 = vmatpush2.bf16.msra.mxu0 %v790
      %1045 = vmatprep.subr.bf16.mxu0 0
      %1046 = vmatpush2.bf16.msra.mxu0 %v789
      %1047 = vmatprep.subr.bf16.mxu0 0
      %1048 = vmatpush2.bf16.msra.mxu0 %v788
      %1049 = vmatprep.subr.bf16.mxu0 0
      %1050 = vmatpush2.bf16.msra.mxu0 %v787
      %1051 = vmatprep.mubr.bf16.mxu0 %v281
      %1052 = vmatmul.mubr.bf16.gmra.mxu0 %v280
      %v1053 = vpop.f32.mrf.mxu0
      %v1054 = vadd.f32 %v1006, %v1053
      %v1055 = vpop.f32.mrf.mxu0
      %v1056 = vpop.f32.mrf.mxu0
      %v1057 = vadd.f32 %v1009, %v1056
      %v1058 = vpop.f32.mrf.mxu0
      %1059 = vmatprep.mubr.bf16.mxu0 %v290
      %1060 = vmatmul.mubr.bf16.gmra.mxu0 %v289
      %v1061 = vpop.f32.mrf.mxu0
      %v1062 = vadd.f32 %v1014, %v1061
      %v1063 = vpop.f32.mrf.mxu0
      %v1064 = vpop.f32.mrf.mxu0
      %v1065 = vpop.f32.mrf.mxu0
      %1066 = vdwg.mxu0
      %1067 = vmatprep.subr.bf16.mxu0 0
      %1068 = vmatpush1.bf16.msra.mxu0 %v802
      %1069 = vmatprep.subr.bf16.mxu0 0
      %1070 = vmatpush1.bf16.msra.mxu0 %v801
      %1071 = vmatprep.subr.bf16.mxu0 0
      %1072 = vmatpush1.bf16.msra.mxu0 %v800
      %1073 = vmatprep.subr.bf16.mxu0 0
      %1074 = vmatpush1.bf16.msra.mxu0 %v799
      %1075 = vmatprep.subr.bf16.mxu0 0
      %1076 = vmatpush1.bf16.msra.mxu0 %v798
      %1077 = vmatprep.subr.bf16.mxu0 0
      %1078 = vmatpush1.bf16.msra.mxu0 %v797
      %1079 = vmatprep.subr.bf16.mxu0 0
      %1080 = vmatpush1.bf16.msra.mxu0 %v796
      %1081 = vmatprep.subr.bf16.mxu0 0
      %1082 = vmatpush1.bf16.msra.mxu0 %v795
      %1083 = vmatprep.subr.bf16.mxu0 0
      %1084 = vmatpush2.bf16.msra.mxu0 0
      %1085 = vmatprep.subr.bf16.mxu0 0
      %1086 = vmatpush2.bf16.msra.mxu0 0
      %1087 = vmatprep.subr.bf16.mxu0 0
      %1088 = vmatpush2.bf16.msra.mxu0 0
      %1089 = vmatprep.subr.bf16.mxu0 0
      %1090 = vmatpush2.bf16.msra.mxu0 0
      %1091 = vmatprep.subr.bf16.mxu0 0
      %1092 = vmatpush2.bf16.msra.mxu0 0
      %1093 = vmatprep.subr.bf16.mxu0 0
      %1094 = vmatpush2.bf16.msra.mxu0 0
      %1095 = vmatprep.subr.bf16.mxu0 0
      %1096 = vmatpush2.bf16.msra.mxu0 0
      %1097 = vmatprep.subr.bf16.mxu0 0
      %1098 = vmatpush2.bf16.msra.mxu0 0
      %1099 = vmatprep.mubr.bf16.mxu0 0
      %1100 = vmatmul.mubr.bf16.gmra.mxu0 %v282
      %v1101 = vpop.f32.mrf.mxu0
      %v1102 = vadd.f32 %v1054, %v1101
      %v1103 = vpop.f32.mrf.mxu0
      %v1104 = vpop.f32.mrf.mxu0
      %v1105 = vadd.f32 %v1057, %v1104
      %v1106 = vpop.f32.mrf.mxu0
      %1107 = vmatprep.mubr.bf16.mxu0 0
      %1108 = vmatmul.mubr.bf16.gmra.mxu0 %v291
      %v1109 = vpop.f32.mrf.mxu0
      %v1110 = vadd.f32 %v1062, %v1109
      %v1111 = vpop.f32.mrf.mxu0
      %v1112 = vpop.f32.mrf.mxu0
      %v1113 = vpop.f32.mrf.mxu0
      %1114 = vdwg.mxu0
      %vm1115 = vcmp.gt.f32.partialorder %v1102, 0.0
      %vm1116 = vcmp.gt.f32.partialorder %v1105, 0.0
      %vm1117 = vcmp.gt.f32.partialorder %v1110, 0.0
      %v1118 = vmul.f32 %v1102, 0.2
      %v1119 = vmul.f32 %v1105, 0.2
      %v1120 = vmul.f32 %v1110, 0.2
      %v1121 = vsel %vm1115, %v1102, %v1118
      %v1122 = vsel %vm1116, %v1105, %v1119
      %v1123 = vsel %vm1117, %v1110, %v1120
      %1124 = vst [vmem:[#allocation3] sm:$0xff] %v1121
      %1125 = vst [vmem:[#allocation3 + $0x8] sm:$0xff] %v1122
      %1126 = vst [vmem:[#allocation3 + $0x10] sm:$0xff] %v1123
      %1127 = vst [vmem:[#allocation4 + $0x24] sm:$0xf] 0.0
      %v1128 = vld [vmem:[#allocation3 + $0x6] sm:$0xf]
      %1129 = vst [vmem:[#allocation4 + $0x1] sm:$0xf] %v1128
      %v1130 = vld [vmem:[#allocation3 + $0x7] sm:$0x1]
      %1131 = vst [vmem:[#allocation4] sm:$0x1] %v1130
      %v1132 = vld [vmem:[#allocation3 + $0x8] sm:$0x1]
      %1133 = vst [vmem:[#allocation4 + $0x5] sm:$0x1] %v1132
      %v1134 = vld [vmem:[#allocation3] sm:$0xf]
      %1135 = vst [vmem:[#allocation4 + $0x7] sm:$0xf] %v1134
      %v1136 = vld [vmem:[#allocation3 + $0x1] sm:$0x1]
      %1137 = vst [vmem:[#allocation4 + $0x6] sm:$0x1] %v1136
      %v1138 = vld [vmem:[#allocation3 + $0x2] sm:$0x1]
      %1139 = vst [vmem:[#allocation4 + $0xb] sm:$0x1] %v1138
      %v1140 = vld [vmem:[#allocation3 + $0x6] sm:$0xf]
      %1141 = vst [vmem:[#allocation4 + $0xd] sm:$0xf] %v1140
      %v1142 = vld [vmem:[#allocation3 + $0x7] sm:$0x1]
      %1143 = vst [vmem:[#allocation4 + $0xc] sm:$0x1] %v1142
      %v1144 = vld [vmem:[#allocation3 + $0x8] sm:$0x1]
      %1145 = vst [vmem:[#allocation4 + $0x11] sm:$0x1] %v1144
      %v1146 = vld [vmem:[#allocation3 + $0xc] sm:$0xf]
      %1147 = vst [vmem:[#allocation4 + $0x13] sm:$0xf] %v1146
      %v1148 = vld [vmem:[#allocation3 + $0xd] sm:$0x1]
      %1149 = vst [vmem:[#allocation4 + $0x12] sm:$0x1] %v1148
      %v1150 = vld [vmem:[#allocation3 + $0xe] sm:$0x1]
      %1151 = vst [vmem:[#allocation4 + $0x17] sm:$0x1] %v1150
      %v1152 = vld [vmem:[#allocation3 + $0x12] sm:$0xf]
      %1153 = vst [vmem:[#allocation4 + $0x19] sm:$0xf] %v1152
      %v1154 = vld [vmem:[#allocation3 + $0x13] sm:$0x1]
      %1155 = vst [vmem:[#allocation4 + $0x18] sm:$0x1] %v1154
      %v1156 = vld [vmem:[#allocation3 + $0x14] sm:$0x1]
      %1157 = vst [vmem:[#allocation4 + $0x1d] sm:$0x1] %v1156
      %v1158 = vld [vmem:[#allocation3 + $0xc] sm:$0xf]
      %1159 = vst [vmem:[#allocation4 + $0x1f] sm:$0xf] %v1158
      %v1160 = vld [vmem:[#allocation3 + $0xd] sm:$0x1]
      %1161 = vst [vmem:[#allocation4 + $0x1e] sm:$0x1] %v1160
      %v1162 = vld [vmem:[#allocation3 + $0xe] sm:$0x1]
      %1163 = vst [vmem:[#allocation4 + $0x23] sm:$0x1] %v1162
      %v1164 = vld [vmem:[#allocation4] sm:$0xff]
      %v1165 = vld [vmem:[#allocation4 + $0x8] sm:$0xff]
      %v1166 = vld [vmem:[#allocation4 + $0x10] sm:$0xff]
      %v1167 = vld [vmem:[#allocation4 + $0x1] sm:$0xff]
      %v1168 = vld [vmem:[#allocation4 + $0x9] sm:$0xff]
      %v1169 = vld [vmem:[#allocation4 + $0x11] sm:$0xff]
      %v1170 = vld [vmem:[#allocation4 + $0x2] sm:$0xff]
      %v1171 = vld [vmem:[#allocation4 + $0xa] sm:$0xff]
      %v1172 = vld [vmem:[#allocation4 + $0x12] sm:$0xff]
      %v1173 = vld [vmem:[#allocation4 + $0x6] sm:$0xff]
      %v1174 = vld [vmem:[#allocation4 + $0xe] sm:$0xff]
      %v1175 = vld [vmem:[#allocation4 + $0x16] sm:$0xff]
      %v1176 = vld [vmem:[#allocation4 + $0x7] sm:$0xff]
      %v1177 = vld [vmem:[#allocation4 + $0xf] sm:$0xff]
      %v1178 = vld [vmem:[#allocation4 + $0x17] sm:$0xff]
      %v1179 = vld [vmem:[#allocation4 + $0x18] sm:$0xff]
      %v1180 = vld [vmem:[#allocation4 + $0xc] sm:$0xff]
      %v1181 = vld [vmem:[#allocation4 + $0x14] sm:$0xff]
      %v1182 = vld [vmem:[#allocation4 + $0x1c] sm:$0xff]
      %v1183 = vld [vmem:[#allocation4 + $0xd] sm:$0xff]
      %v1184 = vld [vmem:[#allocation4 + $0x15] sm:$0xff]
      %v1185 = vld [vmem:[#allocation4 + $0x1d] sm:$0xff]
      %v1186 = vld [vmem:[#allocation4 + $0x1e] sm:$0xff]
      %v1187 = vpack.c.bf16 %v1165, %v1164
      %v1188 = vpack.c.bf16 %v1168, %v1167
      %v1189 = vpack.c.bf16 %v1171, %v1170
      %v1190 = vpack.c.bf16 %v1174, %v1173
      %v1191 = vpack.c.bf16 %v1177, %v1176
      %v1192 = vpack.c.bf16 %v1166, %v1165
      %v1193 = vpack.c.bf16 %v1181, %v1180
      %v1194 = vpack.c.bf16 %v1184, %v1183
      %v1195 = vpack.c.bf16 %v1175, %v1174
      %v1196 = vpack.c.bf16 %v1166, %v1166
      %v1197 = vpack.c.bf16 %v1169, %v1169
      %v1198 = vpack.c.bf16 %v1172, %v1172
      %v1199 = vpack.c.bf16 %v1175, %v1175
      %v1200 = vpack.c.bf16 %v1178, %v1178
      %v1201 = vpack.c.bf16 %v1179, %v1179
      %v1202 = vpack.c.bf16 %v1182, %v1182
      %v1203 = vpack.c.bf16 %v1185, %v1185
      %v1204 = vpack.c.bf16 %v1186, %v1186
      %v1205 = vld [vmem:[%s3] sm:$0xf]
      %v1206 = vld [vmem:[%s3 + $0x4] sm:$0xf]
      %v1207 = vld [vmem:[%s3 + $0x8] sm:$0xf]
      %v1208 = vld [vmem:[%s3 + $0xc] sm:$0xf]
      %v1209 = vld [vmem:[%s3 + $0x10] sm:$0xf]
      %v1210 = vld [vmem:[%s3 + $0x14] sm:$0xf]
      %v1211 = vld [vmem:[%s3 + $0x18] sm:$0xf]
      %v1212 = vld [vmem:[%s3 + $0x1c] sm:$0xf]
      %v1213 = vld [vmem:[%s3 + $0x20] sm:$0xf]
      %v1214 = vld [vmem:[%s3 + $0x24] sm:$0xf]
      %v1215 = vld [vmem:[%s3 + $0x28] sm:$0xf]
      %v1216 = vld [vmem:[%s3 + $0x2c] sm:$0xf]
      %v1217 = vld [vmem:[%s3 + $0x30] sm:$0xf]
      %v1218 = vld [vmem:[%s3 + $0x34] sm:$0xf]
      %v1219 = vld [vmem:[%s3 + $0x38] sm:$0xf]
      %v1220 = vld [vmem:[%s3 + $0x3c] sm:$0xf]
      %v1221 = vld [vmem:[%s3 + $0x40] sm:$0xf]
      %v1222 = vld [vmem:[%s3 + $0x44] sm:$0xf]
      %v1223 = vld [vmem:[%s3 + $0x48] sm:$0xf]
      %v1224 = vld [vmem:[%s3 + $0x4c] sm:$0xf]
      %v1225 = vld [vmem:[%s3 + $0x50] sm:$0xf]
      %v1226 = vld [vmem:[%s3 + $0x54] sm:$0xf]
      %v1227 = vld [vmem:[%s3 + $0x58] sm:$0xf]
      %v1228 = vld [vmem:[%s3 + $0x5c] sm:$0xf]
      %v1229 = vld [vmem:[%s3 + $0x60] sm:$0xf]
      %v1230 = vld [vmem:[%s3 + $0x64] sm:$0xf]
      %v1231 = vld [vmem:[%s3 + $0x68] sm:$0xf]
      %v1232 = vld [vmem:[%s3 + $0x6c] sm:$0xf]
      %v1233 = vld [vmem:[%s3 + $0x70] sm:$0xf]
      %v1234 = vld [vmem:[%s3 + $0x74] sm:$0xf]
      %v1235 = vld [vmem:[%s3 + $0x78] sm:$0xf]
      %v1236 = vld [vmem:[%s3 + $0x7c] sm:$0xf]
      %v1237 = vld [vmem:[%s3 + $0x80] sm:$0xf]
      %v1238 = vld [vmem:[%s3 + $0x84] sm:$0xf]
      %v1239 = vld [vmem:[%s3 + $0x88] sm:$0xf]
      %v1240 = vld [vmem:[%s3 + $0x8c] sm:$0xf]
      %v1241 = vld [vmem:[%s3 + $0x90] sm:$0xf]
      %v1242 = vld [vmem:[%s3 + $0x94] sm:$0xf]
      %v1243 = vld [vmem:[%s3 + $0x98] sm:$0xf]
      %v1244 = vld [vmem:[%s3 + $0x9c] sm:$0xf]
      %v1245 = vld [vmem:[%s3 + $0xa0] sm:$0xf]
      %v1246 = vld [vmem:[%s3 + $0xa4] sm:$0xf]
      %v1247 = vld [vmem:[%s3 + $0xa8] sm:$0xf]
      %v1248 = vld [vmem:[%s3 + $0xac] sm:$0xf]
      %v1249 = vld [vmem:[%s3 + $0xb0] sm:$0xf]
      %v1250 = vld [vmem:[%s3 + $0xb4] sm:$0xf]
      %v1251 = vld [vmem:[%s3 + $0xb8] sm:$0xf]
      %v1252 = vld [vmem:[%s3 + $0xbc] sm:$0xf]
      %v1253 = vld [vmem:[%s3 + $0xc0] sm:$0xf]
      %v1254 = vld [vmem:[%s3 + $0xc4] sm:$0xf]
      %v1255 = vld [vmem:[%s3 + $0xc8] sm:$0xf]
      %v1256 = vld [vmem:[%s3 + $0xcc] sm:$0xf]
      %v1257 = vld [vmem:[%s3 + $0xd0] sm:$0xf]
      %v1258 = vld [vmem:[%s3 + $0xd4] sm:$0xf]
      %v1259 = vld [vmem:[%s3 + $0xd8] sm:$0xf]
      %v1260 = vld [vmem:[%s3 + $0xdc] sm:$0xf]
      %v1261 = vld [vmem:[%s3 + $0xe0] sm:$0xf]
      %v1262 = vld [vmem:[%s3 + $0xe4] sm:$0xf]
      %v1263 = vld [vmem:[%s3 + $0xe8] sm:$0xf]
      %v1264 = vld [vmem:[%s3 + $0xec] sm:$0xf]
      %v1265 = vld [vmem:[%s3 + $0xf0] sm:$0xf]
      %v1266 = vld [vmem:[%s3 + $0xf4] sm:$0xf]
      %v1267 = vld [vmem:[%s3 + $0xf8] sm:$0xf]
      %v1268 = vld [vmem:[%s3 + $0xfc] sm:$0xf]
      %v1269 = vld [vmem:[%s3 + $0x100] sm:$0xf]
      %v1270 = vld [vmem:[%s3 + $0x104] sm:$0xf]
      %v1271 = vld [vmem:[%s3 + $0x108] sm:$0xf]
      %v1272 = vld [vmem:[%s3 + $0x10c] sm:$0xf]
      %v1273 = vld [vmem:[%s3 + $0x110] sm:$0xf]
      %v1274 = vld [vmem:[%s3 + $0x114] sm:$0xf]
      %v1275 = vld [vmem:[%s3 + $0x118] sm:$0xf]
      %v1276 = vld [vmem:[%s3 + $0x11c] sm:$0xf]
      %v1277 = vld [vmem:[%s3 + $0x120] sm:$0xf]
      %v1278 = vld [vmem:[%s3 + $0x124] sm:$0xf]
      %v1279 = vld [vmem:[%s3 + $0x128] sm:$0xf]
      %v1280 = vld [vmem:[%s3 + $0x12c] sm:$0xf]
      %v1281 = vld [vmem:[%s3 + $0x130] sm:$0xf]
      %v1282 = vld [vmem:[%s3 + $0x134] sm:$0xf]
      %v1283 = vld [vmem:[%s3 + $0x138] sm:$0xf]
      %v1284 = vld [vmem:[%s3 + $0x13c] sm:$0xf]
      %v1285 = vld [vmem:[%s3 + $0x140] sm:$0xf]
      %v1286 = vld [vmem:[%s3 + $0x144] sm:$0xf]
      %v1287 = vld [vmem:[%s3 + $0x148] sm:$0xf]
      %v1288 = vld [vmem:[%s3 + $0x14c] sm:$0xf]
      %v1289 = vld [vmem:[%s3 + $0x150] sm:$0xf]
      %v1290 = vld [vmem:[%s3 + $0x154] sm:$0xf]
      %v1291 = vld [vmem:[%s3 + $0x158] sm:$0xf]
      %v1292 = vld [vmem:[%s3 + $0x15c] sm:$0xf]
      %v1293 = vld [vmem:[%s3 + $0x160] sm:$0xf]
      %v1294 = vld [vmem:[%s3 + $0x164] sm:$0xf]
      %v1295 = vld [vmem:[%s3 + $0x168] sm:$0xf]
      %v1296 = vld [vmem:[%s3 + $0x16c] sm:$0xf]
      %v1297 = vld [vmem:[%s3 + $0x170] sm:$0xf]
      %v1298 = vld [vmem:[%s3 + $0x174] sm:$0xf]
      %v1299 = vld [vmem:[%s3 + $0x178] sm:$0xf]
      %v1300 = vld [vmem:[%s3 + $0x17c] sm:$0xf]
      %v1301 = vld [vmem:[%s3 + $0x180] sm:$0xf]
      %v1302 = vld [vmem:[%s3 + $0x184] sm:$0xf]
      %v1303 = vld [vmem:[%s3 + $0x188] sm:$0xf]
      %v1304 = vld [vmem:[%s3 + $0x18c] sm:$0xf]
      %v1305 = vld [vmem:[%s3 + $0x190] sm:$0xf]
      %v1306 = vld [vmem:[%s3 + $0x194] sm:$0xf]
      %v1307 = vld [vmem:[%s3 + $0x198] sm:$0xf]
      %v1308 = vld [vmem:[%s3 + $0x19c] sm:$0xf]
      %v1309 = vld [vmem:[%s3 + $0x1a0] sm:$0xf]
      %v1310 = vld [vmem:[%s3 + $0x1a4] sm:$0xf]
      %v1311 = vld [vmem:[%s3 + $0x1a8] sm:$0xf]
      %v1312 = vld [vmem:[%s3 + $0x1ac] sm:$0xf]
      %v1313 = vld [vmem:[%s3 + $0x1b0] sm:$0xf]
      %v1314 = vld [vmem:[%s3 + $0x1b4] sm:$0xf]
      %v1315 = vld [vmem:[%s3 + $0x1b8] sm:$0xf]
      %v1316 = vld [vmem:[%s3 + $0x1bc] sm:$0xf]
      %v1317 = vld [vmem:[%s3 + $0x1c0] sm:$0xf]
      %v1318 = vld [vmem:[%s3 + $0x1c4] sm:$0xf]
      %v1319 = vld [vmem:[%s3 + $0x1c8] sm:$0xf]
      %v1320 = vld [vmem:[%s3 + $0x1cc] sm:$0xf]
      %v1321 = vld [vmem:[%s3 + $0x1d0] sm:$0xf]
      %v1322 = vld [vmem:[%s3 + $0x1d4] sm:$0xf]
      %v1323 = vld [vmem:[%s3 + $0x1d8] sm:$0xf]
      %v1324 = vld [vmem:[%s3 + $0x1dc] sm:$0xf]
      %v1325 = vld [vmem:[%s3 + $0x1e0] sm:$0xf]
      %v1326 = vld [vmem:[%s3 + $0x1e4] sm:$0xf]
      %v1327 = vld [vmem:[%s3 + $0x1e8] sm:$0xf]
      %v1328 = vld [vmem:[%s3 + $0x1ec] sm:$0xf]
      %v1329 = vld [vmem:[%s3 + $0x1f0] sm:$0xf]
      %v1330 = vld [vmem:[%s3 + $0x1f4] sm:$0xf]
      %v1331 = vld [vmem:[%s3 + $0x1f8] sm:$0xf]
      %v1332 = vld [vmem:[%s3 + $0x1fc] sm:$0xf]
      %v1333 = vld [vmem:[%s3 + $0x200] sm:$0xf]
      %v1334 = vld [vmem:[%s3 + $0x204] sm:$0xf]
      %v1335 = vld [vmem:[%s3 + $0x208] sm:$0xf]
      %v1336 = vld [vmem:[%s3 + $0x20c] sm:$0xf]
      %v1337 = vld [vmem:[%s3 + $0x210] sm:$0xf]
      %v1338 = vld [vmem:[%s3 + $0x214] sm:$0xf]
      %v1339 = vld [vmem:[%s3 + $0x218] sm:$0xf]
      %v1340 = vld [vmem:[%s3 + $0x21c] sm:$0xf]
      %v1341 = vld [vmem:[%s3 + $0x220] sm:$0xf]
      %v1342 = vld [vmem:[%s3 + $0x224] sm:$0xf]
      %v1343 = vld [vmem:[%s3 + $0x228] sm:$0xf]
      %v1344 = vld [vmem:[%s3 + $0x22c] sm:$0xf]
      %v1345 = vld [vmem:[%s3 + $0x230] sm:$0xf]
      %v1346 = vld [vmem:[%s3 + $0x234] sm:$0xf]
      %v1347 = vld [vmem:[%s3 + $0x238] sm:$0xf]
      %v1348 = vld [vmem:[%s3 + $0x23c] sm:$0xf]
      %v1349 = vld [vmem:[%s4] sm:$0x1]
      %v1351 = vlaneseq
      %v1352 = vshrl.u32 %v1351, 7
      %v1353 = vsub.s32 0, %v1352
      %v1354 = vrot.slane %v1349, %v1353
      %v1500 = vunpack.c.l.b16 %v1205
      %v1501 = vunpack.c.l.b16 %v1206
      %v1502 = vunpack.c.l.b16 %v1207
      %v1503 = vunpack.c.l.b16 %v1208
      %v1504 = vunpack.c.l.b16 %v1209
      %v1505 = vunpack.c.l.b16 %v1210
      %v1506 = vunpack.c.l.b16 %v1211
      %v1507 = vunpack.c.l.b16 %v1212
      %v1508 = vunpack.c.l.b16 %v1213
      %v1509 = vunpack.c.l.b16 %v1214
      %v1510 = vunpack.c.l.b16 %v1215
      %v1511 = vunpack.c.l.b16 %v1216
      %v1512 = vunpack.c.l.b16 %v1217
      %v1513 = vunpack.c.l.b16 %v1218
      %v1514 = vunpack.c.l.b16 %v1219
      %v1515 = vunpack.c.l.b16 %v1220
      %v1516 = vunpack.c.l.b16 %v1221
      %v1517 = vunpack.c.l.b16 %v1222
      %v1518 = vunpack.c.l.b16 %v1223
      %v1519 = vunpack.c.l.b16 %v1224
      %v1520 = vunpack.c.l.b16 %v1225
      %v1521 = vunpack.c.l.b16 %v1226
      %v1522 = vunpack.c.l.b16 %v1227
      %v1523 = vunpack.c.l.b16 %v1228
      %v1524 = vunpack.c.l.b16 %v1229
      %v1525 = vunpack.c.l.b16 %v1230
      %v1526 = vunpack.c.l.b16 %v1231
      %v1527 = vunpack.c.l.b16 %v1232
      %v1528 = vunpack.c.l.b16 %v1233
      %v1529 = vunpack.c.l.b16 %v1234
      %v1530 = vunpack.c.l.b16 %v1235
      %v1531 = vunpack.c.l.b16 %v1236
      %v1532 = vunpack.c.l.b16 %v1237
      %v1533 = vunpack.c.l.b16 %v1238
      %v1534 = vunpack.c.l.b16 %v1239
      %v1535 = vunpack.c.l.b16 %v1240
      %v1536 = vunpack.c.l.b16 %v1241
      %v1537 = vunpack.c.l.b16 %v1242
      %v1538 = vunpack.c.l.b16 %v1243
      %v1539 = vunpack.c.l.b16 %v1244
      %v1540 = vunpack.c.l.b16 %v1245
      %v1541 = vunpack.c.l.b16 %v1246
      %v1542 = vunpack.c.l.b16 %v1247
      %v1543 = vunpack.c.l.b16 %v1248
      %v1544 = vunpack.c.l.b16 %v1249
      %v1545 = vunpack.c.l.b16 %v1250
      %v1546 = vunpack.c.l.b16 %v1251
      %v1547 = vunpack.c.l.b16 %v1252
      %v1548 = vunpack.c.l.b16 %v1253
      %v1549 = vunpack.c.l.b16 %v1254
      %v1550 = vunpack.c.l.b16 %v1255
      %v1551 = vunpack.c.l.b16 %v1256
      %v1552 = vunpack.c.l.b16 %v1257
      %v1553 = vunpack.c.l.b16 %v1258
      %v1554 = vunpack.c.l.b16 %v1259
      %v1555 = vunpack.c.l.b16 %v1260
      %v1556 = vunpack.c.l.b16 %v1261
      %v1557 = vunpack.c.l.b16 %v1262
      %v1558 = vunpack.c.l.b16 %v1263
      %v1559 = vunpack.c.l.b16 %v1264
      %v1560 = vunpack.c.l.b16 %v1265
      %v1561 = vunpack.c.l.b16 %v1266
      %v1562 = vunpack.c.l.b16 %v1267
      %v1563 = vunpack.c.l.b16 %v1268
      %v1564 = vunpack.c.l.b16 %v1269
      %v1565 = vunpack.c.l.b16 %v1270
      %v1566 = vunpack.c.l.b16 %v1271
      %v1567 = vunpack.c.l.b16 %v1272
      %v1568 = vunpack.c.l.b16 %v1273
      %v1569 = vunpack.c.l.b16 %v1274
      %v1570 = vunpack.c.l.b16 %v1275
      %v1571 = vunpack.c.l.b16 %v1276
      %v1572 = vunpack.c.l.b16 %v1277
      %v1573 = vunpack.c.l.b16 %v1278
      %v1574 = vunpack.c.l.b16 %v1279
      %v1575 = vunpack.c.l.b16 %v1280
      %v1576 = vunpack.c.l.b16 %v1281
      %v1577 = vunpack.c.l.b16 %v1282
      %v1578 = vunpack.c.l.b16 %v1283
      %v1579 = vunpack.c.l.b16 %v1284
      %v1580 = vunpack.c.l.b16 %v1285
      %v1581 = vunpack.c.l.b16 %v1286
      %v1582 = vunpack.c.l.b16 %v1287
      %v1583 = vunpack.c.l.b16 %v1288
      %v1584 = vunpack.c.l.b16 %v1289
      %v1585 = vunpack.c.l.b16 %v1290
      %v1586 = vunpack.c.l.b16 %v1291
      %v1587 = vunpack.c.l.b16 %v1292
      %v1588 = vunpack.c.l.b16 %v1293
      %v1589 = vunpack.c.l.b16 %v1294
      %v1590 = vunpack.c.l.b16 %v1295
      %v1591 = vunpack.c.l.b16 %v1296
      %v1592 = vunpack.c.l.b16 %v1297
      %v1593 = vunpack.c.l.b16 %v1298
      %v1594 = vunpack.c.l.b16 %v1299
      %v1595 = vunpack.c.l.b16 %v1300
      %v1596 = vunpack.c.l.b16 %v1301
      %v1597 = vunpack.c.l.b16 %v1302
      %v1598 = vunpack.c.l.b16 %v1303
      %v1599 = vunpack.c.l.b16 %v1304
      %v1600 = vunpack.c.l.b16 %v1305
      %v1601 = vunpack.c.l.b16 %v1306
      %v1602 = vunpack.c.l.b16 %v1307
      %v1603 = vunpack.c.l.b16 %v1308
      %v1604 = vunpack.c.l.b16 %v1309
      %v1605 = vunpack.c.l.b16 %v1310
      %v1606 = vunpack.c.l.b16 %v1311
      %v1607 = vunpack.c.l.b16 %v1312
      %v1608 = vunpack.c.l.b16 %v1313
      %v1609 = vunpack.c.l.b16 %v1314
      %v1610 = vunpack.c.l.b16 %v1315
      %v1611 = vunpack.c.l.b16 %v1316
      %v1612 = vunpack.c.l.b16 %v1317
      %v1613 = vunpack.c.l.b16 %v1318
      %v1614 = vunpack.c.l.b16 %v1319
      %v1615 = vunpack.c.l.b16 %v1320
      %v1616 = vunpack.c.l.b16 %v1321
      %v1617 = vunpack.c.l.b16 %v1322
      %v1618 = vunpack.c.l.b16 %v1323
      %v1619 = vunpack.c.l.b16 %v1324
      %v1620 = vunpack.c.l.b16 %v1325
      %v1621 = vunpack.c.l.b16 %v1326
      %v1622 = vunpack.c.l.b16 %v1327
      %v1623 = vunpack.c.l.b16 %v1328
      %v1624 = vunpack.c.l.b16 %v1329
      %v1625 = vunpack.c.l.b16 %v1330
      %v1626 = vunpack.c.l.b16 %v1331
      %v1627 = vunpack.c.l.b16 %v1332
      %v1628 = vunpack.c.l.b16 %v1333
      %v1629 = vunpack.c.l.b16 %v1334
      %v1630 = vunpack.c.l.b16 %v1335
      %v1631 = vunpack.c.l.b16 %v1336
      %v1632 = vunpack.c.l.b16 %v1337
      %v1633 = vunpack.c.l.b16 %v1338
      %v1634 = vunpack.c.l.b16 %v1339
      %v1635 = vunpack.c.l.b16 %v1340
      %v1636 = vunpack.c.l.b16 %v1341
      %v1637 = vunpack.c.l.b16 %v1342
      %v1638 = vunpack.c.l.b16 %v1343
      %v1639 = vunpack.c.l.b16 %v1344
      %v1640 = vunpack.c.l.b16 %v1345
      %v1641 = vunpack.c.l.b16 %v1346
      %v1642 = vunpack.c.l.b16 %v1347
      %v1643 = vunpack.c.l.b16 %v1348
      %v1644 = vpack.c.b16 %v1501, %v1500
      %v1645 = vpack.c.b16 %v1503, %v1502
      %v1646 = vpack.c.b16 %v1505, %v1504
      %v1647 = vpack.c.b16 %v1507, %v1506
      %v1648 = vpack.c.b16 %v1509, %v1508
      %v1649 = vpack.c.b16 %v1511, %v1510
      %v1650 = vpack.c.b16 %v1513, %v1512
      %v1651 = vpack.c.b16 %v1515, %v1514
      %v1652 = vpack.c.b16 %v1517, %v1516
      %v1653 = vpack.c.b16 %v1519, %v1518
      %v1654 = vpack.c.b16 %v1521, %v1520
      %v1655 = vpack.c.b16 %v1523, %v1522
      %v1656 = vpack.c.b16 %v1525, %v1524
      %v1657 = vpack.c.b16 %v1527, %v1526
      %v1658 = vpack.c.b16 %v1529, %v1528
      %v1659 = vpack.c.b16 %v1531, %v1530
      %v1660 = vpack.c.b16 %v1533, %v1532
      %v1661 = vpack.c.b16 %v1535, %v1534
      %v1662 = vpack.c.b16 %v1537, %v1536
      %v1663 = vpack.c.b16 %v1539, %v1538
      %v1664 = vpack.c.b16 %v1541, %v1540
      %v1665 = vpack.c.b16 %v1543, %v1542
      %v1666 = vpack.c.b16 %v1545, %v1544
      %v1667 = vpack.c.b16 %v1547, %v1546
      %v1668 = vpack.c.b16 %v1549, %v1548
      %v1669 = vpack.c.b16 %v1551, %v1550
      %v1670 = vpack.c.b16 %v1553, %v1552
      %v1671 = vpack.c.b16 %v1555, %v1554
      %v1672 = vpack.c.b16 %v1557, %v1556
      %v1673 = vpack.c.b16 %v1559, %v1558
      %v1674 = vpack.c.b16 %v1561, %v1560
      %v1675 = vpack.c.b16 %v1563, %v1562
      %v1676 = vpack.c.b16 %v1565, %v1564
      %v1677 = vpack.c.b16 %v1567, %v1566
      %v1678 = vpack.c.b16 %v1569, %v1568
      %v1679 = vpack.c.b16 %v1571, %v1570
      %v1680 = vpack.c.b16 %v1573, %v1572
      %v1681 = vpack.c.b16 %v1575, %v1574
      %v1682 = vpack.c.b16 %v1577, %v1576
      %v1683 = vpack.c.b16 %v1579, %v1578
      %v1684 = vpack.c.b16 %v1581, %v1580
      %v1685 = vpack.c.b16 %v1583, %v1582
      %v1686 = vpack.c.b16 %v1585, %v1584
      %v1687 = vpack.c.b16 %v1587, %v1586
      %v1688 = vpack.c.b16 %v1589, %v1588
      %v1689 = vpack.c.b16 %v1591, %v1590
      %v1690 = vpack.c.b16 %v1593, %v1592
      %v1691 = vpack.c.b16 %v1595, %v1594
      %v1692 = vpack.c.b16 %v1597, %v1596
      %v1693 = vpack.c.b16 %v1599, %v1598
      %v1694 = vpack.c.b16 %v1601, %v1600
      %v1695 = vpack.c.b16 %v1603, %v1602
      %v1696 = vpack.c.b16 %v1605, %v1604
      %v1697 = vpack.c.b16 %v1607, %v1606
      %v1698 = vpack.c.b16 %v1609, %v1608
      %v1699 = vpack.c.b16 %v1611, %v1610
      %v1700 = vpack.c.b16 %v1613, %v1612
      %v1701 = vpack.c.b16 %v1615, %v1614
      %v1702 = vpack.c.b16 %v1617, %v1616
      %v1703 = vpack.c.b16 %v1619, %v1618
      %v1704 = vpack.c.b16 %v1621, %v1620
      %v1705 = vpack.c.b16 %v1623, %v1622
      %v1706 = vpack.c.b16 %v1625, %v1624
      %v1707 = vpack.c.b16 %v1627, %v1626
      %v1708 = vpack.c.b16 %v1629, %v1628
      %v1709 = vpack.c.b16 %v1631, %v1630
      %v1710 = vpack.c.b16 %v1633, %v1632
      %v1711 = vpack.c.b16 %v1635, %v1634
      %v1712 = vpack.c.b16 %v1637, %v1636
      %v1713 = vpack.c.b16 %v1639, %v1638
      %v1714 = vpack.c.b16 %v1641, %v1640
      %v1715 = vpack.c.b16 %v1643, %v1642
      %1788 = vmatprep.subr.bf16.mxu0 0
      %1789 = vmatpush1.bf16.msra.mxu0 %v1651
      %1790 = vmatprep.subr.bf16.mxu0 0
      %1791 = vmatpush1.bf16.msra.mxu0 %v1650
      %1792 = vmatprep.subr.bf16.mxu0 0
      %1793 = vmatpush1.bf16.msra.mxu0 %v1649
      %1794 = vmatprep.subr.bf16.mxu0 0
      %1795 = vmatpush1.bf16.msra.mxu0 %v1648
      %1796 = vmatprep.subr.bf16.mxu0 0
      %1797 = vmatpush1.bf16.msra.mxu0 %v1647
      %1798 = vmatprep.subr.bf16.mxu0 0
      %1799 = vmatpush1.bf16.msra.mxu0 %v1646
      %1800 = vmatprep.subr.bf16.mxu0 0
      %1801 = vmatpush1.bf16.msra.mxu0 %v1645
      %1802 = vmatprep.subr.bf16.mxu0 0
      %1803 = vmatpush1.bf16.msra.mxu0 %v1644
      %1804 = vmatprep.subr.bf16.mxu0 0
      %1805 = vmatpush2.bf16.msra.mxu0 %v1659
      %1806 = vmatprep.subr.bf16.mxu0 0
      %1807 = vmatpush2.bf16.msra.mxu0 %v1658
      %1808 = vmatprep.subr.bf16.mxu0 0
      %1809 = vmatpush2.bf16.msra.mxu0 %v1657
      %1810 = vmatprep.subr.bf16.mxu0 0
      %1811 = vmatpush2.bf16.msra.mxu0 %v1656
      %1812 = vmatprep.subr.bf16.mxu0 0
      %1813 = vmatpush2.bf16.msra.mxu0 %v1655
      %1814 = vmatprep.subr.bf16.mxu0 0
      %1815 = vmatpush2.bf16.msra.mxu0 %v1654
      %1816 = vmatprep.subr.bf16.mxu0 0
      %1817 = vmatpush2.bf16.msra.mxu0 %v1653
      %1818 = vmatprep.subr.bf16.mxu0 0
      %1819 = vmatpush2.bf16.msra.mxu0 %v1652
      %1820 = vmatprep.mubr.bf16.mxu0 %v1188
      %1821 = vmatmul.mubr.bf16.gmra.mxu0 %v1187
      %v1822 = vpop.f32.mrf.mxu0
      %v1823 = vadd.f32 %v1354, %v1822
      %v1824 = vpop.f32.mrf.mxu0
      %v1825 = vpop.f32.mrf.mxu0
      %v1826 = vadd.f32 %v1354, %v1825
      %v1827 = vpop.f32.mrf.mxu0
      %1828 = vmatprep.mubr.bf16.mxu0 %v1197
      %1829 = vmatmul.mubr.bf16.gmra.mxu0 %v1196
      %v1830 = vpop.f32.mrf.mxu0
      %v1831 = vadd.f32 %v1354, %v1830
      %v1832 = vpop.f32.mrf.mxu0
      %v1833 = vpop.f32.mrf.mxu0
      %v1834 = vpop.f32.mrf.mxu0
      %1835 = vdwg.mxu0
      %1836 = vmatprep.subr.bf16.mxu0 0
      %1837 = vmatpush1.bf16.msra.mxu0 %v1667
      %1838 = vmatprep.subr.bf16.mxu0 0
      %1839 = vmatpush1.bf16.msra.mxu0 %v1666
      %1840 = vmatprep.subr.bf16.mxu0 0
      %1841 = vmatpush1.bf16.msra.mxu0 %v1665
      %1842 = vmatprep.subr.bf16.mxu0 0
      %1843 = vmatpush1.bf16.msra.mxu0 %v1664
      %1844 = vmatprep.subr.bf16.mxu0 0
      %1845 = vmatpush1.bf16.msra.mxu0 %v1663
      %1846 = vmatprep.subr.bf16.mxu0 0
      %1847 = vmatpush1.bf16.msra.mxu0 %v1662
      %1848 = vmatprep.subr.bf16.mxu0 0
      %1849 = vmatpush1.bf16.msra.mxu0 %v1661
      %1850 = vmatprep.subr.bf16.mxu0 0
      %1851 = vmatpush1.bf16.msra.mxu0 %v1660
      %1852 = vmatprep.subr.bf16.mxu0 0
      %1853 = vmatpush2.bf16.msra.mxu0 %v1675
      %1854 = vmatprep.subr.bf16.mxu0 0
      %1855 = vmatpush2.bf16.msra.mxu0 %v1674
      %1856 = vmatprep.subr.bf16.mxu0 0
      %1857 = vmatpush2.bf16.msra.mxu0 %v1673
      %1858 = vmatprep.subr.bf16.mxu0 0
      %1859 = vmatpush2.bf16.msra.mxu0 %v1672
      %1860 = vmatprep.subr.bf16.mxu0 0
      %1861 = vmatpush2.bf16.msra.mxu0 %v1671
      %1862 = vmatprep.subr.bf16.mxu0 0
      %1863 = vmatpush2.bf16.msra.mxu0 %v1670
      %1864 = vmatprep.subr.bf16.mxu0 0
      %1865 = vmatpush2.bf16.msra.mxu0 %v1669
      %1866 = vmatprep.subr.bf16.mxu0 0
      %1867 = vmatpush2.bf16.msra.mxu0 %v1668
      %1868 = vmatprep.mubr.bf16.mxu0 %v1190
      %1869 = vmatmul.mubr.bf16.gmra.mxu0 %v1189
      %v1870 = vpop.f32.mrf.mxu0
      %v1871 = vadd.f32 %v1823, %v1870
      %v1872 = vpop.f32.mrf.mxu0
      %v1873 = vpop.f32.mrf.mxu0
      %v1874 = vadd.f32 %v1826, %v1873
      %v1875 = vpop.f32.mrf.mxu0
      %1876 = vmatprep.mubr.bf16.mxu0 %v1199
      %1877 = vmatmul.mubr.bf16.gmra.mxu0 %v1198
      %v1878 = vpop.f32.mrf.mxu0
      %v1879 = vadd.f32 %v1831, %v1878
      %v1880 = vpop.f32.mrf.mxu0
      %v1881 = vpop.f32.mrf.mxu0
      %v1882 = vpop.f32.mrf.mxu0
      %1883 = vdwg.mxu0
      %1884 = vmatprep.subr.bf16.mxu0 0
      %1885 = vmatpush1.bf16.msra.mxu0 %v1683
      %1886 = vmatprep.subr.bf16.mxu0 0
      %1887 = vmatpush1.bf16.msra.mxu0 %v1682
      %1888 = vmatprep.subr.bf16.mxu0 0
      %1889 = vmatpush1.bf16.msra.mxu0 %v1681
      %1890 = vmatprep.subr.bf16.mxu0 0
      %1891 = vmatpush1.bf16.msra.mxu0 %v1680
      %1892 = vmatprep.subr.bf16.mxu0 0
      %1893 = vmatpush1.bf16.msra.mxu0 %v1679
      %1894 = vmatprep.subr.bf16.mxu0 0
      %1895 = vmatpush1.bf16.msra.mxu0 %v1678
      %1896 = vmatprep.subr.bf16.mxu0 0
      %1897 = vmatpush1.bf16.msra.mxu0 %v1677
      %1898 = vmatprep.subr.bf16.mxu0 0
      %1899 = vmatpush1.bf16.msra.mxu0 %v1676
      %1900 = vmatprep.subr.bf16.mxu0 0
      %1901 = vmatpush2.bf16.msra.mxu0 %v1691
      %1902 = vmatprep.subr.bf16.mxu0 0
      %1903 = vmatpush2.bf16.msra.mxu0 %v1690
      %1904 = vmatprep.subr.bf16.mxu0 0
      %1905 = vmatpush2.bf16.msra.mxu0 %v1689
      %1906 = vmatprep.subr.bf16.mxu0 0
      %1907 = vmatpush2.bf16.msra.mxu0 %v1688
      %1908 = vmatprep.subr.bf16.mxu0 0
      %1909 = vmatpush2.bf16.msra.mxu0 %v1687
      %1910 = vmatprep.subr.bf16.mxu0 0
      %1911 = vmatpush2.bf16.msra.mxu0 %v1686
      %1912 = vmatprep.subr.bf16.mxu0 0
      %1913 = vmatpush2.bf16.msra.mxu0 %v1685
      %1914 = vmatprep.subr.bf16.mxu0 0
      %1915 = vmatpush2.bf16.msra.mxu0 %v1684
      %1916 = vmatprep.mubr.bf16.mxu0 %v1192
      %1917 = vmatmul.mubr.bf16.gmra.mxu0 %v1191
      %v1918 = vpop.f32.mrf.mxu0
      %v1919 = vadd.f32 %v1871, %v1918
      %v1920 = vpop.f32.mrf.mxu0
      %v1921 = vpop.f32.mrf.mxu0
      %v1922 = vadd.f32 %v1874, %v1921
      %v1923 = vpop.f32.mrf.mxu0
      %1924 = vmatprep.mubr.bf16.mxu0 %v1201
      %1925 = vmatmul.mubr.bf16.gmra.mxu0 %v1200
      %v1926 = vpop.f32.mrf.mxu0
      %v1927 = vadd.f32 %v1879, %v1926
      %v1928 = vpop.f32.mrf.mxu0
      %v1929 = vpop.f32.mrf.mxu0
      %v1930 = vpop.f32.mrf.mxu0
      %1931 = vdwg.mxu0
      %1932 = vmatprep.subr.bf16.mxu0 0
      %1933 = vmatpush1.bf16.msra.mxu0 %v1699
      %1934 = vmatprep.subr.bf16.mxu0 0
      %1935 = vmatpush1.bf16.msra.mxu0 %v1698
      %1936 = vmatprep.subr.bf16.mxu0 0
      %1937 = vmatpush1.bf16.msra.mxu0 %v1697
      %1938 = vmatprep.subr.bf16.mxu0 0
      %1939 = vmatpush1.bf16.msra.mxu0 %v1696
      %1940 = vmatprep.subr.bf16.mxu0 0
      %1941 = vmatpush1.bf16.msra.mxu0 %v1695
      %1942 = vmatprep.subr.bf16.mxu0 0
      %1943 = vmatpush1.bf16.msra.mxu0 %v1694
      %1944 = vmatprep.subr.bf16.mxu0 0
      %1945 = vmatpush1.bf16.msra.mxu0 %v1693
      %1946 = vmatprep.subr.bf16.mxu0 0
      %1947 = vmatpush1.bf16.msra.mxu0 %v1692
      %1948 = vmatprep.subr.bf16.mxu0 0
      %1949 = vmatpush2.bf16.msra.mxu0 %v1707
      %1950 = vmatprep.subr.bf16.mxu0 0
      %1951 = vmatpush2.bf16.msra.mxu0 %v1706
      %1952 = vmatprep.subr.bf16.mxu0 0
      %1953 = vmatpush2.bf16.msra.mxu0 %v1705
      %1954 = vmatprep.subr.bf16.mxu0 0
      %1955 = vmatpush2.bf16.msra.mxu0 %v1704
      %1956 = vmatprep.subr.bf16.mxu0 0
      %1957 = vmatpush2.bf16.msra.mxu0 %v1703
      %1958 = vmatprep.subr.bf16.mxu0 0
      %1959 = vmatpush2.bf16.msra.mxu0 %v1702
      %1960 = vmatprep.subr.bf16.mxu0 0
      %1961 = vmatpush2.bf16.msra.mxu0 %v1701
      %1962 = vmatprep.subr.bf16.mxu0 0
      %1963 = vmatpush2.bf16.msra.mxu0 %v1700
      %1964 = vmatprep.mubr.bf16.mxu0 %v1194
      %1965 = vmatmul.mubr.bf16.gmra.mxu0 %v1193
      %v1966 = vpop.f32.mrf.mxu0
      %v1967 = vadd.f32 %v1919, %v1966
      %v1968 = vpop.f32.mrf.mxu0
      %v1969 = vpop.f32.mrf.mxu0
      %v1970 = vadd.f32 %v1922, %v1969
      %v1971 = vpop.f32.mrf.mxu0
      %1972 = vmatprep.mubr.bf16.mxu0 %v1203
      %1973 = vmatmul.mubr.bf16.gmra.mxu0 %v1202
      %v1974 = vpop.f32.mrf.mxu0
      %v1975 = vadd.f32 %v1927, %v1974
      %v1976 = vpop.f32.mrf.mxu0
      %v1977 = vpop.f32.mrf.mxu0
      %v1978 = vpop.f32.mrf.mxu0
      %1979 = vdwg.mxu0
      %1980 = vmatprep.subr.bf16.mxu0 0
      %1981 = vmatpush1.bf16.msra.mxu0 %v1715
      %1982 = vmatprep.subr.bf16.mxu0 0
      %1983 = vmatpush1.bf16.msra.mxu0 %v1714
      %1984 = vmatprep.subr.bf16.mxu0 0
      %1985 = vmatpush1.bf16.msra.mxu0 %v1713
      %1986 = vmatprep.subr.bf16.mxu0 0
      %1987 = vmatpush1.bf16.msra.mxu0 %v1712
      %1988 = vmatprep.subr.bf16.mxu0 0
      %1989 = vmatpush1.bf16.msra.mxu0 %v1711
      %1990 = vmatprep.subr.bf16.mxu0 0
      %1991 = vmatpush1.bf16.msra.mxu0 %v1710
      %1992 = vmatprep.subr.bf16.mxu0 0
      %1993 = vmatpush1.bf16.msra.mxu0 %v1709
      %1994 = vmatprep.subr.bf16.mxu0 0
      %1995 = vmatpush1.bf16.msra.mxu0 %v1708
      %1996 = vmatprep.subr.bf16.mxu0 0
      %1997 = vmatpush2.bf16.msra.mxu0 0
      %1998 = vmatprep.subr.bf16.mxu0 0
      %1999 = vmatpush2.bf16.msra.mxu0 0
      %2000 = vmatprep.subr.bf16.mxu0 0
      %2001 = vmatpush2.bf16.msra.mxu0 0
      %2002 = vmatprep.subr.bf16.mxu0 0
      %2003 = vmatpush2.bf16.msra.mxu0 0
      %2004 = vmatprep.subr.bf16.mxu0 0
      %2005 = vmatpush2.bf16.msra.mxu0 0
      %2006 = vmatprep.subr.bf16.mxu0 0
      %2007 = vmatpush2.bf16.msra.mxu0 0
      %2008 = vmatprep.subr.bf16.mxu0 0
      %2009 = vmatpush2.bf16.msra.mxu0 0
      %2010 = vmatprep.subr.bf16.mxu0 0
      %2011 = vmatpush2.bf16.msra.mxu0 0
      %2012 = vmatprep.mubr.bf16.mxu0 0
      %2013 = vmatmul.mubr.bf16.gmra.mxu0 %v1195
      %v2014 = vpop.f32.mrf.mxu0
      %v2015 = vadd.f32 %v1967, %v2014
      %v2016 = vpop.f32.mrf.mxu0
      %v2017 = vpop.f32.mrf.mxu0
      %v2018 = vadd.f32 %v1970, %v2017
      %v2019 = vpop.f32.mrf.mxu0
      %2020 = vmatprep.mubr.bf16.mxu0 0
      %2021 = vmatmul.mubr.bf16.gmra.mxu0 %v1204
      %v2022 = vpop.f32.mrf.mxu0
      %v2023 = vadd.f32 %v1975, %v2022
      %v2024 = vpop.f32.mrf.mxu0
      %v2025 = vpop.f32.mrf.mxu0
      %v2026 = vpop.f32.mrf.mxu0
      %2027 = vdwg.mxu0
      %v2028 = vld [vmem:[%s219 + $0x7] sm:$0xff]
      %v2029 = vld [vmem:[%s219 + $0xf] sm:$0xff]
      %v2030 = vld [vmem:[%s219 + $0x17] sm:$0xff]
      %v2031 = vadd.f32 %v2015, %v2028
      %v2032 = vadd.f32 %v2018, %v2029
      %v2033 = vadd.f32 %v2023, %v2030
      %2034 = vst [vmem:[%s224] sm:$0xff] %v2031
      %2035 = vst [vmem:[%s224 + $0x8] sm:$0xff] %v2032
      %2036 = vst [vmem:[%s224 + $0x10] sm:$0xff] %v2033
      %p2037 = scmp.lt.s32.totalorder %s16, 1
      %s2038 = scalar_select %p2037, %s16, 1
      %s2039 = smul.addr %s2038, 3
      %s2040 = smul.addr %s2039, 8
      %s2041 = scalar_lea.vmem %s5, %s2040
      // Predicated region
      $region41: #{vaegan_discriminator.16} parent=39 // pred_check
        %p2042 = pneg %p144
      $region42: #{vaegan_discriminator.16} parent=39 // pred_check_branch
        %2044 = sbr.rel (%p2042) target = $region44
      $region43: #{vaegan_discriminator.16} parent=39 // pred_region
        _
      $region44: #{vaegan_discriminator.16} parent=39 // pred_fallthru
        _
    $region40: #{vaegan_discriminator.16} parent=5 // pred_fallthru
      _
    %p2045 = scmp.le.s32.totalorder 2, %s11
    // Predicated region
    $region45: #{vaegan_discriminator.16} parent=5 // pred_check
      %p2046 = pneg %p2045
    $region46: #{vaegan_discriminator.16} parent=5 // pred_check_branch
      %2048 = sbr.rel (%p2046) target = $region48
    $region47: #{vaegan_discriminator.16} parent=5 // pred_region
      %s2049 = ssub.s32 %s11, 2
      // Predicated region
      $region49: #{vaegan_discriminator.16} parent=47 // pred_check
        %p2050 = pneg %p150
      $region50: #{vaegan_discriminator.16} parent=47 // pred_check_branch
        %2052 = sbr.rel (%p2050) target = $region52
      $region51: #{vaegan_discriminator.16} parent=47 // pred_region
        %p2053 = scmp.lt.s32.totalorder %s17, 1
        %s2054 = scalar_select %p2053, %s17, 1
        %s2055 = smul.addr %s2054, 3
        %s2056 = smul.addr %s2055, 8
        %s2057 = scalar_lea.vmem %s5, %s2056
      $region52: #{vaegan_discriminator.16} parent=47 // pred_fallthru
        _
    $region48: #{vaegan_discriminator.16} parent=5 // pred_fallthru
      _
  $region6: #{vaegan_discriminator.16} parent=0 // loop_footer
    %s15 = sadd.s32 1, %s11
  $region7: #{vaegan_discriminator.16} parent=0 // loop_footer_branch
    %10 = sbr.rel target = $region3
  $region8: #{vaegan_discriminator.16} parent=0 // loop_exit
    _

</llo_original>
